<compile_context>
chip_gen: v5e
topology: v5e:2x2
jax: 0.10.0
libtpu: 0.0.40
codegen_flags: <defaults>
</compile_context>

<pallas_src>
import functools

import jax
import jax.numpy as jnp
from jax.experimental import pallas as pl
from jax.experimental.pallas import tpu as pltpu


def _round_up(x, m):
    return (x + m - 1) // m * m


# -----------------------------------------------------------------------------
# Pallas kernel (whole forward pass after the embedding gather)
# -----------------------------------------------------------------------------
def _cell(g, c, Hp):
    """One LSTM cell update from full-width gate pre-activations.

    g: (Bp, 4*Hp) f32, PyTorch gate order i, f, g, o.  Every slice below is a
    whole number of 128-lane vregs (Hp is a multiple of 128) -> no relayouts.
    """
    i_g = jax.nn.sigmoid(g[:, 0 * Hp:1 * Hp])
    f_g = jax.nn.sigmoid(g[:, 1 * Hp:2 * Hp])
    g_g = jnp.tanh(g[:, 2 * Hp:3 * Hp])
    o_g = jax.nn.sigmoid(g[:, 3 * Hp:4 * Hp])
    c = f_g * c + i_g * g_g
    h = o_g * jnp.tanh(c)
    return h, c


def _make_textrnn_kernel(num_layers, T, Bp, Hp):
    def kernel(*refs):
        refs = list(refs)
        x_ref = refs[0]                                   # (T*Bp, Ep) bf16
        layer_refs = [refs[1 + 6 * l: 1 + 6 * (l + 1)] for l in range(num_layers)]
        fc_wt_ref = refs[1 + 6 * num_layers]              # (2*Hp, Op) bf16
        fc_b_ref = refs[2 + 6 * num_layers]               # (1, Op) f32
        out_ref = refs[3 + 6 * num_layers]                # (Bp, Op) f32
        hsf = refs[4 + 6 * num_layers]                    # (T*Bp, Hp) f32 scratch
        hsr = refs[5 + 6 * num_layers]                    # (T*Bp, Hp) f32 scratch
        gxf = refs[6 + 6 * num_layers]                    # (T*Bp, 4*Hp) f32 scratch
        gxr = refs[7 + 6 * num_layers]                    # (T*Bp, 4*Hp) f32 scratch

        for layer, (wihf, whhf, bf, wihr, whhr, br) in enumerate(layer_refs):
            # ---- hoisted input projection (off the serial path) --------------
            if layer == 0:
                x = x_ref[...]                                          # bf16
                gxf[...] = jnp.dot(x, wihf[...],
                                   preferred_element_type=jnp.float32) + bf[...]
                gxr[...] = jnp.dot(x, wihr[...],
                                   preferred_element_type=jnp.float32) + br[...]
            else:
                # Previous layer's fwd / rev hidden streams stay as two
                # lane-dense (T*Bp, Hp) buffers; W_ih^T is row-split instead
                # of concatenating activations along a 2H-wide lane axis.
                xf = hsf[...].astype(jnp.bfloat16)
                xr = hsr[...].astype(jnp.bfloat16)
                gxf[...] = (jnp.dot(xf, wihf[0:Hp, :],
                                    preferred_element_type=jnp.float32)
                            + jnp.dot(xr, wihf[Hp:2 * Hp, :],
                                      preferred_element_type=jnp.float32)
                            + bf[...])
                gxr[...] = (jnp.dot(xf, wihr[0:Hp, :],
                                    preferred_element_type=jnp.float32)
                            + jnp.dot(xr, wihr[Hp:2 * Hp, :],
                                      preferred_element_type=jnp.float32)
                            + br[...])

            whhf_v = whhf[...]                                          # bf16
            whhr_v = whhr[...]                                          # bf16

            # ---- interleaved fwd+rev recurrence (serial critical path) -------
            h_f = jnp.zeros((Bp, Hp), jnp.float32)
            c_f = jnp.zeros((Bp, Hp), jnp.float32)
            h_r = jnp.zeros((Bp, Hp), jnp.float32)
            c_r = jnp.zeros((Bp, Hp), jnp.float32)
            for t in range(T):  # statically unrolled (T is small here)
                tr = T - 1 - t
                g_f = gxf[t * Bp:(t + 1) * Bp, :] + jnp.dot(
                    h_f.astype(jnp.bfloat16), whhf_v,
                    preferred_element_type=jnp.float32)
                g_r = gxr[tr * Bp:(tr + 1) * Bp, :] + jnp.dot(
                    h_r.astype(jnp.bfloat16), whhr_v,
                    preferred_element_type=jnp.float32)
                h_f, c_f = _cell(g_f, c_f, Hp)
                h_r, c_r = _cell(g_r, c_r, Hp)
                hsf[t * Bp:(t + 1) * Bp, :] = h_f      # full (8,128) tile store
                hsr[tr * Bp:(tr + 1) * Bp, :] = h_r

        # ---- fused final Linear on out[:, -1, :] = [h_f(T-1) | h_r(T-1)] -----
        hf_last = hsf[(T - 1) * Bp:T * Bp, :].astype(jnp.bfloat16)
        hr_last = hsr[(T - 1) * Bp:T * Bp, :].astype(jnp.bfloat16)
        out_ref[...] = (jnp.dot(hf_last, fc_wt_ref[0:Hp, :],
                                preferred_element_type=jnp.float32)
                        + jnp.dot(hr_last, fc_wt_ref[Hp:2 * Hp, :],
                                  preferred_element_type=jnp.float32)
                        + fc_b_ref[...])
    return kernel


# -----------------------------------------------------------------------------
# Wrapper: padding / pre-transposition of weights, single pallas_call
# -----------------------------------------------------------------------------
def _pad_gate_rows(w, H, Hp):
    """(4H, D) -> (4Hp, D): zero-pad each of the 4 stacked gate blocks."""
    return jnp.concatenate(
        [jnp.pad(w[k * H:(k + 1) * H], ((0, Hp - H), (0, 0))) for k in range(4)],
        axis=0)


def _pad_gate_bias(b, H, Hp):
    """(1, 4H) -> (1, 4Hp)."""
    return jnp.concatenate(
        [jnp.pad(b[:, k * H:(k + 1) * H], ((0, 0), (0, Hp - H))) for k in range(4)],
        axis=1)


@functools.partial(jax.jit, static_argnames=("num_layers",))
def text_rnn_forward(token_ids, params, num_layers):
    """token_ids: (B, T) int32.  Returns (B, output_size) f32."""
    B, T = token_ids.shape
    E = params["embedding"].shape[1]
    H = params["w_hh_l0_d0"].shape[1]
    O = params["fc_w"].shape[0]

    Bp = _round_up(B, 8)       # sublane tile
    Hp = _round_up(H, 128)     # lane tile
    Ep = _round_up(E, 128)
    Op = _round_up(O, 128)

    # Embedding lookup (data-dependent gather left to XLA), pad batch + width.
    emb = jnp.take(params["embedding"], token_ids, axis=0)        # (B, T, E)
    emb = jnp.pad(emb, ((0, Bp - B), (0, 0), (0, 0)))             # (Bp, T, E)
    x2d = jnp.transpose(emb, (1, 0, 2)).reshape(T * Bp, E)        # time-major
    x2d = jnp.pad(x2d, ((0, 0), (0, Ep - E))).astype(jnp.bfloat16)

    inputs = [x2d]
    for layer in range(num_layers):
        for d in range(2):                                        # 0=fwd, 1=rev
            w_ih = params[f"w_ih_l{layer}_d{d}"]                  # (4H, Din)
            w_hh = params[f"w_hh_l{layer}_d{d}"]                  # (4H, H)
            b = params[f"b_l{layer}_d{d}"]                        # (1, 4H)
            if layer == 0:
                wih_p = _pad_gate_rows(w_ih, H, Hp)               # (4Hp, E)
                wih_p = jnp.pad(wih_p, ((0, 0), (0, Ep - E)))     # (4Hp, Ep)
                wih_t = jnp.transpose(wih_p)                      # (Ep, 4Hp)
            else:
                halves = []
                for s in range(2):  # fwd-half / rev-half of the 2H input dim
                    wh = w_ih[:, s * H:(s + 1) * H]               # (4H, H)
                    wh = _pad_gate_rows(wh, H, Hp)                # (4Hp, H)
                    wh = jnp.pad(wh, ((0, 0), (0, Hp - H)))       # (4Hp, Hp)
                    halves.append(jnp.transpose(wh))              # (Hp, 4Hp)
                wih_t = jnp.concatenate(halves, axis=0)           # (2Hp, 4Hp)
            whh_p = _pad_gate_rows(w_hh, H, Hp)                   # (4Hp, H)
            whh_p = jnp.pad(whh_p, ((0, 0), (0, Hp - H)))         # (4Hp, Hp)
            whh_t = jnp.transpose(whh_p)                          # (Hp, 4Hp)
            b_p = _pad_gate_bias(b, H, Hp)                        # (1, 4Hp)
            inputs += [wih_t.astype(jnp.bfloat16),
                       whh_t.astype(jnp.bfloat16),
                       b_p.astype(jnp.float32)]

    fc_w = params["fc_w"]                                         # (O, 2H)
    fc_halves = []
    for s in range(2):
        fh = jnp.transpose(fc_w[:, s * H:(s + 1) * H])            # (H, O)
        fh = jnp.pad(fh, ((0, Hp - H), (0, Op - O)))              # (Hp, Op)
        fc_halves.append(fh)
    fc_wt = jnp.concatenate(fc_halves, axis=0).astype(jnp.bfloat16)   # (2Hp, Op)
    fc_b = jnp.pad(params["fc_b"], ((0, 0), (0, Op - O))).astype(jnp.float32)
    inputs += [fc_wt, fc_b]

    in_specs = [pl.BlockSpec(a.shape, (lambda i, r=a.ndim: (0,) * r))
                for a in inputs]

    kernel = _make_textrnn_kernel(num_layers, T, Bp, Hp)
    out_p = pl.pallas_call(
        kernel,
        out_shape=jax.ShapeDtypeStruct((Bp, Op), jnp.float32),
        grid_spec=pltpu.PrefetchScalarGridSpec(
            num_scalar_prefetch=0,
            grid=(1,),
            in_specs=in_specs,
            out_specs=pl.BlockSpec((Bp, Op), lambda i: (0, 0)),
            scratch_shapes=[
                pltpu.VMEM((T * Bp, Hp), jnp.float32),      # fwd hidden history
                pltpu.VMEM((T * Bp, Hp), jnp.float32),      # rev hidden history
                pltpu.VMEM((T * Bp, 4 * Hp), jnp.float32),  # fwd gate pre-acts
                pltpu.VMEM((T * Bp, 4 * Hp), jnp.float32),  # rev gate pre-acts
            ],
        ),
        compiler_params=pltpu.CompilerParams(
            dimension_semantics=("arbitrary",),
            vmem_limit_bytes=32 * 1024 * 1024),
    )(*inputs)
    return out_p[:B, :O]


# -----------------------------------------------------------------------------
# Pure-JAX reference (for the correctness check)
# -----------------------------------------------------------------------------
def _q(x):
    """Mirror the kernel's deliberate bf16 MXU-operand quantization
    (all recurrence / gate math stays f32 in both kernel and reference)."""
    return x.astype(jnp.bfloat16).astype(jnp.float32)


def _lstm_ref_dir(x_tbd, w_ih, w_hh, b, reverse):
    B = x_tbd.shape[1]
    H = w_hh.shape[1]

    def step(carry, x_t):
        h, c = carry
        gates = x_t @ w_ih.T + h @ w_hh.T + b[0]
        i, f, g, o = jnp.split(gates, 4, axis=-1)
        i, f, o = jax.nn.sigmoid(i), jax.nn.sigmoid(f), jax.nn.sigmoid(o)
        g = jnp.tanh(g)
        c = f * c + i * g
        h = o * jnp.tanh(c)
        return (h, c), h

    xs = x_tbd[::-1] if reverse else x_tbd
    init = (jnp.zeros((B, H), jnp.float32), jnp.zeros((B, H), jnp.float32))
    _, hs = jax.lax.scan(step, init, xs)
    return hs[::-1] if reverse else hs


def text_rnn_ref(token_ids, params, num_layers):
    emb = jnp.take(params["embedding"], token_ids, axis=0)
    x = _q(jnp.transpose(emb, (1, 0, 2)).astype(jnp.float32))
    for layer in range(num_layers):
        outs = []
        for d, rev in ((0, False), (1, True)):
            outs.append(_lstm_ref_dir(x, _q(params[f"w_ih_l{layer}_d{d}"]),
                                      _q(params[f"w_hh_l{layer}_d{d}"]),
                                      params[f"b_l{layer}_d{d}"], rev))
        x = _q(jnp.concatenate(outs, axis=-1))
    return x[-1] @ _q(params["fc_w"]).T + params["fc_b"][0]


# -----------------------------------------------------------------------------
# Parameter init + main
# -----------------------------------------------------------------------------
def init_params(key, vocab_size, embedding_dim, hidden_size, output_size, num_layers):
    params = {}
    k = 1.0 / jnp.sqrt(hidden_size)

    key, sub = jax.random.split(key)
    params["embedding"] = jax.random.normal(sub, (vocab_size, embedding_dim),
                                            jnp.float32)

    for layer in range(num_layers):
        in_dim = embedding_dim if layer == 0 else 2 * hidden_size
        for d in range(2):  # 0 = forward, 1 = reverse
            key, k1, k2, k3, k4 = jax.random.split(key, 5)
            params[f"w_ih_l{layer}_d{d}"] = jax.random.uniform(
                k1, (4 * hidden_size, in_dim), jnp.float32, -k, k)
            params[f"w_hh_l{layer}_d{d}"] = jax.random.uniform(
                k2, (4 * hidden_size, hidden_size), jnp.float32, -k, k)
            b_ih = jax.random.uniform(k3, (4 * hidden_size,), jnp.float32, -k, k)
            b_hh = jax.random.uniform(k4, (4 * hidden_size,), jnp.float32, -k, k)
            params[f"b_l{layer}_d{d}"] = (b_ih + b_hh).reshape(1, -1)

    key, k1, k2 = jax.random.split(key, 3)
    kf = 1.0 / jnp.sqrt(2 * hidden_size)
    params["fc_w"] = jax.random.uniform(k1, (output_size, 2 * hidden_size),
                                        jnp.float32, -kf, kf)
    params["fc_b"] = jax.random.uniform(k2, (1, output_size),
                                        jnp.float32, -kf, kf)
    return params


if __name__ == "__main__":
    # Small shapes consistent with the module.
    VOCAB = 50
    EMBEDDING_DIM = 32
    HIDDEN_SIZE = 32
    OUTPUT_SIZE = 8
    NUM_LAYERS = 2
    B, T = 2, 8

    key = jax.random.PRNGKey(0)
    key, pkey, xkey = jax.random.split(key, 3)

    params = init_params(pkey, VOCAB, EMBEDDING_DIM, HIDDEN_SIZE,
                         OUTPUT_SIZE, NUM_LAYERS)
    token_ids = jax.random.randint(xkey, (B, T), 0, VOCAB, dtype=jnp.int32)

    out = text_rnn_forward(token_ids, params, NUM_LAYERS)
    out = jax.block_until_ready(out)

    ref = jax.block_until_ready(text_rnn_ref(token_ids, params, NUM_LAYERS))
    assert out.shape == (B, OUTPUT_SIZE)
    assert jnp.allclose(out, ref, atol=1e-2, rtol=1e-2), "mismatch vs reference"

    print("KERNEL_OK")
</pallas_src>

<mosaic_0001>
module attributes {stable_mosaic.version = 11 : i64} {
  func.func @kernel(%arg0: i32, %arg1: memref<64x128xbf16, #tpu.memory_space<vmem>>, %arg2: memref<128x512xbf16, #tpu.memory_space<vmem>>, %arg3: memref<128x512xbf16, #tpu.memory_space<vmem>>, %arg4: memref<1x512xf32, #tpu.memory_space<vmem>>, %arg5: memref<128x512xbf16, #tpu.memory_space<vmem>>, %arg6: memref<128x512xbf16, #tpu.memory_space<vmem>>, %arg7: memref<1x512xf32, #tpu.memory_space<vmem>>, %arg8: memref<256x512xbf16, #tpu.memory_space<vmem>>, %arg9: memref<128x512xbf16, #tpu.memory_space<vmem>>, %arg10: memref<1x512xf32, #tpu.memory_space<vmem>>, %arg11: memref<256x512xbf16, #tpu.memory_space<vmem>>, %arg12: memref<128x512xbf16, #tpu.memory_space<vmem>>, %arg13: memref<1x512xf32, #tpu.memory_space<vmem>>, %arg14: memref<256x128xbf16, #tpu.memory_space<vmem>>, %arg15: memref<1x128xf32, #tpu.memory_space<vmem>>, %arg16: memref<8x128xf32, #tpu.memory_space<vmem>>, %arg17: memref<64x128xf32, #tpu.memory_space<vmem>>, %arg18: memref<64x128xf32, #tpu.memory_space<vmem>>, %arg19: memref<64x512xf32, #tpu.memory_space<vmem>>, %arg20: memref<64x512xf32, #tpu.memory_space<vmem>>) attributes {dimension_semantics = [#tpu.dimension_semantics<arbitrary>], iteration_bounds = array<i64: 1>, scalar_prefetch = 0 : i64, scratch_operands = 4 : i64, tpu.core_type = #tpu.core_type<tc>, window_params = [{pipeline_mode = #tpu.pipeline_mode<synchronous>, transform_indices = @transform_0, window_bounds = array<i64: 64, 128>}, {pipeline_mode = #tpu.pipeline_mode<synchronous>, transform_indices = @transform_1, window_bounds = array<i64: 128, 512>}, {pipeline_mode = #tpu.pipeline_mode<synchronous>, transform_indices = @transform_2, window_bounds = array<i64: 128, 512>}, {pipeline_mode = #tpu.pipeline_mode<synchronous>, transform_indices = @transform_3, window_bounds = array<i64: 1, 512>}, {pipeline_mode = #tpu.pipeline_mode<synchronous>, transform_indices = @transform_4, window_bounds = array<i64: 128, 512>}, {pipeline_mode = #tpu.pipeline_mode<synchronous>, transform_indices = @transform_5, window_bounds = array<i64: 128, 512>}, {pipeline_mode = #tpu.pipeline_mode<synchronous>, transform_indices = @transform_6, window_bounds = array<i64: 1, 512>}, {pipeline_mode = #tpu.pipeline_mode<synchronous>, transform_indices = @transform_7, window_bounds = array<i64: 256, 512>}, {pipeline_mode = #tpu.pipeline_mode<synchronous>, transform_indices = @transform_8, window_bounds = array<i64: 128, 512>}, {pipeline_mode = #tpu.pipeline_mode<synchronous>, transform_indices = @transform_9, window_bounds = array<i64: 1, 512>}, {pipeline_mode = #tpu.pipeline_mode<synchronous>, transform_indices = @transform_10, window_bounds = array<i64: 256, 512>}, {pipeline_mode = #tpu.pipeline_mode<synchronous>, transform_indices = @transform_11, window_bounds = array<i64: 128, 512>}, {pipeline_mode = #tpu.pipeline_mode<synchronous>, transform_indices = @transform_12, window_bounds = array<i64: 1, 512>}, {pipeline_mode = #tpu.pipeline_mode<synchronous>, transform_indices = @transform_13, window_bounds = array<i64: 256, 128>}, {pipeline_mode = #tpu.pipeline_mode<synchronous>, transform_indices = @transform_14, window_bounds = array<i64: 1, 128>}, {pipeline_mode = #tpu.pipeline_mode<synchronous>, transform_indices = @transform_15, window_bounds = array<i64: 8, 128>}]} {
    %c0 = arith.constant 0 : index
    %c0_0 = arith.constant 0 : index
    %0 = vector.load %arg1[%c0, %c0_0] : memref<64x128xbf16, #tpu.memory_space<vmem>>, vector<64x128xbf16>
    %c0_1 = arith.constant 0 : index
    %c0_2 = arith.constant 0 : index
    %1 = vector.load %arg2[%c0_1, %c0_2] : memref<128x512xbf16, #tpu.memory_space<vmem>>, vector<128x512xbf16>
    %cst = arith.constant dense<0.000000e+00> : vector<64x512xf32>
    %2 = tpu.matmul %0, %1, %cst {dimension_numbers = #tpu.dot_dimension_numbers<[1], [0], [0], [1], [0, 0, 1, 1], [], []>} : vector<64x128xbf16>, vector<128x512xbf16>, vector<64x512xf32> -> vector<64x512xf32>
    %c0_3 = arith.constant 0 : index
    %c0_4 = arith.constant 0 : index
    %3 = vector.load %arg4[%c0_3, %c0_4] : memref<1x512xf32, #tpu.memory_space<vmem>>, vector<1x512xf32>
    %4 = vector.broadcast %3 : vector<1x512xf32> to vector<64x512xf32>
    %5 = arith.addf %2, %4 : vector<64x512xf32>
    %c0_5 = arith.constant 0 : index
    %c0_6 = arith.constant 0 : index
    %6 = vector.load %arg19[%c0_5, %c0_6] : memref<64x512xf32, #tpu.memory_space<vmem>>, vector<64x512xf32>
    tpu.vector_store %arg19[%c0_5, %c0_6], %5 {strides = array<i32>} : memref<64x512xf32, #tpu.memory_space<vmem>>, vector<64x512xf32>,
    %c0_7 = arith.constant 0 : index
    %c0_8 = arith.constant 0 : index
    %7 = vector.load %arg5[%c0_7, %c0_8] : memref<128x512xbf16, #tpu.memory_space<vmem>>, vector<128x512xbf16>
    %cst_9 = arith.constant dense<0.000000e+00> : vector<64x512xf32>
    %8 = tpu.matmul %0, %7, %cst_9 {dimension_numbers = #tpu.dot_dimension_numbers<[1], [0], [0], [1], [0, 0, 1, 1], [], []>} : vector<64x128xbf16>, vector<128x512xbf16>, vector<64x512xf32> -> vector<64x512xf32>
    %c0_10 = arith.constant 0 : index
    %c0_11 = arith.constant 0 : index
    %9 = vector.load %arg7[%c0_10, %c0_11] : memref<1x512xf32, #tpu.memory_space<vmem>>, vector<1x512xf32>
    %10 = vector.broadcast %9 : vector<1x512xf32> to vector<64x512xf32>
    %11 = arith.addf %8, %10 : vector<64x512xf32>
    %c0_12 = arith.constant 0 : index
    %c0_13 = arith.constant 0 : index
    %12 = vector.load %arg20[%c0_12, %c0_13] : memref<64x512xf32, #tpu.memory_space<vmem>>, vector<64x512xf32>
    tpu.vector_store %arg20[%c0_12, %c0_13], %11 {strides = array<i32>} : memref<64x512xf32, #tpu.memory_space<vmem>>, vector<64x512xf32>,
    %c0_14 = arith.constant 0 : index
    %c0_15 = arith.constant 0 : index
    %13 = vector.load %arg3[%c0_14, %c0_15] : memref<128x512xbf16, #tpu.memory_space<vmem>>, vector<128x512xbf16>
    %c0_16 = arith.constant 0 : index
    %c0_17 = arith.constant 0 : index
    %14 = vector.load %arg6[%c0_16, %c0_17] : memref<128x512xbf16, #tpu.memory_space<vmem>>, vector<128x512xbf16>
    %cst_18 = arith.constant 0.000000e+00 : f32
    %15 = vector.broadcast %cst_18 : f32 to vector<8x128xf32>
    %cst_19 = arith.constant 0.000000e+00 : f32
    %16 = vector.broadcast %cst_19 : f32 to vector<8x128xf32>
    %cst_20 = arith.constant 0.000000e+00 : f32
    %17 = vector.broadcast %cst_20 : f32 to vector<8x128xf32>
    %cst_21 = arith.constant 0.000000e+00 : f32
    %18 = vector.broadcast %cst_21 : f32 to vector<8x128xf32>
    %c0_22 = arith.constant 0 : index
    %c0_23 = arith.constant 0 : index
    %19 = vector.load %arg19[%c0_22, %c0_23] : memref<64x512xf32, #tpu.memory_space<vmem>>, vector<8x512xf32>
    %20 = arith.truncf %15 : vector<8x128xf32> to vector<8x128xbf16>
    %cst_24 = arith.constant dense<0.000000e+00> : vector<8x512xf32>
    %21 = tpu.matmul %20, %13, %cst_24 {dimension_numbers = #tpu.dot_dimension_numbers<[1], [0], [0], [1], [0, 0, 1, 1], [], []>} : vector<8x128xbf16>, vector<128x512xbf16>, vector<8x512xf32> -> vector<8x512xf32>
    %22 = arith.addf %19, %21 : vector<8x512xf32>
    %c56 = arith.constant 56 : index
    %c0_25 = arith.constant 0 : index
    %23 = vector.load %arg20[%c56, %c0_25] : memref<64x512xf32, #tpu.memory_space<vmem>>, vector<8x512xf32>
    %24 = arith.truncf %17 : vector<8x128xf32> to vector<8x128xbf16>
    %cst_26 = arith.constant dense<0.000000e+00> : vector<8x512xf32>
    %25 = tpu.matmul %24, %14, %cst_26 {dimension_numbers = #tpu.dot_dimension_numbers<[1], [0], [0], [1], [0, 0, 1, 1], [], []>} : vector<8x128xbf16>, vector<128x512xbf16>, vector<8x512xf32> -> vector<8x512xf32>
    %26 = arith.addf %23, %25 : vector<8x512xf32>
    %27 = vector.extract_strided_slice %22 {offsets = [0, 0], sizes = [8, 128], strides = [1, 1]} : vector<8x512xf32> to vector<8x128xf32>
    %28 = arith.negf %27 : vector<8x128xf32>
    %29 = math.exp %28 : vector<8x128xf32>
    %cst_27 = arith.constant 1.000000e+00 : f32
    %30 = vector.broadcast %cst_27 : f32 to vector<8x128xf32>
    %31 = arith.addf %30, %29 : vector<8x128xf32>
    %32 = arith.divf %30, %31 : vector<8x128xf32>
    %33 = vector.extract_strided_slice %22 {offsets = [0, 128], sizes = [8, 128], strides = [1, 1]} : vector<8x512xf32> to vector<8x128xf32>
    %34 = arith.negf %33 : vector<8x128xf32>
    %35 = math.exp %34 : vector<8x128xf32>
    %cst_28 = arith.constant 1.000000e+00 : f32
    %36 = vector.broadcast %cst_28 : f32 to vector<8x128xf32>
    %37 = arith.addf %36, %35 : vector<8x128xf32>
    %38 = arith.divf %36, %37 : vector<8x128xf32>
    %39 = vector.extract_strided_slice %22 {offsets = [0, 256], sizes = [8, 128], strides = [1, 1]} : vector<8x512xf32> to vector<8x128xf32>
    %40 = math.tanh %39 : vector<8x128xf32>
    %41 = vector.extract_strided_slice %22 {offsets = [0, 384], sizes = [8, 128], strides = [1, 1]} : vector<8x512xf32> to vector<8x128xf32>
    %42 = arith.negf %41 : vector<8x128xf32>
    %43 = math.exp %42 : vector<8x128xf32>
    %cst_29 = arith.constant 1.000000e+00 : f32
    %44 = vector.broadcast %cst_29 : f32 to vector<8x128xf32>
    %45 = arith.addf %44, %43 : vector<8x128xf32>
    %46 = arith.divf %44, %45 : vector<8x128xf32>
    %47 = arith.mulf %38, %16 : vector<8x128xf32>
    %48 = arith.mulf %32, %40 : vector<8x128xf32>
    %49 = arith.addf %47, %48 : vector<8x128xf32>
    %50 = math.tanh %49 : vector<8x128xf32>
    %51 = arith.mulf %46, %50 : vector<8x128xf32>
    %52 = vector.extract_strided_slice %26 {offsets = [0, 0], sizes = [8, 128], strides = [1, 1]} : vector<8x512xf32> to vector<8x128xf32>
    %53 = arith.negf %52 : vector<8x128xf32>
    %54 = math.exp %53 : vector<8x128xf32>
    %cst_30 = arith.constant 1.000000e+00 : f32
    %55 = vector.broadcast %cst_30 : f32 to vector<8x128xf32>
    %56 = arith.addf %55, %54 : vector<8x128xf32>
    %57 = arith.divf %55, %56 : vector<8x128xf32>
    %58 = vector.extract_strided_slice %26 {offsets = [0, 128], sizes = [8, 128], strides = [1, 1]} : vector<8x512xf32> to vector<8x128xf32>
    %59 = arith.negf %58 : vector<8x128xf32>
    %60 = math.exp %59 : vector<8x128xf32>
    %cst_31 = arith.constant 1.000000e+00 : f32
    %61 = vector.broadcast %cst_31 : f32 to vector<8x128xf32>
    %62 = arith.addf %61, %60 : vector<8x128xf32>
    %63 = arith.divf %61, %62 : vector<8x128xf32>
    %64 = vector.extract_strided_slice %26 {offsets = [0, 256], sizes = [8, 128], strides = [1, 1]} : vector<8x512xf32> to vector<8x128xf32>
    %65 = math.tanh %64 : vector<8x128xf32>
    %66 = vector.extract_strided_slice %26 {offsets = [0, 384], sizes = [8, 128], strides = [1, 1]} : vector<8x512xf32> to vector<8x128xf32>
    %67 = arith.negf %66 : vector<8x128xf32>
    %68 = math.exp %67 : vector<8x128xf32>
    %cst_32 = arith.constant 1.000000e+00 : f32
    %69 = vector.broadcast %cst_32 : f32 to vector<8x128xf32>
    %70 = arith.addf %69, %68 : vector<8x128xf32>
    %71 = arith.divf %69, %70 : vector<8x128xf32>
    %72 = arith.mulf %63, %18 : vector<8x128xf32>
    %73 = arith.mulf %57, %65 : vector<8x128xf32>
    %74 = arith.addf %72, %73 : vector<8x128xf32>
    %75 = math.tanh %74 : vector<8x128xf32>
    %76 = arith.mulf %71, %75 : vector<8x128xf32>
    %c0_33 = arith.constant 0 : index
    %c0_34 = arith.constant 0 : index
    %77 = vector.load %arg17[%c0_33, %c0_34] : memref<64x128xf32, #tpu.memory_space<vmem>>, vector<8x128xf32>
    tpu.vector_store %arg17[%c0_33, %c0_34], %51 {strides = array<i32>} : memref<64x128xf32, #tpu.memory_space<vmem>>, vector<8x128xf32>,
    %c56_35 = arith.constant 56 : index
    %c0_36 = arith.constant 0 : index
    %78 = vector.load %arg18[%c56_35, %c0_36] : memref<64x128xf32, #tpu.memory_space<vmem>>, vector<8x128xf32>
    tpu.vector_store %arg18[%c56_35, %c0_36], %76 {strides = array<i32>} : memref<64x128xf32, #tpu.memory_space<vmem>>, vector<8x128xf32>,
    %c8 = arith.constant 8 : index
    %c0_37 = arith.constant 0 : index
    %79 = vector.load %arg19[%c8, %c0_37] : memref<64x512xf32, #tpu.memory_space<vmem>>, vector<8x512xf32>
    %80 = arith.truncf %51 : vector<8x128xf32> to vector<8x128xbf16>
    %cst_38 = arith.constant dense<0.000000e+00> : vector<8x512xf32>
    %81 = tpu.matmul %80, %13, %cst_38 {dimension_numbers = #tpu.dot_dimension_numbers<[1], [0], [0], [1], [0, 0, 1, 1], [], []>} : vector<8x128xbf16>, vector<128x512xbf16>, vector<8x512xf32> -> vector<8x512xf32>
    %82 = arith.addf %79, %81 : vector<8x512xf32>
    %c48 = arith.constant 48 : index
    %c0_39 = arith.constant 0 : index
    %83 = vector.load %arg20[%c48, %c0_39] : memref<64x512xf32, #tpu.memory_space<vmem>>, vector<8x512xf32>
    %84 = arith.truncf %76 : vector<8x128xf32> to vector<8x128xbf16>
    %cst_40 = arith.constant dense<0.000000e+00> : vector<8x512xf32>
    %85 = tpu.matmul %84, %14, %cst_40 {dimension_numbers = #tpu.dot_dimension_numbers<[1], [0], [0], [1], [0, 0, 1, 1], [], []>} : vector<8x128xbf16>, vector<128x512xbf16>, vector<8x512xf32> -> vector<8x512xf32>
    %86 = arith.addf %83, %85 : vector<8x512xf32>
    %87 = vector.extract_strided_slice %82 {offsets = [0, 0], sizes = [8, 128], strides = [1, 1]} : vector<8x512xf32> to vector<8x128xf32>
    %88 = arith.negf %87 : vector<8x128xf32>
    %89 = math.exp %88 : vector<8x128xf32>
    %cst_41 = arith.constant 1.000000e+00 : f32
    %90 = vector.broadcast %cst_41 : f32 to vector<8x128xf32>
    %91 = arith.addf %90, %89 : vector<8x128xf32>
    %92 = arith.divf %90, %91 : vector<8x128xf32>
    %93 = vector.extract_strided_slice %82 {offsets = [0, 128], sizes = [8, 128], strides = [1, 1]} : vector<8x512xf32> to vector<8x128xf32>
    %94 = arith.negf %93 : vector<8x128xf32>
    %95 = math.exp %94 : vector<8x128xf32>
    %cst_42 = arith.constant 1.000000e+00 : f32
    %96 = vector.broadcast %cst_42 : f32 to vector<8x128xf32>
    %97 = arith.addf %96, %95 : vector<8x128xf32>
    %98 = arith.divf %96, %97 : vector<8x128xf32>
    %99 = vector.extract_strided_slice %82 {offsets = [0, 256], sizes = [8, 128], strides = [1, 1]} : vector<8x512xf32> to vector<8x128xf32>
    %100 = math.tanh %99 : vector<8x128xf32>
    %101 = vector.extract_strided_slice %82 {offsets = [0, 384], sizes = [8, 128], strides = [1, 1]} : vector<8x512xf32> to vector<8x128xf32>
    %102 = arith.negf %101 : vector<8x128xf32>
    %103 = math.exp %102 : vector<8x128xf32>
    %cst_43 = arith.constant 1.000000e+00 : f32
    %104 = vector.broadcast %cst_43 : f32 to vector<8x128xf32>
    %105 = arith.addf %104, %103 : vector<8x128xf32>
    %106 = arith.divf %104, %105 : vector<8x128xf32>
    %107 = arith.mulf %98, %49 : vector<8x128xf32>
    %108 = arith.mulf %92, %100 : vector<8x128xf32>
    %109 = arith.addf %107, %108 : vector<8x128xf32>
    %110 = math.tanh %109 : vector<8x128xf32>
    %111 = arith.mulf %106, %110 : vector<8x128xf32>
    %112 = vector.extract_strided_slice %86 {offsets = [0, 0], sizes = [8, 128], strides = [1, 1]} : vector<8x512xf32> to vector<8x128xf32>
    %113 = arith.negf %112 : vector<8x128xf32>
    %114 = math.exp %113 : vector<8x128xf32>
    %cst_44 = arith.constant 1.000000e+00 : f32
    %115 = vector.broadcast %cst_44 : f32 to vector<8x128xf32>
    %116 = arith.addf %115, %114 : vector<8x128xf32>
    %117 = arith.divf %115, %116 : vector<8x128xf32>
    %118 = vector.extract_strided_slice %86 {offsets = [0, 128], sizes = [8, 128], strides = [1, 1]} : vector<8x512xf32> to vector<8x128xf32>
    %119 = arith.negf %118 : vector<8x128xf32>
    %120 = math.exp %119 : vector<8x128xf32>
    %cst_45 = arith.constant 1.000000e+00 : f32
    %121 = vector.broadcast %cst_45 : f32 to vector<8x128xf32>
    %122 = arith.addf %121, %120 : vector<8x128xf32>
    %123 = arith.divf %121, %122 : vector<8x128xf32>
    %124 = vector.extract_strided_slice %86 {offsets = [0, 256], sizes = [8, 128], strides = [1, 1]} : vector<8x512xf32> to vector<8x128xf32>
    %125 = math.tanh %124 : vector<8x128xf32>
    %126 = vector.extract_strided_slice %86 {offsets = [0, 384], sizes = [8, 128], strides = [1, 1]} : vector<8x512xf32> to vector<8x128xf32>
    %127 = arith.negf %126 : vector<8x128xf32>
    %128 = math.exp %127 : vector<8x128xf32>
    %cst_46 = arith.constant 1.000000e+00 : f32
    %129 = vector.broadcast %cst_46 : f32 to vector<8x128xf32>
    %130 = arith.addf %129, %128 : vector<8x128xf32>
    %131 = arith.divf %129, %130 : vector<8x128xf32>
    %132 = arith.mulf %123, %74 : vector<8x128xf32>
    %133 = arith.mulf %117, %125 : vector<8x128xf32>
    %134 = arith.addf %132, %133 : vector<8x128xf32>
    %135 = math.tanh %134 : vector<8x128xf32>
    %136 = arith.mulf %131, %135 : vector<8x128xf32>
    %c8_47 = arith.constant 8 : index
    %c0_48 = arith.constant 0 : index
    %137 = vector.load %arg17[%c8_47, %c0_48] : memref<64x128xf32, #tpu.memory_space<vmem>>, vector<8x128xf32>
    tpu.vector_store %arg17[%c8_47, %c0_48], %111 {strides = array<i32>} : memref<64x128xf32, #tpu.memory_space<vmem>>, vector<8x128xf32>,
    %c48_49 = arith.constant 48 : index
    %c0_50 = arith.constant 0 : index
    %138 = vector.load %arg18[%c48_49, %c0_50] : memref<64x128xf32, #tpu.memory_space<vmem>>, vector<8x128xf32>
    tpu.vector_store %arg18[%c48_49, %c0_50], %136 {strides = array<i32>} : memref<64x128xf32, #tpu.memory_space<vmem>>, vector<8x128xf32>,
    %c16 = arith.constant 16 : index
    %c0_51 = arith.constant 0 : index
    %139 = vector.load %arg19[%c16, %c0_51] : memref<64x512xf32, #tpu.memory_space<vmem>>, vector<8x512xf32>
    %140 = arith.truncf %111 : vector<8x128xf32> to vector<8x128xbf16>
    %cst_52 = arith.constant dense<0.000000e+00> : vector<8x512xf32>
    %141 = tpu.matmul %140, %13, %cst_52 {dimension_numbers = #tpu.dot_dimension_numbers<[1], [0], [0], [1], [0, 0, 1, 1], [], []>} : vector<8x128xbf16>, vector<128x512xbf16>, vector<8x512xf32> -> vector<8x512xf32>
    %142 = arith.addf %139, %141 : vector<8x512xf32>
    %c40 = arith.constant 40 : index
    %c0_53 = arith.constant 0 : index
    %143 = vector.load %arg20[%c40, %c0_53] : memref<64x512xf32, #tpu.memory_space<vmem>>, vector<8x512xf32>
    %144 = arith.truncf %136 : vector<8x128xf32> to vector<8x128xbf16>
    %cst_54 = arith.constant dense<0.000000e+00> : vector<8x512xf32>
    %145 = tpu.matmul %144, %14, %cst_54 {dimension_numbers = #tpu.dot_dimension_numbers<[1], [0], [0], [1], [0, 0, 1, 1], [], []>} : vector<8x128xbf16>, vector<128x512xbf16>, vector<8x512xf32> -> vector<8x512xf32>
    %146 = arith.addf %143, %145 : vector<8x512xf32>
    %147 = vector.extract_strided_slice %142 {offsets = [0, 0], sizes = [8, 128], strides = [1, 1]} : vector<8x512xf32> to vector<8x128xf32>
    %148 = arith.negf %147 : vector<8x128xf32>
    %149 = math.exp %148 : vector<8x128xf32>
    %cst_55 = arith.constant 1.000000e+00 : f32
    %150 = vector.broadcast %cst_55 : f32 to vector<8x128xf32>
    %151 = arith.addf %150, %149 : vector<8x128xf32>
    %152 = arith.divf %150, %151 : vector<8x128xf32>
    %153 = vector.extract_strided_slice %142 {offsets = [0, 128], sizes = [8, 128], strides = [1, 1]} : vector<8x512xf32> to vector<8x128xf32>
    %154 = arith.negf %153 : vector<8x128xf32>
    %155 = math.exp %154 : vector<8x128xf32>
    %cst_56 = arith.constant 1.000000e+00 : f32
    %156 = vector.broadcast %cst_56 : f32 to vector<8x128xf32>
    %157 = arith.addf %156, %155 : vector<8x128xf32>
    %158 = arith.divf %156, %157 : vector<8x128xf32>
    %159 = vector.extract_strided_slice %142 {offsets = [0, 256], sizes = [8, 128], strides = [1, 1]} : vector<8x512xf32> to vector<8x128xf32>
    %160 = math.tanh %159 : vector<8x128xf32>
    %161 = vector.extract_strided_slice %142 {offsets = [0, 384], sizes = [8, 128], strides = [1, 1]} : vector<8x512xf32> to vector<8x128xf32>
    %162 = arith.negf %161 : vector<8x128xf32>
    %163 = math.exp %162 : vector<8x128xf32>
    %cst_57 = arith.constant 1.000000e+00 : f32
    %164 = vector.broadcast %cst_57 : f32 to vector<8x128xf32>
    %165 = arith.addf %164, %163 : vector<8x128xf32>
    %166 = arith.divf %164, %165 : vector<8x128xf32>
    %167 = arith.mulf %158, %109 : vector<8x128xf32>
    %168 = arith.mulf %152, %160 : vector<8x128xf32>
    %169 = arith.addf %167, %168 : vector<8x128xf32>
    %170 = math.tanh %169 : vector<8x128xf32>
    %171 = arith.mulf %166, %170 : vector<8x128xf32>
    %172 = vector.extract_strided_slice %146 {offsets = [0, 0], sizes = [8, 128], strides = [1, 1]} : vector<8x512xf32> to vector<8x128xf32>
    %173 = arith.negf %172 : vector<8x128xf32>
    %174 = math.exp %173 : vector<8x128xf32>
    %cst_58 = arith.constant 1.000000e+00 : f32
    %175 = vector.broadcast %cst_58 : f32 to vector<8x128xf32>
    %176 = arith.addf %175, %174 : vector<8x128xf32>
    %177 = arith.divf %175, %176 : vector<8x128xf32>
    %178 = vector.extract_strided_slice %146 {offsets = [0, 128], sizes = [8, 128], strides = [1, 1]} : vector<8x512xf32> to vector<8x128xf32>
    %179 = arith.negf %178 : vector<8x128xf32>
    %180 = math.exp %179 : vector<8x128xf32>
    %cst_59 = arith.constant 1.000000e+00 : f32
    %181 = vector.broadcast %cst_59 : f32 to vector<8x128xf32>
    %182 = arith.addf %181, %180 : vector<8x128xf32>
    %183 = arith.divf %181, %182 : vector<8x128xf32>
    %184 = vector.extract_strided_slice %146 {offsets = [0, 256], sizes = [8, 128], strides = [1, 1]} : vector<8x512xf32> to vector<8x128xf32>
    %185 = math.tanh %184 : vector<8x128xf32>
    %186 = vector.extract_strided_slice %146 {offsets = [0, 384], sizes = [8, 128], strides = [1, 1]} : vector<8x512xf32> to vector<8x128xf32>
    %187 = arith.negf %186 : vector<8x128xf32>
    %188 = math.exp %187 : vector<8x128xf32>
    %cst_60 = arith.constant 1.000000e+00 : f32
    %189 = vector.broadcast %cst_60 : f32 to vector<8x128xf32>
    %190 = arith.addf %189, %188 : vector<8x128xf32>
    %191 = arith.divf %189, %190 : vector<8x128xf32>
    %192 = arith.mulf %183, %134 : vector<8x128xf32>
    %193 = arith.mulf %177, %185 : vector<8x128xf32>
    %194 = arith.addf %192, %193 : vector<8x128xf32>
    %195 = math.tanh %194 : vector<8x128xf32>
    %196 = arith.mulf %191, %195 : vector<8x128xf32>
    %c16_61 = arith.constant 16 : index
    %c0_62 = arith.constant 0 : index
    %197 = vector.load %arg17[%c16_61, %c0_62] : memref<64x128xf32, #tpu.memory_space<vmem>>, vector<8x128xf32>
    tpu.vector_store %arg17[%c16_61, %c0_62], %171 {strides = array<i32>} : memref<64x128xf32, #tpu.memory_space<vmem>>, vector<8x128xf32>,
    %c40_63 = arith.constant 40 : index
    %c0_64 = arith.constant 0 : index
    %198 = vector.load %arg18[%c40_63, %c0_64] : memref<64x128xf32, #tpu.memory_space<vmem>>, vector<8x128xf32>
    tpu.vector_store %arg18[%c40_63, %c0_64], %196 {strides = array<i32>} : memref<64x128xf32, #tpu.memory_space<vmem>>, vector<8x128xf32>,
    %c24 = arith.constant 24 : index
    %c0_65 = arith.constant 0 : index
    %199 = vector.load %arg19[%c24, %c0_65] : memref<64x512xf32, #tpu.memory_space<vmem>>, vector<8x512xf32>
    %200 = arith.truncf %171 : vector<8x128xf32> to vector<8x128xbf16>
    %cst_66 = arith.constant dense<0.000000e+00> : vector<8x512xf32>
    %201 = tpu.matmul %200, %13, %cst_66 {dimension_numbers = #tpu.dot_dimension_numbers<[1], [0], [0], [1], [0, 0, 1, 1], [], []>} : vector<8x128xbf16>, vector<128x512xbf16>, vector<8x512xf32> -> vector<8x512xf32>
    %202 = arith.addf %199, %201 : vector<8x512xf32>
    %c32 = arith.constant 32 : index
    %c0_67 = arith.constant 0 : index
    %203 = vector.load %arg20[%c32, %c0_67] : memref<64x512xf32, #tpu.memory_space<vmem>>, vector<8x512xf32>
    %204 = arith.truncf %196 : vector<8x128xf32> to vector<8x128xbf16>
    %cst_68 = arith.constant dense<0.000000e+00> : vector<8x512xf32>
    %205 = tpu.matmul %204, %14, %cst_68 {dimension_numbers = #tpu.dot_dimension_numbers<[1], [0], [0], [1], [0, 0, 1, 1], [], []>} : vector<8x128xbf16>, vector<128x512xbf16>, vector<8x512xf32> -> vector<8x512xf32>
    %206 = arith.addf %203, %205 : vector<8x512xf32>
    %207 = vector.extract_strided_slice %202 {offsets = [0, 0], sizes = [8, 128], strides = [1, 1]} : vector<8x512xf32> to vector<8x128xf32>
    %208 = arith.negf %207 : vector<8x128xf32>
    %209 = math.exp %208 : vector<8x128xf32>
    %cst_69 = arith.constant 1.000000e+00 : f32
    %210 = vector.broadcast %cst_69 : f32 to vector<8x128xf32>
    %211 = arith.addf %210, %209 : vector<8x128xf32>
    %212 = arith.divf %210, %211 : vector<8x128xf32>
    %213 = vector.extract_strided_slice %202 {offsets = [0, 128], sizes = [8, 128], strides = [1, 1]} : vector<8x512xf32> to vector<8x128xf32>
    %214 = arith.negf %213 : vector<8x128xf32>
    %215 = math.exp %214 : vector<8x128xf32>
    %cst_70 = arith.constant 1.000000e+00 : f32
    %216 = vector.broadcast %cst_70 : f32 to vector<8x128xf32>
    %217 = arith.addf %216, %215 : vector<8x128xf32>
    %218 = arith.divf %216, %217 : vector<8x128xf32>
    %219 = vector.extract_strided_slice %202 {offsets = [0, 256], sizes = [8, 128], strides = [1, 1]} : vector<8x512xf32> to vector<8x128xf32>
    %220 = math.tanh %219 : vector<8x128xf32>
    %221 = vector.extract_strided_slice %202 {offsets = [0, 384], sizes = [8, 128], strides = [1, 1]} : vector<8x512xf32> to vector<8x128xf32>
    %222 = arith.negf %221 : vector<8x128xf32>
    %223 = math.exp %222 : vector<8x128xf32>
    %cst_71 = arith.constant 1.000000e+00 : f32
    %224 = vector.broadcast %cst_71 : f32 to vector<8x128xf32>
    %225 = arith.addf %224, %223 : vector<8x128xf32>
    %226 = arith.divf %224, %225 : vector<8x128xf32>
    %227 = arith.mulf %218, %169 : vector<8x128xf32>
    %228 = arith.mulf %212, %220 : vector<8x128xf32>
    %229 = arith.addf %227, %228 : vector<8x128xf32>
    %230 = math.tanh %229 : vector<8x128xf32>
    %231 = arith.mulf %226, %230 : vector<8x128xf32>
    %232 = vector.extract_strided_slice %206 {offsets = [0, 0], sizes = [8, 128], strides = [1, 1]} : vector<8x512xf32> to vector<8x128xf32>
    %233 = arith.negf %232 : vector<8x128xf32>
    %234 = math.exp %233 : vector<8x128xf32>
    %cst_72 = arith.constant 1.000000e+00 : f32
    %235 = vector.broadcast %cst_72 : f32 to vector<8x128xf32>
    %236 = arith.addf %235, %234 : vector<8x128xf32>
    %237 = arith.divf %235, %236 : vector<8x128xf32>
    %238 = vector.extract_strided_slice %206 {offsets = [0, 128], sizes = [8, 128], strides = [1, 1]} : vector<8x512xf32> to vector<8x128xf32>
    %239 = arith.negf %238 : vector<8x128xf32>
    %240 = math.exp %239 : vector<8x128xf32>
    %cst_73 = arith.constant 1.000000e+00 : f32
    %241 = vector.broadcast %cst_73 : f32 to vector<8x128xf32>
    %242 = arith.addf %241, %240 : vector<8x128xf32>
    %243 = arith.divf %241, %242 : vector<8x128xf32>
    %244 = vector.extract_strided_slice %206 {offsets = [0, 256], sizes = [8, 128], strides = [1, 1]} : vector<8x512xf32> to vector<8x128xf32>
    %245 = math.tanh %244 : vector<8x128xf32>
    %246 = vector.extract_strided_slice %206 {offsets = [0, 384], sizes = [8, 128], strides = [1, 1]} : vector<8x512xf32> to vector<8x128xf32>
    %247 = arith.negf %246 : vector<8x128xf32>
    %248 = math.exp %247 : vector<8x128xf32>
    %cst_74 = arith.constant 1.000000e+00 : f32
    %249 = vector.broadcast %cst_74 : f32 to vector<8x128xf32>
    %250 = arith.addf %249, %248 : vector<8x128xf32>
    %251 = arith.divf %249, %250 : vector<8x128xf32>
    %252 = arith.mulf %243, %194 : vector<8x128xf32>
    %253 = arith.mulf %237, %245 : vector<8x128xf32>
    %254 = arith.addf %252, %253 : vector<8x128xf32>
    %255 = math.tanh %254 : vector<8x128xf32>
    %256 = arith.mulf %251, %255 : vector<8x128xf32>
    %c24_75 = arith.constant 24 : index
    %c0_76 = arith.constant 0 : index
    %257 = vector.load %arg17[%c24_75, %c0_76] : memref<64x128xf32, #tpu.memory_space<vmem>>, vector<8x128xf32>
    tpu.vector_store %arg17[%c24_75, %c0_76], %231 {strides = array<i32>} : memref<64x128xf32, #tpu.memory_space<vmem>>, vector<8x128xf32>,
    %c32_77 = arith.constant 32 : index
    %c0_78 = arith.constant 0 : index
    %258 = vector.load %arg18[%c32_77, %c0_78] : memref<64x128xf32, #tpu.memory_space<vmem>>, vector<8x128xf32>
    tpu.vector_store %arg18[%c32_77, %c0_78], %256 {strides = array<i32>} : memref<64x128xf32, #tpu.memory_space<vmem>>, vector<8x128xf32>,
    %c32_79 = arith.constant 32 : index
    %c0_80 = arith.constant 0 : index
    %259 = vector.load %arg19[%c32_79, %c0_80] : memref<64x512xf32, #tpu.memory_space<vmem>>, vector<8x512xf32>
    %260 = arith.truncf %231 : vector<8x128xf32> to vector<8x128xbf16>
    %cst_81 = arith.constant dense<0.000000e+00> : vector<8x512xf32>
    %261 = tpu.matmul %260, %13, %cst_81 {dimension_numbers = #tpu.dot_dimension_numbers<[1], [0], [0], [1], [0, 0, 1, 1], [], []>} : vector<8x128xbf16>, vector<128x512xbf16>, vector<8x512xf32> -> vector<8x512xf32>
    %262 = arith.addf %259, %261 : vector<8x512xf32>
    %c24_82 = arith.constant 24 : index
    %c0_83 = arith.constant 0 : index
    %263 = vector.load %arg20[%c24_82, %c0_83] : memref<64x512xf32, #tpu.memory_space<vmem>>, vector<8x512xf32>
    %264 = arith.truncf %256 : vector<8x128xf32> to vector<8x128xbf16>
    %cst_84 = arith.constant dense<0.000000e+00> : vector<8x512xf32>
    %265 = tpu.matmul %264, %14, %cst_84 {dimension_numbers = #tpu.dot_dimension_numbers<[1], [0], [0], [1], [0, 0, 1, 1], [], []>} : vector<8x128xbf16>, vector<128x512xbf16>, vector<8x512xf32> -> vector<8x512xf32>
    %266 = arith.addf %263, %265 : vector<8x512xf32>
    %267 = vector.extract_strided_slice %262 {offsets = [0, 0], sizes = [8, 128], strides = [1, 1]} : vector<8x512xf32> to vector<8x128xf32>
    %268 = arith.negf %267 : vector<8x128xf32>
    %269 = math.exp %268 : vector<8x128xf32>
    %cst_85 = arith.constant 1.000000e+00 : f32
    %270 = vector.broadcast %cst_85 : f32 to vector<8x128xf32>
    %271 = arith.addf %270, %269 : vector<8x128xf32>
    %272 = arith.divf %270, %271 : vector<8x128xf32>
    %273 = vector.extract_strided_slice %262 {offsets = [0, 128], sizes = [8, 128], strides = [1, 1]} : vector<8x512xf32> to vector<8x128xf32>
    %274 = arith.negf %273 : vector<8x128xf32>
    %275 = math.exp %274 : vector<8x128xf32>
    %cst_86 = arith.constant 1.000000e+00 : f32
    %276 = vector.broadcast %cst_86 : f32 to vector<8x128xf32>
    %277 = arith.addf %276, %275 : vector<8x128xf32>
    %278 = arith.divf %276, %277 : vector<8x128xf32>
    %279 = vector.extract_strided_slice %262 {offsets = [0, 256], sizes = [8, 128], strides = [1, 1]} : vector<8x512xf32> to vector<8x128xf32>
    %280 = math.tanh %279 : vector<8x128xf32>
    %281 = vector.extract_strided_slice %262 {offsets = [0, 384], sizes = [8, 128], strides = [1, 1]} : vector<8x512xf32> to vector<8x128xf32>
    %282 = arith.negf %281 : vector<8x128xf32>
    %283 = math.exp %282 : vector<8x128xf32>
    %cst_87 = arith.constant 1.000000e+00 : f32
    %284 = vector.broadcast %cst_87 : f32 to vector<8x128xf32>
    %285 = arith.addf %284, %283 : vector<8x128xf32>
    %286 = arith.divf %284, %285 : vector<8x128xf32>
    %287 = arith.mulf %278, %229 : vector<8x128xf32>
    %288 = arith.mulf %272, %280 : vector<8x128xf32>
    %289 = arith.addf %287, %288 : vector<8x128xf32>
    %290 = math.tanh %289 : vector<8x128xf32>
    %291 = arith.mulf %286, %290 : vector<8x128xf32>
    %292 = vector.extract_strided_slice %266 {offsets = [0, 0], sizes = [8, 128], strides = [1, 1]} : vector<8x512xf32> to vector<8x128xf32>
    %293 = arith.negf %292 : vector<8x128xf32>
    %294 = math.exp %293 : vector<8x128xf32>
    %cst_88 = arith.constant 1.000000e+00 : f32
    %295 = vector.broadcast %cst_88 : f32 to vector<8x128xf32>
    %296 = arith.addf %295, %294 : vector<8x128xf32>
    %297 = arith.divf %295, %296 : vector<8x128xf32>
    %298 = vector.extract_strided_slice %266 {offsets = [0, 128], sizes = [8, 128], strides = [1, 1]} : vector<8x512xf32> to vector<8x128xf32>
    %299 = arith.negf %298 : vector<8x128xf32>
    %300 = math.exp %299 : vector<8x128xf32>
    %cst_89 = arith.constant 1.000000e+00 : f32
    %301 = vector.broadcast %cst_89 : f32 to vector<8x128xf32>
    %302 = arith.addf %301, %300 : vector<8x128xf32>
    %303 = arith.divf %301, %302 : vector<8x128xf32>
    %304 = vector.extract_strided_slice %266 {offsets = [0, 256], sizes = [8, 128], strides = [1, 1]} : vector<8x512xf32> to vector<8x128xf32>
    %305 = math.tanh %304 : vector<8x128xf32>
    %306 = vector.extract_strided_slice %266 {offsets = [0, 384], sizes = [8, 128], strides = [1, 1]} : vector<8x512xf32> to vector<8x128xf32>
    %307 = arith.negf %306 : vector<8x128xf32>
    %308 = math.exp %307 : vector<8x128xf32>
    %cst_90 = arith.constant 1.000000e+00 : f32
    %309 = vector.broadcast %cst_90 : f32 to vector<8x128xf32>
    %310 = arith.addf %309, %308 : vector<8x128xf32>
    %311 = arith.divf %309, %310 : vector<8x128xf32>
    %312 = arith.mulf %303, %254 : vector<8x128xf32>
    %313 = arith.mulf %297, %305 : vector<8x128xf32>
    %314 = arith.addf %312, %313 : vector<8x128xf32>
    %315 = math.tanh %314 : vector<8x128xf32>
    %316 = arith.mulf %311, %315 : vector<8x128xf32>
    %c32_91 = arith.constant 32 : index
    %c0_92 = arith.constant 0 : index
    %317 = vector.load %arg17[%c32_91, %c0_92] : memref<64x128xf32, #tpu.memory_space<vmem>>, vector<8x128xf32>
    tpu.vector_store %arg17[%c32_91, %c0_92], %291 {strides = array<i32>} : memref<64x128xf32, #tpu.memory_space<vmem>>, vector<8x128xf32>,
    %c24_93 = arith.constant 24 : index
    %c0_94 = arith.constant 0 : index
    %318 = vector.load %arg18[%c24_93, %c0_94] : memref<64x128xf32, #tpu.memory_space<vmem>>, vector<8x128xf32>
    tpu.vector_store %arg18[%c24_93, %c0_94], %316 {strides = array<i32>} : memref<64x128xf32, #tpu.memory_space<vmem>>, vector<8x128xf32>,
    %c40_95 = arith.constant 40 : index
    %c0_96 = arith.constant 0 : index
    %319 = vector.load %arg19[%c40_95, %c0_96] : memref<64x512xf32, #tpu.memory_space<vmem>>, vector<8x512xf32>
    %320 = arith.truncf %291 : vector<8x128xf32> to vector<8x128xbf16>
    %cst_97 = arith.constant dense<0.000000e+00> : vector<8x512xf32>
    %321 = tpu.matmul %320, %13, %cst_97 {dimension_numbers = #tpu.dot_dimension_numbers<[1], [0], [0], [1], [0, 0, 1, 1], [], []>} : vector<8x128xbf16>, vector<128x512xbf16>, vector<8x512xf32> -> vector<8x512xf32>
    %322 = arith.addf %319, %321 : vector<8x512xf32>
    %c16_98 = arith.constant 16 : index
    %c0_99 = arith.constant 0 : index
    %323 = vector.load %arg20[%c16_98, %c0_99] : memref<64x512xf32, #tpu.memory_space<vmem>>, vector<8x512xf32>
    %324 = arith.truncf %316 : vector<8x128xf32> to vector<8x128xbf16>
    %cst_100 = arith.constant dense<0.000000e+00> : vector<8x512xf32>
    %325 = tpu.matmul %324, %14, %cst_100 {dimension_numbers = #tpu.dot_dimension_numbers<[1], [0], [0], [1], [0, 0, 1, 1], [], []>} : vector<8x128xbf16>, vector<128x512xbf16>, vector<8x512xf32> -> vector<8x512xf32>
    %326 = arith.addf %323, %325 : vector<8x512xf32>
    %327 = vector.extract_strided_slice %322 {offsets = [0, 0], sizes = [8, 128], strides = [1, 1]} : vector<8x512xf32> to vector<8x128xf32>
    %328 = arith.negf %327 : vector<8x128xf32>
    %329 = math.exp %328 : vector<8x128xf32>
    %cst_101 = arith.constant 1.000000e+00 : f32
    %330 = vector.broadcast %cst_101 : f32 to vector<8x128xf32>
    %331 = arith.addf %330, %329 : vector<8x128xf32>
    %332 = arith.divf %330, %331 : vector<8x128xf32>
    %333 = vector.extract_strided_slice %322 {offsets = [0, 128], sizes = [8, 128], strides = [1, 1]} : vector<8x512xf32> to vector<8x128xf32>
    %334 = arith.negf %333 : vector<8x128xf32>
    %335 = math.exp %334 : vector<8x128xf32>
    %cst_102 = arith.constant 1.000000e+00 : f32
    %336 = vector.broadcast %cst_102 : f32 to vector<8x128xf32>
    %337 = arith.addf %336, %335 : vector<8x128xf32>
    %338 = arith.divf %336, %337 : vector<8x128xf32>
    %339 = vector.extract_strided_slice %322 {offsets = [0, 256], sizes = [8, 128], strides = [1, 1]} : vector<8x512xf32> to vector<8x128xf32>
    %340 = math.tanh %339 : vector<8x128xf32>
    %341 = vector.extract_strided_slice %322 {offsets = [0, 384], sizes = [8, 128], strides = [1, 1]} : vector<8x512xf32> to vector<8x128xf32>
    %342 = arith.negf %341 : vector<8x128xf32>
    %343 = math.exp %342 : vector<8x128xf32>
    %cst_103 = arith.constant 1.000000e+00 : f32
    %344 = vector.broadcast %cst_103 : f32 to vector<8x128xf32>
    %345 = arith.addf %344, %343 : vector<8x128xf32>
    %346 = arith.divf %344, %345 : vector<8x128xf32>
    %347 = arith.mulf %338, %289 : vector<8x128xf32>
    %348 = arith.mulf %332, %340 : vector<8x128xf32>
    %349 = arith.addf %347, %348 : vector<8x128xf32>
    %350 = math.tanh %349 : vector<8x128xf32>
    %351 = arith.mulf %346, %350 : vector<8x128xf32>
    %352 = vector.extract_strided_slice %326 {offsets = [0, 0], sizes = [8, 128], strides = [1, 1]} : vector<8x512xf32> to vector<8x128xf32>
    %353 = arith.negf %352 : vector<8x128xf32>
    %354 = math.exp %353 : vector<8x128xf32>
    %cst_104 = arith.constant 1.000000e+00 : f32
    %355 = vector.broadcast %cst_104 : f32 to vector<8x128xf32>
    %356 = arith.addf %355, %354 : vector<8x128xf32>
    %357 = arith.divf %355, %356 : vector<8x128xf32>
    %358 = vector.extract_strided_slice %326 {offsets = [0, 128], sizes = [8, 128], strides = [1, 1]} : vector<8x512xf32> to vector<8x128xf32>
    %359 = arith.negf %358 : vector<8x128xf32>
    %360 = math.exp %359 : vector<8x128xf32>
    %cst_105 = arith.constant 1.000000e+00 : f32
    %361 = vector.broadcast %cst_105 : f32 to vector<8x128xf32>
    %362 = arith.addf %361, %360 : vector<8x128xf32>
    %363 = arith.divf %361, %362 : vector<8x128xf32>
    %364 = vector.extract_strided_slice %326 {offsets = [0, 256], sizes = [8, 128], strides = [1, 1]} : vector<8x512xf32> to vector<8x128xf32>
    %365 = math.tanh %364 : vector<8x128xf32>
    %366 = vector.extract_strided_slice %326 {offsets = [0, 384], sizes = [8, 128], strides = [1, 1]} : vector<8x512xf32> to vector<8x128xf32>
    %367 = arith.negf %366 : vector<8x128xf32>
    %368 = math.exp %367 : vector<8x128xf32>
    %cst_106 = arith.constant 1.000000e+00 : f32
    %369 = vector.broadcast %cst_106 : f32 to vector<8x128xf32>
    %370 = arith.addf %369, %368 : vector<8x128xf32>
    %371 = arith.divf %369, %370 : vector<8x128xf32>
    %372 = arith.mulf %363, %314 : vector<8x128xf32>
    %373 = arith.mulf %357, %365 : vector<8x128xf32>
    %374 = arith.addf %372, %373 : vector<8x128xf32>
    %375 = math.tanh %374 : vector<8x128xf32>
    %376 = arith.mulf %371, %375 : vector<8x128xf32>
    %c40_107 = arith.constant 40 : index
    %c0_108 = arith.constant 0 : index
    %377 = vector.load %arg17[%c40_107, %c0_108] : memref<64x128xf32, #tpu.memory_space<vmem>>, vector<8x128xf32>
    tpu.vector_store %arg17[%c40_107, %c0_108], %351 {strides = array<i32>} : memref<64x128xf32, #tpu.memory_space<vmem>>, vector<8x128xf32>,
    %c16_109 = arith.constant 16 : index
    %c0_110 = arith.constant 0 : index
    %378 = vector.load %arg18[%c16_109, %c0_110] : memref<64x128xf32, #tpu.memory_space<vmem>>, vector<8x128xf32>
    tpu.vector_store %arg18[%c16_109, %c0_110], %376 {strides = array<i32>} : memref<64x128xf32, #tpu.memory_space<vmem>>, vector<8x128xf32>,
    %c48_111 = arith.constant 48 : index
    %c0_112 = arith.constant 0 : index
    %379 = vector.load %arg19[%c48_111, %c0_112] : memref<64x512xf32, #tpu.memory_space<vmem>>, vector<8x512xf32>
    %380 = arith.truncf %351 : vector<8x128xf32> to vector<8x128xbf16>
    %cst_113 = arith.constant dense<0.000000e+00> : vector<8x512xf32>
    %381 = tpu.matmul %380, %13, %cst_113 {dimension_numbers = #tpu.dot_dimension_numbers<[1], [0], [0], [1], [0, 0, 1, 1], [], []>} : vector<8x128xbf16>, vector<128x512xbf16>, vector<8x512xf32> -> vector<8x512xf32>
    %382 = arith.addf %379, %381 : vector<8x512xf32>
    %c8_114 = arith.constant 8 : index
    %c0_115 = arith.constant 0 : index
    %383 = vector.load %arg20[%c8_114, %c0_115] : memref<64x512xf32, #tpu.memory_space<vmem>>, vector<8x512xf32>
    %384 = arith.truncf %376 : vector<8x128xf32> to vector<8x128xbf16>
    %cst_116 = arith.constant dense<0.000000e+00> : vector<8x512xf32>
    %385 = tpu.matmul %384, %14, %cst_116 {dimension_numbers = #tpu.dot_dimension_numbers<[1], [0], [0], [1], [0, 0, 1, 1], [], []>} : vector<8x128xbf16>, vector<128x512xbf16>, vector<8x512xf32> -> vector<8x512xf32>
    %386 = arith.addf %383, %385 : vector<8x512xf32>
    %387 = vector.extract_strided_slice %382 {offsets = [0, 0], sizes = [8, 128], strides = [1, 1]} : vector<8x512xf32> to vector<8x128xf32>
    %388 = arith.negf %387 : vector<8x128xf32>
    %389 = math.exp %388 : vector<8x128xf32>
    %cst_117 = arith.constant 1.000000e+00 : f32
    %390 = vector.broadcast %cst_117 : f32 to vector<8x128xf32>
    %391 = arith.addf %390, %389 : vector<8x128xf32>
    %392 = arith.divf %390, %391 : vector<8x128xf32>
    %393 = vector.extract_strided_slice %382 {offsets = [0, 128], sizes = [8, 128], strides = [1, 1]} : vector<8x512xf32> to vector<8x128xf32>
    %394 = arith.negf %393 : vector<8x128xf32>
    %395 = math.exp %394 : vector<8x128xf32>
    %cst_118 = arith.constant 1.000000e+00 : f32
    %396 = vector.broadcast %cst_118 : f32 to vector<8x128xf32>
    %397 = arith.addf %396, %395 : vector<8x128xf32>
    %398 = arith.divf %396, %397 : vector<8x128xf32>
    %399 = vector.extract_strided_slice %382 {offsets = [0, 256], sizes = [8, 128], strides = [1, 1]} : vector<8x512xf32> to vector<8x128xf32>
    %400 = math.tanh %399 : vector<8x128xf32>
    %401 = vector.extract_strided_slice %382 {offsets = [0, 384], sizes = [8, 128], strides = [1, 1]} : vector<8x512xf32> to vector<8x128xf32>
    %402 = arith.negf %401 : vector<8x128xf32>
    %403 = math.exp %402 : vector<8x128xf32>
    %cst_119 = arith.constant 1.000000e+00 : f32
    %404 = vector.broadcast %cst_119 : f32 to vector<8x128xf32>
    %405 = arith.addf %404, %403 : vector<8x128xf32>
    %406 = arith.divf %404, %405 : vector<8x128xf32>
    %407 = arith.mulf %398, %349 : vector<8x128xf32>
    %408 = arith.mulf %392, %400 : vector<8x128xf32>
    %409 = arith.addf %407, %408 : vector<8x128xf32>
    %410 = math.tanh %409 : vector<8x128xf32>
    %411 = arith.mulf %406, %410 : vector<8x128xf32>
    %412 = vector.extract_strided_slice %386 {offsets = [0, 0], sizes = [8, 128], strides = [1, 1]} : vector<8x512xf32> to vector<8x128xf32>
    %413 = arith.negf %412 : vector<8x128xf32>
    %414 = math.exp %413 : vector<8x128xf32>
    %cst_120 = arith.constant 1.000000e+00 : f32
    %415 = vector.broadcast %cst_120 : f32 to vector<8x128xf32>
    %416 = arith.addf %415, %414 : vector<8x128xf32>
    %417 = arith.divf %415, %416 : vector<8x128xf32>
    %418 = vector.extract_strided_slice %386 {offsets = [0, 128], sizes = [8, 128], strides = [1, 1]} : vector<8x512xf32> to vector<8x128xf32>
    %419 = arith.negf %418 : vector<8x128xf32>
    %420 = math.exp %419 : vector<8x128xf32>
    %cst_121 = arith.constant 1.000000e+00 : f32
    %421 = vector.broadcast %cst_121 : f32 to vector<8x128xf32>
    %422 = arith.addf %421, %420 : vector<8x128xf32>
    %423 = arith.divf %421, %422 : vector<8x128xf32>
    %424 = vector.extract_strided_slice %386 {offsets = [0, 256], sizes = [8, 128], strides = [1, 1]} : vector<8x512xf32> to vector<8x128xf32>
    %425 = math.tanh %424 : vector<8x128xf32>
    %426 = vector.extract_strided_slice %386 {offsets = [0, 384], sizes = [8, 128], strides = [1, 1]} : vector<8x512xf32> to vector<8x128xf32>
    %427 = arith.negf %426 : vector<8x128xf32>
    %428 = math.exp %427 : vector<8x128xf32>
    %cst_122 = arith.constant 1.000000e+00 : f32
    %429 = vector.broadcast %cst_122 : f32 to vector<8x128xf32>
    %430 = arith.addf %429, %428 : vector<8x128xf32>
    %431 = arith.divf %429, %430 : vector<8x128xf32>
    %432 = arith.mulf %423, %374 : vector<8x128xf32>
    %433 = arith.mulf %417, %425 : vector<8x128xf32>
    %434 = arith.addf %432, %433 : vector<8x128xf32>
    %435 = math.tanh %434 : vector<8x128xf32>
    %436 = arith.mulf %431, %435 : vector<8x128xf32>
    %c48_123 = arith.constant 48 : index
    %c0_124 = arith.constant 0 : index
    %437 = vector.load %arg17[%c48_123, %c0_124] : memref<64x128xf32, #tpu.memory_space<vmem>>, vector<8x128xf32>
    tpu.vector_store %arg17[%c48_123, %c0_124], %411 {strides = array<i32>} : memref<64x128xf32, #tpu.memory_space<vmem>>, vector<8x128xf32>,
    %c8_125 = arith.constant 8 : index
    %c0_126 = arith.constant 0 : index
    %438 = vector.load %arg18[%c8_125, %c0_126] : memref<64x128xf32, #tpu.memory_space<vmem>>, vector<8x128xf32>
    tpu.vector_store %arg18[%c8_125, %c0_126], %436 {strides = array<i32>} : memref<64x128xf32, #tpu.memory_space<vmem>>, vector<8x128xf32>,
    %c56_127 = arith.constant 56 : index
    %c0_128 = arith.constant 0 : index
    %439 = vector.load %arg19[%c56_127, %c0_128] : memref<64x512xf32, #tpu.memory_space<vmem>>, vector<8x512xf32>
    %440 = arith.truncf %411 : vector<8x128xf32> to vector<8x128xbf16>
    %cst_129 = arith.constant dense<0.000000e+00> : vector<8x512xf32>
    %441 = tpu.matmul %440, %13, %cst_129 {dimension_numbers = #tpu.dot_dimension_numbers<[1], [0], [0], [1], [0, 0, 1, 1], [], []>} : vector<8x128xbf16>, vector<128x512xbf16>, vector<8x512xf32> -> vector<8x512xf32>
    %442 = arith.addf %439, %441 : vector<8x512xf32>
    %c0_130 = arith.constant 0 : index
    %c0_131 = arith.constant 0 : index
    %443 = vector.load %arg20[%c0_130, %c0_131] : memref<64x512xf32, #tpu.memory_space<vmem>>, vector<8x512xf32>
    %444 = arith.truncf %436 : vector<8x128xf32> to vector<8x128xbf16>
    %cst_132 = arith.constant dense<0.000000e+00> : vector<8x512xf32>
    %445 = tpu.matmul %444, %14, %cst_132 {dimension_numbers = #tpu.dot_dimension_numbers<[1], [0], [0], [1], [0, 0, 1, 1], [], []>} : vector<8x128xbf16>, vector<128x512xbf16>, vector<8x512xf32> -> vector<8x512xf32>
    %446 = arith.addf %443, %445 : vector<8x512xf32>
    %447 = vector.extract_strided_slice %442 {offsets = [0, 0], sizes = [8, 128], strides = [1, 1]} : vector<8x512xf32> to vector<8x128xf32>
    %448 = arith.negf %447 : vector<8x128xf32>
    %449 = math.exp %448 : vector<8x128xf32>
    %cst_133 = arith.constant 1.000000e+00 : f32
    %450 = vector.broadcast %cst_133 : f32 to vector<8x128xf32>
    %451 = arith.addf %450, %449 : vector<8x128xf32>
    %452 = arith.divf %450, %451 : vector<8x128xf32>
    %453 = vector.extract_strided_slice %442 {offsets = [0, 128], sizes = [8, 128], strides = [1, 1]} : vector<8x512xf32> to vector<8x128xf32>
    %454 = arith.negf %453 : vector<8x128xf32>
    %455 = math.exp %454 : vector<8x128xf32>
    %cst_134 = arith.constant 1.000000e+00 : f32
    %456 = vector.broadcast %cst_134 : f32 to vector<8x128xf32>
    %457 = arith.addf %456, %455 : vector<8x128xf32>
    %458 = arith.divf %456, %457 : vector<8x128xf32>
    %459 = vector.extract_strided_slice %442 {offsets = [0, 256], sizes = [8, 128], strides = [1, 1]} : vector<8x512xf32> to vector<8x128xf32>
    %460 = math.tanh %459 : vector<8x128xf32>
    %461 = vector.extract_strided_slice %442 {offsets = [0, 384], sizes = [8, 128], strides = [1, 1]} : vector<8x512xf32> to vector<8x128xf32>
    %462 = arith.negf %461 : vector<8x128xf32>
    %463 = math.exp %462 : vector<8x128xf32>
    %cst_135 = arith.constant 1.000000e+00 : f32
    %464 = vector.broadcast %cst_135 : f32 to vector<8x128xf32>
    %465 = arith.addf %464, %463 : vector<8x128xf32>
    %466 = arith.divf %464, %465 : vector<8x128xf32>
    %467 = arith.mulf %458, %409 : vector<8x128xf32>
    %468 = arith.mulf %452, %460 : vector<8x128xf32>
    %469 = arith.addf %467, %468 : vector<8x128xf32>
    %470 = math.tanh %469 : vector<8x128xf32>
    %471 = arith.mulf %466, %470 : vector<8x128xf32>
    %472 = vector.extract_strided_slice %446 {offsets = [0, 0], sizes = [8, 128], strides = [1, 1]} : vector<8x512xf32> to vector<8x128xf32>
    %473 = arith.negf %472 : vector<8x128xf32>
    %474 = math.exp %473 : vector<8x128xf32>
    %cst_136 = arith.constant 1.000000e+00 : f32
    %475 = vector.broadcast %cst_136 : f32 to vector<8x128xf32>
    %476 = arith.addf %475, %474 : vector<8x128xf32>
    %477 = arith.divf %475, %476 : vector<8x128xf32>
    %478 = vector.extract_strided_slice %446 {offsets = [0, 128], sizes = [8, 128], strides = [1, 1]} : vector<8x512xf32> to vector<8x128xf32>
    %479 = arith.negf %478 : vector<8x128xf32>
    %480 = math.exp %479 : vector<8x128xf32>
    %cst_137 = arith.constant 1.000000e+00 : f32
    %481 = vector.broadcast %cst_137 : f32 to vector<8x128xf32>
    %482 = arith.addf %481, %480 : vector<8x128xf32>
    %483 = arith.divf %481, %482 : vector<8x128xf32>
    %484 = vector.extract_strided_slice %446 {offsets = [0, 256], sizes = [8, 128], strides = [1, 1]} : vector<8x512xf32> to vector<8x128xf32>
    %485 = math.tanh %484 : vector<8x128xf32>
    %486 = vector.extract_strided_slice %446 {offsets = [0, 384], sizes = [8, 128], strides = [1, 1]} : vector<8x512xf32> to vector<8x128xf32>
    %487 = arith.negf %486 : vector<8x128xf32>
    %488 = math.exp %487 : vector<8x128xf32>
    %cst_138 = arith.constant 1.000000e+00 : f32
    %489 = vector.broadcast %cst_138 : f32 to vector<8x128xf32>
    %490 = arith.addf %489, %488 : vector<8x128xf32>
    %491 = arith.divf %489, %490 : vector<8x128xf32>
    %492 = arith.mulf %483, %434 : vector<8x128xf32>
    %493 = arith.mulf %477, %485 : vector<8x128xf32>
    %494 = arith.addf %492, %493 : vector<8x128xf32>
    %495 = math.tanh %494 : vector<8x128xf32>
    %496 = arith.mulf %491, %495 : vector<8x128xf32>
    %c56_139 = arith.constant 56 : index
    %c0_140 = arith.constant 0 : index
    %497 = vector.load %arg17[%c56_139, %c0_140] : memref<64x128xf32, #tpu.memory_space<vmem>>, vector<8x128xf32>
    tpu.vector_store %arg17[%c56_139, %c0_140], %471 {strides = array<i32>} : memref<64x128xf32, #tpu.memory_space<vmem>>, vector<8x128xf32>,
    %c0_141 = arith.constant 0 : index
    %c0_142 = arith.constant 0 : index
    %498 = vector.load %arg18[%c0_141, %c0_142] : memref<64x128xf32, #tpu.memory_space<vmem>>, vector<8x128xf32>
    tpu.vector_store %arg18[%c0_141, %c0_142], %496 {strides = array<i32>} : memref<64x128xf32, #tpu.memory_space<vmem>>, vector<8x128xf32>,
    %c0_143 = arith.constant 0 : index
    %c0_144 = arith.constant 0 : index
    %499 = vector.load %arg17[%c0_143, %c0_144] : memref<64x128xf32, #tpu.memory_space<vmem>>, vector<64x128xf32>
    %500 = arith.truncf %499 : vector<64x128xf32> to vector<64x128xbf16>
    %c0_145 = arith.constant 0 : index
    %c0_146 = arith.constant 0 : index
    %501 = vector.load %arg18[%c0_145, %c0_146] : memref<64x128xf32, #tpu.memory_space<vmem>>, vector<64x128xf32>
    %502 = arith.truncf %501 : vector<64x128xf32> to vector<64x128xbf16>
    %c0_147 = arith.constant 0 : index
    %c0_148 = arith.constant 0 : index
    %503 = vector.load %arg8[%c0_147, %c0_148] : memref<256x512xbf16, #tpu.memory_space<vmem>>, vector<128x512xbf16>
    %cst_149 = arith.constant dense<0.000000e+00> : vector<64x512xf32>
    %504 = tpu.matmul %500, %503, %cst_149 {dimension_numbers = #tpu.dot_dimension_numbers<[1], [0], [0], [1], [0, 0, 1, 1], [], []>} : vector<64x128xbf16>, vector<128x512xbf16>, vector<64x512xf32> -> vector<64x512xf32>
    %c128 = arith.constant 128 : index
    %c0_150 = arith.constant 0 : index
    %505 = vector.load %arg8[%c128, %c0_150] : memref<256x512xbf16, #tpu.memory_space<vmem>>, vector<128x512xbf16>
    %cst_151 = arith.constant dense<0.000000e+00> : vector<64x512xf32>
    %506 = tpu.matmul %502, %505, %cst_151 {dimension_numbers = #tpu.dot_dimension_numbers<[1], [0], [0], [1], [0, 0, 1, 1], [], []>} : vector<64x128xbf16>, vector<128x512xbf16>, vector<64x512xf32> -> vector<64x512xf32>
    %507 = arith.addf %504, %506 : vector<64x512xf32>
    %c0_152 = arith.constant 0 : index
    %c0_153 = arith.constant 0 : index
    %508 = vector.load %arg10[%c0_152, %c0_153] : memref<1x512xf32, #tpu.memory_space<vmem>>, vector<1x512xf32>
    %509 = vector.broadcast %508 : vector<1x512xf32> to vector<64x512xf32>
    %510 = arith.addf %507, %509 : vector<64x512xf32>
    %c0_154 = arith.constant 0 : index
    %c0_155 = arith.constant 0 : index
    %511 = vector.load %arg19[%c0_154, %c0_155] : memref<64x512xf32, #tpu.memory_space<vmem>>, vector<64x512xf32>
    tpu.vector_store %arg19[%c0_154, %c0_155], %510 {strides = array<i32>} : memref<64x512xf32, #tpu.memory_space<vmem>>, vector<64x512xf32>,
    %c0_156 = arith.constant 0 : index
    %c0_157 = arith.constant 0 : index
    %512 = vector.load %arg11[%c0_156, %c0_157] : memref<256x512xbf16, #tpu.memory_space<vmem>>, vector<128x512xbf16>
    %cst_158 = arith.constant dense<0.000000e+00> : vector<64x512xf32>
    %513 = tpu.matmul %500, %512, %cst_158 {dimension_numbers = #tpu.dot_dimension_numbers<[1], [0], [0], [1], [0, 0, 1, 1], [], []>} : vector<64x128xbf16>, vector<128x512xbf16>, vector<64x512xf32> -> vector<64x512xf32>
    %c128_159 = arith.constant 128 : index
    %c0_160 = arith.constant 0 : index
    %514 = vector.load %arg11[%c128_159, %c0_160] : memref<256x512xbf16, #tpu.memory_space<vmem>>, vector<128x512xbf16>
    %cst_161 = arith.constant dense<0.000000e+00> : vector<64x512xf32>
    %515 = tpu.matmul %502, %514, %cst_161 {dimension_numbers = #tpu.dot_dimension_numbers<[1], [0], [0], [1], [0, 0, 1, 1], [], []>} : vector<64x128xbf16>, vector<128x512xbf16>, vector<64x512xf32> -> vector<64x512xf32>
    %516 = arith.addf %513, %515 : vector<64x512xf32>
    %c0_162 = arith.constant 0 : index
    %c0_163 = arith.constant 0 : index
    %517 = vector.load %arg13[%c0_162, %c0_163] : memref<1x512xf32, #tpu.memory_space<vmem>>, vector<1x512xf32>
    %518 = vector.broadcast %517 : vector<1x512xf32> to vector<64x512xf32>
    %519 = arith.addf %516, %518 : vector<64x512xf32>
    %c0_164 = arith.constant 0 : index
    %c0_165 = arith.constant 0 : index
    %520 = vector.load %arg20[%c0_164, %c0_165] : memref<64x512xf32, #tpu.memory_space<vmem>>, vector<64x512xf32>
    tpu.vector_store %arg20[%c0_164, %c0_165], %519 {strides = array<i32>} : memref<64x512xf32, #tpu.memory_space<vmem>>, vector<64x512xf32>,
    %c0_166 = arith.constant 0 : index
    %c0_167 = arith.constant 0 : index
    %521 = vector.load %arg9[%c0_166, %c0_167] : memref<128x512xbf16, #tpu.memory_space<vmem>>, vector<128x512xbf16>
    %c0_168 = arith.constant 0 : index
    %c0_169 = arith.constant 0 : index
    %522 = vector.load %arg12[%c0_168, %c0_169] : memref<128x512xbf16, #tpu.memory_space<vmem>>, vector<128x512xbf16>
    %cst_170 = arith.constant 0.000000e+00 : f32
    %523 = vector.broadcast %cst_170 : f32 to vector<8x128xf32>
    %cst_171 = arith.constant 0.000000e+00 : f32
    %524 = vector.broadcast %cst_171 : f32 to vector<8x128xf32>
    %cst_172 = arith.constant 0.000000e+00 : f32
    %525 = vector.broadcast %cst_172 : f32 to vector<8x128xf32>
    %cst_173 = arith.constant 0.000000e+00 : f32
    %526 = vector.broadcast %cst_173 : f32 to vector<8x128xf32>
    %c0_174 = arith.constant 0 : index
    %c0_175 = arith.constant 0 : index
    %527 = vector.load %arg19[%c0_174, %c0_175] : memref<64x512xf32, #tpu.memory_space<vmem>>, vector<8x512xf32>
    %528 = arith.truncf %523 : vector<8x128xf32> to vector<8x128xbf16>
    %cst_176 = arith.constant dense<0.000000e+00> : vector<8x512xf32>
    %529 = tpu.matmul %528, %521, %cst_176 {dimension_numbers = #tpu.dot_dimension_numbers<[1], [0], [0], [1], [0, 0, 1, 1], [], []>} : vector<8x128xbf16>, vector<128x512xbf16>, vector<8x512xf32> -> vector<8x512xf32>
    %530 = arith.addf %527, %529 : vector<8x512xf32>
    %c56_177 = arith.constant 56 : index
    %c0_178 = arith.constant 0 : index
    %531 = vector.load %arg20[%c56_177, %c0_178] : memref<64x512xf32, #tpu.memory_space<vmem>>, vector<8x512xf32>
    %532 = arith.truncf %525 : vector<8x128xf32> to vector<8x128xbf16>
    %cst_179 = arith.constant dense<0.000000e+00> : vector<8x512xf32>
    %533 = tpu.matmul %532, %522, %cst_179 {dimension_numbers = #tpu.dot_dimension_numbers<[1], [0], [0], [1], [0, 0, 1, 1], [], []>} : vector<8x128xbf16>, vector<128x512xbf16>, vector<8x512xf32> -> vector<8x512xf32>
    %534 = arith.addf %531, %533 : vector<8x512xf32>
    %535 = vector.extract_strided_slice %530 {offsets = [0, 0], sizes = [8, 128], strides = [1, 1]} : vector<8x512xf32> to vector<8x128xf32>
    %536 = arith.negf %535 : vector<8x128xf32>
    %537 = math.exp %536 : vector<8x128xf32>
    %cst_180 = arith.constant 1.000000e+00 : f32
    %538 = vector.broadcast %cst_180 : f32 to vector<8x128xf32>
    %539 = arith.addf %538, %537 : vector<8x128xf32>
    %540 = arith.divf %538, %539 : vector<8x128xf32>
    %541 = vector.extract_strided_slice %530 {offsets = [0, 128], sizes = [8, 128], strides = [1, 1]} : vector<8x512xf32> to vector<8x128xf32>
    %542 = arith.negf %541 : vector<8x128xf32>
    %543 = math.exp %542 : vector<8x128xf32>
    %cst_181 = arith.constant 1.000000e+00 : f32
    %544 = vector.broadcast %cst_181 : f32 to vector<8x128xf32>
    %545 = arith.addf %544, %543 : vector<8x128xf32>
    %546 = arith.divf %544, %545 : vector<8x128xf32>
    %547 = vector.extract_strided_slice %530 {offsets = [0, 256], sizes = [8, 128], strides = [1, 1]} : vector<8x512xf32> to vector<8x128xf32>
    %548 = math.tanh %547 : vector<8x128xf32>
    %549 = vector.extract_strided_slice %530 {offsets = [0, 384], sizes = [8, 128], strides = [1, 1]} : vector<8x512xf32> to vector<8x128xf32>
    %550 = arith.negf %549 : vector<8x128xf32>
    %551 = math.exp %550 : vector<8x128xf32>
    %cst_182 = arith.constant 1.000000e+00 : f32
    %552 = vector.broadcast %cst_182 : f32 to vector<8x128xf32>
    %553 = arith.addf %552, %551 : vector<8x128xf32>
    %554 = arith.divf %552, %553 : vector<8x128xf32>
    %555 = arith.mulf %546, %524 : vector<8x128xf32>
    %556 = arith.mulf %540, %548 : vector<8x128xf32>
    %557 = arith.addf %555, %556 : vector<8x128xf32>
    %558 = math.tanh %557 : vector<8x128xf32>
    %559 = arith.mulf %554, %558 : vector<8x128xf32>
    %560 = vector.extract_strided_slice %534 {offsets = [0, 0], sizes = [8, 128], strides = [1, 1]} : vector<8x512xf32> to vector<8x128xf32>
    %561 = arith.negf %560 : vector<8x128xf32>
    %562 = math.exp %561 : vector<8x128xf32>
    %cst_183 = arith.constant 1.000000e+00 : f32
    %563 = vector.broadcast %cst_183 : f32 to vector<8x128xf32>
    %564 = arith.addf %563, %562 : vector<8x128xf32>
    %565 = arith.divf %563, %564 : vector<8x128xf32>
    %566 = vector.extract_strided_slice %534 {offsets = [0, 128], sizes = [8, 128], strides = [1, 1]} : vector<8x512xf32> to vector<8x128xf32>
    %567 = arith.negf %566 : vector<8x128xf32>
    %568 = math.exp %567 : vector<8x128xf32>
    %cst_184 = arith.constant 1.000000e+00 : f32
    %569 = vector.broadcast %cst_184 : f32 to vector<8x128xf32>
    %570 = arith.addf %569, %568 : vector<8x128xf32>
    %571 = arith.divf %569, %570 : vector<8x128xf32>
    %572 = vector.extract_strided_slice %534 {offsets = [0, 256], sizes = [8, 128], strides = [1, 1]} : vector<8x512xf32> to vector<8x128xf32>
    %573 = math.tanh %572 : vector<8x128xf32>
    %574 = vector.extract_strided_slice %534 {offsets = [0, 384], sizes = [8, 128], strides = [1, 1]} : vector<8x512xf32> to vector<8x128xf32>
    %575 = arith.negf %574 : vector<8x128xf32>
    %576 = math.exp %575 : vector<8x128xf32>
    %cst_185 = arith.constant 1.000000e+00 : f32
    %577 = vector.broadcast %cst_185 : f32 to vector<8x128xf32>
    %578 = arith.addf %577, %576 : vector<8x128xf32>
    %579 = arith.divf %577, %578 : vector<8x128xf32>
    %580 = arith.mulf %571, %526 : vector<8x128xf32>
    %581 = arith.mulf %565, %573 : vector<8x128xf32>
    %582 = arith.addf %580, %581 : vector<8x128xf32>
    %583 = math.tanh %582 : vector<8x128xf32>
    %584 = arith.mulf %579, %583 : vector<8x128xf32>
    %c0_186 = arith.constant 0 : index
    %c0_187 = arith.constant 0 : index
    %585 = vector.load %arg17[%c0_186, %c0_187] : memref<64x128xf32, #tpu.memory_space<vmem>>, vector<8x128xf32>
    tpu.vector_store %arg17[%c0_186, %c0_187], %559 {strides = array<i32>} : memref<64x128xf32, #tpu.memory_space<vmem>>, vector<8x128xf32>,
    %c56_188 = arith.constant 56 : index
    %c0_189 = arith.constant 0 : index
    %586 = vector.load %arg18[%c56_188, %c0_189] : memref<64x128xf32, #tpu.memory_space<vmem>>, vector<8x128xf32>
    tpu.vector_store %arg18[%c56_188, %c0_189], %584 {strides = array<i32>} : memref<64x128xf32, #tpu.memory_space<vmem>>, vector<8x128xf32>,
    %c8_190 = arith.constant 8 : index
    %c0_191 = arith.constant 0 : index
    %587 = vector.load %arg19[%c8_190, %c0_191] : memref<64x512xf32, #tpu.memory_space<vmem>>, vector<8x512xf32>
    %588 = arith.truncf %559 : vector<8x128xf32> to vector<8x128xbf16>
    %cst_192 = arith.constant dense<0.000000e+00> : vector<8x512xf32>
    %589 = tpu.matmul %588, %521, %cst_192 {dimension_numbers = #tpu.dot_dimension_numbers<[1], [0], [0], [1], [0, 0, 1, 1], [], []>} : vector<8x128xbf16>, vector<128x512xbf16>, vector<8x512xf32> -> vector<8x512xf32>
    %590 = arith.addf %587, %589 : vector<8x512xf32>
    %c48_193 = arith.constant 48 : index
    %c0_194 = arith.constant 0 : index
    %591 = vector.load %arg20[%c48_193, %c0_194] : memref<64x512xf32, #tpu.memory_space<vmem>>, vector<8x512xf32>
    %592 = arith.truncf %584 : vector<8x128xf32> to vector<8x128xbf16>
    %cst_195 = arith.constant dense<0.000000e+00> : vector<8x512xf32>
    %593 = tpu.matmul %592, %522, %cst_195 {dimension_numbers = #tpu.dot_dimension_numbers<[1], [0], [0], [1], [0, 0, 1, 1], [], []>} : vector<8x128xbf16>, vector<128x512xbf16>, vector<8x512xf32> -> vector<8x512xf32>
    %594 = arith.addf %591, %593 : vector<8x512xf32>
    %595 = vector.extract_strided_slice %590 {offsets = [0, 0], sizes = [8, 128], strides = [1, 1]} : vector<8x512xf32> to vector<8x128xf32>
    %596 = arith.negf %595 : vector<8x128xf32>
    %597 = math.exp %596 : vector<8x128xf32>
    %cst_196 = arith.constant 1.000000e+00 : f32
    %598 = vector.broadcast %cst_196 : f32 to vector<8x128xf32>
    %599 = arith.addf %598, %597 : vector<8x128xf32>
    %600 = arith.divf %598, %599 : vector<8x128xf32>
    %601 = vector.extract_strided_slice %590 {offsets = [0, 128], sizes = [8, 128], strides = [1, 1]} : vector<8x512xf32> to vector<8x128xf32>
    %602 = arith.negf %601 : vector<8x128xf32>
    %603 = math.exp %602 : vector<8x128xf32>
    %cst_197 = arith.constant 1.000000e+00 : f32
    %604 = vector.broadcast %cst_197 : f32 to vector<8x128xf32>
    %605 = arith.addf %604, %603 : vector<8x128xf32>
    %606 = arith.divf %604, %605 : vector<8x128xf32>
    %607 = vector.extract_strided_slice %590 {offsets = [0, 256], sizes = [8, 128], strides = [1, 1]} : vector<8x512xf32> to vector<8x128xf32>
    %608 = math.tanh %607 : vector<8x128xf32>
    %609 = vector.extract_strided_slice %590 {offsets = [0, 384], sizes = [8, 128], strides = [1, 1]} : vector<8x512xf32> to vector<8x128xf32>
    %610 = arith.negf %609 : vector<8x128xf32>
    %611 = math.exp %610 : vector<8x128xf32>
    %cst_198 = arith.constant 1.000000e+00 : f32
    %612 = vector.broadcast %cst_198 : f32 to vector<8x128xf32>
    %613 = arith.addf %612, %611 : vector<8x128xf32>
    %614 = arith.divf %612, %613 : vector<8x128xf32>
    %615 = arith.mulf %606, %557 : vector<8x128xf32>
    %616 = arith.mulf %600, %608 : vector<8x128xf32>
    %617 = arith.addf %615, %616 : vector<8x128xf32>
    %618 = math.tanh %617 : vector<8x128xf32>
    %619 = arith.mulf %614, %618 : vector<8x128xf32>
    %620 = vector.extract_strided_slice %594 {offsets = [0, 0], sizes = [8, 128], strides = [1, 1]} : vector<8x512xf32> to vector<8x128xf32>
    %621 = arith.negf %620 : vector<8x128xf32>
    %622 = math.exp %621 : vector<8x128xf32>
    %cst_199 = arith.constant 1.000000e+00 : f32
    %623 = vector.broadcast %cst_199 : f32 to vector<8x128xf32>
    %624 = arith.addf %623, %622 : vector<8x128xf32>
    %625 = arith.divf %623, %624 : vector<8x128xf32>
    %626 = vector.extract_strided_slice %594 {offsets = [0, 128], sizes = [8, 128], strides = [1, 1]} : vector<8x512xf32> to vector<8x128xf32>
    %627 = arith.negf %626 : vector<8x128xf32>
    %628 = math.exp %627 : vector<8x128xf32>
    %cst_200 = arith.constant 1.000000e+00 : f32
    %629 = vector.broadcast %cst_200 : f32 to vector<8x128xf32>
    %630 = arith.addf %629, %628 : vector<8x128xf32>
    %631 = arith.divf %629, %630 : vector<8x128xf32>
    %632 = vector.extract_strided_slice %594 {offsets = [0, 256], sizes = [8, 128], strides = [1, 1]} : vector<8x512xf32> to vector<8x128xf32>
    %633 = math.tanh %632 : vector<8x128xf32>
    %634 = vector.extract_strided_slice %594 {offsets = [0, 384], sizes = [8, 128], strides = [1, 1]} : vector<8x512xf32> to vector<8x128xf32>
    %635 = arith.negf %634 : vector<8x128xf32>
    %636 = math.exp %635 : vector<8x128xf32>
    %cst_201 = arith.constant 1.000000e+00 : f32
    %637 = vector.broadcast %cst_201 : f32 to vector<8x128xf32>
    %638 = arith.addf %637, %636 : vector<8x128xf32>
    %639 = arith.divf %637, %638 : vector<8x128xf32>
    %640 = arith.mulf %631, %582 : vector<8x128xf32>
    %641 = arith.mulf %625, %633 : vector<8x128xf32>
    %642 = arith.addf %640, %641 : vector<8x128xf32>
    %643 = math.tanh %642 : vector<8x128xf32>
    %644 = arith.mulf %639, %643 : vector<8x128xf32>
    %c8_202 = arith.constant 8 : index
    %c0_203 = arith.constant 0 : index
    %645 = vector.load %arg17[%c8_202, %c0_203] : memref<64x128xf32, #tpu.memory_space<vmem>>, vector<8x128xf32>
    tpu.vector_store %arg17[%c8_202, %c0_203], %619 {strides = array<i32>} : memref<64x128xf32, #tpu.memory_space<vmem>>, vector<8x128xf32>,
    %c48_204 = arith.constant 48 : index
    %c0_205 = arith.constant 0 : index
    %646 = vector.load %arg18[%c48_204, %c0_205] : memref<64x128xf32, #tpu.memory_space<vmem>>, vector<8x128xf32>
    tpu.vector_store %arg18[%c48_204, %c0_205], %644 {strides = array<i32>} : memref<64x128xf32, #tpu.memory_space<vmem>>, vector<8x128xf32>,
    %c16_206 = arith.constant 16 : index
    %c0_207 = arith.constant 0 : index
    %647 = vector.load %arg19[%c16_206, %c0_207] : memref<64x512xf32, #tpu.memory_space<vmem>>, vector<8x512xf32>
    %648 = arith.truncf %619 : vector<8x128xf32> to vector<8x128xbf16>
    %cst_208 = arith.constant dense<0.000000e+00> : vector<8x512xf32>
    %649 = tpu.matmul %648, %521, %cst_208 {dimension_numbers = #tpu.dot_dimension_numbers<[1], [0], [0], [1], [0, 0, 1, 1], [], []>} : vector<8x128xbf16>, vector<128x512xbf16>, vector<8x512xf32> -> vector<8x512xf32>
    %650 = arith.addf %647, %649 : vector<8x512xf32>
    %c40_209 = arith.constant 40 : index
    %c0_210 = arith.constant 0 : index
    %651 = vector.load %arg20[%c40_209, %c0_210] : memref<64x512xf32, #tpu.memory_space<vmem>>, vector<8x512xf32>
    %652 = arith.truncf %644 : vector<8x128xf32> to vector<8x128xbf16>
    %cst_211 = arith.constant dense<0.000000e+00> : vector<8x512xf32>
    %653 = tpu.matmul %652, %522, %cst_211 {dimension_numbers = #tpu.dot_dimension_numbers<[1], [0], [0], [1], [0, 0, 1, 1], [], []>} : vector<8x128xbf16>, vector<128x512xbf16>, vector<8x512xf32> -> vector<8x512xf32>
    %654 = arith.addf %651, %653 : vector<8x512xf32>
    %655 = vector.extract_strided_slice %650 {offsets = [0, 0], sizes = [8, 128], strides = [1, 1]} : vector<8x512xf32> to vector<8x128xf32>
    %656 = arith.negf %655 : vector<8x128xf32>
    %657 = math.exp %656 : vector<8x128xf32>
    %cst_212 = arith.constant 1.000000e+00 : f32
    %658 = vector.broadcast %cst_212 : f32 to vector<8x128xf32>
    %659 = arith.addf %658, %657 : vector<8x128xf32>
    %660 = arith.divf %658, %659 : vector<8x128xf32>
    %661 = vector.extract_strided_slice %650 {offsets = [0, 128], sizes = [8, 128], strides = [1, 1]} : vector<8x512xf32> to vector<8x128xf32>
    %662 = arith.negf %661 : vector<8x128xf32>
    %663 = math.exp %662 : vector<8x128xf32>
    %cst_213 = arith.constant 1.000000e+00 : f32
    %664 = vector.broadcast %cst_213 : f32 to vector<8x128xf32>
    %665 = arith.addf %664, %663 : vector<8x128xf32>
    %666 = arith.divf %664, %665 : vector<8x128xf32>
    %667 = vector.extract_strided_slice %650 {offsets = [0, 256], sizes = [8, 128], strides = [1, 1]} : vector<8x512xf32> to vector<8x128xf32>
    %668 = math.tanh %667 : vector<8x128xf32>
    %669 = vector.extract_strided_slice %650 {offsets = [0, 384], sizes = [8, 128], strides = [1, 1]} : vector<8x512xf32> to vector<8x128xf32>
    %670 = arith.negf %669 : vector<8x128xf32>
    %671 = math.exp %670 : vector<8x128xf32>
    %cst_214 = arith.constant 1.000000e+00 : f32
    %672 = vector.broadcast %cst_214 : f32 to vector<8x128xf32>
    %673 = arith.addf %672, %671 : vector<8x128xf32>
    %674 = arith.divf %672, %673 : vector<8x128xf32>
    %675 = arith.mulf %666, %617 : vector<8x128xf32>
    %676 = arith.mulf %660, %668 : vector<8x128xf32>
    %677 = arith.addf %675, %676 : vector<8x128xf32>
    %678 = math.tanh %677 : vector<8x128xf32>
    %679 = arith.mulf %674, %678 : vector<8x128xf32>
    %680 = vector.extract_strided_slice %654 {offsets = [0, 0], sizes = [8, 128], strides = [1, 1]} : vector<8x512xf32> to vector<8x128xf32>
    %681 = arith.negf %680 : vector<8x128xf32>
    %682 = math.exp %681 : vector<8x128xf32>
    %cst_215 = arith.constant 1.000000e+00 : f32
    %683 = vector.broadcast %cst_215 : f32 to vector<8x128xf32>
    %684 = arith.addf %683, %682 : vector<8x128xf32>
    %685 = arith.divf %683, %684 : vector<8x128xf32>
    %686 = vector.extract_strided_slice %654 {offsets = [0, 128], sizes = [8, 128], strides = [1, 1]} : vector<8x512xf32> to vector<8x128xf32>
    %687 = arith.negf %686 : vector<8x128xf32>
    %688 = math.exp %687 : vector<8x128xf32>
    %cst_216 = arith.constant 1.000000e+00 : f32
    %689 = vector.broadcast %cst_216 : f32 to vector<8x128xf32>
    %690 = arith.addf %689, %688 : vector<8x128xf32>
    %691 = arith.divf %689, %690 : vector<8x128xf32>
    %692 = vector.extract_strided_slice %654 {offsets = [0, 256], sizes = [8, 128], strides = [1, 1]} : vector<8x512xf32> to vector<8x128xf32>
    %693 = math.tanh %692 : vector<8x128xf32>
    %694 = vector.extract_strided_slice %654 {offsets = [0, 384], sizes = [8, 128], strides = [1, 1]} : vector<8x512xf32> to vector<8x128xf32>
    %695 = arith.negf %694 : vector<8x128xf32>
    %696 = math.exp %695 : vector<8x128xf32>
    %cst_217 = arith.constant 1.000000e+00 : f32
    %697 = vector.broadcast %cst_217 : f32 to vector<8x128xf32>
    %698 = arith.addf %697, %696 : vector<8x128xf32>
    %699 = arith.divf %697, %698 : vector<8x128xf32>
    %700 = arith.mulf %691, %642 : vector<8x128xf32>
    %701 = arith.mulf %685, %693 : vector<8x128xf32>
    %702 = arith.addf %700, %701 : vector<8x128xf32>
    %703 = math.tanh %702 : vector<8x128xf32>
    %704 = arith.mulf %699, %703 : vector<8x128xf32>
    %c16_218 = arith.constant 16 : index
    %c0_219 = arith.constant 0 : index
    %705 = vector.load %arg17[%c16_218, %c0_219] : memref<64x128xf32, #tpu.memory_space<vmem>>, vector<8x128xf32>
    tpu.vector_store %arg17[%c16_218, %c0_219], %679 {strides = array<i32>} : memref<64x128xf32, #tpu.memory_space<vmem>>, vector<8x128xf32>,
    %c40_220 = arith.constant 40 : index
    %c0_221 = arith.constant 0 : index
    %706 = vector.load %arg18[%c40_220, %c0_221] : memref<64x128xf32, #tpu.memory_space<vmem>>, vector<8x128xf32>
    tpu.vector_store %arg18[%c40_220, %c0_221], %704 {strides = array<i32>} : memref<64x128xf32, #tpu.memory_space<vmem>>, vector<8x128xf32>,
    %c24_222 = arith.constant 24 : index
    %c0_223 = arith.constant 0 : index
    %707 = vector.load %arg19[%c24_222, %c0_223] : memref<64x512xf32, #tpu.memory_space<vmem>>, vector<8x512xf32>
    %708 = arith.truncf %679 : vector<8x128xf32> to vector<8x128xbf16>
    %cst_224 = arith.constant dense<0.000000e+00> : vector<8x512xf32>
    %709 = tpu.matmul %708, %521, %cst_224 {dimension_numbers = #tpu.dot_dimension_numbers<[1], [0], [0], [1], [0, 0, 1, 1], [], []>} : vector<8x128xbf16>, vector<128x512xbf16>, vector<8x512xf32> -> vector<8x512xf32>
    %710 = arith.addf %707, %709 : vector<8x512xf32>
    %c32_225 = arith.constant 32 : index
    %c0_226 = arith.constant 0 : index
    %711 = vector.load %arg20[%c32_225, %c0_226] : memref<64x512xf32, #tpu.memory_space<vmem>>, vector<8x512xf32>
    %712 = arith.truncf %704 : vector<8x128xf32> to vector<8x128xbf16>
    %cst_227 = arith.constant dense<0.000000e+00> : vector<8x512xf32>
    %713 = tpu.matmul %712, %522, %cst_227 {dimension_numbers = #tpu.dot_dimension_numbers<[1], [0], [0], [1], [0, 0, 1, 1], [], []>} : vector<8x128xbf16>, vector<128x512xbf16>, vector<8x512xf32> -> vector<8x512xf32>
    %714 = arith.addf %711, %713 : vector<8x512xf32>
    %715 = vector.extract_strided_slice %710 {offsets = [0, 0], sizes = [8, 128], strides = [1, 1]} : vector<8x512xf32> to vector<8x128xf32>
    %716 = arith.negf %715 : vector<8x128xf32>
    %717 = math.exp %716 : vector<8x128xf32>
    %cst_228 = arith.constant 1.000000e+00 : f32
    %718 = vector.broadcast %cst_228 : f32 to vector<8x128xf32>
    %719 = arith.addf %718, %717 : vector<8x128xf32>
    %720 = arith.divf %718, %719 : vector<8x128xf32>
    %721 = vector.extract_strided_slice %710 {offsets = [0, 128], sizes = [8, 128], strides = [1, 1]} : vector<8x512xf32> to vector<8x128xf32>
    %722 = arith.negf %721 : vector<8x128xf32>
    %723 = math.exp %722 : vector<8x128xf32>
    %cst_229 = arith.constant 1.000000e+00 : f32
    %724 = vector.broadcast %cst_229 : f32 to vector<8x128xf32>
    %725 = arith.addf %724, %723 : vector<8x128xf32>
    %726 = arith.divf %724, %725 : vector<8x128xf32>
    %727 = vector.extract_strided_slice %710 {offsets = [0, 256], sizes = [8, 128], strides = [1, 1]} : vector<8x512xf32> to vector<8x128xf32>
    %728 = math.tanh %727 : vector<8x128xf32>
    %729 = vector.extract_strided_slice %710 {offsets = [0, 384], sizes = [8, 128], strides = [1, 1]} : vector<8x512xf32> to vector<8x128xf32>
    %730 = arith.negf %729 : vector<8x128xf32>
    %731 = math.exp %730 : vector<8x128xf32>
    %cst_230 = arith.constant 1.000000e+00 : f32
    %732 = vector.broadcast %cst_230 : f32 to vector<8x128xf32>
    %733 = arith.addf %732, %731 : vector<8x128xf32>
    %734 = arith.divf %732, %733 : vector<8x128xf32>
    %735 = arith.mulf %726, %677 : vector<8x128xf32>
    %736 = arith.mulf %720, %728 : vector<8x128xf32>
    %737 = arith.addf %735, %736 : vector<8x128xf32>
    %738 = math.tanh %737 : vector<8x128xf32>
    %739 = arith.mulf %734, %738 : vector<8x128xf32>
    %740 = vector.extract_strided_slice %714 {offsets = [0, 0], sizes = [8, 128], strides = [1, 1]} : vector<8x512xf32> to vector<8x128xf32>
    %741 = arith.negf %740 : vector<8x128xf32>
    %742 = math.exp %741 : vector<8x128xf32>
    %cst_231 = arith.constant 1.000000e+00 : f32
    %743 = vector.broadcast %cst_231 : f32 to vector<8x128xf32>
    %744 = arith.addf %743, %742 : vector<8x128xf32>
    %745 = arith.divf %743, %744 : vector<8x128xf32>
    %746 = vector.extract_strided_slice %714 {offsets = [0, 128], sizes = [8, 128], strides = [1, 1]} : vector<8x512xf32> to vector<8x128xf32>
    %747 = arith.negf %746 : vector<8x128xf32>
    %748 = math.exp %747 : vector<8x128xf32>
    %cst_232 = arith.constant 1.000000e+00 : f32
    %749 = vector.broadcast %cst_232 : f32 to vector<8x128xf32>
    %750 = arith.addf %749, %748 : vector<8x128xf32>
    %751 = arith.divf %749, %750 : vector<8x128xf32>
    %752 = vector.extract_strided_slice %714 {offsets = [0, 256], sizes = [8, 128], strides = [1, 1]} : vector<8x512xf32> to vector<8x128xf32>
    %753 = math.tanh %752 : vector<8x128xf32>
    %754 = vector.extract_strided_slice %714 {offsets = [0, 384], sizes = [8, 128], strides = [1, 1]} : vector<8x512xf32> to vector<8x128xf32>
    %755 = arith.negf %754 : vector<8x128xf32>
    %756 = math.exp %755 : vector<8x128xf32>
    %cst_233 = arith.constant 1.000000e+00 : f32
    %757 = vector.broadcast %cst_233 : f32 to vector<8x128xf32>
    %758 = arith.addf %757, %756 : vector<8x128xf32>
    %759 = arith.divf %757, %758 : vector<8x128xf32>
    %760 = arith.mulf %751, %702 : vector<8x128xf32>
    %761 = arith.mulf %745, %753 : vector<8x128xf32>
    %762 = arith.addf %760, %761 : vector<8x128xf32>
    %763 = math.tanh %762 : vector<8x128xf32>
    %764 = arith.mulf %759, %763 : vector<8x128xf32>
    %c24_234 = arith.constant 24 : index
    %c0_235 = arith.constant 0 : index
    %765 = vector.load %arg17[%c24_234, %c0_235] : memref<64x128xf32, #tpu.memory_space<vmem>>, vector<8x128xf32>
    tpu.vector_store %arg17[%c24_234, %c0_235], %739 {strides = array<i32>} : memref<64x128xf32, #tpu.memory_space<vmem>>, vector<8x128xf32>,
    %c32_236 = arith.constant 32 : index
    %c0_237 = arith.constant 0 : index
    %766 = vector.load %arg18[%c32_236, %c0_237] : memref<64x128xf32, #tpu.memory_space<vmem>>, vector<8x128xf32>
    tpu.vector_store %arg18[%c32_236, %c0_237], %764 {strides = array<i32>} : memref<64x128xf32, #tpu.memory_space<vmem>>, vector<8x128xf32>,
    %c32_238 = arith.constant 32 : index
    %c0_239 = arith.constant 0 : index
    %767 = vector.load %arg19[%c32_238, %c0_239] : memref<64x512xf32, #tpu.memory_space<vmem>>, vector<8x512xf32>
    %768 = arith.truncf %739 : vector<8x128xf32> to vector<8x128xbf16>
    %cst_240 = arith.constant dense<0.000000e+00> : vector<8x512xf32>
    %769 = tpu.matmul %768, %521, %cst_240 {dimension_numbers = #tpu.dot_dimension_numbers<[1], [0], [0], [1], [0, 0, 1, 1], [], []>} : vector<8x128xbf16>, vector<128x512xbf16>, vector<8x512xf32> -> vector<8x512xf32>
    %770 = arith.addf %767, %769 : vector<8x512xf32>
    %c24_241 = arith.constant 24 : index
    %c0_242 = arith.constant 0 : index
    %771 = vector.load %arg20[%c24_241, %c0_242] : memref<64x512xf32, #tpu.memory_space<vmem>>, vector<8x512xf32>
    %772 = arith.truncf %764 : vector<8x128xf32> to vector<8x128xbf16>
    %cst_243 = arith.constant dense<0.000000e+00> : vector<8x512xf32>
    %773 = tpu.matmul %772, %522, %cst_243 {dimension_numbers = #tpu.dot_dimension_numbers<[1], [0], [0], [1], [0, 0, 1, 1], [], []>} : vector<8x128xbf16>, vector<128x512xbf16>, vector<8x512xf32> -> vector<8x512xf32>
    %774 = arith.addf %771, %773 : vector<8x512xf32>
    %775 = vector.extract_strided_slice %770 {offsets = [0, 0], sizes = [8, 128], strides = [1, 1]} : vector<8x512xf32> to vector<8x128xf32>
    %776 = arith.negf %775 : vector<8x128xf32>
    %777 = math.exp %776 : vector<8x128xf32>
    %cst_244 = arith.constant 1.000000e+00 : f32
    %778 = vector.broadcast %cst_244 : f32 to vector<8x128xf32>
    %779 = arith.addf %778, %777 : vector<8x128xf32>
    %780 = arith.divf %778, %779 : vector<8x128xf32>
    %781 = vector.extract_strided_slice %770 {offsets = [0, 128], sizes = [8, 128], strides = [1, 1]} : vector<8x512xf32> to vector<8x128xf32>
    %782 = arith.negf %781 : vector<8x128xf32>
    %783 = math.exp %782 : vector<8x128xf32>
    %cst_245 = arith.constant 1.000000e+00 : f32
    %784 = vector.broadcast %cst_245 : f32 to vector<8x128xf32>
    %785 = arith.addf %784, %783 : vector<8x128xf32>
    %786 = arith.divf %784, %785 : vector<8x128xf32>
    %787 = vector.extract_strided_slice %770 {offsets = [0, 256], sizes = [8, 128], strides = [1, 1]} : vector<8x512xf32> to vector<8x128xf32>
    %788 = math.tanh %787 : vector<8x128xf32>
    %789 = vector.extract_strided_slice %770 {offsets = [0, 384], sizes = [8, 128], strides = [1, 1]} : vector<8x512xf32> to vector<8x128xf32>
    %790 = arith.negf %789 : vector<8x128xf32>
    %791 = math.exp %790 : vector<8x128xf32>
    %cst_246 = arith.constant 1.000000e+00 : f32
    %792 = vector.broadcast %cst_246 : f32 to vector<8x128xf32>
    %793 = arith.addf %792, %791 : vector<8x128xf32>
    %794 = arith.divf %792, %793 : vector<8x128xf32>
    %795 = arith.mulf %786, %737 : vector<8x128xf32>
    %796 = arith.mulf %780, %788 : vector<8x128xf32>
    %797 = arith.addf %795, %796 : vector<8x128xf32>
    %798 = math.tanh %797 : vector<8x128xf32>
    %799 = arith.mulf %794, %798 : vector<8x128xf32>
    %800 = vector.extract_strided_slice %774 {offsets = [0, 0], sizes = [8, 128], strides = [1, 1]} : vector<8x512xf32> to vector<8x128xf32>
    %801 = arith.negf %800 : vector<8x128xf32>
    %802 = math.exp %801 : vector<8x128xf32>
    %cst_247 = arith.constant 1.000000e+00 : f32
    %803 = vector.broadcast %cst_247 : f32 to vector<8x128xf32>
    %804 = arith.addf %803, %802 : vector<8x128xf32>
    %805 = arith.divf %803, %804 : vector<8x128xf32>
    %806 = vector.extract_strided_slice %774 {offsets = [0, 128], sizes = [8, 128], strides = [1, 1]} : vector<8x512xf32> to vector<8x128xf32>
    %807 = arith.negf %806 : vector<8x128xf32>
    %808 = math.exp %807 : vector<8x128xf32>
    %cst_248 = arith.constant 1.000000e+00 : f32
    %809 = vector.broadcast %cst_248 : f32 to vector<8x128xf32>
    %810 = arith.addf %809, %808 : vector<8x128xf32>
    %811 = arith.divf %809, %810 : vector<8x128xf32>
    %812 = vector.extract_strided_slice %774 {offsets = [0, 256], sizes = [8, 128], strides = [1, 1]} : vector<8x512xf32> to vector<8x128xf32>
    %813 = math.tanh %812 : vector<8x128xf32>
    %814 = vector.extract_strided_slice %774 {offsets = [0, 384], sizes = [8, 128], strides = [1, 1]} : vector<8x512xf32> to vector<8x128xf32>
    %815 = arith.negf %814 : vector<8x128xf32>
    %816 = math.exp %815 : vector<8x128xf32>
    %cst_249 = arith.constant 1.000000e+00 : f32
    %817 = vector.broadcast %cst_249 : f32 to vector<8x128xf32>
    %818 = arith.addf %817, %816 : vector<8x128xf32>
    %819 = arith.divf %817, %818 : vector<8x128xf32>
    %820 = arith.mulf %811, %762 : vector<8x128xf32>
    %821 = arith.mulf %805, %813 : vector<8x128xf32>
    %822 = arith.addf %820, %821 : vector<8x128xf32>
    %823 = math.tanh %822 : vector<8x128xf32>
    %824 = arith.mulf %819, %823 : vector<8x128xf32>
    %c32_250 = arith.constant 32 : index
    %c0_251 = arith.constant 0 : index
    %825 = vector.load %arg17[%c32_250, %c0_251] : memref<64x128xf32, #tpu.memory_space<vmem>>, vector<8x128xf32>
    tpu.vector_store %arg17[%c32_250, %c0_251], %799 {strides = array<i32>} : memref<64x128xf32, #tpu.memory_space<vmem>>, vector<8x128xf32>,
    %c24_252 = arith.constant 24 : index
    %c0_253 = arith.constant 0 : index
    %826 = vector.load %arg18[%c24_252, %c0_253] : memref<64x128xf32, #tpu.memory_space<vmem>>, vector<8x128xf32>
    tpu.vector_store %arg18[%c24_252, %c0_253], %824 {strides = array<i32>} : memref<64x128xf32, #tpu.memory_space<vmem>>, vector<8x128xf32>,
    %c40_254 = arith.constant 40 : index
    %c0_255 = arith.constant 0 : index
    %827 = vector.load %arg19[%c40_254, %c0_255] : memref<64x512xf32, #tpu.memory_space<vmem>>, vector<8x512xf32>
    %828 = arith.truncf %799 : vector<8x128xf32> to vector<8x128xbf16>
    %cst_256 = arith.constant dense<0.000000e+00> : vector<8x512xf32>
    %829 = tpu.matmul %828, %521, %cst_256 {dimension_numbers = #tpu.dot_dimension_numbers<[1], [0], [0], [1], [0, 0, 1, 1], [], []>} : vector<8x128xbf16>, vector<128x512xbf16>, vector<8x512xf32> -> vector<8x512xf32>
    %830 = arith.addf %827, %829 : vector<8x512xf32>
    %c16_257 = arith.constant 16 : index
    %c0_258 = arith.constant 0 : index
    %831 = vector.load %arg20[%c16_257, %c0_258] : memref<64x512xf32, #tpu.memory_space<vmem>>, vector<8x512xf32>
    %832 = arith.truncf %824 : vector<8x128xf32> to vector<8x128xbf16>
    %cst_259 = arith.constant dense<0.000000e+00> : vector<8x512xf32>
    %833 = tpu.matmul %832, %522, %cst_259 {dimension_numbers = #tpu.dot_dimension_numbers<[1], [0], [0], [1], [0, 0, 1, 1], [], []>} : vector<8x128xbf16>, vector<128x512xbf16>, vector<8x512xf32> -> vector<8x512xf32>
    %834 = arith.addf %831, %833 : vector<8x512xf32>
    %835 = vector.extract_strided_slice %830 {offsets = [0, 0], sizes = [8, 128], strides = [1, 1]} : vector<8x512xf32> to vector<8x128xf32>
    %836 = arith.negf %835 : vector<8x128xf32>
    %837 = math.exp %836 : vector<8x128xf32>
    %cst_260 = arith.constant 1.000000e+00 : f32
    %838 = vector.broadcast %cst_260 : f32 to vector<8x128xf32>
    %839 = arith.addf %838, %837 : vector<8x128xf32>
    %840 = arith.divf %838, %839 : vector<8x128xf32>
    %841 = vector.extract_strided_slice %830 {offsets = [0, 128], sizes = [8, 128], strides = [1, 1]} : vector<8x512xf32> to vector<8x128xf32>
    %842 = arith.negf %841 : vector<8x128xf32>
    %843 = math.exp %842 : vector<8x128xf32>
    %cst_261 = arith.constant 1.000000e+00 : f32
    %844 = vector.broadcast %cst_261 : f32 to vector<8x128xf32>
    %845 = arith.addf %844, %843 : vector<8x128xf32>
    %846 = arith.divf %844, %845 : vector<8x128xf32>
    %847 = vector.extract_strided_slice %830 {offsets = [0, 256], sizes = [8, 128], strides = [1, 1]} : vector<8x512xf32> to vector<8x128xf32>
    %848 = math.tanh %847 : vector<8x128xf32>
    %849 = vector.extract_strided_slice %830 {offsets = [0, 384], sizes = [8, 128], strides = [1, 1]} : vector<8x512xf32> to vector<8x128xf32>
    %850 = arith.negf %849 : vector<8x128xf32>
    %851 = math.exp %850 : vector<8x128xf32>
    %cst_262 = arith.constant 1.000000e+00 : f32
    %852 = vector.broadcast %cst_262 : f32 to vector<8x128xf32>
    %853 = arith.addf %852, %851 : vector<8x128xf32>
    %854 = arith.divf %852, %853 : vector<8x128xf32>
    %855 = arith.mulf %846, %797 : vector<8x128xf32>
    %856 = arith.mulf %840, %848 : vector<8x128xf32>
    %857 = arith.addf %855, %856 : vector<8x128xf32>
    %858 = math.tanh %857 : vector<8x128xf32>
    %859 = arith.mulf %854, %858 : vector<8x128xf32>
    %860 = vector.extract_strided_slice %834 {offsets = [0, 0], sizes = [8, 128], strides = [1, 1]} : vector<8x512xf32> to vector<8x128xf32>
    %861 = arith.negf %860 : vector<8x128xf32>
    %862 = math.exp %861 : vector<8x128xf32>
    %cst_263 = arith.constant 1.000000e+00 : f32
    %863 = vector.broadcast %cst_263 : f32 to vector<8x128xf32>
    %864 = arith.addf %863, %862 : vector<8x128xf32>
    %865 = arith.divf %863, %864 : vector<8x128xf32>
    %866 = vector.extract_strided_slice %834 {offsets = [0, 128], sizes = [8, 128], strides = [1, 1]} : vector<8x512xf32> to vector<8x128xf32>
    %867 = arith.negf %866 : vector<8x128xf32>
    %868 = math.exp %867 : vector<8x128xf32>
    %cst_264 = arith.constant 1.000000e+00 : f32
    %869 = vector.broadcast %cst_264 : f32 to vector<8x128xf32>
    %870 = arith.addf %869, %868 : vector<8x128xf32>
    %871 = arith.divf %869, %870 : vector<8x128xf32>
    %872 = vector.extract_strided_slice %834 {offsets = [0, 256], sizes = [8, 128], strides = [1, 1]} : vector<8x512xf32> to vector<8x128xf32>
    %873 = math.tanh %872 : vector<8x128xf32>
    %874 = vector.extract_strided_slice %834 {offsets = [0, 384], sizes = [8, 128], strides = [1, 1]} : vector<8x512xf32> to vector<8x128xf32>
    %875 = arith.negf %874 : vector<8x128xf32>
    %876 = math.exp %875 : vector<8x128xf32>
    %cst_265 = arith.constant 1.000000e+00 : f32
    %877 = vector.broadcast %cst_265 : f32 to vector<8x128xf32>
    %878 = arith.addf %877, %876 : vector<8x128xf32>
    %879 = arith.divf %877, %878 : vector<8x128xf32>
    %880 = arith.mulf %871, %822 : vector<8x128xf32>
    %881 = arith.mulf %865, %873 : vector<8x128xf32>
    %882 = arith.addf %880, %881 : vector<8x128xf32>
    %883 = math.tanh %882 : vector<8x128xf32>
    %884 = arith.mulf %879, %883 : vector<8x128xf32>
    %c40_266 = arith.constant 40 : index
    %c0_267 = arith.constant 0 : index
    %885 = vector.load %arg17[%c40_266, %c0_267] : memref<64x128xf32, #tpu.memory_space<vmem>>, vector<8x128xf32>
    tpu.vector_store %arg17[%c40_266, %c0_267], %859 {strides = array<i32>} : memref<64x128xf32, #tpu.memory_space<vmem>>, vector<8x128xf32>,
    %c16_268 = arith.constant 16 : index
    %c0_269 = arith.constant 0 : index
    %886 = vector.load %arg18[%c16_268, %c0_269] : memref<64x128xf32, #tpu.memory_space<vmem>>, vector<8x128xf32>
    tpu.vector_store %arg18[%c16_268, %c0_269], %884 {strides = array<i32>} : memref<64x128xf32, #tpu.memory_space<vmem>>, vector<8x128xf32>,
    %c48_270 = arith.constant 48 : index
    %c0_271 = arith.constant 0 : index
    %887 = vector.load %arg19[%c48_270, %c0_271] : memref<64x512xf32, #tpu.memory_space<vmem>>, vector<8x512xf32>
    %888 = arith.truncf %859 : vector<8x128xf32> to vector<8x128xbf16>
    %cst_272 = arith.constant dense<0.000000e+00> : vector<8x512xf32>
    %889 = tpu.matmul %888, %521, %cst_272 {dimension_numbers = #tpu.dot_dimension_numbers<[1], [0], [0], [1], [0, 0, 1, 1], [], []>} : vector<8x128xbf16>, vector<128x512xbf16>, vector<8x512xf32> -> vector<8x512xf32>
    %890 = arith.addf %887, %889 : vector<8x512xf32>
    %c8_273 = arith.constant 8 : index
    %c0_274 = arith.constant 0 : index
    %891 = vector.load %arg20[%c8_273, %c0_274] : memref<64x512xf32, #tpu.memory_space<vmem>>, vector<8x512xf32>
    %892 = arith.truncf %884 : vector<8x128xf32> to vector<8x128xbf16>
    %cst_275 = arith.constant dense<0.000000e+00> : vector<8x512xf32>
    %893 = tpu.matmul %892, %522, %cst_275 {dimension_numbers = #tpu.dot_dimension_numbers<[1], [0], [0], [1], [0, 0, 1, 1], [], []>} : vector<8x128xbf16>, vector<128x512xbf16>, vector<8x512xf32> -> vector<8x512xf32>
    %894 = arith.addf %891, %893 : vector<8x512xf32>
    %895 = vector.extract_strided_slice %890 {offsets = [0, 0], sizes = [8, 128], strides = [1, 1]} : vector<8x512xf32> to vector<8x128xf32>
    %896 = arith.negf %895 : vector<8x128xf32>
    %897 = math.exp %896 : vector<8x128xf32>
    %cst_276 = arith.constant 1.000000e+00 : f32
    %898 = vector.broadcast %cst_276 : f32 to vector<8x128xf32>
    %899 = arith.addf %898, %897 : vector<8x128xf32>
    %900 = arith.divf %898, %899 : vector<8x128xf32>
    %901 = vector.extract_strided_slice %890 {offsets = [0, 128], sizes = [8, 128], strides = [1, 1]} : vector<8x512xf32> to vector<8x128xf32>
    %902 = arith.negf %901 : vector<8x128xf32>
    %903 = math.exp %902 : vector<8x128xf32>
    %cst_277 = arith.constant 1.000000e+00 : f32
    %904 = vector.broadcast %cst_277 : f32 to vector<8x128xf32>
    %905 = arith.addf %904, %903 : vector<8x128xf32>
    %906 = arith.divf %904, %905 : vector<8x128xf32>
    %907 = vector.extract_strided_slice %890 {offsets = [0, 256], sizes = [8, 128], strides = [1, 1]} : vector<8x512xf32> to vector<8x128xf32>
    %908 = math.tanh %907 : vector<8x128xf32>
    %909 = vector.extract_strided_slice %890 {offsets = [0, 384], sizes = [8, 128], strides = [1, 1]} : vector<8x512xf32> to vector<8x128xf32>
    %910 = arith.negf %909 : vector<8x128xf32>
    %911 = math.exp %910 : vector<8x128xf32>
    %cst_278 = arith.constant 1.000000e+00 : f32
    %912 = vector.broadcast %cst_278 : f32 to vector<8x128xf32>
    %913 = arith.addf %912, %911 : vector<8x128xf32>
    %914 = arith.divf %912, %913 : vector<8x128xf32>
    %915 = arith.mulf %906, %857 : vector<8x128xf32>
    %916 = arith.mulf %900, %908 : vector<8x128xf32>
    %917 = arith.addf %915, %916 : vector<8x128xf32>
    %918 = math.tanh %917 : vector<8x128xf32>
    %919 = arith.mulf %914, %918 : vector<8x128xf32>
    %920 = vector.extract_strided_slice %894 {offsets = [0, 0], sizes = [8, 128], strides = [1, 1]} : vector<8x512xf32> to vector<8x128xf32>
    %921 = arith.negf %920 : vector<8x128xf32>
    %922 = math.exp %921 : vector<8x128xf32>
    %cst_279 = arith.constant 1.000000e+00 : f32
    %923 = vector.broadcast %cst_279 : f32 to vector<8x128xf32>
    %924 = arith.addf %923, %922 : vector<8x128xf32>
    %925 = arith.divf %923, %924 : vector<8x128xf32>
    %926 = vector.extract_strided_slice %894 {offsets = [0, 128], sizes = [8, 128], strides = [1, 1]} : vector<8x512xf32> to vector<8x128xf32>
    %927 = arith.negf %926 : vector<8x128xf32>
    %928 = math.exp %927 : vector<8x128xf32>
    %cst_280 = arith.constant 1.000000e+00 : f32
    %929 = vector.broadcast %cst_280 : f32 to vector<8x128xf32>
    %930 = arith.addf %929, %928 : vector<8x128xf32>
    %931 = arith.divf %929, %930 : vector<8x128xf32>
    %932 = vector.extract_strided_slice %894 {offsets = [0, 256], sizes = [8, 128], strides = [1, 1]} : vector<8x512xf32> to vector<8x128xf32>
    %933 = math.tanh %932 : vector<8x128xf32>
    %934 = vector.extract_strided_slice %894 {offsets = [0, 384], sizes = [8, 128], strides = [1, 1]} : vector<8x512xf32> to vector<8x128xf32>
    %935 = arith.negf %934 : vector<8x128xf32>
    %936 = math.exp %935 : vector<8x128xf32>
    %cst_281 = arith.constant 1.000000e+00 : f32
    %937 = vector.broadcast %cst_281 : f32 to vector<8x128xf32>
    %938 = arith.addf %937, %936 : vector<8x128xf32>
    %939 = arith.divf %937, %938 : vector<8x128xf32>
    %940 = arith.mulf %931, %882 : vector<8x128xf32>
    %941 = arith.mulf %925, %933 : vector<8x128xf32>
    %942 = arith.addf %940, %941 : vector<8x128xf32>
    %943 = math.tanh %942 : vector<8x128xf32>
    %944 = arith.mulf %939, %943 : vector<8x128xf32>
    %c48_282 = arith.constant 48 : index
    %c0_283 = arith.constant 0 : index
    %945 = vector.load %arg17[%c48_282, %c0_283] : memref<64x128xf32, #tpu.memory_space<vmem>>, vector<8x128xf32>
    tpu.vector_store %arg17[%c48_282, %c0_283], %919 {strides = array<i32>} : memref<64x128xf32, #tpu.memory_space<vmem>>, vector<8x128xf32>,
    %c8_284 = arith.constant 8 : index
    %c0_285 = arith.constant 0 : index
    %946 = vector.load %arg18[%c8_284, %c0_285] : memref<64x128xf32, #tpu.memory_space<vmem>>, vector<8x128xf32>
    tpu.vector_store %arg18[%c8_284, %c0_285], %944 {strides = array<i32>} : memref<64x128xf32, #tpu.memory_space<vmem>>, vector<8x128xf32>,
    %c56_286 = arith.constant 56 : index
    %c0_287 = arith.constant 0 : index
    %947 = vector.load %arg19[%c56_286, %c0_287] : memref<64x512xf32, #tpu.memory_space<vmem>>, vector<8x512xf32>
    %948 = arith.truncf %919 : vector<8x128xf32> to vector<8x128xbf16>
    %cst_288 = arith.constant dense<0.000000e+00> : vector<8x512xf32>
    %949 = tpu.matmul %948, %521, %cst_288 {dimension_numbers = #tpu.dot_dimension_numbers<[1], [0], [0], [1], [0, 0, 1, 1], [], []>} : vector<8x128xbf16>, vector<128x512xbf16>, vector<8x512xf32> -> vector<8x512xf32>
    %950 = arith.addf %947, %949 : vector<8x512xf32>
    %c0_289 = arith.constant 0 : index
    %c0_290 = arith.constant 0 : index
    %951 = vector.load %arg20[%c0_289, %c0_290] : memref<64x512xf32, #tpu.memory_space<vmem>>, vector<8x512xf32>
    %952 = arith.truncf %944 : vector<8x128xf32> to vector<8x128xbf16>
    %cst_291 = arith.constant dense<0.000000e+00> : vector<8x512xf32>
    %953 = tpu.matmul %952, %522, %cst_291 {dimension_numbers = #tpu.dot_dimension_numbers<[1], [0], [0], [1], [0, 0, 1, 1], [], []>} : vector<8x128xbf16>, vector<128x512xbf16>, vector<8x512xf32> -> vector<8x512xf32>
    %954 = arith.addf %951, %953 : vector<8x512xf32>
    %955 = vector.extract_strided_slice %950 {offsets = [0, 0], sizes = [8, 128], strides = [1, 1]} : vector<8x512xf32> to vector<8x128xf32>
    %956 = arith.negf %955 : vector<8x128xf32>
    %957 = math.exp %956 : vector<8x128xf32>
    %cst_292 = arith.constant 1.000000e+00 : f32
    %958 = vector.broadcast %cst_292 : f32 to vector<8x128xf32>
    %959 = arith.addf %958, %957 : vector<8x128xf32>
    %960 = arith.divf %958, %959 : vector<8x128xf32>
    %961 = vector.extract_strided_slice %950 {offsets = [0, 128], sizes = [8, 128], strides = [1, 1]} : vector<8x512xf32> to vector<8x128xf32>
    %962 = arith.negf %961 : vector<8x128xf32>
    %963 = math.exp %962 : vector<8x128xf32>
    %cst_293 = arith.constant 1.000000e+00 : f32
    %964 = vector.broadcast %cst_293 : f32 to vector<8x128xf32>
    %965 = arith.addf %964, %963 : vector<8x128xf32>
    %966 = arith.divf %964, %965 : vector<8x128xf32>
    %967 = vector.extract_strided_slice %950 {offsets = [0, 256], sizes = [8, 128], strides = [1, 1]} : vector<8x512xf32> to vector<8x128xf32>
    %968 = math.tanh %967 : vector<8x128xf32>
    %969 = vector.extract_strided_slice %950 {offsets = [0, 384], sizes = [8, 128], strides = [1, 1]} : vector<8x512xf32> to vector<8x128xf32>
    %970 = arith.negf %969 : vector<8x128xf32>
    %971 = math.exp %970 : vector<8x128xf32>
    %cst_294 = arith.constant 1.000000e+00 : f32
    %972 = vector.broadcast %cst_294 : f32 to vector<8x128xf32>
    %973 = arith.addf %972, %971 : vector<8x128xf32>
    %974 = arith.divf %972, %973 : vector<8x128xf32>
    %975 = arith.mulf %966, %917 : vector<8x128xf32>
    %976 = arith.mulf %960, %968 : vector<8x128xf32>
    %977 = arith.addf %975, %976 : vector<8x128xf32>
    %978 = math.tanh %977 : vector<8x128xf32>
    %979 = arith.mulf %974, %978 : vector<8x128xf32>
    %980 = vector.extract_strided_slice %954 {offsets = [0, 0], sizes = [8, 128], strides = [1, 1]} : vector<8x512xf32> to vector<8x128xf32>
    %981 = arith.negf %980 : vector<8x128xf32>
    %982 = math.exp %981 : vector<8x128xf32>
    %cst_295 = arith.constant 1.000000e+00 : f32
    %983 = vector.broadcast %cst_295 : f32 to vector<8x128xf32>
    %984 = arith.addf %983, %982 : vector<8x128xf32>
    %985 = arith.divf %983, %984 : vector<8x128xf32>
    %986 = vector.extract_strided_slice %954 {offsets = [0, 128], sizes = [8, 128], strides = [1, 1]} : vector<8x512xf32> to vector<8x128xf32>
    %987 = arith.negf %986 : vector<8x128xf32>
    %988 = math.exp %987 : vector<8x128xf32>
    %cst_296 = arith.constant 1.000000e+00 : f32
    %989 = vector.broadcast %cst_296 : f32 to vector<8x128xf32>
    %990 = arith.addf %989, %988 : vector<8x128xf32>
    %991 = arith.divf %989, %990 : vector<8x128xf32>
    %992 = vector.extract_strided_slice %954 {offsets = [0, 256], sizes = [8, 128], strides = [1, 1]} : vector<8x512xf32> to vector<8x128xf32>
    %993 = math.tanh %992 : vector<8x128xf32>
    %994 = vector.extract_strided_slice %954 {offsets = [0, 384], sizes = [8, 128], strides = [1, 1]} : vector<8x512xf32> to vector<8x128xf32>
    %995 = arith.negf %994 : vector<8x128xf32>
    %996 = math.exp %995 : vector<8x128xf32>
    %cst_297 = arith.constant 1.000000e+00 : f32
    %997 = vector.broadcast %cst_297 : f32 to vector<8x128xf32>
    %998 = arith.addf %997, %996 : vector<8x128xf32>
    %999 = arith.divf %997, %998 : vector<8x128xf32>
    %1000 = arith.mulf %991, %942 : vector<8x128xf32>
    %1001 = arith.mulf %985, %993 : vector<8x128xf32>
    %1002 = arith.addf %1000, %1001 : vector<8x128xf32>
    %1003 = math.tanh %1002 : vector<8x128xf32>
    %1004 = arith.mulf %999, %1003 : vector<8x128xf32>
    %c56_298 = arith.constant 56 : index
    %c0_299 = arith.constant 0 : index
    %1005 = vector.load %arg17[%c56_298, %c0_299] : memref<64x128xf32, #tpu.memory_space<vmem>>, vector<8x128xf32>
    tpu.vector_store %arg17[%c56_298, %c0_299], %979 {strides = array<i32>} : memref<64x128xf32, #tpu.memory_space<vmem>>, vector<8x128xf32>,
    %c0_300 = arith.constant 0 : index
    %c0_301 = arith.constant 0 : index
    %1006 = vector.load %arg18[%c0_300, %c0_301] : memref<64x128xf32, #tpu.memory_space<vmem>>, vector<8x128xf32>
    tpu.vector_store %arg18[%c0_300, %c0_301], %1004 {strides = array<i32>} : memref<64x128xf32, #tpu.memory_space<vmem>>, vector<8x128xf32>,
    %c56_302 = arith.constant 56 : index
    %c0_303 = arith.constant 0 : index
    %1007 = vector.load %arg17[%c56_302, %c0_303] : memref<64x128xf32, #tpu.memory_space<vmem>>, vector<8x128xf32>
    %1008 = arith.truncf %1007 : vector<8x128xf32> to vector<8x128xbf16>
    %c56_304 = arith.constant 56 : index
    %c0_305 = arith.constant 0 : index
    %1009 = vector.load %arg18[%c56_304, %c0_305] : memref<64x128xf32, #tpu.memory_space<vmem>>, vector<8x128xf32>
    %1010 = arith.truncf %1009 : vector<8x128xf32> to vector<8x128xbf16>
    %c0_306 = arith.constant 0 : index
    %c0_307 = arith.constant 0 : index
    %1011 = vector.load %arg14[%c0_306, %c0_307] : memref<256x128xbf16, #tpu.memory_space<vmem>>, vector<128x128xbf16>
    %cst_308 = arith.constant dense<0.000000e+00> : vector<8x128xf32>
    %1012 = tpu.matmul %1008, %1011, %cst_308 {dimension_numbers = #tpu.dot_dimension_numbers<[1], [0], [0], [1], [0, 0, 1, 1], [], []>} : vector<8x128xbf16>, vector<128x128xbf16>, vector<8x128xf32> -> vector<8x128xf32>
    %c128_309 = arith.constant 128 : index
    %c0_310 = arith.constant 0 : index
    %1013 = vector.load %arg14[%c128_309, %c0_310] : memref<256x128xbf16, #tpu.memory_space<vmem>>, vector<128x128xbf16>
    %cst_311 = arith.constant dense<0.000000e+00> : vector<8x128xf32>
    %1014 = tpu.matmul %1010, %1013, %cst_311 {dimension_numbers = #tpu.dot_dimension_numbers<[1], [0], [0], [1], [0, 0, 1, 1], [], []>} : vector<8x128xbf16>, vector<128x128xbf16>, vector<8x128xf32> -> vector<8x128xf32>
    %1015 = arith.addf %1012, %1014 : vector<8x128xf32>
    %c0_312 = arith.constant 0 : index
    %c0_313 = arith.constant 0 : index
    %1016 = vector.load %arg15[%c0_312, %c0_313] : memref<1x128xf32, #tpu.memory_space<vmem>>, vector<1x128xf32>
    %1017 = vector.broadcast %1016 : vector<1x128xf32> to vector<8x128xf32>
    %1018 = arith.addf %1015, %1017 : vector<8x128xf32>
    %c0_314 = arith.constant 0 : index
    %c0_315 = arith.constant 0 : index
    %1019 = vector.load %arg16[%c0_314, %c0_315] : memref<8x128xf32, #tpu.memory_space<vmem>>, vector<8x128xf32>
    tpu.vector_store %arg16[%c0_314, %c0_315], %1018 {strides = array<i32>} : memref<8x128xf32, #tpu.memory_space<vmem>>, vector<8x128xf32>,
    return
  }
  func.func @transform_0(%arg0: i32) -> (i32, i32) {
    %c0_i32 = arith.constant 0 : i32
    %c0_i32_0 = arith.constant 0 : i32
    %c0_i32_1 = arith.constant 0 : i32
    return %c0_i32, %c0_i32_0 : i32, i32
  }
  func.func @transform_1(%arg0: i32) -> (i32, i32) {
    %c0_i32 = arith.constant 0 : i32
    %c0_i32_0 = arith.constant 0 : i32
    %c0_i32_1 = arith.constant 0 : i32
    return %c0_i32, %c0_i32_0 : i32, i32
  }
  func.func @transform_2(%arg0: i32) -> (i32, i32) {
    %c0_i32 = arith.constant 0 : i32
    %c0_i32_0 = arith.constant 0 : i32
    %c0_i32_1 = arith.constant 0 : i32
    return %c0_i32, %c0_i32_0 : i32, i32
  }
  func.func @transform_3(%arg0: i32) -> (i32, i32) {
    %c0_i32 = arith.constant 0 : i32
    %c0_i32_0 = arith.constant 0 : i32
    %c0_i32_1 = arith.constant 0 : i32
    return %c0_i32, %c0_i32_0 : i32, i32
  }
  func.func @transform_4(%arg0: i32) -> (i32, i32) {
    %c0_i32 = arith.constant 0 : i32
    %c0_i32_0 = arith.constant 0 : i32
    %c0_i32_1 = arith.constant 0 : i32
    return %c0_i32, %c0_i32_0 : i32, i32
  }
  func.func @transform_5(%arg0: i32) -> (i32, i32) {
    %c0_i32 = arith.constant 0 : i32
    %c0_i32_0 = arith.constant 0 : i32
    %c0_i32_1 = arith.constant 0 : i32
    return %c0_i32, %c0_i32_0 : i32, i32
  }
  func.func @transform_6(%arg0: i32) -> (i32, i32) {
    %c0_i32 = arith.constant 0 : i32
    %c0_i32_0 = arith.constant 0 : i32
    %c0_i32_1 = arith.constant 0 : i32
    return %c0_i32, %c0_i32_0 : i32, i32
  }
  func.func @transform_7(%arg0: i32) -> (i32, i32) {
    %c0_i32 = arith.constant 0 : i32
    %c0_i32_0 = arith.constant 0 : i32
    %c0_i32_1 = arith.constant 0 : i32
    return %c0_i32, %c0_i32_0 : i32, i32
  }
  func.func @transform_8(%arg0: i32) -> (i32, i32) {
    %c0_i32 = arith.constant 0 : i32
    %c0_i32_0 = arith.constant 0 : i32
    %c0_i32_1 = arith.constant 0 : i32
    return %c0_i32, %c0_i32_0 : i32, i32
  }
  func.func @transform_9(%arg0: i32) -> (i32, i32) {
    %c0_i32 = arith.constant 0 : i32
    %c0_i32_0 = arith.constant 0 : i32
    %c0_i32_1 = arith.constant 0 : i32
    return %c0_i32, %c0_i32_0 : i32, i32
  }
  func.func @transform_10(%arg0: i32) -> (i32, i32) {
    %c0_i32 = arith.constant 0 : i32
    %c0_i32_0 = arith.constant 0 : i32
    %c0_i32_1 = arith.constant 0 : i32
    return %c0_i32, %c0_i32_0 : i32, i32
  }
  func.func @transform_11(%arg0: i32) -> (i32, i32) {
    %c0_i32 = arith.constant 0 : i32
    %c0_i32_0 = arith.constant 0 : i32
    %c0_i32_1 = arith.constant 0 : i32
    return %c0_i32, %c0_i32_0 : i32, i32
  }
  func.func @transform_12(%arg0: i32) -> (i32, i32) {
    %c0_i32 = arith.constant 0 : i32
    %c0_i32_0 = arith.constant 0 : i32
    %c0_i32_1 = arith.constant 0 : i32
    return %c0_i32, %c0_i32_0 : i32, i32
  }
  func.func @transform_13(%arg0: i32) -> (i32, i32) {
    %c0_i32 = arith.constant 0 : i32
    %c0_i32_0 = arith.constant 0 : i32
    %c0_i32_1 = arith.constant 0 : i32
    return %c0_i32, %c0_i32_0 : i32, i32
  }
  func.func @transform_14(%arg0: i32) -> (i32, i32) {
    %c0_i32 = arith.constant 0 : i32
    %c0_i32_0 = arith.constant 0 : i32
    %c0_i32_1 = arith.constant 0 : i32
    return %c0_i32, %c0_i32_0 : i32, i32
  }
  func.func @transform_15(%arg0: i32) -> (i32, i32) {
    %c0_i32 = arith.constant 0 : i32
    %c0_i32_0 = arith.constant 0 : i32
    %c0_i32_1 = arith.constant 0 : i32
    return %c0_i32, %c0_i32_0 : i32, i32
  }
}

</mosaic_0001>

<llo_original>
// kernel: text_rnn_forward.1
$region0: #{text_rnn_forward.1}
  #allocation0 [shape = 'u32[]', space=smem, size = 0x4, offset = 0x4, fixed_abs, tag = 'smem constant byte address 0x4 - core index']
  #allocation1 [shape = 'u32[72,128]{1,0:T(1,128)}', space=vmem, size = 0x9000, scoped, tag = 'internal scratch']
  #allocation2 [shape = 'f32[64,128]{1,0:T(8,128)}', space=vmem, size = 0x8000, scoped, tag = 'scratch operand']
  #allocation3 [shape = 'f32[64,128]{1,0:T(8,128)}', space=vmem, size = 0x8000, scoped, tag = 'scratch operand']
  #allocation4 [shape = 'f32[64,512]{1,0:T(8,128)}', space=vmem, size = 0x20000, scoped, tag = 'scratch operand']
  #allocation5 [shape = 'f32[64,512]{1,0:T(8,128)}', space=vmem, size = 0x20000, scoped, tag = 'scratch operand']
  %s0 = inlined_call_operand.vmem [shape: bf16[64,128], index: 0, kind: input, shape index: {}]
  %s1 = inlined_call_operand.vmem [shape: bf16[128,512], index: 1, kind: input, shape index: {}]
  %s2 = inlined_call_operand.vmem [shape: bf16[128,512], index: 2, kind: input, shape index: {}]
  %s3 = inlined_call_operand.vmem [shape: f32[1,512], index: 3, kind: input, shape index: {}]
  %s4 = inlined_call_operand.vmem [shape: bf16[128,512], index: 4, kind: input, shape index: {}]
  %s5 = inlined_call_operand.vmem [shape: bf16[128,512], index: 5, kind: input, shape index: {}]
  %s6 = inlined_call_operand.vmem [shape: f32[1,512], index: 6, kind: input, shape index: {}]
  %s7 = inlined_call_operand.vmem [shape: bf16[256,512], index: 7, kind: input, shape index: {}]
  %s8 = inlined_call_operand.vmem [shape: bf16[128,512], index: 8, kind: input, shape index: {}]
  %s9 = inlined_call_operand.vmem [shape: f32[1,512], index: 9, kind: input, shape index: {}]
  %s10 = inlined_call_operand.vmem [shape: bf16[256,512], index: 10, kind: input, shape index: {}]
  %s11 = inlined_call_operand.vmem [shape: bf16[128,512], index: 11, kind: input, shape index: {}]
  %s12 = inlined_call_operand.vmem [shape: f32[1,512], index: 12, kind: input, shape index: {}]
  %s13 = inlined_call_operand.vmem [shape: bf16[256,128], index: 13, kind: input, shape index: {}]
  %s14 = inlined_call_operand.vmem [shape: f32[1,128], index: 14, kind: input, shape index: {}]
  %s15 = inlined_call_operand.vmem [shape: f32[8,128], index: 15, kind: output, shape index: {}]
  %s16 = sld [smem:[#allocation0]]
  $region70: #{text_rnn_forward.1} parent=0
    _
  %s18 = ssub.s32 1, %s16
  %s19 = scalar_select 0, %s18, %s16
  // Predicated region
  $region2: #{text_rnn_forward.1} parent=0 // pred_check
    _
  $region3: #{text_rnn_forward.1} parent=0 // pred_check_branch
    %21 = sbr.rel (0) target = $region5
  $region4: #{text_rnn_forward.1} parent=0 // pred_region
    _
  $region5: #{text_rnn_forward.1} parent=0 // pred_fallthru
    _
  // Predicated region
  $region6: #{text_rnn_forward.1} parent=0 // pred_check
    _
  $region7: #{text_rnn_forward.1} parent=0 // pred_check_branch
    %23 = sbr.rel (0) target = $region9
  $region8: #{text_rnn_forward.1} parent=0 // pred_region
    _
  $region9: #{text_rnn_forward.1} parent=0 // pred_fallthru
    _
  // Predicated region
  $region10: #{text_rnn_forward.1} parent=0 // pred_check
    _
  $region11: #{text_rnn_forward.1} parent=0 // pred_check_branch
    %25 = sbr.rel (0) target = $region13
  $region12: #{text_rnn_forward.1} parent=0 // pred_region
    _
  $region13: #{text_rnn_forward.1} parent=0 // pred_fallthru
    _
  // Predicated region
  $region14: #{text_rnn_forward.1} parent=0 // pred_check
    _
  $region15: #{text_rnn_forward.1} parent=0 // pred_check_branch
    %27 = sbr.rel (0) target = $region17
  $region16: #{text_rnn_forward.1} parent=0 // pred_region
    _
  $region17: #{text_rnn_forward.1} parent=0 // pred_fallthru
    _
  // Predicated region
  $region18: #{text_rnn_forward.1} parent=0 // pred_check
    _
  $region19: #{text_rnn_forward.1} parent=0 // pred_check_branch
    %29 = sbr.rel (0) target = $region21
  $region20: #{text_rnn_forward.1} parent=0 // pred_region
    _
  $region21: #{text_rnn_forward.1} parent=0 // pred_fallthru
    _
  // Predicated region
  $region22: #{text_rnn_forward.1} parent=0 // pred_check
    _
  $region23: #{text_rnn_forward.1} parent=0 // pred_check_branch
    %31 = sbr.rel (0) target = $region25
  $region24: #{text_rnn_forward.1} parent=0 // pred_region
    _
  $region25: #{text_rnn_forward.1} parent=0 // pred_fallthru
    _
  // Predicated region
  $region26: #{text_rnn_forward.1} parent=0 // pred_check
    _
  $region27: #{text_rnn_forward.1} parent=0 // pred_check_branch
    %33 = sbr.rel (0) target = $region29
  $region28: #{text_rnn_forward.1} parent=0 // pred_region
    _
  $region29: #{text_rnn_forward.1} parent=0 // pred_fallthru
    _
  // Predicated region
  $region30: #{text_rnn_forward.1} parent=0 // pred_check
    _
  $region31: #{text_rnn_forward.1} parent=0 // pred_check_branch
    %35 = sbr.rel (0) target = $region33
  $region32: #{text_rnn_forward.1} parent=0 // pred_region
    _
  $region33: #{text_rnn_forward.1} parent=0 // pred_fallthru
    _
  // Predicated region
  $region34: #{text_rnn_forward.1} parent=0 // pred_check
    _
  $region35: #{text_rnn_forward.1} parent=0 // pred_check_branch
    %37 = sbr.rel (0) target = $region37
  $region36: #{text_rnn_forward.1} parent=0 // pred_region
    _
  $region37: #{text_rnn_forward.1} parent=0 // pred_fallthru
    _
  // Predicated region
  $region38: #{text_rnn_forward.1} parent=0 // pred_check
    _
  $region39: #{text_rnn_forward.1} parent=0 // pred_check_branch
    %39 = sbr.rel (0) target = $region41
  $region40: #{text_rnn_forward.1} parent=0 // pred_region
    _
  $region41: #{text_rnn_forward.1} parent=0 // pred_fallthru
    _
  // Predicated region
  $region42: #{text_rnn_forward.1} parent=0 // pred_check
    _
  $region43: #{text_rnn_forward.1} parent=0 // pred_check_branch
    %41 = sbr.rel (0) target = $region45
  $region44: #{text_rnn_forward.1} parent=0 // pred_region
    _
  $region45: #{text_rnn_forward.1} parent=0 // pred_fallthru
    _
  // Predicated region
  $region46: #{text_rnn_forward.1} parent=0 // pred_check
    _
  $region47: #{text_rnn_forward.1} parent=0 // pred_check_branch
    %43 = sbr.rel (0) target = $region49
  $region48: #{text_rnn_forward.1} parent=0 // pred_region
    _
  $region49: #{text_rnn_forward.1} parent=0 // pred_fallthru
    _
  // Predicated region
  $region50: #{text_rnn_forward.1} parent=0 // pred_check
    _
  $region51: #{text_rnn_forward.1} parent=0 // pred_check_branch
    %45 = sbr.rel (0) target = $region53
  $region52: #{text_rnn_forward.1} parent=0 // pred_region
    _
  $region53: #{text_rnn_forward.1} parent=0 // pred_fallthru
    _
  // Predicated region
  $region54: #{text_rnn_forward.1} parent=0 // pred_check
    _
  $region55: #{text_rnn_forward.1} parent=0 // pred_check_branch
    %47 = sbr.rel (0) target = $region57
  $region56: #{text_rnn_forward.1} parent=0 // pred_region
    _
  $region57: #{text_rnn_forward.1} parent=0 // pred_fallthru
    _
  // Predicated region
  $region58: #{text_rnn_forward.1} parent=0 // pred_check
    _
  $region59: #{text_rnn_forward.1} parent=0 // pred_check_branch
    %49 = sbr.rel (0) target = $region61
  $region60: #{text_rnn_forward.1} parent=0 // pred_region
    _
  $region61: #{text_rnn_forward.1} parent=0 // pred_fallthru
    _
  %v51 = vld [vmem:[%s0] sm:$0xf]
  %v52 = vld [vmem:[%s0 + $0x4] sm:$0xf]
  %v53 = vld [vmem:[%s0 + $0x8] sm:$0xf]
  %v54 = vld [vmem:[%s0 + $0xc] sm:$0xf]
  %v55 = vld [vmem:[%s0 + $0x10] sm:$0xf]
  %v56 = vld [vmem:[%s0 + $0x14] sm:$0xf]
  %v57 = vld [vmem:[%s0 + $0x18] sm:$0xf]
  %v58 = vld [vmem:[%s0 + $0x1c] sm:$0xf]
  %v59 = vld [vmem:[%s1] sm:$0xff]
  %v60 = vld [vmem:[%s1 + $0x8] sm:$0xff]
  %v61 = vld [vmem:[%s1 + $0x10] sm:$0xff]
  %v62 = vld [vmem:[%s1 + $0x18] sm:$0xff]
  %v63 = vld [vmem:[%s1 + $0x20] sm:$0xff]
  %v64 = vld [vmem:[%s1 + $0x28] sm:$0xff]
  %v65 = vld [vmem:[%s1 + $0x30] sm:$0xff]
  %v66 = vld [vmem:[%s1 + $0x38] sm:$0xff]
  %v67 = vld [vmem:[%s1 + $0x40] sm:$0xff]
  %v68 = vld [vmem:[%s1 + $0x48] sm:$0xff]
  %v69 = vld [vmem:[%s1 + $0x50] sm:$0xff]
  %v70 = vld [vmem:[%s1 + $0x58] sm:$0xff]
  %v71 = vld [vmem:[%s1 + $0x60] sm:$0xff]
  %v72 = vld [vmem:[%s1 + $0x68] sm:$0xff]
  %v73 = vld [vmem:[%s1 + $0x70] sm:$0xff]
  %v74 = vld [vmem:[%s1 + $0x78] sm:$0xff]
  %v75 = vld [vmem:[%s1 + $0x80] sm:$0xff]
  %v76 = vld [vmem:[%s1 + $0x88] sm:$0xff]
  %v77 = vld [vmem:[%s1 + $0x90] sm:$0xff]
  %v78 = vld [vmem:[%s1 + $0x98] sm:$0xff]
  %v79 = vld [vmem:[%s1 + $0xa0] sm:$0xff]
  %v80 = vld [vmem:[%s1 + $0xa8] sm:$0xff]
  %v81 = vld [vmem:[%s1 + $0xb0] sm:$0xff]
  %v82 = vld [vmem:[%s1 + $0xb8] sm:$0xff]
  %v83 = vld [vmem:[%s1 + $0xc0] sm:$0xff]
  %v84 = vld [vmem:[%s1 + $0xc8] sm:$0xff]
  %v85 = vld [vmem:[%s1 + $0xd0] sm:$0xff]
  %v86 = vld [vmem:[%s1 + $0xd8] sm:$0xff]
  %v87 = vld [vmem:[%s1 + $0xe0] sm:$0xff]
  %v88 = vld [vmem:[%s1 + $0xe8] sm:$0xff]
  %v89 = vld [vmem:[%s1 + $0xf0] sm:$0xff]
  %v90 = vld [vmem:[%s1 + $0xf8] sm:$0xff]
  %v91 = vld [vmem:[%s3] sm:$0xf]
  %v93 = vperm.slane %v91, 0
  %v94 = vperm.slane %v91, 1
  %v95 = vperm.slane %v91, 2
  %v96 = vperm.slane %v91, 3
  %v109 = vunpack.c.l.b16 %v51
  %v110 = vunpack.c.l.b16 %v52
  %v111 = vunpack.c.l.b16 %v53
  %v112 = vunpack.c.l.b16 %v54
  %v113 = vunpack.c.l.b16 %v55
  %v114 = vunpack.c.l.b16 %v56
  %v115 = vunpack.c.l.b16 %v57
  %v116 = vunpack.c.l.b16 %v58
  %v117 = vpack.c.b16 %v110, %v109
  %v118 = vpack.c.b16 %v112, %v111
  %v119 = vpack.c.b16 %v114, %v113
  %v120 = vpack.c.b16 %v116, %v115
  %v157 = vunpack.c.l.b16 %v59
  %v158 = vunpack.c.h.b16 %v59
  %v159 = vunpack.c.l.b16 %v60
  %v160 = vunpack.c.h.b16 %v60
  %v161 = vunpack.c.l.b16 %v61
  %v162 = vunpack.c.h.b16 %v61
  %v163 = vunpack.c.l.b16 %v62
  %v164 = vunpack.c.h.b16 %v62
  %v165 = vunpack.c.l.b16 %v63
  %v166 = vunpack.c.h.b16 %v63
  %v167 = vunpack.c.l.b16 %v64
  %v168 = vunpack.c.h.b16 %v64
  %v169 = vunpack.c.l.b16 %v65
  %v170 = vunpack.c.h.b16 %v65
  %v171 = vunpack.c.l.b16 %v66
  %v172 = vunpack.c.h.b16 %v66
  %v173 = vunpack.c.l.b16 %v67
  %v174 = vunpack.c.h.b16 %v67
  %v175 = vunpack.c.l.b16 %v68
  %v176 = vunpack.c.h.b16 %v68
  %v177 = vunpack.c.l.b16 %v69
  %v178 = vunpack.c.h.b16 %v69
  %v179 = vunpack.c.l.b16 %v70
  %v180 = vunpack.c.h.b16 %v70
  %v181 = vunpack.c.l.b16 %v71
  %v182 = vunpack.c.h.b16 %v71
  %v183 = vunpack.c.l.b16 %v72
  %v184 = vunpack.c.h.b16 %v72
  %v185 = vunpack.c.l.b16 %v73
  %v186 = vunpack.c.h.b16 %v73
  %v187 = vunpack.c.l.b16 %v74
  %v188 = vunpack.c.h.b16 %v74
  %v189 = vunpack.c.l.b16 %v75
  %v190 = vunpack.c.h.b16 %v75
  %v191 = vunpack.c.l.b16 %v76
  %v192 = vunpack.c.h.b16 %v76
  %v193 = vunpack.c.l.b16 %v77
  %v194 = vunpack.c.h.b16 %v77
  %v195 = vunpack.c.l.b16 %v78
  %v196 = vunpack.c.h.b16 %v78
  %v197 = vunpack.c.l.b16 %v79
  %v198 = vunpack.c.h.b16 %v79
  %v199 = vunpack.c.l.b16 %v80
  %v200 = vunpack.c.h.b16 %v80
  %v201 = vunpack.c.l.b16 %v81
  %v202 = vunpack.c.h.b16 %v81
  %v203 = vunpack.c.l.b16 %v82
  %v204 = vunpack.c.h.b16 %v82
  %v205 = vunpack.c.l.b16 %v83
  %v206 = vunpack.c.h.b16 %v83
  %v207 = vunpack.c.l.b16 %v84
  %v208 = vunpack.c.h.b16 %v84
  %v209 = vunpack.c.l.b16 %v85
  %v210 = vunpack.c.h.b16 %v85
  %v211 = vunpack.c.l.b16 %v86
  %v212 = vunpack.c.h.b16 %v86
  %v213 = vunpack.c.l.b16 %v87
  %v214 = vunpack.c.h.b16 %v87
  %v215 = vunpack.c.l.b16 %v88
  %v216 = vunpack.c.h.b16 %v88
  %v217 = vunpack.c.l.b16 %v89
  %v218 = vunpack.c.h.b16 %v89
  %v219 = vunpack.c.l.b16 %v90
  %v220 = vunpack.c.h.b16 %v90
  %v221 = vpack.c.b16 %v161, %v157
  %v222 = vpack.c.b16 %v162, %v158
  %v223 = vpack.c.b16 %v163, %v159
  %v224 = vpack.c.b16 %v164, %v160
  %v225 = vpack.c.b16 %v169, %v165
  %v226 = vpack.c.b16 %v170, %v166
  %v227 = vpack.c.b16 %v171, %v167
  %v228 = vpack.c.b16 %v172, %v168
  %v229 = vpack.c.b16 %v177, %v173
  %v230 = vpack.c.b16 %v178, %v174
  %v231 = vpack.c.b16 %v179, %v175
  %v232 = vpack.c.b16 %v180, %v176
  %v233 = vpack.c.b16 %v185, %v181
  %v234 = vpack.c.b16 %v186, %v182
  %v235 = vpack.c.b16 %v187, %v183
  %v236 = vpack.c.b16 %v188, %v184
  %v237 = vpack.c.b16 %v193, %v189
  %v238 = vpack.c.b16 %v194, %v190
  %v239 = vpack.c.b16 %v195, %v191
  %v240 = vpack.c.b16 %v196, %v192
  %v241 = vpack.c.b16 %v201, %v197
  %v242 = vpack.c.b16 %v202, %v198
  %v243 = vpack.c.b16 %v203, %v199
  %v244 = vpack.c.b16 %v204, %v200
  %v245 = vpack.c.b16 %v209, %v205
  %v246 = vpack.c.b16 %v210, %v206
  %v247 = vpack.c.b16 %v211, %v207
  %v248 = vpack.c.b16 %v212, %v208
  %v249 = vpack.c.b16 %v217, %v213
  %v250 = vpack.c.b16 %v218, %v214
  %v251 = vpack.c.b16 %v219, %v215
  %v252 = vpack.c.b16 %v220, %v216
  %285 = vmatpush.bf16.msra.mxu0 %v249
  %286 = vmatpush.bf16.msra.mxu0 %v245
  %287 = vmatpush.bf16.msra.mxu0 %v241
  %288 = vmatpush.bf16.msra.mxu0 %v237
  %289 = vmatpush.bf16.msra.mxu0 %v233
  %290 = vmatpush.bf16.msra.mxu0 %v229
  %291 = vmatpush.bf16.msra.mxu0 %v225
  %292 = vmatpush.bf16.msra.mxu0 %v221
  %293 = vmatmul.bf16.gmra.mxu0 %v117
  %v294 = vpop.f32.mrf.mxu0
  %v295 = vadd.f32 %v93, %v294
  %v296 = vpop.f32.mrf.mxu0
  %v297 = vadd.f32 %v93, %v296
  %298 = vmatmul.bf16.gmra.mxu0 %v118
  %v299 = vpop.f32.mrf.mxu0
  %v300 = vadd.f32 %v93, %v299
  %v301 = vpop.f32.mrf.mxu0
  %v302 = vadd.f32 %v93, %v301
  %303 = vmatmul.bf16.gmra.mxu0 %v119
  %v304 = vpop.f32.mrf.mxu0
  %v305 = vadd.f32 %v93, %v304
  %v306 = vpop.f32.mrf.mxu0
  %v307 = vadd.f32 %v93, %v306
  %308 = vmatmul.bf16.gmra.mxu0 %v120
  %v309 = vpop.f32.mrf.mxu0
  %v310 = vadd.f32 %v93, %v309
  %v311 = vpop.f32.mrf.mxu0
  %v312 = vadd.f32 %v93, %v311
  %313 = vdwg.mxu0
  %314 = vmatpush.bf16.msra.mxu0 %v250
  %315 = vmatpush.bf16.msra.mxu0 %v246
  %316 = vmatpush.bf16.msra.mxu0 %v242
  %317 = vmatpush.bf16.msra.mxu0 %v238
  %318 = vmatpush.bf16.msra.mxu0 %v234
  %319 = vmatpush.bf16.msra.mxu0 %v230
  %320 = vmatpush.bf16.msra.mxu0 %v226
  %321 = vmatpush.bf16.msra.mxu0 %v222
  %322 = vmatmul.bf16.gmra.mxu0 %v117
  %v323 = vpop.f32.mrf.mxu0
  %v324 = vadd.f32 %v94, %v323
  %v325 = vpop.f32.mrf.mxu0
  %v326 = vadd.f32 %v94, %v325
  %327 = vmatmul.bf16.gmra.mxu0 %v118
  %v328 = vpop.f32.mrf.mxu0
  %v329 = vadd.f32 %v94, %v328
  %v330 = vpop.f32.mrf.mxu0
  %v331 = vadd.f32 %v94, %v330
  %332 = vmatmul.bf16.gmra.mxu0 %v119
  %v333 = vpop.f32.mrf.mxu0
  %v334 = vadd.f32 %v94, %v333
  %v335 = vpop.f32.mrf.mxu0
  %v336 = vadd.f32 %v94, %v335
  %337 = vmatmul.bf16.gmra.mxu0 %v120
  %v338 = vpop.f32.mrf.mxu0
  %v339 = vadd.f32 %v94, %v338
  %v340 = vpop.f32.mrf.mxu0
  %v341 = vadd.f32 %v94, %v340
  %342 = vdwg.mxu0
  %343 = vmatpush.bf16.msra.mxu0 %v251
  %344 = vmatpush.bf16.msra.mxu0 %v247
  %345 = vmatpush.bf16.msra.mxu0 %v243
  %346 = vmatpush.bf16.msra.mxu0 %v239
  %347 = vmatpush.bf16.msra.mxu0 %v235
  %348 = vmatpush.bf16.msra.mxu0 %v231
  %349 = vmatpush.bf16.msra.mxu0 %v227
  %350 = vmatpush.bf16.msra.mxu0 %v223
  %351 = vmatmul.bf16.gmra.mxu0 %v117
  %v352 = vpop.f32.mrf.mxu0
  %v353 = vadd.f32 %v95, %v352
  %v354 = vpop.f32.mrf.mxu0
  %v355 = vadd.f32 %v95, %v354
  %356 = vmatmul.bf16.gmra.mxu0 %v118
  %v357 = vpop.f32.mrf.mxu0
  %v358 = vadd.f32 %v95, %v357
  %v359 = vpop.f32.mrf.mxu0
  %v360 = vadd.f32 %v95, %v359
  %361 = vmatmul.bf16.gmra.mxu0 %v119
  %v362 = vpop.f32.mrf.mxu0
  %v363 = vadd.f32 %v95, %v362
  %v364 = vpop.f32.mrf.mxu0
  %v365 = vadd.f32 %v95, %v364
  %366 = vmatmul.bf16.gmra.mxu0 %v120
  %v367 = vpop.f32.mrf.mxu0
  %v368 = vadd.f32 %v95, %v367
  %v369 = vpop.f32.mrf.mxu0
  %v370 = vadd.f32 %v95, %v369
  %371 = vdwg.mxu0
  %372 = vmatpush.bf16.msra.mxu0 %v252
  %373 = vmatpush.bf16.msra.mxu0 %v248
  %374 = vmatpush.bf16.msra.mxu0 %v244
  %375 = vmatpush.bf16.msra.mxu0 %v240
  %376 = vmatpush.bf16.msra.mxu0 %v236
  %377 = vmatpush.bf16.msra.mxu0 %v232
  %378 = vmatpush.bf16.msra.mxu0 %v228
  %379 = vmatpush.bf16.msra.mxu0 %v224
  %380 = vmatmul.bf16.gmra.mxu0 %v117
  %v381 = vpop.f32.mrf.mxu0
  %v382 = vadd.f32 %v96, %v381
  %v383 = vpop.f32.mrf.mxu0
  %v384 = vadd.f32 %v96, %v383
  %385 = vmatmul.bf16.gmra.mxu0 %v118
  %v386 = vpop.f32.mrf.mxu0
  %v387 = vadd.f32 %v96, %v386
  %v388 = vpop.f32.mrf.mxu0
  %v389 = vadd.f32 %v96, %v388
  %390 = vmatmul.bf16.gmra.mxu0 %v119
  %v391 = vpop.f32.mrf.mxu0
  %v392 = vadd.f32 %v96, %v391
  %v393 = vpop.f32.mrf.mxu0
  %v394 = vadd.f32 %v96, %v393
  %395 = vmatmul.bf16.gmra.mxu0 %v120
  %v396 = vpop.f32.mrf.mxu0
  %v397 = vadd.f32 %v96, %v396
  %v398 = vpop.f32.mrf.mxu0
  %v399 = vadd.f32 %v96, %v398
  %400 = vdwg.mxu0
  %401 = vst [vmem:[#allocation4] sm:$0xff] %v295
  %402 = vst [vmem:[#allocation4 + $0x8] sm:$0xff] %v324
  %403 = vst [vmem:[#allocation4 + $0x10] sm:$0xff] %v353
  %404 = vst [vmem:[#allocation4 + $0x18] sm:$0xff] %v382
  %405 = vst [vmem:[#allocation4 + $0x20] sm:$0xff] %v297
  %406 = vst [vmem:[#allocation4 + $0x28] sm:$0xff] %v326
  %407 = vst [vmem:[#allocation4 + $0x30] sm:$0xff] %v355
  %408 = vst [vmem:[#allocation4 + $0x38] sm:$0xff] %v384
  %409 = vst [vmem:[#allocation4 + $0x40] sm:$0xff] %v300
  %410 = vst [vmem:[#allocation4 + $0x48] sm:$0xff] %v329
  %411 = vst [vmem:[#allocation4 + $0x50] sm:$0xff] %v358
  %412 = vst [vmem:[#allocation4 + $0x58] sm:$0xff] %v387
  %413 = vst [vmem:[#allocation4 + $0x60] sm:$0xff] %v302
  %414 = vst [vmem:[#allocation4 + $0x68] sm:$0xff] %v331
  %415 = vst [vmem:[#allocation4 + $0x70] sm:$0xff] %v360
  %416 = vst [vmem:[#allocation4 + $0x78] sm:$0xff] %v389
  %417 = vst [vmem:[#allocation4 + $0x80] sm:$0xff] %v305
  %418 = vst [vmem:[#allocation4 + $0x88] sm:$0xff] %v334
  %419 = vst [vmem:[#allocation4 + $0x90] sm:$0xff] %v363
  %420 = vst [vmem:[#allocation4 + $0x98] sm:$0xff] %v392
  %421 = vst [vmem:[#allocation4 + $0xa0] sm:$0xff] %v307
  %422 = vst [vmem:[#allocation4 + $0xa8] sm:$0xff] %v336
  %423 = vst [vmem:[#allocation4 + $0xb0] sm:$0xff] %v365
  %424 = vst [vmem:[#allocation4 + $0xb8] sm:$0xff] %v394
  %425 = vst [vmem:[#allocation4 + $0xc0] sm:$0xff] %v310
  %426 = vst [vmem:[#allocation4 + $0xc8] sm:$0xff] %v339
  %427 = vst [vmem:[#allocation4 + $0xd0] sm:$0xff] %v368
  %428 = vst [vmem:[#allocation4 + $0xd8] sm:$0xff] %v397
  %429 = vst [vmem:[#allocation4 + $0xe0] sm:$0xff] %v312
  %430 = vst [vmem:[#allocation4 + $0xe8] sm:$0xff] %v341
  %431 = vst [vmem:[#allocation4 + $0xf0] sm:$0xff] %v370
  %432 = vst [vmem:[#allocation4 + $0xf8] sm:$0xff] %v399
  %v433 = vld [vmem:[%s4] sm:$0xff]
  %v434 = vld [vmem:[%s4 + $0x8] sm:$0xff]
  %v435 = vld [vmem:[%s4 + $0x10] sm:$0xff]
  %v436 = vld [vmem:[%s4 + $0x18] sm:$0xff]
  %v437 = vld [vmem:[%s4 + $0x20] sm:$0xff]
  %v438 = vld [vmem:[%s4 + $0x28] sm:$0xff]
  %v439 = vld [vmem:[%s4 + $0x30] sm:$0xff]
  %v440 = vld [vmem:[%s4 + $0x38] sm:$0xff]
  %v441 = vld [vmem:[%s4 + $0x40] sm:$0xff]
  %v442 = vld [vmem:[%s4 + $0x48] sm:$0xff]
  %v443 = vld [vmem:[%s4 + $0x50] sm:$0xff]
  %v444 = vld [vmem:[%s4 + $0x58] sm:$0xff]
  %v445 = vld [vmem:[%s4 + $0x60] sm:$0xff]
  %v446 = vld [vmem:[%s4 + $0x68] sm:$0xff]
  %v447 = vld [vmem:[%s4 + $0x70] sm:$0xff]
  %v448 = vld [vmem:[%s4 + $0x78] sm:$0xff]
  %v449 = vld [vmem:[%s4 + $0x80] sm:$0xff]
  %v450 = vld [vmem:[%s4 + $0x88] sm:$0xff]
  %v451 = vld [vmem:[%s4 + $0x90] sm:$0xff]
  %v452 = vld [vmem:[%s4 + $0x98] sm:$0xff]
  %v453 = vld [vmem:[%s4 + $0xa0] sm:$0xff]
  %v454 = vld [vmem:[%s4 + $0xa8] sm:$0xff]
  %v455 = vld [vmem:[%s4 + $0xb0] sm:$0xff]
  %v456 = vld [vmem:[%s4 + $0xb8] sm:$0xff]
  %v457 = vld [vmem:[%s4 + $0xc0] sm:$0xff]
  %v458 = vld [vmem:[%s4 + $0xc8] sm:$0xff]
  %v459 = vld [vmem:[%s4 + $0xd0] sm:$0xff]
  %v460 = vld [vmem:[%s4 + $0xd8] sm:$0xff]
  %v461 = vld [vmem:[%s4 + $0xe0] sm:$0xff]
  %v462 = vld [vmem:[%s4 + $0xe8] sm:$0xff]
  %v463 = vld [vmem:[%s4 + $0xf0] sm:$0xff]
  %v464 = vld [vmem:[%s4 + $0xf8] sm:$0xff]
  %v465 = vld [vmem:[%s6] sm:$0xf]
  %v467 = vperm.slane %v465, 0
  %v468 = vperm.slane %v465, 1
  %v469 = vperm.slane %v465, 2
  %v470 = vperm.slane %v465, 3
  %v507 = vunpack.c.l.b16 %v433
  %v508 = vunpack.c.h.b16 %v433
  %v509 = vunpack.c.l.b16 %v434
  %v510 = vunpack.c.h.b16 %v434
  %v511 = vunpack.c.l.b16 %v435
  %v512 = vunpack.c.h.b16 %v435
  %v513 = vunpack.c.l.b16 %v436
  %v514 = vunpack.c.h.b16 %v436
  %v515 = vunpack.c.l.b16 %v437
  %v516 = vunpack.c.h.b16 %v437
  %v517 = vunpack.c.l.b16 %v438
  %v518 = vunpack.c.h.b16 %v438
  %v519 = vunpack.c.l.b16 %v439
  %v520 = vunpack.c.h.b16 %v439
  %v521 = vunpack.c.l.b16 %v440
  %v522 = vunpack.c.h.b16 %v440
  %v523 = vunpack.c.l.b16 %v441
  %v524 = vunpack.c.h.b16 %v441
  %v525 = vunpack.c.l.b16 %v442
  %v526 = vunpack.c.h.b16 %v442
  %v527 = vunpack.c.l.b16 %v443
  %v528 = vunpack.c.h.b16 %v443
  %v529 = vunpack.c.l.b16 %v444
  %v530 = vunpack.c.h.b16 %v444
  %v531 = vunpack.c.l.b16 %v445
  %v532 = vunpack.c.h.b16 %v445
  %v533 = vunpack.c.l.b16 %v446
  %v534 = vunpack.c.h.b16 %v446
  %v535 = vunpack.c.l.b16 %v447
  %v536 = vunpack.c.h.b16 %v447
  %v537 = vunpack.c.l.b16 %v448
  %v538 = vunpack.c.h.b16 %v448
  %v539 = vunpack.c.l.b16 %v449
  %v540 = vunpack.c.h.b16 %v449
  %v541 = vunpack.c.l.b16 %v450
  %v542 = vunpack.c.h.b16 %v450
  %v543 = vunpack.c.l.b16 %v451
  %v544 = vunpack.c.h.b16 %v451
  %v545 = vunpack.c.l.b16 %v452
  %v546 = vunpack.c.h.b16 %v452
  %v547 = vunpack.c.l.b16 %v453
  %v548 = vunpack.c.h.b16 %v453
  %v549 = vunpack.c.l.b16 %v454
  %v550 = vunpack.c.h.b16 %v454
  %v551 = vunpack.c.l.b16 %v455
  %v552 = vunpack.c.h.b16 %v455
  %v553 = vunpack.c.l.b16 %v456
  %v554 = vunpack.c.h.b16 %v456
  %v555 = vunpack.c.l.b16 %v457
  %v556 = vunpack.c.h.b16 %v457
  %v557 = vunpack.c.l.b16 %v458
  %v558 = vunpack.c.h.b16 %v458
  %v559 = vunpack.c.l.b16 %v459
  %v560 = vunpack.c.h.b16 %v459
  %v561 = vunpack.c.l.b16 %v460
  %v562 = vunpack.c.h.b16 %v460
  %v563 = vunpack.c.l.b16 %v461
  %v564 = vunpack.c.h.b16 %v461
  %v565 = vunpack.c.l.b16 %v462
  %v566 = vunpack.c.h.b16 %v462
  %v567 = vunpack.c.l.b16 %v463
  %v568 = vunpack.c.h.b16 %v463
  %v569 = vunpack.c.l.b16 %v464
  %v570 = vunpack.c.h.b16 %v464
  %v571 = vpack.c.b16 %v511, %v507
  %v572 = vpack.c.b16 %v512, %v508
  %v573 = vpack.c.b16 %v513, %v509
  %v574 = vpack.c.b16 %v514, %v510
  %v575 = vpack.c.b16 %v519, %v515
  %v576 = vpack.c.b16 %v520, %v516
  %v577 = vpack.c.b16 %v521, %v517
  %v578 = vpack.c.b16 %v522, %v518
  %v579 = vpack.c.b16 %v527, %v523
  %v580 = vpack.c.b16 %v528, %v524
  %v581 = vpack.c.b16 %v529, %v525
  %v582 = vpack.c.b16 %v530, %v526
  %v583 = vpack.c.b16 %v535, %v531
  %v584 = vpack.c.b16 %v536, %v532
  %v585 = vpack.c.b16 %v537, %v533
  %v586 = vpack.c.b16 %v538, %v534
  %v587 = vpack.c.b16 %v543, %v539
  %v588 = vpack.c.b16 %v544, %v540
  %v589 = vpack.c.b16 %v545, %v541
  %v590 = vpack.c.b16 %v546, %v542
  %v591 = vpack.c.b16 %v551, %v547
  %v592 = vpack.c.b16 %v552, %v548
  %v593 = vpack.c.b16 %v553, %v549
  %v594 = vpack.c.b16 %v554, %v550
  %v595 = vpack.c.b16 %v559, %v555
  %v596 = vpack.c.b16 %v560, %v556
  %v597 = vpack.c.b16 %v561, %v557
  %v598 = vpack.c.b16 %v562, %v558
  %v599 = vpack.c.b16 %v567, %v563
  %v600 = vpack.c.b16 %v568, %v564
  %v601 = vpack.c.b16 %v569, %v565
  %v602 = vpack.c.b16 %v570, %v566
  %635 = vmatpush.bf16.msra.mxu0 %v599
  %636 = vmatpush.bf16.msra.mxu0 %v595
  %637 = vmatpush.bf16.msra.mxu0 %v591
  %638 = vmatpush.bf16.msra.mxu0 %v587
  %639 = vmatpush.bf16.msra.mxu0 %v583
  %640 = vmatpush.bf16.msra.mxu0 %v579
  %641 = vmatpush.bf16.msra.mxu0 %v575
  %642 = vmatpush.bf16.msra.mxu0 %v571
  %643 = vmatmul.bf16.gmra.mxu0 %v117
  %v644 = vpop.f32.mrf.mxu0
  %v645 = vadd.f32 %v467, %v644
  %v646 = vpop.f32.mrf.mxu0
  %v647 = vadd.f32 %v467, %v646
  %648 = vmatmul.bf16.gmra.mxu0 %v118
  %v649 = vpop.f32.mrf.mxu0
  %v650 = vadd.f32 %v467, %v649
  %v651 = vpop.f32.mrf.mxu0
  %v652 = vadd.f32 %v467, %v651
  %653 = vmatmul.bf16.gmra.mxu0 %v119
  %v654 = vpop.f32.mrf.mxu0
  %v655 = vadd.f32 %v467, %v654
  %v656 = vpop.f32.mrf.mxu0
  %v657 = vadd.f32 %v467, %v656
  %658 = vmatmul.bf16.gmra.mxu0 %v120
  %v659 = vpop.f32.mrf.mxu0
  %v660 = vadd.f32 %v467, %v659
  %v661 = vpop.f32.mrf.mxu0
  %v662 = vadd.f32 %v467, %v661
  %663 = vdwg.mxu0
  %664 = vmatpush.bf16.msra.mxu0 %v600
  %665 = vmatpush.bf16.msra.mxu0 %v596
  %666 = vmatpush.bf16.msra.mxu0 %v592
  %667 = vmatpush.bf16.msra.mxu0 %v588
  %668 = vmatpush.bf16.msra.mxu0 %v584
  %669 = vmatpush.bf16.msra.mxu0 %v580
  %670 = vmatpush.bf16.msra.mxu0 %v576
  %671 = vmatpush.bf16.msra.mxu0 %v572
  %672 = vmatmul.bf16.gmra.mxu0 %v117
  %v673 = vpop.f32.mrf.mxu0
  %v674 = vadd.f32 %v468, %v673
  %v675 = vpop.f32.mrf.mxu0
  %v676 = vadd.f32 %v468, %v675
  %677 = vmatmul.bf16.gmra.mxu0 %v118
  %v678 = vpop.f32.mrf.mxu0
  %v679 = vadd.f32 %v468, %v678
  %v680 = vpop.f32.mrf.mxu0
  %v681 = vadd.f32 %v468, %v680
  %682 = vmatmul.bf16.gmra.mxu0 %v119
  %v683 = vpop.f32.mrf.mxu0
  %v684 = vadd.f32 %v468, %v683
  %v685 = vpop.f32.mrf.mxu0
  %v686 = vadd.f32 %v468, %v685
  %687 = vmatmul.bf16.gmra.mxu0 %v120
  %v688 = vpop.f32.mrf.mxu0
  %v689 = vadd.f32 %v468, %v688
  %v690 = vpop.f32.mrf.mxu0
  %v691 = vadd.f32 %v468, %v690
  %692 = vdwg.mxu0
  %693 = vmatpush.bf16.msra.mxu0 %v601
  %694 = vmatpush.bf16.msra.mxu0 %v597
  %695 = vmatpush.bf16.msra.mxu0 %v593
  %696 = vmatpush.bf16.msra.mxu0 %v589
  %697 = vmatpush.bf16.msra.mxu0 %v585
  %698 = vmatpush.bf16.msra.mxu0 %v581
  %699 = vmatpush.bf16.msra.mxu0 %v577
  %700 = vmatpush.bf16.msra.mxu0 %v573
  %701 = vmatmul.bf16.gmra.mxu0 %v117
  %v702 = vpop.f32.mrf.mxu0
  %v703 = vadd.f32 %v469, %v702
  %v704 = vpop.f32.mrf.mxu0
  %v705 = vadd.f32 %v469, %v704
  %706 = vmatmul.bf16.gmra.mxu0 %v118
  %v707 = vpop.f32.mrf.mxu0
  %v708 = vadd.f32 %v469, %v707
  %v709 = vpop.f32.mrf.mxu0
  %v710 = vadd.f32 %v469, %v709
  %711 = vmatmul.bf16.gmra.mxu0 %v119
  %v712 = vpop.f32.mrf.mxu0
  %v713 = vadd.f32 %v469, %v712
  %v714 = vpop.f32.mrf.mxu0
  %v715 = vadd.f32 %v469, %v714
  %716 = vmatmul.bf16.gmra.mxu0 %v120
  %v717 = vpop.f32.mrf.mxu0
  %v718 = vadd.f32 %v469, %v717
  %v719 = vpop.f32.mrf.mxu0
  %v720 = vadd.f32 %v469, %v719
  %721 = vdwg.mxu0
  %722 = vmatpush.bf16.msra.mxu0 %v602
  %723 = vmatpush.bf16.msra.mxu0 %v598
  %724 = vmatpush.bf16.msra.mxu0 %v594
  %725 = vmatpush.bf16.msra.mxu0 %v590
  %726 = vmatpush.bf16.msra.mxu0 %v586
  %727 = vmatpush.bf16.msra.mxu0 %v582
  %728 = vmatpush.bf16.msra.mxu0 %v578
  %729 = vmatpush.bf16.msra.mxu0 %v574
  %730 = vmatmul.bf16.gmra.mxu0 %v117
  %v731 = vpop.f32.mrf.mxu0
  %v732 = vadd.f32 %v470, %v731
  %v733 = vpop.f32.mrf.mxu0
  %v734 = vadd.f32 %v470, %v733
  %735 = vmatmul.bf16.gmra.mxu0 %v118
  %v736 = vpop.f32.mrf.mxu0
  %v737 = vadd.f32 %v470, %v736
  %v738 = vpop.f32.mrf.mxu0
  %v739 = vadd.f32 %v470, %v738
  %740 = vmatmul.bf16.gmra.mxu0 %v119
  %v741 = vpop.f32.mrf.mxu0
  %v742 = vadd.f32 %v470, %v741
  %v743 = vpop.f32.mrf.mxu0
  %v744 = vadd.f32 %v470, %v743
  %745 = vmatmul.bf16.gmra.mxu0 %v120
  %v746 = vpop.f32.mrf.mxu0
  %v747 = vadd.f32 %v470, %v746
  %v748 = vpop.f32.mrf.mxu0
  %v749 = vadd.f32 %v470, %v748
  %750 = vdwg.mxu0
  %751 = vst [vmem:[#allocation5] sm:$0xff] %v645
  %752 = vst [vmem:[#allocation5 + $0x8] sm:$0xff] %v674
  %753 = vst [vmem:[#allocation5 + $0x10] sm:$0xff] %v703
  %754 = vst [vmem:[#allocation5 + $0x18] sm:$0xff] %v732
  %755 = vst [vmem:[#allocation5 + $0x20] sm:$0xff] %v647
  %756 = vst [vmem:[#allocation5 + $0x28] sm:$0xff] %v676
  %757 = vst [vmem:[#allocation5 + $0x30] sm:$0xff] %v705
  %758 = vst [vmem:[#allocation5 + $0x38] sm:$0xff] %v734
  %759 = vst [vmem:[#allocation5 + $0x40] sm:$0xff] %v650
  %760 = vst [vmem:[#allocation5 + $0x48] sm:$0xff] %v679
  %761 = vst [vmem:[#allocation5 + $0x50] sm:$0xff] %v708
  %762 = vst [vmem:[#allocation5 + $0x58] sm:$0xff] %v737
  %763 = vst [vmem:[#allocation5 + $0x60] sm:$0xff] %v652
  %764 = vst [vmem:[#allocation5 + $0x68] sm:$0xff] %v681
  %765 = vst [vmem:[#allocation5 + $0x70] sm:$0xff] %v710
  %766 = vst [vmem:[#allocation5 + $0x78] sm:$0xff] %v739
  %767 = vst [vmem:[#allocation5 + $0x80] sm:$0xff] %v655
  %768 = vst [vmem:[#allocation5 + $0x88] sm:$0xff] %v684
  %769 = vst [vmem:[#allocation5 + $0x90] sm:$0xff] %v713
  %770 = vst [vmem:[#allocation5 + $0x98] sm:$0xff] %v742
  %771 = vst [vmem:[#allocation5 + $0xa0] sm:$0xff] %v657
  %772 = vst [vmem:[#allocation5 + $0xa8] sm:$0xff] %v686
  %773 = vst [vmem:[#allocation5 + $0xb0] sm:$0xff] %v715
  %774 = vst [vmem:[#allocation5 + $0xb8] sm:$0xff] %v744
  %775 = vst [vmem:[#allocation5 + $0xc0] sm:$0xff] %v660
  %776 = vst [vmem:[#allocation5 + $0xc8] sm:$0xff] %v689
  %777 = vst [vmem:[#allocation5 + $0xd0] sm:$0xff] %v718
  %778 = vst [vmem:[#allocation5 + $0xd8] sm:$0xff] %v747
  %779 = vst [vmem:[#allocation5 + $0xe0] sm:$0xff] %v662
  %780 = vst [vmem:[#allocation5 + $0xe8] sm:$0xff] %v691
  %781 = vst [vmem:[#allocation5 + $0xf0] sm:$0xff] %v720
  %782 = vst [vmem:[#allocation5 + $0xf8] sm:$0xff] %v749
  %v783 = vld [vmem:[%s2] sm:$0xff]
  %v784 = vld [vmem:[%s2 + $0x8] sm:$0xff]
  %v785 = vld [vmem:[%s2 + $0x10] sm:$0xff]
  %v786 = vld [vmem:[%s2 + $0x18] sm:$0xff]
  %v787 = vld [vmem:[%s2 + $0x20] sm:$0xff]
  %v788 = vld [vmem:[%s2 + $0x28] sm:$0xff]
  %v789 = vld [vmem:[%s2 + $0x30] sm:$0xff]
  %v790 = vld [vmem:[%s2 + $0x38] sm:$0xff]
  %v791 = vld [vmem:[%s2 + $0x40] sm:$0xff]
  %v792 = vld [vmem:[%s2 + $0x48] sm:$0xff]
  %v793 = vld [vmem:[%s2 + $0x50] sm:$0xff]
  %v794 = vld [vmem:[%s2 + $0x58] sm:$0xff]
  %v795 = vld [vmem:[%s2 + $0x60] sm:$0xff]
  %v796 = vld [vmem:[%s2 + $0x68] sm:$0xff]
  %v797 = vld [vmem:[%s2 + $0x70] sm:$0xff]
  %v798 = vld [vmem:[%s2 + $0x78] sm:$0xff]
  %v799 = vld [vmem:[%s2 + $0x80] sm:$0xff]
  %v800 = vld [vmem:[%s2 + $0x88] sm:$0xff]
  %v801 = vld [vmem:[%s2 + $0x90] sm:$0xff]
  %v802 = vld [vmem:[%s2 + $0x98] sm:$0xff]
  %v803 = vld [vmem:[%s2 + $0xa0] sm:$0xff]
  %v804 = vld [vmem:[%s2 + $0xa8] sm:$0xff]
  %v805 = vld [vmem:[%s2 + $0xb0] sm:$0xff]
  %v806 = vld [vmem:[%s2 + $0xb8] sm:$0xff]
  %v807 = vld [vmem:[%s2 + $0xc0] sm:$0xff]
  %v808 = vld [vmem:[%s2 + $0xc8] sm:$0xff]
  %v809 = vld [vmem:[%s2 + $0xd0] sm:$0xff]
  %v810 = vld [vmem:[%s2 + $0xd8] sm:$0xff]
  %v811 = vld [vmem:[%s2 + $0xe0] sm:$0xff]
  %v812 = vld [vmem:[%s2 + $0xe8] sm:$0xff]
  %v813 = vld [vmem:[%s2 + $0xf0] sm:$0xff]
  %v814 = vld [vmem:[%s2 + $0xf8] sm:$0xff]
  %v815 = vld [vmem:[%s5] sm:$0xff]
  %v816 = vld [vmem:[%s5 + $0x8] sm:$0xff]
  %v817 = vld [vmem:[%s5 + $0x10] sm:$0xff]
  %v818 = vld [vmem:[%s5 + $0x18] sm:$0xff]
  %v819 = vld [vmem:[%s5 + $0x20] sm:$0xff]
  %v820 = vld [vmem:[%s5 + $0x28] sm:$0xff]
  %v821 = vld [vmem:[%s5 + $0x30] sm:$0xff]
  %v822 = vld [vmem:[%s5 + $0x38] sm:$0xff]
  %v823 = vld [vmem:[%s5 + $0x40] sm:$0xff]
  %v824 = vld [vmem:[%s5 + $0x48] sm:$0xff]
  %v825 = vld [vmem:[%s5 + $0x50] sm:$0xff]
  %v826 = vld [vmem:[%s5 + $0x58] sm:$0xff]
  %v827 = vld [vmem:[%s5 + $0x60] sm:$0xff]
  %v828 = vld [vmem:[%s5 + $0x68] sm:$0xff]
  %v829 = vld [vmem:[%s5 + $0x70] sm:$0xff]
  %v830 = vld [vmem:[%s5 + $0x78] sm:$0xff]
  %v831 = vld [vmem:[%s5 + $0x80] sm:$0xff]
  %v832 = vld [vmem:[%s5 + $0x88] sm:$0xff]
  %v833 = vld [vmem:[%s5 + $0x90] sm:$0xff]
  %v834 = vld [vmem:[%s5 + $0x98] sm:$0xff]
  %v835 = vld [vmem:[%s5 + $0xa0] sm:$0xff]
  %v836 = vld [vmem:[%s5 + $0xa8] sm:$0xff]
  %v837 = vld [vmem:[%s5 + $0xb0] sm:$0xff]
  %v838 = vld [vmem:[%s5 + $0xb8] sm:$0xff]
  %v839 = vld [vmem:[%s5 + $0xc0] sm:$0xff]
  %v840 = vld [vmem:[%s5 + $0xc8] sm:$0xff]
  %v841 = vld [vmem:[%s5 + $0xd0] sm:$0xff]
  %v842 = vld [vmem:[%s5 + $0xd8] sm:$0xff]
  %v843 = vld [vmem:[%s5 + $0xe0] sm:$0xff]
  %v844 = vld [vmem:[%s5 + $0xe8] sm:$0xff]
  %v845 = vld [vmem:[%s5 + $0xf0] sm:$0xff]
  %v846 = vld [vmem:[%s5 + $0xf8] sm:$0xff]
  %v847 = vld [vmem:[#allocation4] sm:$0xff]
  %v848 = vld [vmem:[#allocation4 + $0x8] sm:$0xff]
  %v849 = vld [vmem:[#allocation4 + $0x10] sm:$0xff]
  %v850 = vld [vmem:[#allocation4 + $0x18] sm:$0xff]
  %v883 = vunpack.c.l.b16 %v783
  %v884 = vunpack.c.h.b16 %v783
  %v885 = vunpack.c.l.b16 %v784
  %v886 = vunpack.c.h.b16 %v784
  %v887 = vunpack.c.l.b16 %v785
  %v888 = vunpack.c.h.b16 %v785
  %v889 = vunpack.c.l.b16 %v786
  %v890 = vunpack.c.h.b16 %v786
  %v891 = vunpack.c.l.b16 %v787
  %v892 = vunpack.c.h.b16 %v787
  %v893 = vunpack.c.l.b16 %v788
  %v894 = vunpack.c.h.b16 %v788
  %v895 = vunpack.c.l.b16 %v789
  %v896 = vunpack.c.h.b16 %v789
  %v897 = vunpack.c.l.b16 %v790
  %v898 = vunpack.c.h.b16 %v790
  %v899 = vunpack.c.l.b16 %v791
  %v900 = vunpack.c.h.b16 %v791
  %v901 = vunpack.c.l.b16 %v792
  %v902 = vunpack.c.h.b16 %v792
  %v903 = vunpack.c.l.b16 %v793
  %v904 = vunpack.c.h.b16 %v793
  %v905 = vunpack.c.l.b16 %v794
  %v906 = vunpack.c.h.b16 %v794
  %v907 = vunpack.c.l.b16 %v795
  %v908 = vunpack.c.h.b16 %v795
  %v909 = vunpack.c.l.b16 %v796
  %v910 = vunpack.c.h.b16 %v796
  %v911 = vunpack.c.l.b16 %v797
  %v912 = vunpack.c.h.b16 %v797
  %v913 = vunpack.c.l.b16 %v798
  %v914 = vunpack.c.h.b16 %v798
  %v915 = vunpack.c.l.b16 %v799
  %v916 = vunpack.c.h.b16 %v799
  %v917 = vunpack.c.l.b16 %v800
  %v918 = vunpack.c.h.b16 %v800
  %v919 = vunpack.c.l.b16 %v801
  %v920 = vunpack.c.h.b16 %v801
  %v921 = vunpack.c.l.b16 %v802
  %v922 = vunpack.c.h.b16 %v802
  %v923 = vunpack.c.l.b16 %v803
  %v924 = vunpack.c.h.b16 %v803
  %v925 = vunpack.c.l.b16 %v804
  %v926 = vunpack.c.h.b16 %v804
  %v927 = vunpack.c.l.b16 %v805
  %v928 = vunpack.c.h.b16 %v805
  %v929 = vunpack.c.l.b16 %v806
  %v930 = vunpack.c.h.b16 %v806
  %v931 = vunpack.c.l.b16 %v807
  %v932 = vunpack.c.h.b16 %v807
  %v933 = vunpack.c.l.b16 %v808
  %v934 = vunpack.c.h.b16 %v808
  %v935 = vunpack.c.l.b16 %v809
  %v936 = vunpack.c.h.b16 %v809
  %v937 = vunpack.c.l.b16 %v810
  %v938 = vunpack.c.h.b16 %v810
  %v939 = vunpack.c.l.b16 %v811
  %v940 = vunpack.c.h.b16 %v811
  %v941 = vunpack.c.l.b16 %v812
  %v942 = vunpack.c.h.b16 %v812
  %v943 = vunpack.c.l.b16 %v813
  %v944 = vunpack.c.h.b16 %v813
  %v945 = vunpack.c.l.b16 %v814
  %v946 = vunpack.c.h.b16 %v814
  %v947 = vpack.c.b16 %v887, %v883
  %v948 = vpack.c.b16 %v888, %v884
  %v949 = vpack.c.b16 %v889, %v885
  %v950 = vpack.c.b16 %v890, %v886
  %v951 = vpack.c.b16 %v895, %v891
  %v952 = vpack.c.b16 %v896, %v892
  %v953 = vpack.c.b16 %v897, %v893
  %v954 = vpack.c.b16 %v898, %v894
  %v955 = vpack.c.b16 %v903, %v899
  %v956 = vpack.c.b16 %v904, %v900
  %v957 = vpack.c.b16 %v905, %v901
  %v958 = vpack.c.b16 %v906, %v902
  %v959 = vpack.c.b16 %v911, %v907
  %v960 = vpack.c.b16 %v912, %v908
  %v961 = vpack.c.b16 %v913, %v909
  %v962 = vpack.c.b16 %v914, %v910
  %v963 = vpack.c.b16 %v919, %v915
  %v964 = vpack.c.b16 %v920, %v916
  %v965 = vpack.c.b16 %v921, %v917
  %v966 = vpack.c.b16 %v922, %v918
  %v967 = vpack.c.b16 %v927, %v923
  %v968 = vpack.c.b16 %v928, %v924
  %v969 = vpack.c.b16 %v929, %v925
  %v970 = vpack.c.b16 %v930, %v926
  %v971 = vpack.c.b16 %v935, %v931
  %v972 = vpack.c.b16 %v936, %v932
  %v973 = vpack.c.b16 %v937, %v933
  %v974 = vpack.c.b16 %v938, %v934
  %v975 = vpack.c.b16 %v943, %v939
  %v976 = vpack.c.b16 %v944, %v940
  %v977 = vpack.c.b16 %v945, %v941
  %v978 = vpack.c.b16 %v946, %v942
  %1011 = vmatpush.bf16.msra.mxu0 %v975
  %1012 = vmatpush.bf16.msra.mxu0 %v971
  %1013 = vmatpush.bf16.msra.mxu0 %v967
  %1014 = vmatpush.bf16.msra.mxu0 %v963
  %1015 = vmatpush.bf16.msra.mxu0 %v959
  %1016 = vmatpush.bf16.msra.mxu0 %v955
  %1017 = vmatpush.bf16.msra.mxu0 %v951
  %1018 = vmatpush.bf16.msra.mxu0 %v947
  %1019 = vmatmul.bf16.gmra.mxu0 0
  %v1020 = vpop.f32.mrf.mxu0
  %v1021 = vadd.f32 0.0, %v1020
  %v1022 = vpop.f32.mrf.mxu0
  %1023 = vdwg.mxu0
  %1024 = vmatpush.bf16.msra.mxu0 %v976
  %1025 = vmatpush.bf16.msra.mxu0 %v972
  %1026 = vmatpush.bf16.msra.mxu0 %v968
  %1027 = vmatpush.bf16.msra.mxu0 %v964
  %1028 = vmatpush.bf16.msra.mxu0 %v960
  %1029 = vmatpush.bf16.msra.mxu0 %v956
  %1030 = vmatpush.bf16.msra.mxu0 %v952
  %1031 = vmatpush.bf16.msra.mxu0 %v948
  %1032 = vmatmul.bf16.gmra.mxu0 0
  %v1033 = vpop.f32.mrf.mxu0
  %v1034 = vadd.f32 0.0, %v1033
  %v1035 = vpop.f32.mrf.mxu0
  %1036 = vdwg.mxu0
  %1037 = vmatpush.bf16.msra.mxu0 %v977
  %1038 = vmatpush.bf16.msra.mxu0 %v973
  %1039 = vmatpush.bf16.msra.mxu0 %v969
  %1040 = vmatpush.bf16.msra.mxu0 %v965
  %1041 = vmatpush.bf16.msra.mxu0 %v961
  %1042 = vmatpush.bf16.msra.mxu0 %v957
  %1043 = vmatpush.bf16.msra.mxu0 %v953
  %1044 = vmatpush.bf16.msra.mxu0 %v949
  %1045 = vmatmul.bf16.gmra.mxu0 0
  %v1046 = vpop.f32.mrf.mxu0
  %v1047 = vadd.f32 0.0, %v1046
  %v1048 = vpop.f32.mrf.mxu0
  %1049 = vdwg.mxu0
  %1050 = vmatpush.bf16.msra.mxu0 %v978
  %1051 = vmatpush.bf16.msra.mxu0 %v974
  %1052 = vmatpush.bf16.msra.mxu0 %v970
  %1053 = vmatpush.bf16.msra.mxu0 %v966
  %1054 = vmatpush.bf16.msra.mxu0 %v962
  %1055 = vmatpush.bf16.msra.mxu0 %v958
  %1056 = vmatpush.bf16.msra.mxu0 %v954
  %1057 = vmatpush.bf16.msra.mxu0 %v950
  %1058 = vmatmul.bf16.gmra.mxu0 0
  %v1059 = vpop.f32.mrf.mxu0
  %v1060 = vadd.f32 0.0, %v1059
  %v1061 = vpop.f32.mrf.mxu0
  %1062 = vdwg.mxu0
  %v1063 = vadd.f32 %v847, %v1021
  %v1064 = vadd.f32 %v848, %v1034
  %v1065 = vadd.f32 %v849, %v1047
  %v1066 = vadd.f32 %v850, %v1060
  %v1067 = vld [vmem:[#allocation5 + $0xe0] sm:$0xff]
  %v1068 = vld [vmem:[#allocation5 + $0xe8] sm:$0xff]
  %v1069 = vld [vmem:[#allocation5 + $0xf0] sm:$0xff]
  %v1070 = vld [vmem:[#allocation5 + $0xf8] sm:$0xff]
  %v1103 = vunpack.c.l.b16 %v815
  %v1104 = vunpack.c.h.b16 %v815
  %v1105 = vunpack.c.l.b16 %v816
  %v1106 = vunpack.c.h.b16 %v816
  %v1107 = vunpack.c.l.b16 %v817
  %v1108 = vunpack.c.h.b16 %v817
  %v1109 = vunpack.c.l.b16 %v818
  %v1110 = vunpack.c.h.b16 %v818
  %v1111 = vunpack.c.l.b16 %v819
  %v1112 = vunpack.c.h.b16 %v819
  %v1113 = vunpack.c.l.b16 %v820
  %v1114 = vunpack.c.h.b16 %v820
  %v1115 = vunpack.c.l.b16 %v821
  %v1116 = vunpack.c.h.b16 %v821
  %v1117 = vunpack.c.l.b16 %v822
  %v1118 = vunpack.c.h.b16 %v822
  %v1119 = vunpack.c.l.b16 %v823
  %v1120 = vunpack.c.h.b16 %v823
  %v1121 = vunpack.c.l.b16 %v824
  %v1122 = vunpack.c.h.b16 %v824
  %v1123 = vunpack.c.l.b16 %v825
  %v1124 = vunpack.c.h.b16 %v825
  %v1125 = vunpack.c.l.b16 %v826
  %v1126 = vunpack.c.h.b16 %v826
  %v1127 = vunpack.c.l.b16 %v827
  %v1128 = vunpack.c.h.b16 %v827
  %v1129 = vunpack.c.l.b16 %v828
  %v1130 = vunpack.c.h.b16 %v828
  %v1131 = vunpack.c.l.b16 %v829
  %v1132 = vunpack.c.h.b16 %v829
  %v1133 = vunpack.c.l.b16 %v830
  %v1134 = vunpack.c.h.b16 %v830
  %v1135 = vunpack.c.l.b16 %v831
  %v1136 = vunpack.c.h.b16 %v831
  %v1137 = vunpack.c.l.b16 %v832
  %v1138 = vunpack.c.h.b16 %v832
  %v1139 = vunpack.c.l.b16 %v833
  %v1140 = vunpack.c.h.b16 %v833
  %v1141 = vunpack.c.l.b16 %v834
  %v1142 = vunpack.c.h.b16 %v834
  %v1143 = vunpack.c.l.b16 %v835
  %v1144 = vunpack.c.h.b16 %v835
  %v1145 = vunpack.c.l.b16 %v836
  %v1146 = vunpack.c.h.b16 %v836
  %v1147 = vunpack.c.l.b16 %v837
  %v1148 = vunpack.c.h.b16 %v837
  %v1149 = vunpack.c.l.b16 %v838
  %v1150 = vunpack.c.h.b16 %v838
  %v1151 = vunpack.c.l.b16 %v839
  %v1152 = vunpack.c.h.b16 %v839
  %v1153 = vunpack.c.l.b16 %v840
  %v1154 = vunpack.c.h.b16 %v840
  %v1155 = vunpack.c.l.b16 %v841
  %v1156 = vunpack.c.h.b16 %v841
  %v1157 = vunpack.c.l.b16 %v842
  %v1158 = vunpack.c.h.b16 %v842
  %v1159 = vunpack.c.l.b16 %v843
  %v1160 = vunpack.c.h.b16 %v843
  %v1161 = vunpack.c.l.b16 %v844
  %v1162 = vunpack.c.h.b16 %v844
  %v1163 = vunpack.c.l.b16 %v845
  %v1164 = vunpack.c.h.b16 %v845
  %v1165 = vunpack.c.l.b16 %v846
  %v1166 = vunpack.c.h.b16 %v846
  %v1167 = vpack.c.b16 %v1107, %v1103
  %v1168 = vpack.c.b16 %v1108, %v1104
  %v1169 = vpack.c.b16 %v1109, %v1105
  %v1170 = vpack.c.b16 %v1110, %v1106
  %v1171 = vpack.c.b16 %v1115, %v1111
  %v1172 = vpack.c.b16 %v1116, %v1112
  %v1173 = vpack.c.b16 %v1117, %v1113
  %v1174 = vpack.c.b16 %v1118, %v1114
  %v1175 = vpack.c.b16 %v1123, %v1119
  %v1176 = vpack.c.b16 %v1124, %v1120
  %v1177 = vpack.c.b16 %v1125, %v1121
  %v1178 = vpack.c.b16 %v1126, %v1122
  %v1179 = vpack.c.b16 %v1131, %v1127
  %v1180 = vpack.c.b16 %v1132, %v1128
  %v1181 = vpack.c.b16 %v1133, %v1129
  %v1182 = vpack.c.b16 %v1134, %v1130
  %v1183 = vpack.c.b16 %v1139, %v1135
  %v1184 = vpack.c.b16 %v1140, %v1136
  %v1185 = vpack.c.b16 %v1141, %v1137
  %v1186 = vpack.c.b16 %v1142, %v1138
  %v1187 = vpack.c.b16 %v1147, %v1143
  %v1188 = vpack.c.b16 %v1148, %v1144
  %v1189 = vpack.c.b16 %v1149, %v1145
  %v1190 = vpack.c.b16 %v1150, %v1146
  %v1191 = vpack.c.b16 %v1155, %v1151
  %v1192 = vpack.c.b16 %v1156, %v1152
  %v1193 = vpack.c.b16 %v1157, %v1153
  %v1194 = vpack.c.b16 %v1158, %v1154
  %v1195 = vpack.c.b16 %v1163, %v1159
  %v1196 = vpack.c.b16 %v1164, %v1160
  %v1197 = vpack.c.b16 %v1165, %v1161
  %v1198 = vpack.c.b16 %v1166, %v1162
  %1231 = vmatpush.bf16.msra.mxu0 %v1195
  %1232 = vmatpush.bf16.msra.mxu0 %v1191
  %1233 = vmatpush.bf16.msra.mxu0 %v1187
  %1234 = vmatpush.bf16.msra.mxu0 %v1183
  %1235 = vmatpush.bf16.msra.mxu0 %v1179
  %1236 = vmatpush.bf16.msra.mxu0 %v1175
  %1237 = vmatpush.bf16.msra.mxu0 %v1171
  %1238 = vmatpush.bf16.msra.mxu0 %v1167
  %1239 = vmatmul.bf16.gmra.mxu0 0
  %v1240 = vpop.f32.mrf.mxu0
  %v1241 = vadd.f32 0.0, %v1240
  %v1242 = vpop.f32.mrf.mxu0
  %1243 = vdwg.mxu0
  %1244 = vmatpush.bf16.msra.mxu0 %v1196
  %1245 = vmatpush.bf16.msra.mxu0 %v1192
  %1246 = vmatpush.bf16.msra.mxu0 %v1188
  %1247 = vmatpush.bf16.msra.mxu0 %v1184
  %1248 = vmatpush.bf16.msra.mxu0 %v1180
  %1249 = vmatpush.bf16.msra.mxu0 %v1176
  %1250 = vmatpush.bf16.msra.mxu0 %v1172
  %1251 = vmatpush.bf16.msra.mxu0 %v1168
  %1252 = vmatmul.bf16.gmra.mxu0 0
  %v1253 = vpop.f32.mrf.mxu0
  %v1254 = vadd.f32 0.0, %v1253
  %v1255 = vpop.f32.mrf.mxu0
  %1256 = vdwg.mxu0
  %1257 = vmatpush.bf16.msra.mxu0 %v1197
  %1258 = vmatpush.bf16.msra.mxu0 %v1193
  %1259 = vmatpush.bf16.msra.mxu0 %v1189
  %1260 = vmatpush.bf16.msra.mxu0 %v1185
  %1261 = vmatpush.bf16.msra.mxu0 %v1181
  %1262 = vmatpush.bf16.msra.mxu0 %v1177
  %1263 = vmatpush.bf16.msra.mxu0 %v1173
  %1264 = vmatpush.bf16.msra.mxu0 %v1169
  %1265 = vmatmul.bf16.gmra.mxu0 0
  %v1266 = vpop.f32.mrf.mxu0
  %v1267 = vadd.f32 0.0, %v1266
  %v1268 = vpop.f32.mrf.mxu0
  %1269 = vdwg.mxu0
  %1270 = vmatpush.bf16.msra.mxu0 %v1198
  %1271 = vmatpush.bf16.msra.mxu0 %v1194
  %1272 = vmatpush.bf16.msra.mxu0 %v1190
  %1273 = vmatpush.bf16.msra.mxu0 %v1186
  %1274 = vmatpush.bf16.msra.mxu0 %v1182
  %1275 = vmatpush.bf16.msra.mxu0 %v1178
  %1276 = vmatpush.bf16.msra.mxu0 %v1174
  %1277 = vmatpush.bf16.msra.mxu0 %v1170
  %1278 = vmatmul.bf16.gmra.mxu0 0
  %v1279 = vpop.f32.mrf.mxu0
  %v1280 = vadd.f32 0.0, %v1279
  %v1281 = vpop.f32.mrf.mxu0
  %1282 = vdwg.mxu0
  %v1283 = vadd.f32 %v1067, %v1241
  %v1284 = vadd.f32 %v1068, %v1254
  %v1285 = vadd.f32 %v1069, %v1267
  %v1286 = vadd.f32 %v1070, %v1280
  %v1287 = vxor.u32 %v1063, 2147483648
  %v1288 = vmul.f32 %v1287, 1.442695
  %v1289 = vpow.pop %v1288
  %v1290 = vadd.f32 %v1289, 1.0
  %v1291 = vrcp.pop %v1290
  %v1292 = vmul.f32 %v1290, %v1291
  %v1293 = vsub.f32 1.0, %v1292
  %v1294 = vmul.f32 %v1291, %v1293
  %v1295 = vadd.f32 %v1291, %v1294
  %vm1296 = vweird.f32 %v1290
  %vm1297 = vweird.f32 %v1291
  %vm1298 = vmor %vm1296, %vm1297
  %v1299 = vsel %vm1298, %v1291, %v1295
  %v1300 = vand.u32 2147483647, %v1290
  %vm1301 = vcmp.eq.f32.partialorder %v1300, 8.507059e+37
  %v1302 = vand.u32 %v1290, 2147483648
  %v1303 = vor.u32 1.1754944e-38, %v1302
  %v1304 = vsel %vm1301, %v1303, %v1299
  %v1305 = vmul.f32 1.0, %v1304
  %v1306 = vxor.u32 %v1064, 2147483648
  %v1307 = vmul.f32 %v1306, 1.442695
  %v1308 = vpow.pop %v1307
  %v1309 = vadd.f32 %v1308, 1.0
  %v1310 = vrcp.pop %v1309
  %v1311 = vmul.f32 %v1309, %v1310
  %v1312 = vsub.f32 1.0, %v1311
  %v1313 = vmul.f32 %v1310, %v1312
  %v1314 = vadd.f32 %v1310, %v1313
  %vm1315 = vweird.f32 %v1309
  %vm1316 = vweird.f32 %v1310
  %vm1317 = vmor %vm1315, %vm1316
  %v1318 = vsel %vm1317, %v1310, %v1314
  %v1319 = vand.u32 2147483647, %v1309
  %vm1320 = vcmp.eq.f32.partialorder %v1319, 8.507059e+37
  %v1321 = vand.u32 %v1309, 2147483648
  %v1322 = vor.u32 1.1754944e-38, %v1321
  %v1323 = vsel %vm1320, %v1322, %v1318
  %v1324 = vmul.f32 1.0, %v1323
  %v1325 = vtanh.pop %v1065
  %v1326 = vxor.u32 %v1066, 2147483648
  %v1327 = vmul.f32 %v1326, 1.442695
  %v1328 = vpow.pop %v1327
  %v1329 = vadd.f32 %v1328, 1.0
  %v1330 = vrcp.pop %v1329
  %v1331 = vmul.f32 %v1329, %v1330
  %v1332 = vsub.f32 1.0, %v1331
  %v1333 = vmul.f32 %v1330, %v1332
  %v1334 = vadd.f32 %v1330, %v1333
  %vm1335 = vweird.f32 %v1329
  %vm1336 = vweird.f32 %v1330
  %vm1337 = vmor %vm1335, %vm1336
  %v1338 = vsel %vm1337, %v1330, %v1334
  %v1339 = vand.u32 2147483647, %v1329
  %vm1340 = vcmp.eq.f32.partialorder %v1339, 8.507059e+37
  %v1341 = vand.u32 %v1329, 2147483648
  %v1342 = vor.u32 1.1754944e-38, %v1341
  %v1343 = vsel %vm1340, %v1342, %v1338
  %v1344 = vmul.f32 1.0, %v1343
  %v1345 = vmul.f32 %v1324, 0.0
  %v1346 = vmul.f32 %v1305, %v1325
  %v1347 = vadd.f32 %v1345, %v1346
  %v1348 = vtanh.pop %v1347
  %v1349 = vmul.f32 %v1344, %v1348
  %v1350 = vxor.u32 %v1283, 2147483648
  %v1351 = vmul.f32 %v1350, 1.442695
  %v1352 = vpow.pop %v1351
  %v1353 = vadd.f32 %v1352, 1.0
  %v1354 = vrcp.pop %v1353
  %v1355 = vmul.f32 %v1353, %v1354
  %v1356 = vsub.f32 1.0, %v1355
  %v1357 = vmul.f32 %v1354, %v1356
  %v1358 = vadd.f32 %v1354, %v1357
  %vm1359 = vweird.f32 %v1353
  %vm1360 = vweird.f32 %v1354
  %vm1361 = vmor %vm1359, %vm1360
  %v1362 = vsel %vm1361, %v1354, %v1358
  %v1363 = vand.u32 2147483647, %v1353
  %vm1364 = vcmp.eq.f32.partialorder %v1363, 8.507059e+37
  %v1365 = vand.u32 %v1353, 2147483648
  %v1366 = vor.u32 1.1754944e-38, %v1365
  %v1367 = vsel %vm1364, %v1366, %v1362
  %v1368 = vmul.f32 1.0, %v1367
  %v1369 = vxor.u32 %v1284, 2147483648
  %v1370 = vmul.f32 %v1369, 1.442695
  %v1371 = vpow.pop %v1370
  %v1372 = vadd.f32 %v1371, 1.0
  %v1373 = vrcp.pop %v1372
  %v1374 = vmul.f32 %v1372, %v1373
  %v1375 = vsub.f32 1.0, %v1374
  %v1376 = vmul.f32 %v1373, %v1375
  %v1377 = vadd.f32 %v1373, %v1376
  %vm1378 = vweird.f32 %v1372
  %vm1379 = vweird.f32 %v1373
  %vm1380 = vmor %vm1378, %vm1379
  %v1381 = vsel %vm1380, %v1373, %v1377
  %v1382 = vand.u32 2147483647, %v1372
  %vm1383 = vcmp.eq.f32.partialorder %v1382, 8.507059e+37
  %v1384 = vand.u32 %v1372, 2147483648
  %v1385 = vor.u32 1.1754944e-38, %v1384
  %v1386 = vsel %vm1383, %v1385, %v1381
  %v1387 = vmul.f32 1.0, %v1386
  %v1388 = vtanh.pop %v1285
  %v1389 = vxor.u32 %v1286, 2147483648
  %v1390 = vmul.f32 %v1389, 1.442695
  %v1391 = vpow.pop %v1390
  %v1392 = vadd.f32 %v1391, 1.0
  %v1393 = vrcp.pop %v1392
  %v1394 = vmul.f32 %v1392, %v1393
  %v1395 = vsub.f32 1.0, %v1394
  %v1396 = vmul.f32 %v1393, %v1395
  %v1397 = vadd.f32 %v1393, %v1396
  %vm1398 = vweird.f32 %v1392
  %vm1399 = vweird.f32 %v1393
  %vm1400 = vmor %vm1398, %vm1399
  %v1401 = vsel %vm1400, %v1393, %v1397
  %v1402 = vand.u32 2147483647, %v1392
  %vm1403 = vcmp.eq.f32.partialorder %v1402, 8.507059e+37
  %v1404 = vand.u32 %v1392, 2147483648
  %v1405 = vor.u32 1.1754944e-38, %v1404
  %v1406 = vsel %vm1403, %v1405, %v1401
  %v1407 = vmul.f32 1.0, %v1406
  %v1408 = vmul.f32 %v1387, 0.0
  %v1409 = vmul.f32 %v1368, %v1388
  %v1410 = vadd.f32 %v1408, %v1409
  %v1411 = vtanh.pop %v1410
  %v1412 = vmul.f32 %v1407, %v1411
  %1413 = vst [vmem:[#allocation2] sm:$0xff] %v1349
  %1414 = vst [vmem:[#allocation3 + $0x38] sm:$0xff] %v1412
  %v1415 = vld [vmem:[#allocation4 + $0x20] sm:$0xff]
  %v1416 = vld [vmem:[#allocation4 + $0x28] sm:$0xff]
  %v1417 = vld [vmem:[#allocation4 + $0x30] sm:$0xff]
  %v1418 = vld [vmem:[#allocation4 + $0x38] sm:$0xff]
  %v1419 = vpack.c.bf16 %v1349, %v1349
  %1420 = vmatpush.bf16.msra.mxu0 %v975
  %1421 = vmatpush.bf16.msra.mxu0 %v971
  %1422 = vmatpush.bf16.msra.mxu0 %v967
  %1423 = vmatpush.bf16.msra.mxu0 %v963
  %1424 = vmatpush.bf16.msra.mxu0 %v959
  %1425 = vmatpush.bf16.msra.mxu0 %v955
  %1426 = vmatpush.bf16.msra.mxu0 %v951
  %1427 = vmatpush.bf16.msra.mxu0 %v947
  %1428 = vmatmul.bf16.gmra.mxu0 %v1419
  %v1429 = vpop.f32.mrf.mxu0
  %v1430 = vadd.f32 0.0, %v1429
  %v1431 = vpop.f32.mrf.mxu0
  %1432 = vdwg.mxu0
  %1433 = vmatpush.bf16.msra.mxu0 %v976
  %1434 = vmatpush.bf16.msra.mxu0 %v972
  %1435 = vmatpush.bf16.msra.mxu0 %v968
  %1436 = vmatpush.bf16.msra.mxu0 %v964
  %1437 = vmatpush.bf16.msra.mxu0 %v960
  %1438 = vmatpush.bf16.msra.mxu0 %v956
  %1439 = vmatpush.bf16.msra.mxu0 %v952
  %1440 = vmatpush.bf16.msra.mxu0 %v948
  %1441 = vmatmul.bf16.gmra.mxu0 %v1419
  %v1442 = vpop.f32.mrf.mxu0
  %v1443 = vadd.f32 0.0, %v1442
  %v1444 = vpop.f32.mrf.mxu0
  %1445 = vdwg.mxu0
  %1446 = vmatpush.bf16.msra.mxu0 %v977
  %1447 = vmatpush.bf16.msra.mxu0 %v973
  %1448 = vmatpush.bf16.msra.mxu0 %v969
  %1449 = vmatpush.bf16.msra.mxu0 %v965
  %1450 = vmatpush.bf16.msra.mxu0 %v961
  %1451 = vmatpush.bf16.msra.mxu0 %v957
  %1452 = vmatpush.bf16.msra.mxu0 %v953
  %1453 = vmatpush.bf16.msra.mxu0 %v949
  %1454 = vmatmul.bf16.gmra.mxu0 %v1419
  %v1455 = vpop.f32.mrf.mxu0
  %v1456 = vadd.f32 0.0, %v1455
  %v1457 = vpop.f32.mrf.mxu0
  %1458 = vdwg.mxu0
  %1459 = vmatpush.bf16.msra.mxu0 %v978
  %1460 = vmatpush.bf16.msra.mxu0 %v974
  %1461 = vmatpush.bf16.msra.mxu0 %v970
  %1462 = vmatpush.bf16.msra.mxu0 %v966
  %1463 = vmatpush.bf16.msra.mxu0 %v962
  %1464 = vmatpush.bf16.msra.mxu0 %v958
  %1465 = vmatpush.bf16.msra.mxu0 %v954
  %1466 = vmatpush.bf16.msra.mxu0 %v950
  %1467 = vmatmul.bf16.gmra.mxu0 %v1419
  %v1468 = vpop.f32.mrf.mxu0
  %v1469 = vadd.f32 0.0, %v1468
  %v1470 = vpop.f32.mrf.mxu0
  %1471 = vdwg.mxu0
  %v1472 = vadd.f32 %v1415, %v1430
  %v1473 = vadd.f32 %v1416, %v1443
  %v1474 = vadd.f32 %v1417, %v1456
  %v1475 = vadd.f32 %v1418, %v1469
  %v1476 = vld [vmem:[#allocation5 + $0xc0] sm:$0xff]
  %v1477 = vld [vmem:[#allocation5 + $0xc8] sm:$0xff]
  %v1478 = vld [vmem:[#allocation5 + $0xd0] sm:$0xff]
  %v1479 = vld [vmem:[#allocation5 + $0xd8] sm:$0xff]
  %v1480 = vpack.c.bf16 %v1412, %v1412
  %1481 = vmatpush.bf16.msra.mxu0 %v1195
  %1482 = vmatpush.bf16.msra.mxu0 %v1191
  %1483 = vmatpush.bf16.msra.mxu0 %v1187
  %1484 = vmatpush.bf16.msra.mxu0 %v1183
  %1485 = vmatpush.bf16.msra.mxu0 %v1179
  %1486 = vmatpush.bf16.msra.mxu0 %v1175
  %1487 = vmatpush.bf16.msra.mxu0 %v1171
  %1488 = vmatpush.bf16.msra.mxu0 %v1167
  %1489 = vmatmul.bf16.gmra.mxu0 %v1480
  %v1490 = vpop.f32.mrf.mxu0
  %v1491 = vadd.f32 0.0, %v1490
  %v1492 = vpop.f32.mrf.mxu0
  %1493 = vdwg.mxu0
  %1494 = vmatpush.bf16.msra.mxu0 %v1196
  %1495 = vmatpush.bf16.msra.mxu0 %v1192
  %1496 = vmatpush.bf16.msra.mxu0 %v1188
  %1497 = vmatpush.bf16.msra.mxu0 %v1184
  %1498 = vmatpush.bf16.msra.mxu0 %v1180
  %1499 = vmatpush.bf16.msra.mxu0 %v1176
  %1500 = vmatpush.bf16.msra.mxu0 %v1172
  %1501 = vmatpush.bf16.msra.mxu0 %v1168
  %1502 = vmatmul.bf16.gmra.mxu0 %v1480
  %v1503 = vpop.f32.mrf.mxu0
  %v1504 = vadd.f32 0.0, %v1503
  %v1505 = vpop.f32.mrf.mxu0
  %1506 = vdwg.mxu0
  %1507 = vmatpush.bf16.msra.mxu0 %v1197
  %1508 = vmatpush.bf16.msra.mxu0 %v1193
  %1509 = vmatpush.bf16.msra.mxu0 %v1189
  %1510 = vmatpush.bf16.msra.mxu0 %v1185
  %1511 = vmatpush.bf16.msra.mxu0 %v1181
  %1512 = vmatpush.bf16.msra.mxu0 %v1177
  %1513 = vmatpush.bf16.msra.mxu0 %v1173
  %1514 = vmatpush.bf16.msra.mxu0 %v1169
  %1515 = vmatmul.bf16.gmra.mxu0 %v1480
  %v1516 = vpop.f32.mrf.mxu0
  %v1517 = vadd.f32 0.0, %v1516
  %v1518 = vpop.f32.mrf.mxu0
  %1519 = vdwg.mxu0
  %1520 = vmatpush.bf16.msra.mxu0 %v1198
  %1521 = vmatpush.bf16.msra.mxu0 %v1194
  %1522 = vmatpush.bf16.msra.mxu0 %v1190
  %1523 = vmatpush.bf16.msra.mxu0 %v1186
  %1524 = vmatpush.bf16.msra.mxu0 %v1182
  %1525 = vmatpush.bf16.msra.mxu0 %v1178
  %1526 = vmatpush.bf16.msra.mxu0 %v1174
  %1527 = vmatpush.bf16.msra.mxu0 %v1170
  %1528 = vmatmul.bf16.gmra.mxu0 %v1480
  %v1529 = vpop.f32.mrf.mxu0
  %v1530 = vadd.f32 0.0, %v1529
  %v1531 = vpop.f32.mrf.mxu0
  %1532 = vdwg.mxu0
  %v1533 = vadd.f32 %v1476, %v1491
  %v1534 = vadd.f32 %v1477, %v1504
  %v1535 = vadd.f32 %v1478, %v1517
  %v1536 = vadd.f32 %v1479, %v1530
  %v1537 = vxor.u32 %v1472, 2147483648
  %v1538 = vmul.f32 %v1537, 1.442695
  %v1539 = vpow.pop %v1538
  %v1540 = vadd.f32 %v1539, 1.0
  %v1541 = vrcp.pop %v1540
  %v1542 = vmul.f32 %v1540, %v1541
  %v1543 = vsub.f32 1.0, %v1542
  %v1544 = vmul.f32 %v1541, %v1543
  %v1545 = vadd.f32 %v1541, %v1544
  %vm1546 = vweird.f32 %v1540
  %vm1547 = vweird.f32 %v1541
  %vm1548 = vmor %vm1546, %vm1547
  %v1549 = vsel %vm1548, %v1541, %v1545
  %v1550 = vand.u32 2147483647, %v1540
  %vm1551 = vcmp.eq.f32.partialorder %v1550, 8.507059e+37
  %v1552 = vand.u32 %v1540, 2147483648
  %v1553 = vor.u32 1.1754944e-38, %v1552
  %v1554 = vsel %vm1551, %v1553, %v1549
  %v1555 = vmul.f32 1.0, %v1554
  %v1556 = vxor.u32 %v1473, 2147483648
  %v1557 = vmul.f32 %v1556, 1.442695
  %v1558 = vpow.pop %v1557
  %v1559 = vadd.f32 %v1558, 1.0
  %v1560 = vrcp.pop %v1559
  %v1561 = vmul.f32 %v1559, %v1560
  %v1562 = vsub.f32 1.0, %v1561
  %v1563 = vmul.f32 %v1560, %v1562
  %v1564 = vadd.f32 %v1560, %v1563
  %vm1565 = vweird.f32 %v1559
  %vm1566 = vweird.f32 %v1560
  %vm1567 = vmor %vm1565, %vm1566
  %v1568 = vsel %vm1567, %v1560, %v1564
  %v1569 = vand.u32 2147483647, %v1559
  %vm1570 = vcmp.eq.f32.partialorder %v1569, 8.507059e+37
  %v1571 = vand.u32 %v1559, 2147483648
  %v1572 = vor.u32 1.1754944e-38, %v1571
  %v1573 = vsel %vm1570, %v1572, %v1568
  %v1574 = vmul.f32 1.0, %v1573
  %v1575 = vtanh.pop %v1474
  %v1576 = vxor.u32 %v1475, 2147483648
  %v1577 = vmul.f32 %v1576, 1.442695
  %v1578 = vpow.pop %v1577
  %v1579 = vadd.f32 %v1578, 1.0
  %v1580 = vrcp.pop %v1579
  %v1581 = vmul.f32 %v1579, %v1580
  %v1582 = vsub.f32 1.0, %v1581
  %v1583 = vmul.f32 %v1580, %v1582
  %v1584 = vadd.f32 %v1580, %v1583
  %vm1585 = vweird.f32 %v1579
  %vm1586 = vweird.f32 %v1580
  %vm1587 = vmor %vm1585, %vm1586
  %v1588 = vsel %vm1587, %v1580, %v1584
  %v1589 = vand.u32 2147483647, %v1579
  %vm1590 = vcmp.eq.f32.partialorder %v1589, 8.507059e+37
  %v1591 = vand.u32 %v1579, 2147483648
  %v1592 = vor.u32 1.1754944e-38, %v1591
  %v1593 = vsel %vm1590, %v1592, %v1588
  %v1594 = vmul.f32 1.0, %v1593
  %v1595 = vmul.f32 %v1574, %v1347
  %v1596 = vmul.f32 %v1555, %v1575
  %v1597 = vadd.f32 %v1595, %v1596
  %v1598 = vtanh.pop %v1597
  %v1599 = vmul.f32 %v1594, %v1598
  %v1600 = vxor.u32 %v1533, 2147483648
  %v1601 = vmul.f32 %v1600, 1.442695
  %v1602 = vpow.pop %v1601
  %v1603 = vadd.f32 %v1602, 1.0
  %v1604 = vrcp.pop %v1603
  %v1605 = vmul.f32 %v1603, %v1604
  %v1606 = vsub.f32 1.0, %v1605
  %v1607 = vmul.f32 %v1604, %v1606
  %v1608 = vadd.f32 %v1604, %v1607
  %vm1609 = vweird.f32 %v1603
  %vm1610 = vweird.f32 %v1604
  %vm1611 = vmor %vm1609, %vm1610
  %v1612 = vsel %vm1611, %v1604, %v1608
  %v1613 = vand.u32 2147483647, %v1603
  %vm1614 = vcmp.eq.f32.partialorder %v1613, 8.507059e+37
  %v1615 = vand.u32 %v1603, 2147483648
  %v1616 = vor.u32 1.1754944e-38, %v1615
  %v1617 = vsel %vm1614, %v1616, %v1612
  %v1618 = vmul.f32 1.0, %v1617
  %v1619 = vxor.u32 %v1534, 2147483648
  %v1620 = vmul.f32 %v1619, 1.442695
  %v1621 = vpow.pop %v1620
  %v1622 = vadd.f32 %v1621, 1.0
  %v1623 = vrcp.pop %v1622
  %v1624 = vmul.f32 %v1622, %v1623
  %v1625 = vsub.f32 1.0, %v1624
  %v1626 = vmul.f32 %v1623, %v1625
  %v1627 = vadd.f32 %v1623, %v1626
  %vm1628 = vweird.f32 %v1622
  %vm1629 = vweird.f32 %v1623
  %vm1630 = vmor %vm1628, %vm1629
  %v1631 = vsel %vm1630, %v1623, %v1627
  %v1632 = vand.u32 2147483647, %v1622
  %vm1633 = vcmp.eq.f32.partialorder %v1632, 8.507059e+37
  %v1634 = vand.u32 %v1622, 2147483648
  %v1635 = vor.u32 1.1754944e-38, %v1634
  %v1636 = vsel %vm1633, %v1635, %v1631
  %v1637 = vmul.f32 1.0, %v1636
  %v1638 = vtanh.pop %v1535
  %v1639 = vxor.u32 %v1536, 2147483648
  %v1640 = vmul.f32 %v1639, 1.442695
  %v1641 = vpow.pop %v1640
  %v1642 = vadd.f32 %v1641, 1.0
  %v1643 = vrcp.pop %v1642
  %v1644 = vmul.f32 %v1642, %v1643
  %v1645 = vsub.f32 1.0, %v1644
  %v1646 = vmul.f32 %v1643, %v1645
  %v1647 = vadd.f32 %v1643, %v1646
  %vm1648 = vweird.f32 %v1642
  %vm1649 = vweird.f32 %v1643
  %vm1650 = vmor %vm1648, %vm1649
  %v1651 = vsel %vm1650, %v1643, %v1647
  %v1652 = vand.u32 2147483647, %v1642
  %vm1653 = vcmp.eq.f32.partialorder %v1652, 8.507059e+37
  %v1654 = vand.u32 %v1642, 2147483648
  %v1655 = vor.u32 1.1754944e-38, %v1654
  %v1656 = vsel %vm1653, %v1655, %v1651
  %v1657 = vmul.f32 1.0, %v1656
  %v1658 = vmul.f32 %v1637, %v1410
  %v1659 = vmul.f32 %v1618, %v1638
  %v1660 = vadd.f32 %v1658, %v1659
  %v1661 = vtanh.pop %v1660
  %v1662 = vmul.f32 %v1657, %v1661
  %1663 = vst [vmem:[#allocation2 + $0x8] sm:$0xff] %v1599
  %1664 = vst [vmem:[#allocation3 + $0x30] sm:$0xff] %v1662
  %v1665 = vld [vmem:[#allocation4 + $0x40] sm:$0xff]
  %v1666 = vld [vmem:[#allocation4 + $0x48] sm:$0xff]
  %v1667 = vld [vmem:[#allocation4 + $0x50] sm:$0xff]
  %v1668 = vld [vmem:[#allocation4 + $0x58] sm:$0xff]
  %v1669 = vpack.c.bf16 %v1599, %v1599
  %1670 = vmatpush.bf16.msra.mxu0 %v975
  %1671 = vmatpush.bf16.msra.mxu0 %v971
  %1672 = vmatpush.bf16.msra.mxu0 %v967
  %1673 = vmatpush.bf16.msra.mxu0 %v963
  %1674 = vmatpush.bf16.msra.mxu0 %v959
  %1675 = vmatpush.bf16.msra.mxu0 %v955
  %1676 = vmatpush.bf16.msra.mxu0 %v951
  %1677 = vmatpush.bf16.msra.mxu0 %v947
  %1678 = vmatmul.bf16.gmra.mxu0 %v1669
  %v1679 = vpop.f32.mrf.mxu0
  %v1680 = vadd.f32 0.0, %v1679
  %v1681 = vpop.f32.mrf.mxu0
  %1682 = vdwg.mxu0
  %1683 = vmatpush.bf16.msra.mxu0 %v976
  %1684 = vmatpush.bf16.msra.mxu0 %v972
  %1685 = vmatpush.bf16.msra.mxu0 %v968
  %1686 = vmatpush.bf16.msra.mxu0 %v964
  %1687 = vmatpush.bf16.msra.mxu0 %v960
  %1688 = vmatpush.bf16.msra.mxu0 %v956
  %1689 = vmatpush.bf16.msra.mxu0 %v952
  %1690 = vmatpush.bf16.msra.mxu0 %v948
  %1691 = vmatmul.bf16.gmra.mxu0 %v1669
  %v1692 = vpop.f32.mrf.mxu0
  %v1693 = vadd.f32 0.0, %v1692
  %v1694 = vpop.f32.mrf.mxu0
  %1695 = vdwg.mxu0
  %1696 = vmatpush.bf16.msra.mxu0 %v977
  %1697 = vmatpush.bf16.msra.mxu0 %v973
  %1698 = vmatpush.bf16.msra.mxu0 %v969
  %1699 = vmatpush.bf16.msra.mxu0 %v965
  %1700 = vmatpush.bf16.msra.mxu0 %v961
  %1701 = vmatpush.bf16.msra.mxu0 %v957
  %1702 = vmatpush.bf16.msra.mxu0 %v953
  %1703 = vmatpush.bf16.msra.mxu0 %v949
  %1704 = vmatmul.bf16.gmra.mxu0 %v1669
  %v1705 = vpop.f32.mrf.mxu0
  %v1706 = vadd.f32 0.0, %v1705
  %v1707 = vpop.f32.mrf.mxu0
  %1708 = vdwg.mxu0
  %1709 = vmatpush.bf16.msra.mxu0 %v978
  %1710 = vmatpush.bf16.msra.mxu0 %v974
  %1711 = vmatpush.bf16.msra.mxu0 %v970
  %1712 = vmatpush.bf16.msra.mxu0 %v966
  %1713 = vmatpush.bf16.msra.mxu0 %v962
  %1714 = vmatpush.bf16.msra.mxu0 %v958
  %1715 = vmatpush.bf16.msra.mxu0 %v954
  %1716 = vmatpush.bf16.msra.mxu0 %v950
  %1717 = vmatmul.bf16.gmra.mxu0 %v1669
  %v1718 = vpop.f32.mrf.mxu0
  %v1719 = vadd.f32 0.0, %v1718
  %v1720 = vpop.f32.mrf.mxu0
  %1721 = vdwg.mxu0
  %v1722 = vadd.f32 %v1665, %v1680
  %v1723 = vadd.f32 %v1666, %v1693
  %v1724 = vadd.f32 %v1667, %v1706
  %v1725 = vadd.f32 %v1668, %v1719
  %v1726 = vld [vmem:[#allocation5 + $0xa0] sm:$0xff]
  %v1727 = vld [vmem:[#allocation5 + $0xa8] sm:$0xff]
  %v1728 = vld [vmem:[#allocation5 + $0xb0] sm:$0xff]
  %v1729 = vld [vmem:[#allocation5 + $0xb8] sm:$0xff]
  %v1730 = vpack.c.bf16 %v1662, %v1662
  %1731 = vmatpush.bf16.msra.mxu0 %v1195
  %1732 = vmatpush.bf16.msra.mxu0 %v1191
  %1733 = vmatpush.bf16.msra.mxu0 %v1187
  %1734 = vmatpush.bf16.msra.mxu0 %v1183
  %1735 = vmatpush.bf16.msra.mxu0 %v1179
  %1736 = vmatpush.bf16.msra.mxu0 %v1175
  %1737 = vmatpush.bf16.msra.mxu0 %v1171
  %1738 = vmatpush.bf16.msra.mxu0 %v1167
  %1739 = vmatmul.bf16.gmra.mxu0 %v1730
  %v1740 = vpop.f32.mrf.mxu0
  %v1741 = vadd.f32 0.0, %v1740
  %v1742 = vpop.f32.mrf.mxu0
  %1743 = vdwg.mxu0
  %1744 = vmatpush.bf16.msra.mxu0 %v1196
  %1745 = vmatpush.bf16.msra.mxu0 %v1192
  %1746 = vmatpush.bf16.msra.mxu0 %v1188
  %1747 = vmatpush.bf16.msra.mxu0 %v1184
  %1748 = vmatpush.bf16.msra.mxu0 %v1180
  %1749 = vmatpush.bf16.msra.mxu0 %v1176
  %1750 = vmatpush.bf16.msra.mxu0 %v1172
  %1751 = vmatpush.bf16.msra.mxu0 %v1168
  %1752 = vmatmul.bf16.gmra.mxu0 %v1730
  %v1753 = vpop.f32.mrf.mxu0
  %v1754 = vadd.f32 0.0, %v1753
  %v1755 = vpop.f32.mrf.mxu0
  %1756 = vdwg.mxu0
  %1757 = vmatpush.bf16.msra.mxu0 %v1197
  %1758 = vmatpush.bf16.msra.mxu0 %v1193
  %1759 = vmatpush.bf16.msra.mxu0 %v1189
  %1760 = vmatpush.bf16.msra.mxu0 %v1185
  %1761 = vmatpush.bf16.msra.mxu0 %v1181
  %1762 = vmatpush.bf16.msra.mxu0 %v1177
  %1763 = vmatpush.bf16.msra.mxu0 %v1173
  %1764 = vmatpush.bf16.msra.mxu0 %v1169
  %1765 = vmatmul.bf16.gmra.mxu0 %v1730
  %v1766 = vpop.f32.mrf.mxu0
  %v1767 = vadd.f32 0.0, %v1766
  %v1768 = vpop.f32.mrf.mxu0
  %1769 = vdwg.mxu0
  %1770 = vmatpush.bf16.msra.mxu0 %v1198
  %1771 = vmatpush.bf16.msra.mxu0 %v1194
  %1772 = vmatpush.bf16.msra.mxu0 %v1190
  %1773 = vmatpush.bf16.msra.mxu0 %v1186
  %1774 = vmatpush.bf16.msra.mxu0 %v1182
  %1775 = vmatpush.bf16.msra.mxu0 %v1178
  %1776 = vmatpush.bf16.msra.mxu0 %v1174
  %1777 = vmatpush.bf16.msra.mxu0 %v1170
  %1778 = vmatmul.bf16.gmra.mxu0 %v1730
  %v1779 = vpop.f32.mrf.mxu0
  %v1780 = vadd.f32 0.0, %v1779
  %v1781 = vpop.f32.mrf.mxu0
  %1782 = vdwg.mxu0
  %v1783 = vadd.f32 %v1726, %v1741
  %v1784 = vadd.f32 %v1727, %v1754
  %v1785 = vadd.f32 %v1728, %v1767
  %v1786 = vadd.f32 %v1729, %v1780
  %v1787 = vxor.u32 %v1722, 2147483648
  %v1788 = vmul.f32 %v1787, 1.442695
  %v1789 = vpow.pop %v1788
  %v1790 = vadd.f32 %v1789, 1.0
  %v1791 = vrcp.pop %v1790
  %v1792 = vmul.f32 %v1790, %v1791
  %v1793 = vsub.f32 1.0, %v1792
  %v1794 = vmul.f32 %v1791, %v1793
  %v1795 = vadd.f32 %v1791, %v1794
  %vm1796 = vweird.f32 %v1790
  %vm1797 = vweird.f32 %v1791
  %vm1798 = vmor %vm1796, %vm1797
  %v1799 = vsel %vm1798, %v1791, %v1795
  %v1800 = vand.u32 2147483647, %v1790
  %vm1801 = vcmp.eq.f32.partialorder %v1800, 8.507059e+37
  %v1802 = vand.u32 %v1790, 2147483648
  %v1803 = vor.u32 1.1754944e-38, %v1802
  %v1804 = vsel %vm1801, %v1803, %v1799
  %v1805 = vmul.f32 1.0, %v1804
  %v1806 = vxor.u32 %v1723, 2147483648
  %v1807 = vmul.f32 %v1806, 1.442695
  %v1808 = vpow.pop %v1807
  %v1809 = vadd.f32 %v1808, 1.0
  %v1810 = vrcp.pop %v1809
  %v1811 = vmul.f32 %v1809, %v1810
  %v1812 = vsub.f32 1.0, %v1811
  %v1813 = vmul.f32 %v1810, %v1812
  %v1814 = vadd.f32 %v1810, %v1813
  %vm1815 = vweird.f32 %v1809
  %vm1816 = vweird.f32 %v1810
  %vm1817 = vmor %vm1815, %vm1816
  %v1818 = vsel %vm1817, %v1810, %v1814
  %v1819 = vand.u32 2147483647, %v1809
  %vm1820 = vcmp.eq.f32.partialorder %v1819, 8.507059e+37
  %v1821 = vand.u32 %v1809, 2147483648
  %v1822 = vor.u32 1.1754944e-38, %v1821
  %v1823 = vsel %vm1820, %v1822, %v1818
  %v1824 = vmul.f32 1.0, %v1823
  %v1825 = vtanh.pop %v1724
  %v1826 = vxor.u32 %v1725, 2147483648
  %v1827 = vmul.f32 %v1826, 1.442695
  %v1828 = vpow.pop %v1827
  %v1829 = vadd.f32 %v1828, 1.0
  %v1830 = vrcp.pop %v1829
  %v1831 = vmul.f32 %v1829, %v1830
  %v1832 = vsub.f32 1.0, %v1831
  %v1833 = vmul.f32 %v1830, %v1832
  %v1834 = vadd.f32 %v1830, %v1833
  %vm1835 = vweird.f32 %v1829
  %vm1836 = vweird.f32 %v1830
  %vm1837 = vmor %vm1835, %vm1836
  %v1838 = vsel %vm1837, %v1830, %v1834
  %v1839 = vand.u32 2147483647, %v1829
  %vm1840 = vcmp.eq.f32.partialorder %v1839, 8.507059e+37
  %v1841 = vand.u32 %v1829, 2147483648
  %v1842 = vor.u32 1.1754944e-38, %v1841
  %v1843 = vsel %vm1840, %v1842, %v1838
  %v1844 = vmul.f32 1.0, %v1843
  %v1845 = vmul.f32 %v1824, %v1597
  %v1846 = vmul.f32 %v1805, %v1825
  %v1847 = vadd.f32 %v1845, %v1846
  %v1848 = vtanh.pop %v1847
  %v1849 = vmul.f32 %v1844, %v1848
  %v1850 = vxor.u32 %v1783, 2147483648
  %v1851 = vmul.f32 %v1850, 1.442695
  %v1852 = vpow.pop %v1851
  %v1853 = vadd.f32 %v1852, 1.0
  %v1854 = vrcp.pop %v1853
  %v1855 = vmul.f32 %v1853, %v1854
  %v1856 = vsub.f32 1.0, %v1855
  %v1857 = vmul.f32 %v1854, %v1856
  %v1858 = vadd.f32 %v1854, %v1857
  %vm1859 = vweird.f32 %v1853
  %vm1860 = vweird.f32 %v1854
  %vm1861 = vmor %vm1859, %vm1860
  %v1862 = vsel %vm1861, %v1854, %v1858
  %v1863 = vand.u32 2147483647, %v1853
  %vm1864 = vcmp.eq.f32.partialorder %v1863, 8.507059e+37
  %v1865 = vand.u32 %v1853, 2147483648
  %v1866 = vor.u32 1.1754944e-38, %v1865
  %v1867 = vsel %vm1864, %v1866, %v1862
  %v1868 = vmul.f32 1.0, %v1867
  %v1869 = vxor.u32 %v1784, 2147483648
  %v1870 = vmul.f32 %v1869, 1.442695
  %v1871 = vpow.pop %v1870
  %v1872 = vadd.f32 %v1871, 1.0
  %v1873 = vrcp.pop %v1872
  %v1874 = vmul.f32 %v1872, %v1873
  %v1875 = vsub.f32 1.0, %v1874
  %v1876 = vmul.f32 %v1873, %v1875
  %v1877 = vadd.f32 %v1873, %v1876
  %vm1878 = vweird.f32 %v1872
  %vm1879 = vweird.f32 %v1873
  %vm1880 = vmor %vm1878, %vm1879
  %v1881 = vsel %vm1880, %v1873, %v1877
  %v1882 = vand.u32 2147483647, %v1872
  %vm1883 = vcmp.eq.f32.partialorder %v1882, 8.507059e+37
  %v1884 = vand.u32 %v1872, 2147483648
  %v1885 = vor.u32 1.1754944e-38, %v1884
  %v1886 = vsel %vm1883, %v1885, %v1881
  %v1887 = vmul.f32 1.0, %v1886
  %v1888 = vtanh.pop %v1785
  %v1889 = vxor.u32 %v1786, 2147483648
  %v1890 = vmul.f32 %v1889, 1.442695
  %v1891 = vpow.pop %v1890
  %v1892 = vadd.f32 %v1891, 1.0
  %v1893 = vrcp.pop %v1892
  %v1894 = vmul.f32 %v1892, %v1893
  %v1895 = vsub.f32 1.0, %v1894
  %v1896 = vmul.f32 %v1893, %v1895
  %v1897 = vadd.f32 %v1893, %v1896
  %vm1898 = vweird.f32 %v1892
  %vm1899 = vweird.f32 %v1893
  %vm1900 = vmor %vm1898, %vm1899
  %v1901 = vsel %vm1900, %v1893, %v1897
  %v1902 = vand.u32 2147483647, %v1892
  %vm1903 = vcmp.eq.f32.partialorder %v1902, 8.507059e+37
  %v1904 = vand.u32 %v1892, 2147483648
  %v1905 = vor.u32 1.1754944e-38, %v1904
  %v1906 = vsel %vm1903, %v1905, %v1901
  %v1907 = vmul.f32 1.0, %v1906
  %v1908 = vmul.f32 %v1887, %v1660
  %v1909 = vmul.f32 %v1868, %v1888
  %v1910 = vadd.f32 %v1908, %v1909
  %v1911 = vtanh.pop %v1910
  %v1912 = vmul.f32 %v1907, %v1911
  %1913 = vst [vmem:[#allocation2 + $0x10] sm:$0xff] %v1849
  %1914 = vst [vmem:[#allocation3 + $0x28] sm:$0xff] %v1912
  %v1915 = vld [vmem:[#allocation4 + $0x60] sm:$0xff]
  %v1916 = vld [vmem:[#allocation4 + $0x68] sm:$0xff]
  %v1917 = vld [vmem:[#allocation4 + $0x70] sm:$0xff]
  %v1918 = vld [vmem:[#allocation4 + $0x78] sm:$0xff]
  %v1919 = vpack.c.bf16 %v1849, %v1849
  %1920 = vmatpush.bf16.msra.mxu0 %v975
  %1921 = vmatpush.bf16.msra.mxu0 %v971
  %1922 = vmatpush.bf16.msra.mxu0 %v967
  %1923 = vmatpush.bf16.msra.mxu0 %v963
  %1924 = vmatpush.bf16.msra.mxu0 %v959
  %1925 = vmatpush.bf16.msra.mxu0 %v955
  %1926 = vmatpush.bf16.msra.mxu0 %v951
  %1927 = vmatpush.bf16.msra.mxu0 %v947
  %1928 = vmatmul.bf16.gmra.mxu0 %v1919
  %v1929 = vpop.f32.mrf.mxu0
  %v1930 = vadd.f32 0.0, %v1929
  %v1931 = vpop.f32.mrf.mxu0
  %1932 = vdwg.mxu0
  %1933 = vmatpush.bf16.msra.mxu0 %v976
  %1934 = vmatpush.bf16.msra.mxu0 %v972
  %1935 = vmatpush.bf16.msra.mxu0 %v968
  %1936 = vmatpush.bf16.msra.mxu0 %v964
  %1937 = vmatpush.bf16.msra.mxu0 %v960
  %1938 = vmatpush.bf16.msra.mxu0 %v956
  %1939 = vmatpush.bf16.msra.mxu0 %v952
  %1940 = vmatpush.bf16.msra.mxu0 %v948
  %1941 = vmatmul.bf16.gmra.mxu0 %v1919
  %v1942 = vpop.f32.mrf.mxu0
  %v1943 = vadd.f32 0.0, %v1942
  %v1944 = vpop.f32.mrf.mxu0
  %1945 = vdwg.mxu0
  %1946 = vmatpush.bf16.msra.mxu0 %v977
  %1947 = vmatpush.bf16.msra.mxu0 %v973
  %1948 = vmatpush.bf16.msra.mxu0 %v969
  %1949 = vmatpush.bf16.msra.mxu0 %v965
  %1950 = vmatpush.bf16.msra.mxu0 %v961
  %1951 = vmatpush.bf16.msra.mxu0 %v957
  %1952 = vmatpush.bf16.msra.mxu0 %v953
  %1953 = vmatpush.bf16.msra.mxu0 %v949
  %1954 = vmatmul.bf16.gmra.mxu0 %v1919
  %v1955 = vpop.f32.mrf.mxu0
  %v1956 = vadd.f32 0.0, %v1955
  %v1957 = vpop.f32.mrf.mxu0
  %1958 = vdwg.mxu0
  %1959 = vmatpush.bf16.msra.mxu0 %v978
  %1960 = vmatpush.bf16.msra.mxu0 %v974
  %1961 = vmatpush.bf16.msra.mxu0 %v970
  %1962 = vmatpush.bf16.msra.mxu0 %v966
  %1963 = vmatpush.bf16.msra.mxu0 %v962
  %1964 = vmatpush.bf16.msra.mxu0 %v958
  %1965 = vmatpush.bf16.msra.mxu0 %v954
  %1966 = vmatpush.bf16.msra.mxu0 %v950
  %1967 = vmatmul.bf16.gmra.mxu0 %v1919
  %v1968 = vpop.f32.mrf.mxu0
  %v1969 = vadd.f32 0.0, %v1968
  %v1970 = vpop.f32.mrf.mxu0
  %1971 = vdwg.mxu0
  %v1972 = vadd.f32 %v1915, %v1930
  %v1973 = vadd.f32 %v1916, %v1943
  %v1974 = vadd.f32 %v1917, %v1956
  %v1975 = vadd.f32 %v1918, %v1969
  %v1976 = vld [vmem:[#allocation5 + $0x80] sm:$0xff]
  %v1977 = vld [vmem:[#allocation5 + $0x88] sm:$0xff]
  %v1978 = vld [vmem:[#allocation5 + $0x90] sm:$0xff]
  %v1979 = vld [vmem:[#allocation5 + $0x98] sm:$0xff]
  %v1980 = vpack.c.bf16 %v1912, %v1912
  %1981 = vmatpush.bf16.msra.mxu0 %v1195
  %1982 = vmatpush.bf16.msra.mxu0 %v1191
  %1983 = vmatpush.bf16.msra.mxu0 %v1187
  %1984 = vmatpush.bf16.msra.mxu0 %v1183
  %1985 = vmatpush.bf16.msra.mxu0 %v1179
  %1986 = vmatpush.bf16.msra.mxu0 %v1175
  %1987 = vmatpush.bf16.msra.mxu0 %v1171
  %1988 = vmatpush.bf16.msra.mxu0 %v1167
  %1989 = vmatmul.bf16.gmra.mxu0 %v1980
  %v1990 = vpop.f32.mrf.mxu0
  %v1991 = vadd.f32 0.0, %v1990
  %v1992 = vpop.f32.mrf.mxu0
  %1993 = vdwg.mxu0
  %1994 = vmatpush.bf16.msra.mxu0 %v1196
  %1995 = vmatpush.bf16.msra.mxu0 %v1192
  %1996 = vmatpush.bf16.msra.mxu0 %v1188
  %1997 = vmatpush.bf16.msra.mxu0 %v1184
  %1998 = vmatpush.bf16.msra.mxu0 %v1180
  %1999 = vmatpush.bf16.msra.mxu0 %v1176
  %2000 = vmatpush.bf16.msra.mxu0 %v1172
  %2001 = vmatpush.bf16.msra.mxu0 %v1168
  %2002 = vmatmul.bf16.gmra.mxu0 %v1980
  %v2003 = vpop.f32.mrf.mxu0
  %v2004 = vadd.f32 0.0, %v2003
  %v2005 = vpop.f32.mrf.mxu0
  %2006 = vdwg.mxu0
  %2007 = vmatpush.bf16.msra.mxu0 %v1197
  %2008 = vmatpush.bf16.msra.mxu0 %v1193
  %2009 = vmatpush.bf16.msra.mxu0 %v1189
  %2010 = vmatpush.bf16.msra.mxu0 %v1185
  %2011 = vmatpush.bf16.msra.mxu0 %v1181
  %2012 = vmatpush.bf16.msra.mxu0 %v1177
  %2013 = vmatpush.bf16.msra.mxu0 %v1173
  %2014 = vmatpush.bf16.msra.mxu0 %v1169
  %2015 = vmatmul.bf16.gmra.mxu0 %v1980
  %v2016 = vpop.f32.mrf.mxu0
  %v2017 = vadd.f32 0.0, %v2016
  %v2018 = vpop.f32.mrf.mxu0
  %2019 = vdwg.mxu0
  %2020 = vmatpush.bf16.msra.mxu0 %v1198
  %2021 = vmatpush.bf16.msra.mxu0 %v1194
  %2022 = vmatpush.bf16.msra.mxu0 %v1190
  %2023 = vmatpush.bf16.msra.mxu0 %v1186
  %2024 = vmatpush.bf16.msra.mxu0 %v1182
  %2025 = vmatpush.bf16.msra.mxu0 %v1178
  %2026 = vmatpush.bf16.msra.mxu0 %v1174
  %2027 = vmatpush.bf16.msra.mxu0 %v1170
  %2028 = vmatmul.bf16.gmra.mxu0 %v1980
  %v2029 = vpop.f32.mrf.mxu0
  %v2030 = vadd.f32 0.0, %v2029
  %v2031 = vpop.f32.mrf.mxu0
  %2032 = vdwg.mxu0
  %v2033 = vadd.f32 %v1976, %v1991
  %v2034 = vadd.f32 %v1977, %v2004
  %v2035 = vadd.f32 %v1978, %v2017
  %v2036 = vadd.f32 %v1979, %v2030
  %v2037 = vxor.u32 %v1972, 2147483648
  %v2038 = vmul.f32 %v2037, 1.442695
  %v2039 = vpow.pop %v2038
  %v2040 = vadd.f32 %v2039, 1.0
  %v2041 = vrcp.pop %v2040
  %v2042 = vmul.f32 %v2040, %v2041
  %v2043 = vsub.f32 1.0, %v2042
  %v2044 = vmul.f32 %v2041, %v2043
  %v2045 = vadd.f32 %v2041, %v2044
  %vm2046 = vweird.f32 %v2040
  %vm2047 = vweird.f32 %v2041
  %vm2048 = vmor %vm2046, %vm2047
  %v2049 = vsel %vm2048, %v2041, %v2045
  %v2050 = vand.u32 2147483647, %v2040
  %vm2051 = vcmp.eq.f32.partialorder %v2050, 8.507059e+37
  %v2052 = vand.u32 %v2040, 2147483648
  %v2053 = vor.u32 1.1754944e-38, %v2052
  %v2054 = vsel %vm2051, %v2053, %v2049
  %v2055 = vmul.f32 1.0, %v2054
  %v2056 = vxor.u32 %v1973, 2147483648
  %v2057 = vmul.f32 %v2056, 1.442695
  %v2058 = vpow.pop %v2057
  %v2059 = vadd.f32 %v2058, 1.0
  %v2060 = vrcp.pop %v2059
  %v2061 = vmul.f32 %v2059, %v2060
  %v2062 = vsub.f32 1.0, %v2061
  %v2063 = vmul.f32 %v2060, %v2062
  %v2064 = vadd.f32 %v2060, %v2063
  %vm2065 = vweird.f32 %v2059
  %vm2066 = vweird.f32 %v2060
  %vm2067 = vmor %vm2065, %vm2066
  %v2068 = vsel %vm2067, %v2060, %v2064
  %v2069 = vand.u32 2147483647, %v2059
  %vm2070 = vcmp.eq.f32.partialorder %v2069, 8.507059e+37
  %v2071 = vand.u32 %v2059, 2147483648
  %v2072 = vor.u32 1.1754944e-38, %v2071
  %v2073 = vsel %vm2070, %v2072, %v2068
  %v2074 = vmul.f32 1.0, %v2073
  %v2075 = vtanh.pop %v1974
  %v2076 = vxor.u32 %v1975, 2147483648
  %v2077 = vmul.f32 %v2076, 1.442695
  %v2078 = vpow.pop %v2077
  %v2079 = vadd.f32 %v2078, 1.0
  %v2080 = vrcp.pop %v2079
  %v2081 = vmul.f32 %v2079, %v2080
  %v2082 = vsub.f32 1.0, %v2081
  %v2083 = vmul.f32 %v2080, %v2082
  %v2084 = vadd.f32 %v2080, %v2083
  %vm2085 = vweird.f32 %v2079
  %vm2086 = vweird.f32 %v2080
  %vm2087 = vmor %vm2085, %vm2086
  %v2088 = vsel %vm2087, %v2080, %v2084
  %v2089 = vand.u32 2147483647, %v2079
  %vm2090 = vcmp.eq.f32.partialorder %v2089, 8.507059e+37
  %v2091 = vand.u32 %v2079, 2147483648
  %v2092 = vor.u32 1.1754944e-38, %v2091
  %v2093 = vsel %vm2090, %v2092, %v2088
  %v2094 = vmul.f32 1.0, %v2093
  %v2095 = vmul.f32 %v2074, %v1847
  %v2096 = vmul.f32 %v2055, %v2075
  %v2097 = vadd.f32 %v2095, %v2096
  %v2098 = vtanh.pop %v2097
  %v2099 = vmul.f32 %v2094, %v2098
  %v2100 = vxor.u32 %v2033, 2147483648
  %v2101 = vmul.f32 %v2100, 1.442695
  %v2102 = vpow.pop %v2101
  %v2103 = vadd.f32 %v2102, 1.0
  %v2104 = vrcp.pop %v2103
  %v2105 = vmul.f32 %v2103, %v2104
  %v2106 = vsub.f32 1.0, %v2105
  %v2107 = vmul.f32 %v2104, %v2106
  %v2108 = vadd.f32 %v2104, %v2107
  %vm2109 = vweird.f32 %v2103
  %vm2110 = vweird.f32 %v2104
  %vm2111 = vmor %vm2109, %vm2110
  %v2112 = vsel %vm2111, %v2104, %v2108
  %v2113 = vand.u32 2147483647, %v2103
  %vm2114 = vcmp.eq.f32.partialorder %v2113, 8.507059e+37
  %v2115 = vand.u32 %v2103, 2147483648
  %v2116 = vor.u32 1.1754944e-38, %v2115
  %v2117 = vsel %vm2114, %v2116, %v2112
  %v2118 = vmul.f32 1.0, %v2117
  %v2119 = vxor.u32 %v2034, 2147483648
  %v2120 = vmul.f32 %v2119, 1.442695
  %v2121 = vpow.pop %v2120
  %v2122 = vadd.f32 %v2121, 1.0
  %v2123 = vrcp.pop %v2122
  %v2124 = vmul.f32 %v2122, %v2123
  %v2125 = vsub.f32 1.0, %v2124
  %v2126 = vmul.f32 %v2123, %v2125
  %v2127 = vadd.f32 %v2123, %v2126
  %vm2128 = vweird.f32 %v2122
  %vm2129 = vweird.f32 %v2123
  %vm2130 = vmor %vm2128, %vm2129
  %v2131 = vsel %vm2130, %v2123, %v2127
  %v2132 = vand.u32 2147483647, %v2122
  %vm2133 = vcmp.eq.f32.partialorder %v2132, 8.507059e+37
  %v2134 = vand.u32 %v2122, 2147483648
  %v2135 = vor.u32 1.1754944e-38, %v2134
  %v2136 = vsel %vm2133, %v2135, %v2131
  %v2137 = vmul.f32 1.0, %v2136
  %v2138 = vtanh.pop %v2035
  %v2139 = vxor.u32 %v2036, 2147483648
  %v2140 = vmul.f32 %v2139, 1.442695
  %v2141 = vpow.pop %v2140
  %v2142 = vadd.f32 %v2141, 1.0
  %v2143 = vrcp.pop %v2142
  %v2144 = vmul.f32 %v2142, %v2143
  %v2145 = vsub.f32 1.0, %v2144
  %v2146 = vmul.f32 %v2143, %v2145
  %v2147 = vadd.f32 %v2143, %v2146
  %vm2148 = vweird.f32 %v2142
  %vm2149 = vweird.f32 %v2143
  %vm2150 = vmor %vm2148, %vm2149
  %v2151 = vsel %vm2150, %v2143, %v2147
  %v2152 = vand.u32 2147483647, %v2142
  %vm2153 = vcmp.eq.f32.partialorder %v2152, 8.507059e+37
  %v2154 = vand.u32 %v2142, 2147483648
  %v2155 = vor.u32 1.1754944e-38, %v2154
  %v2156 = vsel %vm2153, %v2155, %v2151
  %v2157 = vmul.f32 1.0, %v2156
  %v2158 = vmul.f32 %v2137, %v1910
  %v2159 = vmul.f32 %v2118, %v2138
  %v2160 = vadd.f32 %v2158, %v2159
  %v2161 = vtanh.pop %v2160
  %v2162 = vmul.f32 %v2157, %v2161
  %2163 = vst [vmem:[#allocation2 + $0x18] sm:$0xff] %v2099
  %2164 = vst [vmem:[#allocation3 + $0x20] sm:$0xff] %v2162
  %v2165 = vld [vmem:[#allocation4 + $0x80] sm:$0xff]
  %v2166 = vld [vmem:[#allocation4 + $0x88] sm:$0xff]
  %v2167 = vld [vmem:[#allocation4 + $0x90] sm:$0xff]
  %v2168 = vld [vmem:[#allocation4 + $0x98] sm:$0xff]
  %v2169 = vpack.c.bf16 %v2099, %v2099
  %2170 = vmatpush.bf16.msra.mxu0 %v975
  %2171 = vmatpush.bf16.msra.mxu0 %v971
  %2172 = vmatpush.bf16.msra.mxu0 %v967
  %2173 = vmatpush.bf16.msra.mxu0 %v963
  %2174 = vmatpush.bf16.msra.mxu0 %v959
  %2175 = vmatpush.bf16.msra.mxu0 %v955
  %2176 = vmatpush.bf16.msra.mxu0 %v951
  %2177 = vmatpush.bf16.msra.mxu0 %v947
  %2178 = vmatmul.bf16.gmra.mxu0 %v2169
  %v2179 = vpop.f32.mrf.mxu0
  %v2180 = vadd.f32 0.0, %v2179
  %v2181 = vpop.f32.mrf.mxu0
  %2182 = vdwg.mxu0
  %2183 = vmatpush.bf16.msra.mxu0 %v976
  %2184 = vmatpush.bf16.msra.mxu0 %v972
  %2185 = vmatpush.bf16.msra.mxu0 %v968
  %2186 = vmatpush.bf16.msra.mxu0 %v964
  %2187 = vmatpush.bf16.msra.mxu0 %v960
  %2188 = vmatpush.bf16.msra.mxu0 %v956
  %2189 = vmatpush.bf16.msra.mxu0 %v952
  %2190 = vmatpush.bf16.msra.mxu0 %v948
  %2191 = vmatmul.bf16.gmra.mxu0 %v2169
  %v2192 = vpop.f32.mrf.mxu0
  %v2193 = vadd.f32 0.0, %v2192
  %v2194 = vpop.f32.mrf.mxu0
  %2195 = vdwg.mxu0
  %2196 = vmatpush.bf16.msra.mxu0 %v977
  %2197 = vmatpush.bf16.msra.mxu0 %v973
  %2198 = vmatpush.bf16.msra.mxu0 %v969
  %2199 = vmatpush.bf16.msra.mxu0 %v965
  %2200 = vmatpush.bf16.msra.mxu0 %v961
  %2201 = vmatpush.bf16.msra.mxu0 %v957
  %2202 = vmatpush.bf16.msra.mxu0 %v953
  %2203 = vmatpush.bf16.msra.mxu0 %v949
  %2204 = vmatmul.bf16.gmra.mxu0 %v2169
  %v2205 = vpop.f32.mrf.mxu0
  %v2206 = vadd.f32 0.0, %v2205
  %v2207 = vpop.f32.mrf.mxu0
  %2208 = vdwg.mxu0
  %2209 = vmatpush.bf16.msra.mxu0 %v978
  %2210 = vmatpush.bf16.msra.mxu0 %v974
  %2211 = vmatpush.bf16.msra.mxu0 %v970
  %2212 = vmatpush.bf16.msra.mxu0 %v966
  %2213 = vmatpush.bf16.msra.mxu0 %v962
  %2214 = vmatpush.bf16.msra.mxu0 %v958
  %2215 = vmatpush.bf16.msra.mxu0 %v954
  %2216 = vmatpush.bf16.msra.mxu0 %v950
  %2217 = vmatmul.bf16.gmra.mxu0 %v2169
  %v2218 = vpop.f32.mrf.mxu0
  %v2219 = vadd.f32 0.0, %v2218
  %v2220 = vpop.f32.mrf.mxu0
  %2221 = vdwg.mxu0
  %v2222 = vadd.f32 %v2165, %v2180
  %v2223 = vadd.f32 %v2166, %v2193
  %v2224 = vadd.f32 %v2167, %v2206
  %v2225 = vadd.f32 %v2168, %v2219
  %v2226 = vld [vmem:[#allocation5 + $0x60] sm:$0xff]
  %v2227 = vld [vmem:[#allocation5 + $0x68] sm:$0xff]
  %v2228 = vld [vmem:[#allocation5 + $0x70] sm:$0xff]
  %v2229 = vld [vmem:[#allocation5 + $0x78] sm:$0xff]
  %v2230 = vpack.c.bf16 %v2162, %v2162
  %2231 = vmatpush.bf16.msra.mxu0 %v1195
  %2232 = vmatpush.bf16.msra.mxu0 %v1191
  %2233 = vmatpush.bf16.msra.mxu0 %v1187
  %2234 = vmatpush.bf16.msra.mxu0 %v1183
  %2235 = vmatpush.bf16.msra.mxu0 %v1179
  %2236 = vmatpush.bf16.msra.mxu0 %v1175
  %2237 = vmatpush.bf16.msra.mxu0 %v1171
  %2238 = vmatpush.bf16.msra.mxu0 %v1167
  %2239 = vmatmul.bf16.gmra.mxu0 %v2230
  %v2240 = vpop.f32.mrf.mxu0
  %v2241 = vadd.f32 0.0, %v2240
  %v2242 = vpop.f32.mrf.mxu0
  %2243 = vdwg.mxu0
  %2244 = vmatpush.bf16.msra.mxu0 %v1196
  %2245 = vmatpush.bf16.msra.mxu0 %v1192
  %2246 = vmatpush.bf16.msra.mxu0 %v1188
  %2247 = vmatpush.bf16.msra.mxu0 %v1184
  %2248 = vmatpush.bf16.msra.mxu0 %v1180
  %2249 = vmatpush.bf16.msra.mxu0 %v1176
  %2250 = vmatpush.bf16.msra.mxu0 %v1172
  %2251 = vmatpush.bf16.msra.mxu0 %v1168
  %2252 = vmatmul.bf16.gmra.mxu0 %v2230
  %v2253 = vpop.f32.mrf.mxu0
  %v2254 = vadd.f32 0.0, %v2253
  %v2255 = vpop.f32.mrf.mxu0
  %2256 = vdwg.mxu0
  %2257 = vmatpush.bf16.msra.mxu0 %v1197
  %2258 = vmatpush.bf16.msra.mxu0 %v1193
  %2259 = vmatpush.bf16.msra.mxu0 %v1189
  %2260 = vmatpush.bf16.msra.mxu0 %v1185
  %2261 = vmatpush.bf16.msra.mxu0 %v1181
  %2262 = vmatpush.bf16.msra.mxu0 %v1177
  %2263 = vmatpush.bf16.msra.mxu0 %v1173
  %2264 = vmatpush.bf16.msra.mxu0 %v1169
  %2265 = vmatmul.bf16.gmra.mxu0 %v2230
  %v2266 = vpop.f32.mrf.mxu0
  %v2267 = vadd.f32 0.0, %v2266
  %v2268 = vpop.f32.mrf.mxu0
  %2269 = vdwg.mxu0
  %2270 = vmatpush.bf16.msra.mxu0 %v1198
  %2271 = vmatpush.bf16.msra.mxu0 %v1194
  %2272 = vmatpush.bf16.msra.mxu0 %v1190
  %2273 = vmatpush.bf16.msra.mxu0 %v1186
  %2274 = vmatpush.bf16.msra.mxu0 %v1182
  %2275 = vmatpush.bf16.msra.mxu0 %v1178
  %2276 = vmatpush.bf16.msra.mxu0 %v1174
  %2277 = vmatpush.bf16.msra.mxu0 %v1170
  %2278 = vmatmul.bf16.gmra.mxu0 %v2230
  %v2279 = vpop.f32.mrf.mxu0
  %v2280 = vadd.f32 0.0, %v2279
  %v2281 = vpop.f32.mrf.mxu0
  %2282 = vdwg.mxu0
  %v2283 = vadd.f32 %v2226, %v2241
  %v2284 = vadd.f32 %v2227, %v2254
  %v2285 = vadd.f32 %v2228, %v2267
  %v2286 = vadd.f32 %v2229, %v2280
  %v2287 = vxor.u32 %v2222, 2147483648
  %v2288 = vmul.f32 %v2287, 1.442695
  %v2289 = vpow.pop %v2288
  %v2290 = vadd.f32 %v2289, 1.0
  %v2291 = vrcp.pop %v2290
  %v2292 = vmul.f32 %v2290, %v2291
  %v2293 = vsub.f32 1.0, %v2292
  %v2294 = vmul.f32 %v2291, %v2293
  %v2295 = vadd.f32 %v2291, %v2294
  %vm2296 = vweird.f32 %v2290
  %vm2297 = vweird.f32 %v2291
  %vm2298 = vmor %vm2296, %vm2297
  %v2299 = vsel %vm2298, %v2291, %v2295
  %v2300 = vand.u32 2147483647, %v2290
  %vm2301 = vcmp.eq.f32.partialorder %v2300, 8.507059e+37
  %v2302 = vand.u32 %v2290, 2147483648
  %v2303 = vor.u32 1.1754944e-38, %v2302
  %v2304 = vsel %vm2301, %v2303, %v2299
  %v2305 = vmul.f32 1.0, %v2304
  %v2306 = vxor.u32 %v2223, 2147483648
  %v2307 = vmul.f32 %v2306, 1.442695
  %v2308 = vpow.pop %v2307
  %v2309 = vadd.f32 %v2308, 1.0
  %v2310 = vrcp.pop %v2309
  %v2311 = vmul.f32 %v2309, %v2310
  %v2312 = vsub.f32 1.0, %v2311
  %v2313 = vmul.f32 %v2310, %v2312
  %v2314 = vadd.f32 %v2310, %v2313
  %vm2315 = vweird.f32 %v2309
  %vm2316 = vweird.f32 %v2310
  %vm2317 = vmor %vm2315, %vm2316
  %v2318 = vsel %vm2317, %v2310, %v2314
  %v2319 = vand.u32 2147483647, %v2309
  %vm2320 = vcmp.eq.f32.partialorder %v2319, 8.507059e+37
  %v2321 = vand.u32 %v2309, 2147483648
  %v2322 = vor.u32 1.1754944e-38, %v2321
  %v2323 = vsel %vm2320, %v2322, %v2318
  %v2324 = vmul.f32 1.0, %v2323
  %v2325 = vtanh.pop %v2224
  %v2326 = vxor.u32 %v2225, 2147483648
  %v2327 = vmul.f32 %v2326, 1.442695
  %v2328 = vpow.pop %v2327
  %v2329 = vadd.f32 %v2328, 1.0
  %v2330 = vrcp.pop %v2329
  %v2331 = vmul.f32 %v2329, %v2330
  %v2332 = vsub.f32 1.0, %v2331
  %v2333 = vmul.f32 %v2330, %v2332
  %v2334 = vadd.f32 %v2330, %v2333
  %vm2335 = vweird.f32 %v2329
  %vm2336 = vweird.f32 %v2330
  %vm2337 = vmor %vm2335, %vm2336
  %v2338 = vsel %vm2337, %v2330, %v2334
  %v2339 = vand.u32 2147483647, %v2329
  %vm2340 = vcmp.eq.f32.partialorder %v2339, 8.507059e+37
  %v2341 = vand.u32 %v2329, 2147483648
  %v2342 = vor.u32 1.1754944e-38, %v2341
  %v2343 = vsel %vm2340, %v2342, %v2338
  %v2344 = vmul.f32 1.0, %v2343
  %v2345 = vmul.f32 %v2324, %v2097
  %v2346 = vmul.f32 %v2305, %v2325
  %v2347 = vadd.f32 %v2345, %v2346
  %v2348 = vtanh.pop %v2347
  %v2349 = vmul.f32 %v2344, %v2348
  %v2350 = vxor.u32 %v2283, 2147483648
  %v2351 = vmul.f32 %v2350, 1.442695
  %v2352 = vpow.pop %v2351
  %v2353 = vadd.f32 %v2352, 1.0
  %v2354 = vrcp.pop %v2353
  %v2355 = vmul.f32 %v2353, %v2354
  %v2356 = vsub.f32 1.0, %v2355
  %v2357 = vmul.f32 %v2354, %v2356
  %v2358 = vadd.f32 %v2354, %v2357
  %vm2359 = vweird.f32 %v2353
  %vm2360 = vweird.f32 %v2354
  %vm2361 = vmor %vm2359, %vm2360
  %v2362 = vsel %vm2361, %v2354, %v2358
  %v2363 = vand.u32 2147483647, %v2353
  %vm2364 = vcmp.eq.f32.partialorder %v2363, 8.507059e+37
  %v2365 = vand.u32 %v2353, 2147483648
  %v2366 = vor.u32 1.1754944e-38, %v2365
  %v2367 = vsel %vm2364, %v2366, %v2362
  %v2368 = vmul.f32 1.0, %v2367
  %v2369 = vxor.u32 %v2284, 2147483648
  %v2370 = vmul.f32 %v2369, 1.442695
  %v2371 = vpow.pop %v2370
  %v2372 = vadd.f32 %v2371, 1.0
  %v2373 = vrcp.pop %v2372
  %v2374 = vmul.f32 %v2372, %v2373
  %v2375 = vsub.f32 1.0, %v2374
  %v2376 = vmul.f32 %v2373, %v2375
  %v2377 = vadd.f32 %v2373, %v2376
  %vm2378 = vweird.f32 %v2372
  %vm2379 = vweird.f32 %v2373
  %vm2380 = vmor %vm2378, %vm2379
  %v2381 = vsel %vm2380, %v2373, %v2377
  %v2382 = vand.u32 2147483647, %v2372
  %vm2383 = vcmp.eq.f32.partialorder %v2382, 8.507059e+37
  %v2384 = vand.u32 %v2372, 2147483648
  %v2385 = vor.u32 1.1754944e-38, %v2384
  %v2386 = vsel %vm2383, %v2385, %v2381
  %v2387 = vmul.f32 1.0, %v2386
  %v2388 = vtanh.pop %v2285
  %v2389 = vxor.u32 %v2286, 2147483648
  %v2390 = vmul.f32 %v2389, 1.442695
  %v2391 = vpow.pop %v2390
  %v2392 = vadd.f32 %v2391, 1.0
  %v2393 = vrcp.pop %v2392
  %v2394 = vmul.f32 %v2392, %v2393
  %v2395 = vsub.f32 1.0, %v2394
  %v2396 = vmul.f32 %v2393, %v2395
  %v2397 = vadd.f32 %v2393, %v2396
  %vm2398 = vweird.f32 %v2392
  %vm2399 = vweird.f32 %v2393
  %vm2400 = vmor %vm2398, %vm2399
  %v2401 = vsel %vm2400, %v2393, %v2397
  %v2402 = vand.u32 2147483647, %v2392
  %vm2403 = vcmp.eq.f32.partialorder %v2402, 8.507059e+37
  %v2404 = vand.u32 %v2392, 2147483648
  %v2405 = vor.u32 1.1754944e-38, %v2404
  %v2406 = vsel %vm2403, %v2405, %v2401
  %v2407 = vmul.f32 1.0, %v2406
  %v2408 = vmul.f32 %v2387, %v2160
  %v2409 = vmul.f32 %v2368, %v2388
  %v2410 = vadd.f32 %v2408, %v2409
  %v2411 = vtanh.pop %v2410
  %v2412 = vmul.f32 %v2407, %v2411
  %2413 = vst [vmem:[#allocation2 + $0x20] sm:$0xff] %v2349
  %2414 = vst [vmem:[#allocation3 + $0x18] sm:$0xff] %v2412
  %v2415 = vld [vmem:[#allocation4 + $0xa0] sm:$0xff]
  %v2416 = vld [vmem:[#allocation4 + $0xa8] sm:$0xff]
  %v2417 = vld [vmem:[#allocation4 + $0xb0] sm:$0xff]
  %v2418 = vld [vmem:[#allocation4 + $0xb8] sm:$0xff]
  %v2419 = vpack.c.bf16 %v2349, %v2349
  %2420 = vmatpush.bf16.msra.mxu0 %v975
  %2421 = vmatpush.bf16.msra.mxu0 %v971
  %2422 = vmatpush.bf16.msra.mxu0 %v967
  %2423 = vmatpush.bf16.msra.mxu0 %v963
  %2424 = vmatpush.bf16.msra.mxu0 %v959
  %2425 = vmatpush.bf16.msra.mxu0 %v955
  %2426 = vmatpush.bf16.msra.mxu0 %v951
  %2427 = vmatpush.bf16.msra.mxu0 %v947
  %2428 = vmatmul.bf16.gmra.mxu0 %v2419
  %v2429 = vpop.f32.mrf.mxu0
  %v2430 = vadd.f32 0.0, %v2429
  %v2431 = vpop.f32.mrf.mxu0
  %2432 = vdwg.mxu0
  %2433 = vmatpush.bf16.msra.mxu0 %v976
  %2434 = vmatpush.bf16.msra.mxu0 %v972
  %2435 = vmatpush.bf16.msra.mxu0 %v968
  %2436 = vmatpush.bf16.msra.mxu0 %v964
  %2437 = vmatpush.bf16.msra.mxu0 %v960
  %2438 = vmatpush.bf16.msra.mxu0 %v956
  %2439 = vmatpush.bf16.msra.mxu0 %v952
  %2440 = vmatpush.bf16.msra.mxu0 %v948
  %2441 = vmatmul.bf16.gmra.mxu0 %v2419
  %v2442 = vpop.f32.mrf.mxu0
  %v2443 = vadd.f32 0.0, %v2442
  %v2444 = vpop.f32.mrf.mxu0
  %2445 = vdwg.mxu0
  %2446 = vmatpush.bf16.msra.mxu0 %v977
  %2447 = vmatpush.bf16.msra.mxu0 %v973
  %2448 = vmatpush.bf16.msra.mxu0 %v969
  %2449 = vmatpush.bf16.msra.mxu0 %v965
  %2450 = vmatpush.bf16.msra.mxu0 %v961
  %2451 = vmatpush.bf16.msra.mxu0 %v957
  %2452 = vmatpush.bf16.msra.mxu0 %v953
  %2453 = vmatpush.bf16.msra.mxu0 %v949
  %2454 = vmatmul.bf16.gmra.mxu0 %v2419
  %v2455 = vpop.f32.mrf.mxu0
  %v2456 = vadd.f32 0.0, %v2455
  %v2457 = vpop.f32.mrf.mxu0
  %2458 = vdwg.mxu0
  %2459 = vmatpush.bf16.msra.mxu0 %v978
  %2460 = vmatpush.bf16.msra.mxu0 %v974
  %2461 = vmatpush.bf16.msra.mxu0 %v970
  %2462 = vmatpush.bf16.msra.mxu0 %v966
  %2463 = vmatpush.bf16.msra.mxu0 %v962
  %2464 = vmatpush.bf16.msra.mxu0 %v958
  %2465 = vmatpush.bf16.msra.mxu0 %v954
  %2466 = vmatpush.bf16.msra.mxu0 %v950
  %2467 = vmatmul.bf16.gmra.mxu0 %v2419
  %v2468 = vpop.f32.mrf.mxu0
  %v2469 = vadd.f32 0.0, %v2468
  %v2470 = vpop.f32.mrf.mxu0
  %2471 = vdwg.mxu0
  %v2472 = vadd.f32 %v2415, %v2430
  %v2473 = vadd.f32 %v2416, %v2443
  %v2474 = vadd.f32 %v2417, %v2456
  %v2475 = vadd.f32 %v2418, %v2469
  %v2476 = vld [vmem:[#allocation5 + $0x40] sm:$0xff]
  %v2477 = vld [vmem:[#allocation5 + $0x48] sm:$0xff]
  %v2478 = vld [vmem:[#allocation5 + $0x50] sm:$0xff]
  %v2479 = vld [vmem:[#allocation5 + $0x58] sm:$0xff]
  %v2480 = vpack.c.bf16 %v2412, %v2412
  %2481 = vmatpush.bf16.msra.mxu0 %v1195
  %2482 = vmatpush.bf16.msra.mxu0 %v1191
  %2483 = vmatpush.bf16.msra.mxu0 %v1187
  %2484 = vmatpush.bf16.msra.mxu0 %v1183
  %2485 = vmatpush.bf16.msra.mxu0 %v1179
  %2486 = vmatpush.bf16.msra.mxu0 %v1175
  %2487 = vmatpush.bf16.msra.mxu0 %v1171
  %2488 = vmatpush.bf16.msra.mxu0 %v1167
  %2489 = vmatmul.bf16.gmra.mxu0 %v2480
  %v2490 = vpop.f32.mrf.mxu0
  %v2491 = vadd.f32 0.0, %v2490
  %v2492 = vpop.f32.mrf.mxu0
  %2493 = vdwg.mxu0
  %2494 = vmatpush.bf16.msra.mxu0 %v1196
  %2495 = vmatpush.bf16.msra.mxu0 %v1192
  %2496 = vmatpush.bf16.msra.mxu0 %v1188
  %2497 = vmatpush.bf16.msra.mxu0 %v1184
  %2498 = vmatpush.bf16.msra.mxu0 %v1180
  %2499 = vmatpush.bf16.msra.mxu0 %v1176
  %2500 = vmatpush.bf16.msra.mxu0 %v1172
  %2501 = vmatpush.bf16.msra.mxu0 %v1168
  %2502 = vmatmul.bf16.gmra.mxu0 %v2480
  %v2503 = vpop.f32.mrf.mxu0
  %v2504 = vadd.f32 0.0, %v2503
  %v2505 = vpop.f32.mrf.mxu0
  %2506 = vdwg.mxu0
  %2507 = vmatpush.bf16.msra.mxu0 %v1197
  %2508 = vmatpush.bf16.msra.mxu0 %v1193
  %2509 = vmatpush.bf16.msra.mxu0 %v1189
  %2510 = vmatpush.bf16.msra.mxu0 %v1185
  %2511 = vmatpush.bf16.msra.mxu0 %v1181
  %2512 = vmatpush.bf16.msra.mxu0 %v1177
  %2513 = vmatpush.bf16.msra.mxu0 %v1173
  %2514 = vmatpush.bf16.msra.mxu0 %v1169
  %2515 = vmatmul.bf16.gmra.mxu0 %v2480
  %v2516 = vpop.f32.mrf.mxu0
  %v2517 = vadd.f32 0.0, %v2516
  %v2518 = vpop.f32.mrf.mxu0
  %2519 = vdwg.mxu0
  %2520 = vmatpush.bf16.msra.mxu0 %v1198
  %2521 = vmatpush.bf16.msra.mxu0 %v1194
  %2522 = vmatpush.bf16.msra.mxu0 %v1190
  %2523 = vmatpush.bf16.msra.mxu0 %v1186
  %2524 = vmatpush.bf16.msra.mxu0 %v1182
  %2525 = vmatpush.bf16.msra.mxu0 %v1178
  %2526 = vmatpush.bf16.msra.mxu0 %v1174
  %2527 = vmatpush.bf16.msra.mxu0 %v1170
  %2528 = vmatmul.bf16.gmra.mxu0 %v2480
  %v2529 = vpop.f32.mrf.mxu0
  %v2530 = vadd.f32 0.0, %v2529
  %v2531 = vpop.f32.mrf.mxu0
  %2532 = vdwg.mxu0
  %v2533 = vadd.f32 %v2476, %v2491
  %v2534 = vadd.f32 %v2477, %v2504
  %v2535 = vadd.f32 %v2478, %v2517
  %v2536 = vadd.f32 %v2479, %v2530
  %v2537 = vxor.u32 %v2472, 2147483648
  %v2538 = vmul.f32 %v2537, 1.442695
  %v2539 = vpow.pop %v2538
  %v2540 = vadd.f32 %v2539, 1.0
  %v2541 = vrcp.pop %v2540
  %v2542 = vmul.f32 %v2540, %v2541
  %v2543 = vsub.f32 1.0, %v2542
  %v2544 = vmul.f32 %v2541, %v2543
  %v2545 = vadd.f32 %v2541, %v2544
  %vm2546 = vweird.f32 %v2540
  %vm2547 = vweird.f32 %v2541
  %vm2548 = vmor %vm2546, %vm2547
  %v2549 = vsel %vm2548, %v2541, %v2545
  %v2550 = vand.u32 2147483647, %v2540
  %vm2551 = vcmp.eq.f32.partialorder %v2550, 8.507059e+37
  %v2552 = vand.u32 %v2540, 2147483648
  %v2553 = vor.u32 1.1754944e-38, %v2552
  %v2554 = vsel %vm2551, %v2553, %v2549
  %v2555 = vmul.f32 1.0, %v2554
  %v2556 = vxor.u32 %v2473, 2147483648
  %v2557 = vmul.f32 %v2556, 1.442695
  %v2558 = vpow.pop %v2557
  %v2559 = vadd.f32 %v2558, 1.0
  %v2560 = vrcp.pop %v2559
  %v2561 = vmul.f32 %v2559, %v2560
  %v2562 = vsub.f32 1.0, %v2561
  %v2563 = vmul.f32 %v2560, %v2562
  %v2564 = vadd.f32 %v2560, %v2563
  %vm2565 = vweird.f32 %v2559
  %vm2566 = vweird.f32 %v2560
  %vm2567 = vmor %vm2565, %vm2566
  %v2568 = vsel %vm2567, %v2560, %v2564
  %v2569 = vand.u32 2147483647, %v2559
  %vm2570 = vcmp.eq.f32.partialorder %v2569, 8.507059e+37
  %v2571 = vand.u32 %v2559, 2147483648
  %v2572 = vor.u32 1.1754944e-38, %v2571
  %v2573 = vsel %vm2570, %v2572, %v2568
  %v2574 = vmul.f32 1.0, %v2573
  %v2575 = vtanh.pop %v2474
  %v2576 = vxor.u32 %v2475, 2147483648
  %v2577 = vmul.f32 %v2576, 1.442695
  %v2578 = vpow.pop %v2577
  %v2579 = vadd.f32 %v2578, 1.0
  %v2580 = vrcp.pop %v2579
  %v2581 = vmul.f32 %v2579, %v2580
  %v2582 = vsub.f32 1.0, %v2581
  %v2583 = vmul.f32 %v2580, %v2582
  %v2584 = vadd.f32 %v2580, %v2583
  %vm2585 = vweird.f32 %v2579
  %vm2586 = vweird.f32 %v2580
  %vm2587 = vmor %vm2585, %vm2586
  %v2588 = vsel %vm2587, %v2580, %v2584
  %v2589 = vand.u32 2147483647, %v2579
  %vm2590 = vcmp.eq.f32.partialorder %v2589, 8.507059e+37
  %v2591 = vand.u32 %v2579, 2147483648
  %v2592 = vor.u32 1.1754944e-38, %v2591
  %v2593 = vsel %vm2590, %v2592, %v2588
  %v2594 = vmul.f32 1.0, %v2593
  %v2595 = vmul.f32 %v2574, %v2347
  %v2596 = vmul.f32 %v2555, %v2575
  %v2597 = vadd.f32 %v2595, %v2596
  %v2598 = vtanh.pop %v2597
  %v2599 = vmul.f32 %v2594, %v2598
  %v2600 = vxor.u32 %v2533, 2147483648
  %v2601 = vmul.f32 %v2600, 1.442695
  %v2602 = vpow.pop %v2601
  %v2603 = vadd.f32 %v2602, 1.0
  %v2604 = vrcp.pop %v2603
  %v2605 = vmul.f32 %v2603, %v2604
  %v2606 = vsub.f32 1.0, %v2605
  %v2607 = vmul.f32 %v2604, %v2606
  %v2608 = vadd.f32 %v2604, %v2607
  %vm2609 = vweird.f32 %v2603
  %vm2610 = vweird.f32 %v2604
  %vm2611 = vmor %vm2609, %vm2610
  %v2612 = vsel %vm2611, %v2604, %v2608
  %v2613 = vand.u32 2147483647, %v2603
  %vm2614 = vcmp.eq.f32.partialorder %v2613, 8.507059e+37
  %v2615 = vand.u32 %v2603, 2147483648
  %v2616 = vor.u32 1.1754944e-38, %v2615
  %v2617 = vsel %vm2614, %v2616, %v2612
  %v2618 = vmul.f32 1.0, %v2617
  %v2619 = vxor.u32 %v2534, 2147483648
  %v2620 = vmul.f32 %v2619, 1.442695
  %v2621 = vpow.pop %v2620
  %v2622 = vadd.f32 %v2621, 1.0
  %v2623 = vrcp.pop %v2622
  %v2624 = vmul.f32 %v2622, %v2623
  %v2625 = vsub.f32 1.0, %v2624
  %v2626 = vmul.f32 %v2623, %v2625
  %v2627 = vadd.f32 %v2623, %v2626
  %vm2628 = vweird.f32 %v2622
  %vm2629 = vweird.f32 %v2623
  %vm2630 = vmor %vm2628, %vm2629
  %v2631 = vsel %vm2630, %v2623, %v2627
  %v2632 = vand.u32 2147483647, %v2622
  %vm2633 = vcmp.eq.f32.partialorder %v2632, 8.507059e+37
  %v2634 = vand.u32 %v2622, 2147483648
  %v2635 = vor.u32 1.1754944e-38, %v2634
  %v2636 = vsel %vm2633, %v2635, %v2631
  %v2637 = vmul.f32 1.0, %v2636
  %v2638 = vtanh.pop %v2535
  %v2639 = vxor.u32 %v2536, 2147483648
  %v2640 = vmul.f32 %v2639, 1.442695
  %v2641 = vpow.pop %v2640
  %v2642 = vadd.f32 %v2641, 1.0
  %v2643 = vrcp.pop %v2642
  %v2644 = vmul.f32 %v2642, %v2643
  %v2645 = vsub.f32 1.0, %v2644
  %v2646 = vmul.f32 %v2643, %v2645
  %v2647 = vadd.f32 %v2643, %v2646
  %vm2648 = vweird.f32 %v2642
  %vm2649 = vweird.f32 %v2643
  %vm2650 = vmor %vm2648, %vm2649
  %v2651 = vsel %vm2650, %v2643, %v2647
  %v2652 = vand.u32 2147483647, %v2642
  %vm2653 = vcmp.eq.f32.partialorder %v2652, 8.507059e+37
  %v2654 = vand.u32 %v2642, 2147483648
  %v2655 = vor.u32 1.1754944e-38, %v2654
  %v2656 = vsel %vm2653, %v2655, %v2651
  %v2657 = vmul.f32 1.0, %v2656
  %v2658 = vmul.f32 %v2637, %v2410
  %v2659 = vmul.f32 %v2618, %v2638
  %v2660 = vadd.f32 %v2658, %v2659
  %v2661 = vtanh.pop %v2660
  %v2662 = vmul.f32 %v2657, %v2661
  %2663 = vst [vmem:[#allocation2 + $0x28] sm:$0xff] %v2599
  %2664 = vst [vmem:[#allocation3 + $0x10] sm:$0xff] %v2662
  %v2665 = vld [vmem:[#allocation4 + $0xc0] sm:$0xff]
  %v2666 = vld [vmem:[#allocation4 + $0xc8] sm:$0xff]
  %v2667 = vld [vmem:[#allocation4 + $0xd0] sm:$0xff]
  %v2668 = vld [vmem:[#allocation4 + $0xd8] sm:$0xff]
  %v2669 = vpack.c.bf16 %v2599, %v2599
  %2670 = vmatpush.bf16.msra.mxu0 %v975
  %2671 = vmatpush.bf16.msra.mxu0 %v971
  %2672 = vmatpush.bf16.msra.mxu0 %v967
  %2673 = vmatpush.bf16.msra.mxu0 %v963
  %2674 = vmatpush.bf16.msra.mxu0 %v959
  %2675 = vmatpush.bf16.msra.mxu0 %v955
  %2676 = vmatpush.bf16.msra.mxu0 %v951
  %2677 = vmatpush.bf16.msra.mxu0 %v947
  %2678 = vmatmul.bf16.gmra.mxu0 %v2669
  %v2679 = vpop.f32.mrf.mxu0
  %v2680 = vadd.f32 0.0, %v2679
  %v2681 = vpop.f32.mrf.mxu0
  %2682 = vdwg.mxu0
  %2683 = vmatpush.bf16.msra.mxu0 %v976
  %2684 = vmatpush.bf16.msra.mxu0 %v972
  %2685 = vmatpush.bf16.msra.mxu0 %v968
  %2686 = vmatpush.bf16.msra.mxu0 %v964
  %2687 = vmatpush.bf16.msra.mxu0 %v960
  %2688 = vmatpush.bf16.msra.mxu0 %v956
  %2689 = vmatpush.bf16.msra.mxu0 %v952
  %2690 = vmatpush.bf16.msra.mxu0 %v948
  %2691 = vmatmul.bf16.gmra.mxu0 %v2669
  %v2692 = vpop.f32.mrf.mxu0
  %v2693 = vadd.f32 0.0, %v2692
  %v2694 = vpop.f32.mrf.mxu0
  %2695 = vdwg.mxu0
  %2696 = vmatpush.bf16.msra.mxu0 %v977
  %2697 = vmatpush.bf16.msra.mxu0 %v973
  %2698 = vmatpush.bf16.msra.mxu0 %v969
  %2699 = vmatpush.bf16.msra.mxu0 %v965
  %2700 = vmatpush.bf16.msra.mxu0 %v961
  %2701 = vmatpush.bf16.msra.mxu0 %v957
  %2702 = vmatpush.bf16.msra.mxu0 %v953
  %2703 = vmatpush.bf16.msra.mxu0 %v949
  %2704 = vmatmul.bf16.gmra.mxu0 %v2669
  %v2705 = vpop.f32.mrf.mxu0
  %v2706 = vadd.f32 0.0, %v2705
  %v2707 = vpop.f32.mrf.mxu0
  %2708 = vdwg.mxu0
  %2709 = vmatpush.bf16.msra.mxu0 %v978
  %2710 = vmatpush.bf16.msra.mxu0 %v974
  %2711 = vmatpush.bf16.msra.mxu0 %v970
  %2712 = vmatpush.bf16.msra.mxu0 %v966
  %2713 = vmatpush.bf16.msra.mxu0 %v962
  %2714 = vmatpush.bf16.msra.mxu0 %v958
  %2715 = vmatpush.bf16.msra.mxu0 %v954
  %2716 = vmatpush.bf16.msra.mxu0 %v950
  %2717 = vmatmul.bf16.gmra.mxu0 %v2669
  %v2718 = vpop.f32.mrf.mxu0
  %v2719 = vadd.f32 0.0, %v2718
  %v2720 = vpop.f32.mrf.mxu0
  %2721 = vdwg.mxu0
  %v2722 = vadd.f32 %v2665, %v2680
  %v2723 = vadd.f32 %v2666, %v2693
  %v2724 = vadd.f32 %v2667, %v2706
  %v2725 = vadd.f32 %v2668, %v2719
  %v2726 = vld [vmem:[#allocation5 + $0x20] sm:$0xff]
  %v2727 = vld [vmem:[#allocation5 + $0x28] sm:$0xff]
  %v2728 = vld [vmem:[#allocation5 + $0x30] sm:$0xff]
  %v2729 = vld [vmem:[#allocation5 + $0x38] sm:$0xff]
  %v2730 = vpack.c.bf16 %v2662, %v2662
  %2731 = vmatpush.bf16.msra.mxu0 %v1195
  %2732 = vmatpush.bf16.msra.mxu0 %v1191
  %2733 = vmatpush.bf16.msra.mxu0 %v1187
  %2734 = vmatpush.bf16.msra.mxu0 %v1183
  %2735 = vmatpush.bf16.msra.mxu0 %v1179
  %2736 = vmatpush.bf16.msra.mxu0 %v1175
  %2737 = vmatpush.bf16.msra.mxu0 %v1171
  %2738 = vmatpush.bf16.msra.mxu0 %v1167
  %2739 = vmatmul.bf16.gmra.mxu0 %v2730
  %v2740 = vpop.f32.mrf.mxu0
  %v2741 = vadd.f32 0.0, %v2740
  %v2742 = vpop.f32.mrf.mxu0
  %2743 = vdwg.mxu0
  %2744 = vmatpush.bf16.msra.mxu0 %v1196
  %2745 = vmatpush.bf16.msra.mxu0 %v1192
  %2746 = vmatpush.bf16.msra.mxu0 %v1188
  %2747 = vmatpush.bf16.msra.mxu0 %v1184
  %2748 = vmatpush.bf16.msra.mxu0 %v1180
  %2749 = vmatpush.bf16.msra.mxu0 %v1176
  %2750 = vmatpush.bf16.msra.mxu0 %v1172
  %2751 = vmatpush.bf16.msra.mxu0 %v1168
  %2752 = vmatmul.bf16.gmra.mxu0 %v2730
  %v2753 = vpop.f32.mrf.mxu0
  %v2754 = vadd.f32 0.0, %v2753
  %v2755 = vpop.f32.mrf.mxu0
  %2756 = vdwg.mxu0
  %2757 = vmatpush.bf16.msra.mxu0 %v1197
  %2758 = vmatpush.bf16.msra.mxu0 %v1193
  %2759 = vmatpush.bf16.msra.mxu0 %v1189
  %2760 = vmatpush.bf16.msra.mxu0 %v1185
  %2761 = vmatpush.bf16.msra.mxu0 %v1181
  %2762 = vmatpush.bf16.msra.mxu0 %v1177
  %2763 = vmatpush.bf16.msra.mxu0 %v1173
  %2764 = vmatpush.bf16.msra.mxu0 %v1169
  %2765 = vmatmul.bf16.gmra.mxu0 %v2730
  %v2766 = vpop.f32.mrf.mxu0
  %v2767 = vadd.f32 0.0, %v2766
  %v2768 = vpop.f32.mrf.mxu0
  %2769 = vdwg.mxu0
  %2770 = vmatpush.bf16.msra.mxu0 %v1198
  %2771 = vmatpush.bf16.msra.mxu0 %v1194
  %2772 = vmatpush.bf16.msra.mxu0 %v1190
  %2773 = vmatpush.bf16.msra.mxu0 %v1186
  %2774 = vmatpush.bf16.msra.mxu0 %v1182
  %2775 = vmatpush.bf16.msra.mxu0 %v1178
  %2776 = vmatpush.bf16.msra.mxu0 %v1174
  %2777 = vmatpush.bf16.msra.mxu0 %v1170
  %2778 = vmatmul.bf16.gmra.mxu0 %v2730
  %v2779 = vpop.f32.mrf.mxu0
  %v2780 = vadd.f32 0.0, %v2779
  %v2781 = vpop.f32.mrf.mxu0
  %2782 = vdwg.mxu0
  %v2783 = vadd.f32 %v2726, %v2741
  %v2784 = vadd.f32 %v2727, %v2754
  %v2785 = vadd.f32 %v2728, %v2767
  %v2786 = vadd.f32 %v2729, %v2780
  %v2787 = vxor.u32 %v2722, 2147483648
  %v2788 = vmul.f32 %v2787, 1.442695
  %v2789 = vpow.pop %v2788
  %v2790 = vadd.f32 %v2789, 1.0
  %v2791 = vrcp.pop %v2790
  %v2792 = vmul.f32 %v2790, %v2791
  %v2793 = vsub.f32 1.0, %v2792
  %v2794 = vmul.f32 %v2791, %v2793
  %v2795 = vadd.f32 %v2791, %v2794
  %vm2796 = vweird.f32 %v2790
  %vm2797 = vweird.f32 %v2791
  %vm2798 = vmor %vm2796, %vm2797
  %v2799 = vsel %vm2798, %v2791, %v2795
  %v2800 = vand.u32 2147483647, %v2790
  %vm2801 = vcmp.eq.f32.partialorder %v2800, 8.507059e+37
  %v2802 = vand.u32 %v2790, 2147483648
  %v2803 = vor.u32 1.1754944e-38, %v2802
  %v2804 = vsel %vm2801, %v2803, %v2799
  %v2805 = vmul.f32 1.0, %v2804
  %v2806 = vxor.u32 %v2723, 2147483648
  %v2807 = vmul.f32 %v2806, 1.442695
  %v2808 = vpow.pop %v2807
  %v2809 = vadd.f32 %v2808, 1.0
  %v2810 = vrcp.pop %v2809
  %v2811 = vmul.f32 %v2809, %v2810
  %v2812 = vsub.f32 1.0, %v2811
  %v2813 = vmul.f32 %v2810, %v2812
  %v2814 = vadd.f32 %v2810, %v2813
  %vm2815 = vweird.f32 %v2809
  %vm2816 = vweird.f32 %v2810
  %vm2817 = vmor %vm2815, %vm2816
  %v2818 = vsel %vm2817, %v2810, %v2814
  %v2819 = vand.u32 2147483647, %v2809
  %vm2820 = vcmp.eq.f32.partialorder %v2819, 8.507059e+37
  %v2821 = vand.u32 %v2809, 2147483648
  %v2822 = vor.u32 1.1754944e-38, %v2821
  %v2823 = vsel %vm2820, %v2822, %v2818
  %v2824 = vmul.f32 1.0, %v2823
  %v2825 = vtanh.pop %v2724
  %v2826 = vxor.u32 %v2725, 2147483648
  %v2827 = vmul.f32 %v2826, 1.442695
  %v2828 = vpow.pop %v2827
  %v2829 = vadd.f32 %v2828, 1.0
  %v2830 = vrcp.pop %v2829
  %v2831 = vmul.f32 %v2829, %v2830
  %v2832 = vsub.f32 1.0, %v2831
  %v2833 = vmul.f32 %v2830, %v2832
  %v2834 = vadd.f32 %v2830, %v2833
  %vm2835 = vweird.f32 %v2829
  %vm2836 = vweird.f32 %v2830
  %vm2837 = vmor %vm2835, %vm2836
  %v2838 = vsel %vm2837, %v2830, %v2834
  %v2839 = vand.u32 2147483647, %v2829
  %vm2840 = vcmp.eq.f32.partialorder %v2839, 8.507059e+37
  %v2841 = vand.u32 %v2829, 2147483648
  %v2842 = vor.u32 1.1754944e-38, %v2841
  %v2843 = vsel %vm2840, %v2842, %v2838
  %v2844 = vmul.f32 1.0, %v2843
  %v2845 = vmul.f32 %v2824, %v2597
  %v2846 = vmul.f32 %v2805, %v2825
  %v2847 = vadd.f32 %v2845, %v2846
  %v2848 = vtanh.pop %v2847
  %v2849 = vmul.f32 %v2844, %v2848
  %v2850 = vxor.u32 %v2783, 2147483648
  %v2851 = vmul.f32 %v2850, 1.442695
  %v2852 = vpow.pop %v2851
  %v2853 = vadd.f32 %v2852, 1.0
  %v2854 = vrcp.pop %v2853
  %v2855 = vmul.f32 %v2853, %v2854
  %v2856 = vsub.f32 1.0, %v2855
  %v2857 = vmul.f32 %v2854, %v2856
  %v2858 = vadd.f32 %v2854, %v2857
  %vm2859 = vweird.f32 %v2853
  %vm2860 = vweird.f32 %v2854
  %vm2861 = vmor %vm2859, %vm2860
  %v2862 = vsel %vm2861, %v2854, %v2858
  %v2863 = vand.u32 2147483647, %v2853
  %vm2864 = vcmp.eq.f32.partialorder %v2863, 8.507059e+37
  %v2865 = vand.u32 %v2853, 2147483648
  %v2866 = vor.u32 1.1754944e-38, %v2865
  %v2867 = vsel %vm2864, %v2866, %v2862
  %v2868 = vmul.f32 1.0, %v2867
  %v2869 = vxor.u32 %v2784, 2147483648
  %v2870 = vmul.f32 %v2869, 1.442695
  %v2871 = vpow.pop %v2870
  %v2872 = vadd.f32 %v2871, 1.0
  %v2873 = vrcp.pop %v2872
  %v2874 = vmul.f32 %v2872, %v2873
  %v2875 = vsub.f32 1.0, %v2874
  %v2876 = vmul.f32 %v2873, %v2875
  %v2877 = vadd.f32 %v2873, %v2876
  %vm2878 = vweird.f32 %v2872
  %vm2879 = vweird.f32 %v2873
  %vm2880 = vmor %vm2878, %vm2879
  %v2881 = vsel %vm2880, %v2873, %v2877
  %v2882 = vand.u32 2147483647, %v2872
  %vm2883 = vcmp.eq.f32.partialorder %v2882, 8.507059e+37
  %v2884 = vand.u32 %v2872, 2147483648
  %v2885 = vor.u32 1.1754944e-38, %v2884
  %v2886 = vsel %vm2883, %v2885, %v2881
  %v2887 = vmul.f32 1.0, %v2886
  %v2888 = vtanh.pop %v2785
  %v2889 = vxor.u32 %v2786, 2147483648
  %v2890 = vmul.f32 %v2889, 1.442695
  %v2891 = vpow.pop %v2890
  %v2892 = vadd.f32 %v2891, 1.0
  %v2893 = vrcp.pop %v2892
  %v2894 = vmul.f32 %v2892, %v2893
  %v2895 = vsub.f32 1.0, %v2894
  %v2896 = vmul.f32 %v2893, %v2895
  %v2897 = vadd.f32 %v2893, %v2896
  %vm2898 = vweird.f32 %v2892
  %vm2899 = vweird.f32 %v2893
  %vm2900 = vmor %vm2898, %vm2899
  %v2901 = vsel %vm2900, %v2893, %v2897
  %v2902 = vand.u32 2147483647, %v2892
  %vm2903 = vcmp.eq.f32.partialorder %v2902, 8.507059e+37
  %v2904 = vand.u32 %v2892, 2147483648
  %v2905 = vor.u32 1.1754944e-38, %v2904
  %v2906 = vsel %vm2903, %v2905, %v2901
  %v2907 = vmul.f32 1.0, %v2906
  %v2908 = vmul.f32 %v2887, %v2660
  %v2909 = vmul.f32 %v2868, %v2888
  %v2910 = vadd.f32 %v2908, %v2909
  %v2911 = vtanh.pop %v2910
  %v2912 = vmul.f32 %v2907, %v2911
  %2913 = vst [vmem:[#allocation2 + $0x30] sm:$0xff] %v2849
  %2914 = vst [vmem:[#allocation3 + $0x8] sm:$0xff] %v2912
  %v2915 = vld [vmem:[#allocation4 + $0xe0] sm:$0xff]
  %v2916 = vld [vmem:[#allocation4 + $0xe8] sm:$0xff]
  %v2917 = vld [vmem:[#allocation4 + $0xf0] sm:$0xff]
  %v2918 = vld [vmem:[#allocation4 + $0xf8] sm:$0xff]
  %v2919 = vpack.c.bf16 %v2849, %v2849
  %2920 = vmatpush.bf16.msra.mxu0 %v975
  %2921 = vmatpush.bf16.msra.mxu0 %v971
  %2922 = vmatpush.bf16.msra.mxu0 %v967
  %2923 = vmatpush.bf16.msra.mxu0 %v963
  %2924 = vmatpush.bf16.msra.mxu0 %v959
  %2925 = vmatpush.bf16.msra.mxu0 %v955
  %2926 = vmatpush.bf16.msra.mxu0 %v951
  %2927 = vmatpush.bf16.msra.mxu0 %v947
  %2928 = vmatmul.bf16.gmra.mxu0 %v2919
  %v2929 = vpop.f32.mrf.mxu0
  %v2930 = vadd.f32 0.0, %v2929
  %v2931 = vpop.f32.mrf.mxu0
  %2932 = vdwg.mxu0
  %2933 = vmatpush.bf16.msra.mxu0 %v976
  %2934 = vmatpush.bf16.msra.mxu0 %v972
  %2935 = vmatpush.bf16.msra.mxu0 %v968
  %2936 = vmatpush.bf16.msra.mxu0 %v964
  %2937 = vmatpush.bf16.msra.mxu0 %v960
  %2938 = vmatpush.bf16.msra.mxu0 %v956
  %2939 = vmatpush.bf16.msra.mxu0 %v952
  %2940 = vmatpush.bf16.msra.mxu0 %v948
  %2941 = vmatmul.bf16.gmra.mxu0 %v2919
  %v2942 = vpop.f32.mrf.mxu0
  %v2943 = vadd.f32 0.0, %v2942
  %v2944 = vpop.f32.mrf.mxu0
  %2945 = vdwg.mxu0
  %2946 = vmatpush.bf16.msra.mxu0 %v977
  %2947 = vmatpush.bf16.msra.mxu0 %v973
  %2948 = vmatpush.bf16.msra.mxu0 %v969
  %2949 = vmatpush.bf16.msra.mxu0 %v965
  %2950 = vmatpush.bf16.msra.mxu0 %v961
  %2951 = vmatpush.bf16.msra.mxu0 %v957
  %2952 = vmatpush.bf16.msra.mxu0 %v953
  %2953 = vmatpush.bf16.msra.mxu0 %v949
  %2954 = vmatmul.bf16.gmra.mxu0 %v2919
  %v2955 = vpop.f32.mrf.mxu0
  %v2956 = vadd.f32 0.0, %v2955
  %v2957 = vpop.f32.mrf.mxu0
  %2958 = vdwg.mxu0
  %2959 = vmatpush.bf16.msra.mxu0 %v978
  %2960 = vmatpush.bf16.msra.mxu0 %v974
  %2961 = vmatpush.bf16.msra.mxu0 %v970
  %2962 = vmatpush.bf16.msra.mxu0 %v966
  %2963 = vmatpush.bf16.msra.mxu0 %v962
  %2964 = vmatpush.bf16.msra.mxu0 %v958
  %2965 = vmatpush.bf16.msra.mxu0 %v954
  %2966 = vmatpush.bf16.msra.mxu0 %v950
  %2967 = vmatmul.bf16.gmra.mxu0 %v2919
  %v2968 = vpop.f32.mrf.mxu0
  %v2969 = vadd.f32 0.0, %v2968
  %v2970 = vpop.f32.mrf.mxu0
  %2971 = vdwg.mxu0
  %v2972 = vadd.f32 %v2915, %v2930
  %v2973 = vadd.f32 %v2916, %v2943
  %v2974 = vadd.f32 %v2917, %v2956
  %v2975 = vadd.f32 %v2918, %v2969
  %v2976 = vld [vmem:[#allocation5] sm:$0xff]
  %v2977 = vld [vmem:[#allocation5 + $0x8] sm:$0xff]
  %v2978 = vld [vmem:[#allocation5 + $0x10] sm:$0xff]
  %v2979 = vld [vmem:[#allocation5 + $0x18] sm:$0xff]
  %v2980 = vpack.c.bf16 %v2912, %v2912
  %2981 = vmatpush.bf16.msra.mxu0 %v1195
  %2982 = vmatpush.bf16.msra.mxu0 %v1191
  %2983 = vmatpush.bf16.msra.mxu0 %v1187
  %2984 = vmatpush.bf16.msra.mxu0 %v1183
  %2985 = vmatpush.bf16.msra.mxu0 %v1179
  %2986 = vmatpush.bf16.msra.mxu0 %v1175
  %2987 = vmatpush.bf16.msra.mxu0 %v1171
  %2988 = vmatpush.bf16.msra.mxu0 %v1167
  %2989 = vmatmul.bf16.gmra.mxu0 %v2980
  %v2990 = vpop.f32.mrf.mxu0
  %v2991 = vadd.f32 0.0, %v2990
  %v2992 = vpop.f32.mrf.mxu0
  %2993 = vdwg.mxu0
  %2994 = vmatpush.bf16.msra.mxu0 %v1196
  %2995 = vmatpush.bf16.msra.mxu0 %v1192
  %2996 = vmatpush.bf16.msra.mxu0 %v1188
  %2997 = vmatpush.bf16.msra.mxu0 %v1184
  %2998 = vmatpush.bf16.msra.mxu0 %v1180
  %2999 = vmatpush.bf16.msra.mxu0 %v1176
  %3000 = vmatpush.bf16.msra.mxu0 %v1172
  %3001 = vmatpush.bf16.msra.mxu0 %v1168
  %3002 = vmatmul.bf16.gmra.mxu0 %v2980
  %v3003 = vpop.f32.mrf.mxu0
  %v3004 = vadd.f32 0.0, %v3003
  %v3005 = vpop.f32.mrf.mxu0
  %3006 = vdwg.mxu0
  %3007 = vmatpush.bf16.msra.mxu0 %v1197
  %3008 = vmatpush.bf16.msra.mxu0 %v1193
  %3009 = vmatpush.bf16.msra.mxu0 %v1189
  %3010 = vmatpush.bf16.msra.mxu0 %v1185
  %3011 = vmatpush.bf16.msra.mxu0 %v1181
  %3012 = vmatpush.bf16.msra.mxu0 %v1177
  %3013 = vmatpush.bf16.msra.mxu0 %v1173
  %3014 = vmatpush.bf16.msra.mxu0 %v1169
  %3015 = vmatmul.bf16.gmra.mxu0 %v2980
  %v3016 = vpop.f32.mrf.mxu0
  %v3017 = vadd.f32 0.0, %v3016
  %v3018 = vpop.f32.mrf.mxu0
  %3019 = vdwg.mxu0
  %3020 = vmatpush.bf16.msra.mxu0 %v1198
  %3021 = vmatpush.bf16.msra.mxu0 %v1194
  %3022 = vmatpush.bf16.msra.mxu0 %v1190
  %3023 = vmatpush.bf16.msra.mxu0 %v1186
  %3024 = vmatpush.bf16.msra.mxu0 %v1182
  %3025 = vmatpush.bf16.msra.mxu0 %v1178
  %3026 = vmatpush.bf16.msra.mxu0 %v1174
  %3027 = vmatpush.bf16.msra.mxu0 %v1170
  %3028 = vmatmul.bf16.gmra.mxu0 %v2980
  %v3029 = vpop.f32.mrf.mxu0
  %v3030 = vadd.f32 0.0, %v3029
  %v3031 = vpop.f32.mrf.mxu0
  %3032 = vdwg.mxu0
  %v3033 = vadd.f32 %v2976, %v2991
  %v3034 = vadd.f32 %v2977, %v3004
  %v3035 = vadd.f32 %v2978, %v3017
  %v3036 = vadd.f32 %v2979, %v3030
  %v3037 = vxor.u32 %v2972, 2147483648
  %v3038 = vmul.f32 %v3037, 1.442695
  %v3039 = vpow.pop %v3038
  %v3040 = vadd.f32 %v3039, 1.0
  %v3041 = vrcp.pop %v3040
  %v3042 = vmul.f32 %v3040, %v3041
  %v3043 = vsub.f32 1.0, %v3042
  %v3044 = vmul.f32 %v3041, %v3043
  %v3045 = vadd.f32 %v3041, %v3044
  %vm3046 = vweird.f32 %v3040
  %vm3047 = vweird.f32 %v3041
  %vm3048 = vmor %vm3046, %vm3047
  %v3049 = vsel %vm3048, %v3041, %v3045
  %v3050 = vand.u32 2147483647, %v3040
  %vm3051 = vcmp.eq.f32.partialorder %v3050, 8.507059e+37
  %v3052 = vand.u32 %v3040, 2147483648
  %v3053 = vor.u32 1.1754944e-38, %v3052
  %v3054 = vsel %vm3051, %v3053, %v3049
  %v3055 = vmul.f32 1.0, %v3054
  %v3056 = vxor.u32 %v2973, 2147483648
  %v3057 = vmul.f32 %v3056, 1.442695
  %v3058 = vpow.pop %v3057
  %v3059 = vadd.f32 %v3058, 1.0
  %v3060 = vrcp.pop %v3059
  %v3061 = vmul.f32 %v3059, %v3060
  %v3062 = vsub.f32 1.0, %v3061
  %v3063 = vmul.f32 %v3060, %v3062
  %v3064 = vadd.f32 %v3060, %v3063
  %vm3065 = vweird.f32 %v3059
  %vm3066 = vweird.f32 %v3060
  %vm3067 = vmor %vm3065, %vm3066
  %v3068 = vsel %vm3067, %v3060, %v3064
  %v3069 = vand.u32 2147483647, %v3059
  %vm3070 = vcmp.eq.f32.partialorder %v3069, 8.507059e+37
  %v3071 = vand.u32 %v3059, 2147483648
  %v3072 = vor.u32 1.1754944e-38, %v3071
  %v3073 = vsel %vm3070, %v3072, %v3068
  %v3074 = vmul.f32 1.0, %v3073
  %v3075 = vtanh.pop %v2974
  %v3076 = vxor.u32 %v2975, 2147483648
  %v3077 = vmul.f32 %v3076, 1.442695
  %v3078 = vpow.pop %v3077
  %v3079 = vadd.f32 %v3078, 1.0
  %v3080 = vrcp.pop %v3079
  %v3081 = vmul.f32 %v3079, %v3080
  %v3082 = vsub.f32 1.0, %v3081
  %v3083 = vmul.f32 %v3080, %v3082
  %v3084 = vadd.f32 %v3080, %v3083
  %vm3085 = vweird.f32 %v3079
  %vm3086 = vweird.f32 %v3080
  %vm3087 = vmor %vm3085, %vm3086
  %v3088 = vsel %vm3087, %v3080, %v3084
  %v3089 = vand.u32 2147483647, %v3079
  %vm3090 = vcmp.eq.f32.partialorder %v3089, 8.507059e+37
  %v3091 = vand.u32 %v3079, 2147483648
  %v3092 = vor.u32 1.1754944e-38, %v3091
  %v3093 = vsel %vm3090, %v3092, %v3088
  %v3094 = vmul.f32 1.0, %v3093
  %v3095 = vmul.f32 %v3074, %v2847
  %v3096 = vmul.f32 %v3055, %v3075
  %v3097 = vadd.f32 %v3095, %v3096
  %v3098 = vtanh.pop %v3097
  %v3099 = vmul.f32 %v3094, %v3098
  %v3100 = vxor.u32 %v3033, 2147483648
  %v3101 = vmul.f32 %v3100, 1.442695
  %v3102 = vpow.pop %v3101
  %v3103 = vadd.f32 %v3102, 1.0
  %v3104 = vrcp.pop %v3103
  %v3105 = vmul.f32 %v3103, %v3104
  %v3106 = vsub.f32 1.0, %v3105
  %v3107 = vmul.f32 %v3104, %v3106
  %v3108 = vadd.f32 %v3104, %v3107
  %vm3109 = vweird.f32 %v3103
  %vm3110 = vweird.f32 %v3104
  %vm3111 = vmor %vm3109, %vm3110
  %v3112 = vsel %vm3111, %v3104, %v3108
  %v3113 = vand.u32 2147483647, %v3103
  %vm3114 = vcmp.eq.f32.partialorder %v3113, 8.507059e+37
  %v3115 = vand.u32 %v3103, 2147483648
  %v3116 = vor.u32 1.1754944e-38, %v3115
  %v3117 = vsel %vm3114, %v3116, %v3112
  %v3118 = vmul.f32 1.0, %v3117
  %v3119 = vxor.u32 %v3034, 2147483648
  %v3120 = vmul.f32 %v3119, 1.442695
  %v3121 = vpow.pop %v3120
  %v3122 = vadd.f32 %v3121, 1.0
  %v3123 = vrcp.pop %v3122
  %v3124 = vmul.f32 %v3122, %v3123
  %v3125 = vsub.f32 1.0, %v3124
  %v3126 = vmul.f32 %v3123, %v3125
  %v3127 = vadd.f32 %v3123, %v3126
  %vm3128 = vweird.f32 %v3122
  %vm3129 = vweird.f32 %v3123
  %vm3130 = vmor %vm3128, %vm3129
  %v3131 = vsel %vm3130, %v3123, %v3127
  %v3132 = vand.u32 2147483647, %v3122
  %vm3133 = vcmp.eq.f32.partialorder %v3132, 8.507059e+37
  %v3134 = vand.u32 %v3122, 2147483648
  %v3135 = vor.u32 1.1754944e-38, %v3134
  %v3136 = vsel %vm3133, %v3135, %v3131
  %v3137 = vmul.f32 1.0, %v3136
  %v3138 = vtanh.pop %v3035
  %v3139 = vxor.u32 %v3036, 2147483648
  %v3140 = vmul.f32 %v3139, 1.442695
  %v3141 = vpow.pop %v3140
  %v3142 = vadd.f32 %v3141, 1.0
  %v3143 = vrcp.pop %v3142
  %v3144 = vmul.f32 %v3142, %v3143
  %v3145 = vsub.f32 1.0, %v3144
  %v3146 = vmul.f32 %v3143, %v3145
  %v3147 = vadd.f32 %v3143, %v3146
  %vm3148 = vweird.f32 %v3142
  %vm3149 = vweird.f32 %v3143
  %vm3150 = vmor %vm3148, %vm3149
  %v3151 = vsel %vm3150, %v3143, %v3147
  %v3152 = vand.u32 2147483647, %v3142
  %vm3153 = vcmp.eq.f32.partialorder %v3152, 8.507059e+37
  %v3154 = vand.u32 %v3142, 2147483648
  %v3155 = vor.u32 1.1754944e-38, %v3154
  %v3156 = vsel %vm3153, %v3155, %v3151
  %v3157 = vmul.f32 1.0, %v3156
  %v3158 = vmul.f32 %v3137, %v2910
  %v3159 = vmul.f32 %v3118, %v3138
  %v3160 = vadd.f32 %v3158, %v3159
  %v3161 = vtanh.pop %v3160
  %v3162 = vmul.f32 %v3157, %v3161
  %3163 = vst [vmem:[#allocation2 + $0x38] sm:$0xff] %v3099
  %3164 = vst [vmem:[#allocation3] sm:$0xff] %v3162
  %v3165 = vld [vmem:[#allocation2] sm:$0xff]
  %v3166 = vld [vmem:[#allocation2 + $0x8] sm:$0xff]
  %v3167 = vld [vmem:[#allocation2 + $0x10] sm:$0xff]
  %v3168 = vld [vmem:[#allocation2 + $0x18] sm:$0xff]
  %v3169 = vld [vmem:[#allocation2 + $0x20] sm:$0xff]
  %v3170 = vld [vmem:[#allocation2 + $0x28] sm:$0xff]
  %v3171 = vld [vmem:[#allocation2 + $0x30] sm:$0xff]
  %v3172 = vld [vmem:[#allocation2 + $0x38] sm:$0xff]
  %v3173 = vpack.c.bf16 %v3166, %v3165
  %v3174 = vpack.c.bf16 %v3168, %v3167
  %v3175 = vpack.c.bf16 %v3170, %v3169
  %v3176 = vpack.c.bf16 %v3172, %v3171
  %v3177 = vld [vmem:[#allocation3] sm:$0xff]
  %v3178 = vld [vmem:[#allocation3 + $0x8] sm:$0xff]
  %v3179 = vld [vmem:[#allocation3 + $0x10] sm:$0xff]
  %v3180 = vld [vmem:[#allocation3 + $0x18] sm:$0xff]
  %v3181 = vld [vmem:[#allocation3 + $0x20] sm:$0xff]
  %v3182 = vld [vmem:[#allocation3 + $0x28] sm:$0xff]
  %v3183 = vld [vmem:[#allocation3 + $0x30] sm:$0xff]
  %v3184 = vld [vmem:[#allocation3 + $0x38] sm:$0xff]
  %v3185 = vpack.c.bf16 %v3178, %v3177
  %v3186 = vpack.c.bf16 %v3180, %v3179
  %v3187 = vpack.c.bf16 %v3182, %v3181
  %v3188 = vpack.c.bf16 %v3184, %v3183
  %v3189 = vld [vmem:[%s7] sm:$0xff]
  %v3190 = vld [vmem:[%s7 + $0x8] sm:$0xff]
  %v3191 = vld [vmem:[%s7 + $0x10] sm:$0xff]
  %v3192 = vld [vmem:[%s7 + $0x18] sm:$0xff]
  %v3193 = vld [vmem:[%s7 + $0x20] sm:$0xff]
  %v3194 = vld [vmem:[%s7 + $0x28] sm:$0xff]
  %v3195 = vld [vmem:[%s7 + $0x30] sm:$0xff]
  %v3196 = vld [vmem:[%s7 + $0x38] sm:$0xff]
  %v3197 = vld [vmem:[%s7 + $0x40] sm:$0xff]
  %v3198 = vld [vmem:[%s7 + $0x48] sm:$0xff]
  %v3199 = vld [vmem:[%s7 + $0x50] sm:$0xff]
  %v3200 = vld [vmem:[%s7 + $0x58] sm:$0xff]
  %v3201 = vld [vmem:[%s7 + $0x60] sm:$0xff]
  %v3202 = vld [vmem:[%s7 + $0x68] sm:$0xff]
  %v3203 = vld [vmem:[%s7 + $0x70] sm:$0xff]
  %v3204 = vld [vmem:[%s7 + $0x78] sm:$0xff]
  %v3205 = vld [vmem:[%s7 + $0x80] sm:$0xff]
  %v3206 = vld [vmem:[%s7 + $0x88] sm:$0xff]
  %v3207 = vld [vmem:[%s7 + $0x90] sm:$0xff]
  %v3208 = vld [vmem:[%s7 + $0x98] sm:$0xff]
  %v3209 = vld [vmem:[%s7 + $0xa0] sm:$0xff]
  %v3210 = vld [vmem:[%s7 + $0xa8] sm:$0xff]
  %v3211 = vld [vmem:[%s7 + $0xb0] sm:$0xff]
  %v3212 = vld [vmem:[%s7 + $0xb8] sm:$0xff]
  %v3213 = vld [vmem:[%s7 + $0xc0] sm:$0xff]
  %v3214 = vld [vmem:[%s7 + $0xc8] sm:$0xff]
  %v3215 = vld [vmem:[%s7 + $0xd0] sm:$0xff]
  %v3216 = vld [vmem:[%s7 + $0xd8] sm:$0xff]
  %v3217 = vld [vmem:[%s7 + $0xe0] sm:$0xff]
  %v3218 = vld [vmem:[%s7 + $0xe8] sm:$0xff]
  %v3219 = vld [vmem:[%s7 + $0xf0] sm:$0xff]
  %v3220 = vld [vmem:[%s7 + $0xf8] sm:$0xff]
  %v3221 = vld [vmem:[%s7 + $0x100] sm:$0xff]
  %v3222 = vld [vmem:[%s7 + $0x108] sm:$0xff]
  %v3223 = vld [vmem:[%s7 + $0x110] sm:$0xff]
  %v3224 = vld [vmem:[%s7 + $0x118] sm:$0xff]
  %v3225 = vld [vmem:[%s7 + $0x120] sm:$0xff]
  %v3226 = vld [vmem:[%s7 + $0x128] sm:$0xff]
  %v3227 = vld [vmem:[%s7 + $0x130] sm:$0xff]
  %v3228 = vld [vmem:[%s7 + $0x138] sm:$0xff]
  %v3229 = vld [vmem:[%s7 + $0x140] sm:$0xff]
  %v3230 = vld [vmem:[%s7 + $0x148] sm:$0xff]
  %v3231 = vld [vmem:[%s7 + $0x150] sm:$0xff]
  %v3232 = vld [vmem:[%s7 + $0x158] sm:$0xff]
  %v3233 = vld [vmem:[%s7 + $0x160] sm:$0xff]
  %v3234 = vld [vmem:[%s7 + $0x168] sm:$0xff]
  %v3235 = vld [vmem:[%s7 + $0x170] sm:$0xff]
  %v3236 = vld [vmem:[%s7 + $0x178] sm:$0xff]
  %v3237 = vld [vmem:[%s7 + $0x180] sm:$0xff]
  %v3238 = vld [vmem:[%s7 + $0x188] sm:$0xff]
  %v3239 = vld [vmem:[%s7 + $0x190] sm:$0xff]
  %v3240 = vld [vmem:[%s7 + $0x198] sm:$0xff]
  %v3241 = vld [vmem:[%s7 + $0x1a0] sm:$0xff]
  %v3242 = vld [vmem:[%s7 + $0x1a8] sm:$0xff]
  %v3243 = vld [vmem:[%s7 + $0x1b0] sm:$0xff]
  %v3244 = vld [vmem:[%s7 + $0x1b8] sm:$0xff]
  %v3245 = vld [vmem:[%s7 + $0x1c0] sm:$0xff]
  %v3246 = vld [vmem:[%s7 + $0x1c8] sm:$0xff]
  %v3247 = vld [vmem:[%s7 + $0x1d0] sm:$0xff]
  %v3248 = vld [vmem:[%s7 + $0x1d8] sm:$0xff]
  %v3249 = vld [vmem:[%s7 + $0x1e0] sm:$0xff]
  %v3250 = vld [vmem:[%s7 + $0x1e8] sm:$0xff]
  %v3251 = vld [vmem:[%s7 + $0x1f0] sm:$0xff]
  %v3252 = vld [vmem:[%s7 + $0x1f8] sm:$0xff]
  %v3285 = vunpack.c.l.b16 %v3221
  %v3286 = vunpack.c.h.b16 %v3221
  %v3287 = vunpack.c.l.b16 %v3222
  %v3288 = vunpack.c.h.b16 %v3222
  %v3289 = vunpack.c.l.b16 %v3223
  %v3290 = vunpack.c.h.b16 %v3223
  %v3291 = vunpack.c.l.b16 %v3224
  %v3292 = vunpack.c.h.b16 %v3224
  %v3293 = vunpack.c.l.b16 %v3225
  %v3294 = vunpack.c.h.b16 %v3225
  %v3295 = vunpack.c.l.b16 %v3226
  %v3296 = vunpack.c.h.b16 %v3226
  %v3297 = vunpack.c.l.b16 %v3227
  %v3298 = vunpack.c.h.b16 %v3227
  %v3299 = vunpack.c.l.b16 %v3228
  %v3300 = vunpack.c.h.b16 %v3228
  %v3301 = vunpack.c.l.b16 %v3229
  %v3302 = vunpack.c.h.b16 %v3229
  %v3303 = vunpack.c.l.b16 %v3230
  %v3304 = vunpack.c.h.b16 %v3230
  %v3305 = vunpack.c.l.b16 %v3231
  %v3306 = vunpack.c.h.b16 %v3231
  %v3307 = vunpack.c.l.b16 %v3232
  %v3308 = vunpack.c.h.b16 %v3232
  %v3309 = vunpack.c.l.b16 %v3233
  %v3310 = vunpack.c.h.b16 %v3233
  %v3311 = vunpack.c.l.b16 %v3234
  %v3312 = vunpack.c.h.b16 %v3234
  %v3313 = vunpack.c.l.b16 %v3235
  %v3314 = vunpack.c.h.b16 %v3235
  %v3315 = vunpack.c.l.b16 %v3236
  %v3316 = vunpack.c.h.b16 %v3236
  %v3317 = vunpack.c.l.b16 %v3237
  %v3318 = vunpack.c.h.b16 %v3237
  %v3319 = vunpack.c.l.b16 %v3238
  %v3320 = vunpack.c.h.b16 %v3238
  %v3321 = vunpack.c.l.b16 %v3239
  %v3322 = vunpack.c.h.b16 %v3239
  %v3323 = vunpack.c.l.b16 %v3240
  %v3324 = vunpack.c.h.b16 %v3240
  %v3325 = vunpack.c.l.b16 %v3241
  %v3326 = vunpack.c.h.b16 %v3241
  %v3327 = vunpack.c.l.b16 %v3242
  %v3328 = vunpack.c.h.b16 %v3242
  %v3329 = vunpack.c.l.b16 %v3243
  %v3330 = vunpack.c.h.b16 %v3243
  %v3331 = vunpack.c.l.b16 %v3244
  %v3332 = vunpack.c.h.b16 %v3244
  %v3333 = vunpack.c.l.b16 %v3245
  %v3334 = vunpack.c.h.b16 %v3245
  %v3335 = vunpack.c.l.b16 %v3246
  %v3336 = vunpack.c.h.b16 %v3246
  %v3337 = vunpack.c.l.b16 %v3247
  %v3338 = vunpack.c.h.b16 %v3247
  %v3339 = vunpack.c.l.b16 %v3248
  %v3340 = vunpack.c.h.b16 %v3248
  %v3341 = vunpack.c.l.b16 %v3249
  %v3342 = vunpack.c.h.b16 %v3249
  %v3343 = vunpack.c.l.b16 %v3250
  %v3344 = vunpack.c.h.b16 %v3250
  %v3345 = vunpack.c.l.b16 %v3251
  %v3346 = vunpack.c.h.b16 %v3251
  %v3347 = vunpack.c.l.b16 %v3252
  %v3348 = vunpack.c.h.b16 %v3252
  %v3349 = vpack.c.b16 %v3289, %v3285
  %v3350 = vpack.c.b16 %v3290, %v3286
  %v3351 = vpack.c.b16 %v3291, %v3287
  %v3352 = vpack.c.b16 %v3292, %v3288
  %v3353 = vpack.c.b16 %v3297, %v3293
  %v3354 = vpack.c.b16 %v3298, %v3294
  %v3355 = vpack.c.b16 %v3299, %v3295
  %v3356 = vpack.c.b16 %v3300, %v3296
  %v3357 = vpack.c.b16 %v3305, %v3301
  %v3358 = vpack.c.b16 %v3306, %v3302
  %v3359 = vpack.c.b16 %v3307, %v3303
  %v3360 = vpack.c.b16 %v3308, %v3304
  %v3361 = vpack.c.b16 %v3313, %v3309
  %v3362 = vpack.c.b16 %v3314, %v3310
  %v3363 = vpack.c.b16 %v3315, %v3311
  %v3364 = vpack.c.b16 %v3316, %v3312
  %v3365 = vpack.c.b16 %v3321, %v3317
  %v3366 = vpack.c.b16 %v3322, %v3318
  %v3367 = vpack.c.b16 %v3323, %v3319
  %v3368 = vpack.c.b16 %v3324, %v3320
  %v3369 = vpack.c.b16 %v3329, %v3325
  %v3370 = vpack.c.b16 %v3330, %v3326
  %v3371 = vpack.c.b16 %v3331, %v3327
  %v3372 = vpack.c.b16 %v3332, %v3328
  %v3373 = vpack.c.b16 %v3337, %v3333
  %v3374 = vpack.c.b16 %v3338, %v3334
  %v3375 = vpack.c.b16 %v3339, %v3335
  %v3376 = vpack.c.b16 %v3340, %v3336
  %v3377 = vpack.c.b16 %v3345, %v3341
  %v3378 = vpack.c.b16 %v3346, %v3342
  %v3379 = vpack.c.b16 %v3347, %v3343
  %v3380 = vpack.c.b16 %v3348, %v3344
  %3413 = vmatpush.bf16.msra.mxu0 %v3377
  %3414 = vmatpush.bf16.msra.mxu0 %v3373
  %3415 = vmatpush.bf16.msra.mxu0 %v3369
  %3416 = vmatpush.bf16.msra.mxu0 %v3365
  %3417 = vmatpush.bf16.msra.mxu0 %v3361
  %3418 = vmatpush.bf16.msra.mxu0 %v3357
  %3419 = vmatpush.bf16.msra.mxu0 %v3353
  %3420 = vmatpush.bf16.msra.mxu0 %v3349
  %3421 = vmatmul.bf16.gmra.mxu0 %v3185
  %v3422 = vpop.f32.mrf.mxu0
  %v3423 = vadd.f32 0.0, %v3422
  %v3424 = vpop.f32.mrf.mxu0
  %v3425 = vadd.f32 0.0, %v3424
  %3426 = vmatmul.bf16.gmra.mxu0 %v3186
  %v3427 = vpop.f32.mrf.mxu0
  %v3428 = vadd.f32 0.0, %v3427
  %v3429 = vpop.f32.mrf.mxu0
  %v3430 = vadd.f32 0.0, %v3429
  %3431 = vmatmul.bf16.gmra.mxu0 %v3187
  %v3432 = vpop.f32.mrf.mxu0
  %v3433 = vadd.f32 0.0, %v3432
  %v3434 = vpop.f32.mrf.mxu0
  %v3435 = vadd.f32 0.0, %v3434
  %3436 = vmatmul.bf16.gmra.mxu0 %v3188
  %v3437 = vpop.f32.mrf.mxu0
  %v3438 = vadd.f32 0.0, %v3437
  %v3439 = vpop.f32.mrf.mxu0
  %v3440 = vadd.f32 0.0, %v3439
  %3441 = vdwg.mxu0
  %3442 = vmatpush.bf16.msra.mxu0 %v3378
  %3443 = vmatpush.bf16.msra.mxu0 %v3374
  %3444 = vmatpush.bf16.msra.mxu0 %v3370
  %3445 = vmatpush.bf16.msra.mxu0 %v3366
  %3446 = vmatpush.bf16.msra.mxu0 %v3362
  %3447 = vmatpush.bf16.msra.mxu0 %v3358
  %3448 = vmatpush.bf16.msra.mxu0 %v3354
  %3449 = vmatpush.bf16.msra.mxu0 %v3350
  %3450 = vmatmul.bf16.gmra.mxu0 %v3185
  %v3451 = vpop.f32.mrf.mxu0
  %v3452 = vadd.f32 0.0, %v3451
  %v3453 = vpop.f32.mrf.mxu0
  %v3454 = vadd.f32 0.0, %v3453
  %3455 = vmatmul.bf16.gmra.mxu0 %v3186
  %v3456 = vpop.f32.mrf.mxu0
  %v3457 = vadd.f32 0.0, %v3456
  %v3458 = vpop.f32.mrf.mxu0
  %v3459 = vadd.f32 0.0, %v3458
  %3460 = vmatmul.bf16.gmra.mxu0 %v3187
  %v3461 = vpop.f32.mrf.mxu0
  %v3462 = vadd.f32 0.0, %v3461
  %v3463 = vpop.f32.mrf.mxu0
  %v3464 = vadd.f32 0.0, %v3463
  %3465 = vmatmul.bf16.gmra.mxu0 %v3188
  %v3466 = vpop.f32.mrf.mxu0
  %v3467 = vadd.f32 0.0, %v3466
  %v3468 = vpop.f32.mrf.mxu0
  %v3469 = vadd.f32 0.0, %v3468
  %3470 = vdwg.mxu0
  %3471 = vmatpush.bf16.msra.mxu0 %v3379
  %3472 = vmatpush.bf16.msra.mxu0 %v3375
  %3473 = vmatpush.bf16.msra.mxu0 %v3371
  %3474 = vmatpush.bf16.msra.mxu0 %v3367
  %3475 = vmatpush.bf16.msra.mxu0 %v3363
  %3476 = vmatpush.bf16.msra.mxu0 %v3359
  %3477 = vmatpush.bf16.msra.mxu0 %v3355
  %3478 = vmatpush.bf16.msra.mxu0 %v3351
  %3479 = vmatmul.bf16.gmra.mxu0 %v3185
  %v3480 = vpop.f32.mrf.mxu0
  %v3481 = vadd.f32 0.0, %v3480
  %v3482 = vpop.f32.mrf.mxu0
  %v3483 = vadd.f32 0.0, %v3482
  %3484 = vmatmul.bf16.gmra.mxu0 %v3186
  %v3485 = vpop.f32.mrf.mxu0
  %v3486 = vadd.f32 0.0, %v3485
  %v3487 = vpop.f32.mrf.mxu0
  %v3488 = vadd.f32 0.0, %v3487
  %3489 = vmatmul.bf16.gmra.mxu0 %v3187
  %v3490 = vpop.f32.mrf.mxu0
  %v3491 = vadd.f32 0.0, %v3490
  %v3492 = vpop.f32.mrf.mxu0
  %v3493 = vadd.f32 0.0, %v3492
  %3494 = vmatmul.bf16.gmra.mxu0 %v3188
  %v3495 = vpop.f32.mrf.mxu0
  %v3496 = vadd.f32 0.0, %v3495
  %v3497 = vpop.f32.mrf.mxu0
  %v3498 = vadd.f32 0.0, %v3497
  %3499 = vdwg.mxu0
  %3500 = vmatpush.bf16.msra.mxu0 %v3380
  %3501 = vmatpush.bf16.msra.mxu0 %v3376
  %3502 = vmatpush.bf16.msra.mxu0 %v3372
  %3503 = vmatpush.bf16.msra.mxu0 %v3368
  %3504 = vmatpush.bf16.msra.mxu0 %v3364
  %3505 = vmatpush.bf16.msra.mxu0 %v3360
  %3506 = vmatpush.bf16.msra.mxu0 %v3356
  %3507 = vmatpush.bf16.msra.mxu0 %v3352
  %3508 = vmatmul.bf16.gmra.mxu0 %v3185
  %v3509 = vpop.f32.mrf.mxu0
  %v3510 = vadd.f32 0.0, %v3509
  %v3511 = vpop.f32.mrf.mxu0
  %v3512 = vadd.f32 0.0, %v3511
  %3513 = vmatmul.bf16.gmra.mxu0 %v3186
  %v3514 = vpop.f32.mrf.mxu0
  %v3515 = vadd.f32 0.0, %v3514
  %v3516 = vpop.f32.mrf.mxu0
  %v3517 = vadd.f32 0.0, %v3516
  %3518 = vmatmul.bf16.gmra.mxu0 %v3187
  %v3519 = vpop.f32.mrf.mxu0
  %v3520 = vadd.f32 0.0, %v3519
  %v3521 = vpop.f32.mrf.mxu0
  %v3522 = vadd.f32 0.0, %v3521
  %3523 = vmatmul.bf16.gmra.mxu0 %v3188
  %v3524 = vpop.f32.mrf.mxu0
  %v3525 = vadd.f32 0.0, %v3524
  %v3526 = vpop.f32.mrf.mxu0
  %v3527 = vadd.f32 0.0, %v3526
  %3528 = vdwg.mxu0
  %v3561 = vunpack.c.l.b16 %v3189
  %v3562 = vunpack.c.h.b16 %v3189
  %v3563 = vunpack.c.l.b16 %v3190
  %v3564 = vunpack.c.h.b16 %v3190
  %v3565 = vunpack.c.l.b16 %v3191
  %v3566 = vunpack.c.h.b16 %v3191
  %v3567 = vunpack.c.l.b16 %v3192
  %v3568 = vunpack.c.h.b16 %v3192
  %v3569 = vunpack.c.l.b16 %v3193
  %v3570 = vunpack.c.h.b16 %v3193
  %v3571 = vunpack.c.l.b16 %v3194
  %v3572 = vunpack.c.h.b16 %v3194
  %v3573 = vunpack.c.l.b16 %v3195
  %v3574 = vunpack.c.h.b16 %v3195
  %v3575 = vunpack.c.l.b16 %v3196
  %v3576 = vunpack.c.h.b16 %v3196
  %v3577 = vunpack.c.l.b16 %v3197
  %v3578 = vunpack.c.h.b16 %v3197
  %v3579 = vunpack.c.l.b16 %v3198
  %v3580 = vunpack.c.h.b16 %v3198
  %v3581 = vunpack.c.l.b16 %v3199
  %v3582 = vunpack.c.h.b16 %v3199
  %v3583 = vunpack.c.l.b16 %v3200
  %v3584 = vunpack.c.h.b16 %v3200
  %v3585 = vunpack.c.l.b16 %v3201
  %v3586 = vunpack.c.h.b16 %v3201
  %v3587 = vunpack.c.l.b16 %v3202
  %v3588 = vunpack.c.h.b16 %v3202
  %v3589 = vunpack.c.l.b16 %v3203
  %v3590 = vunpack.c.h.b16 %v3203
  %v3591 = vunpack.c.l.b16 %v3204
  %v3592 = vunpack.c.h.b16 %v3204
  %v3593 = vunpack.c.l.b16 %v3205
  %v3594 = vunpack.c.h.b16 %v3205
  %v3595 = vunpack.c.l.b16 %v3206
  %v3596 = vunpack.c.h.b16 %v3206
  %v3597 = vunpack.c.l.b16 %v3207
  %v3598 = vunpack.c.h.b16 %v3207
  %v3599 = vunpack.c.l.b16 %v3208
  %v3600 = vunpack.c.h.b16 %v3208
  %v3601 = vunpack.c.l.b16 %v3209
  %v3602 = vunpack.c.h.b16 %v3209
  %v3603 = vunpack.c.l.b16 %v3210
  %v3604 = vunpack.c.h.b16 %v3210
  %v3605 = vunpack.c.l.b16 %v3211
  %v3606 = vunpack.c.h.b16 %v3211
  %v3607 = vunpack.c.l.b16 %v3212
  %v3608 = vunpack.c.h.b16 %v3212
  %v3609 = vunpack.c.l.b16 %v3213
  %v3610 = vunpack.c.h.b16 %v3213
  %v3611 = vunpack.c.l.b16 %v3214
  %v3612 = vunpack.c.h.b16 %v3214
  %v3613 = vunpack.c.l.b16 %v3215
  %v3614 = vunpack.c.h.b16 %v3215
  %v3615 = vunpack.c.l.b16 %v3216
  %v3616 = vunpack.c.h.b16 %v3216
  %v3617 = vunpack.c.l.b16 %v3217
  %v3618 = vunpack.c.h.b16 %v3217
  %v3619 = vunpack.c.l.b16 %v3218
  %v3620 = vunpack.c.h.b16 %v3218
  %v3621 = vunpack.c.l.b16 %v3219
  %v3622 = vunpack.c.h.b16 %v3219
  %v3623 = vunpack.c.l.b16 %v3220
  %v3624 = vunpack.c.h.b16 %v3220
  %v3625 = vpack.c.b16 %v3565, %v3561
  %v3626 = vpack.c.b16 %v3566, %v3562
  %v3627 = vpack.c.b16 %v3567, %v3563
  %v3628 = vpack.c.b16 %v3568, %v3564
  %v3629 = vpack.c.b16 %v3573, %v3569
  %v3630 = vpack.c.b16 %v3574, %v3570
  %v3631 = vpack.c.b16 %v3575, %v3571
  %v3632 = vpack.c.b16 %v3576, %v3572
  %v3633 = vpack.c.b16 %v3581, %v3577
  %v3634 = vpack.c.b16 %v3582, %v3578
  %v3635 = vpack.c.b16 %v3583, %v3579
  %v3636 = vpack.c.b16 %v3584, %v3580
  %v3637 = vpack.c.b16 %v3589, %v3585
  %v3638 = vpack.c.b16 %v3590, %v3586
  %v3639 = vpack.c.b16 %v3591, %v3587
  %v3640 = vpack.c.b16 %v3592, %v3588
  %v3641 = vpack.c.b16 %v3597, %v3593
  %v3642 = vpack.c.b16 %v3598, %v3594
  %v3643 = vpack.c.b16 %v3599, %v3595
  %v3644 = vpack.c.b16 %v3600, %v3596
  %v3645 = vpack.c.b16 %v3605, %v3601
  %v3646 = vpack.c.b16 %v3606, %v3602
  %v3647 = vpack.c.b16 %v3607, %v3603
  %v3648 = vpack.c.b16 %v3608, %v3604
  %v3649 = vpack.c.b16 %v3613, %v3609
  %v3650 = vpack.c.b16 %v3614, %v3610
  %v3651 = vpack.c.b16 %v3615, %v3611
  %v3652 = vpack.c.b16 %v3616, %v3612
  %v3653 = vpack.c.b16 %v3621, %v3617
  %v3654 = vpack.c.b16 %v3622, %v3618
  %v3655 = vpack.c.b16 %v3623, %v3619
  %v3656 = vpack.c.b16 %v3624, %v3620
  %3689 = vmatpush.bf16.msra.mxu0 %v3653
  %3690 = vmatpush.bf16.msra.mxu0 %v3649
  %3691 = vmatpush.bf16.msra.mxu0 %v3645
  %3692 = vmatpush.bf16.msra.mxu0 %v3641
  %3693 = vmatpush.bf16.msra.mxu0 %v3637
  %3694 = vmatpush.bf16.msra.mxu0 %v3633
  %3695 = vmatpush.bf16.msra.mxu0 %v3629
  %3696 = vmatpush.bf16.msra.mxu0 %v3625
  %3697 = vmatmul.bf16.gmra.mxu0 %v3173
  %v3698 = vpop.f32.mrf.mxu0
  %v3699 = vadd.f32 %v3423, %v3698
  %v3700 = vpop.f32.mrf.mxu0
  %v3701 = vadd.f32 %v3425, %v3700
  %3702 = vmatmul.bf16.gmra.mxu0 %v3174
  %v3703 = vpop.f32.mrf.mxu0
  %v3704 = vadd.f32 %v3428, %v3703
  %v3705 = vpop.f32.mrf.mxu0
  %v3706 = vadd.f32 %v3430, %v3705
  %3707 = vmatmul.bf16.gmra.mxu0 %v3175
  %v3708 = vpop.f32.mrf.mxu0
  %v3709 = vadd.f32 %v3433, %v3708
  %v3710 = vpop.f32.mrf.mxu0
  %v3711 = vadd.f32 %v3435, %v3710
  %3712 = vmatmul.bf16.gmra.mxu0 %v3176
  %v3713 = vpop.f32.mrf.mxu0
  %v3714 = vadd.f32 %v3438, %v3713
  %v3715 = vpop.f32.mrf.mxu0
  %v3716 = vadd.f32 %v3440, %v3715
  %3717 = vdwg.mxu0
  %3718 = vmatpush.bf16.msra.mxu0 %v3654
  %3719 = vmatpush.bf16.msra.mxu0 %v3650
  %3720 = vmatpush.bf16.msra.mxu0 %v3646
  %3721 = vmatpush.bf16.msra.mxu0 %v3642
  %3722 = vmatpush.bf16.msra.mxu0 %v3638
  %3723 = vmatpush.bf16.msra.mxu0 %v3634
  %3724 = vmatpush.bf16.msra.mxu0 %v3630
  %3725 = vmatpush.bf16.msra.mxu0 %v3626
  %3726 = vmatmul.bf16.gmra.mxu0 %v3173
  %v3727 = vpop.f32.mrf.mxu0
  %v3728 = vadd.f32 %v3452, %v3727
  %v3729 = vpop.f32.mrf.mxu0
  %v3730 = vadd.f32 %v3454, %v3729
  %3731 = vmatmul.bf16.gmra.mxu0 %v3174
  %v3732 = vpop.f32.mrf.mxu0
  %v3733 = vadd.f32 %v3457, %v3732
  %v3734 = vpop.f32.mrf.mxu0
  %v3735 = vadd.f32 %v3459, %v3734
  %3736 = vmatmul.bf16.gmra.mxu0 %v3175
  %v3737 = vpop.f32.mrf.mxu0
  %v3738 = vadd.f32 %v3462, %v3737
  %v3739 = vpop.f32.mrf.mxu0
  %v3740 = vadd.f32 %v3464, %v3739
  %3741 = vmatmul.bf16.gmra.mxu0 %v3176
  %v3742 = vpop.f32.mrf.mxu0
  %v3743 = vadd.f32 %v3467, %v3742
  %v3744 = vpop.f32.mrf.mxu0
  %v3745 = vadd.f32 %v3469, %v3744
  %3746 = vdwg.mxu0
  %3747 = vmatpush.bf16.msra.mxu0 %v3655
  %3748 = vmatpush.bf16.msra.mxu0 %v3651
  %3749 = vmatpush.bf16.msra.mxu0 %v3647
  %3750 = vmatpush.bf16.msra.mxu0 %v3643
  %3751 = vmatpush.bf16.msra.mxu0 %v3639
  %3752 = vmatpush.bf16.msra.mxu0 %v3635
  %3753 = vmatpush.bf16.msra.mxu0 %v3631
  %3754 = vmatpush.bf16.msra.mxu0 %v3627
  %3755 = vmatmul.bf16.gmra.mxu0 %v3173
  %v3756 = vpop.f32.mrf.mxu0
  %v3757 = vadd.f32 %v3481, %v3756
  %v3758 = vpop.f32.mrf.mxu0
  %v3759 = vadd.f32 %v3483, %v3758
  %3760 = vmatmul.bf16.gmra.mxu0 %v3174
  %v3761 = vpop.f32.mrf.mxu0
  %v3762 = vadd.f32 %v3486, %v3761
  %v3763 = vpop.f32.mrf.mxu0
  %v3764 = vadd.f32 %v3488, %v3763
  %3765 = vmatmul.bf16.gmra.mxu0 %v3175
  %v3766 = vpop.f32.mrf.mxu0
  %v3767 = vadd.f32 %v3491, %v3766
  %v3768 = vpop.f32.mrf.mxu0
  %v3769 = vadd.f32 %v3493, %v3768
  %3770 = vmatmul.bf16.gmra.mxu0 %v3176
  %v3771 = vpop.f32.mrf.mxu0
  %v3772 = vadd.f32 %v3496, %v3771
  %v3773 = vpop.f32.mrf.mxu0
  %v3774 = vadd.f32 %v3498, %v3773
  %3775 = vdwg.mxu0
  %3776 = vmatpush.bf16.msra.mxu0 %v3656
  %3777 = vmatpush.bf16.msra.mxu0 %v3652
  %3778 = vmatpush.bf16.msra.mxu0 %v3648
  %3779 = vmatpush.bf16.msra.mxu0 %v3644
  %3780 = vmatpush.bf16.msra.mxu0 %v3640
  %3781 = vmatpush.bf16.msra.mxu0 %v3636
  %3782 = vmatpush.bf16.msra.mxu0 %v3632
  %3783 = vmatpush.bf16.msra.mxu0 %v3628
  %3784 = vmatmul.bf16.gmra.mxu0 %v3173
  %v3785 = vpop.f32.mrf.mxu0
  %v3786 = vadd.f32 %v3510, %v3785
  %v3787 = vpop.f32.mrf.mxu0
  %v3788 = vadd.f32 %v3512, %v3787
  %3789 = vmatmul.bf16.gmra.mxu0 %v3174
  %v3790 = vpop.f32.mrf.mxu0
  %v3791 = vadd.f32 %v3515, %v3790
  %v3792 = vpop.f32.mrf.mxu0
  %v3793 = vadd.f32 %v3517, %v3792
  %3794 = vmatmul.bf16.gmra.mxu0 %v3175
  %v3795 = vpop.f32.mrf.mxu0
  %v3796 = vadd.f32 %v3520, %v3795
  %v3797 = vpop.f32.mrf.mxu0
  %v3798 = vadd.f32 %v3522, %v3797
  %3799 = vmatmul.bf16.gmra.mxu0 %v3176
  %v3800 = vpop.f32.mrf.mxu0
  %v3801 = vadd.f32 %v3525, %v3800
  %v3802 = vpop.f32.mrf.mxu0
  %v3803 = vadd.f32 %v3527, %v3802
  %3804 = vdwg.mxu0
  %v3805 = vld [vmem:[%s9] sm:$0xf]
  %v3807 = vperm.slane %v3805, 0
  %v3808 = vperm.slane %v3805, 1
  %v3809 = vperm.slane %v3805, 2
  %v3810 = vperm.slane %v3805, 3
  %v3815 = vadd.f32 %v3699, %v3807
  %v3816 = vadd.f32 %v3728, %v3808
  %v3817 = vadd.f32 %v3757, %v3809
  %v3818 = vadd.f32 %v3786, %v3810
  %v3819 = vadd.f32 %v3701, %v3807
  %v3820 = vadd.f32 %v3730, %v3808
  %v3821 = vadd.f32 %v3759, %v3809
  %v3822 = vadd.f32 %v3788, %v3810
  %v3823 = vadd.f32 %v3704, %v3807
  %v3824 = vadd.f32 %v3733, %v3808
  %v3825 = vadd.f32 %v3762, %v3809
  %v3826 = vadd.f32 %v3791, %v3810
  %v3827 = vadd.f32 %v3706, %v3807
  %v3828 = vadd.f32 %v3735, %v3808
  %v3829 = vadd.f32 %v3764, %v3809
  %v3830 = vadd.f32 %v3793, %v3810
  %v3831 = vadd.f32 %v3709, %v3807
  %v3832 = vadd.f32 %v3738, %v3808
  %v3833 = vadd.f32 %v3767, %v3809
  %v3834 = vadd.f32 %v3796, %v3810
  %v3835 = vadd.f32 %v3711, %v3807
  %v3836 = vadd.f32 %v3740, %v3808
  %v3837 = vadd.f32 %v3769, %v3809
  %v3838 = vadd.f32 %v3798, %v3810
  %v3839 = vadd.f32 %v3714, %v3807
  %v3840 = vadd.f32 %v3743, %v3808
  %v3841 = vadd.f32 %v3772, %v3809
  %v3842 = vadd.f32 %v3801, %v3810
  %v3843 = vadd.f32 %v3716, %v3807
  %v3844 = vadd.f32 %v3745, %v3808
  %v3845 = vadd.f32 %v3774, %v3809
  %v3846 = vadd.f32 %v3803, %v3810
  %3847 = vst [vmem:[#allocation4] sm:$0xff] %v3815
  %3848 = vst [vmem:[#allocation4 + $0x8] sm:$0xff] %v3816
  %3849 = vst [vmem:[#allocation4 + $0x10] sm:$0xff] %v3817
  %3850 = vst [vmem:[#allocation4 + $0x18] sm:$0xff] %v3818
  %3851 = vst [vmem:[#allocation4 + $0x20] sm:$0xff] %v3819
  %3852 = vst [vmem:[#allocation4 + $0x28] sm:$0xff] %v3820
  %3853 = vst [vmem:[#allocation4 + $0x30] sm:$0xff] %v3821
  %3854 = vst [vmem:[#allocation4 + $0x38] sm:$0xff] %v3822
  %3855 = vst [vmem:[#allocation4 + $0x40] sm:$0xff] %v3823
  %3856 = vst [vmem:[#allocation4 + $0x48] sm:$0xff] %v3824
  %3857 = vst [vmem:[#allocation4 + $0x50] sm:$0xff] %v3825
  %3858 = vst [vmem:[#allocation4 + $0x58] sm:$0xff] %v3826
  %3859 = vst [vmem:[#allocation4 + $0x60] sm:$0xff] %v3827
  %3860 = vst [vmem:[#allocation4 + $0x68] sm:$0xff] %v3828
  %3861 = vst [vmem:[#allocation4 + $0x70] sm:$0xff] %v3829
  %3862 = vst [vmem:[#allocation4 + $0x78] sm:$0xff] %v3830
  %3863 = vst [vmem:[#allocation4 + $0x80] sm:$0xff] %v3831
  %3864 = vst [vmem:[#allocation4 + $0x88] sm:$0xff] %v3832
  %3865 = vst [vmem:[#allocation4 + $0x90] sm:$0xff] %v3833
  %3866 = vst [vmem:[#allocation4 + $0x98] sm:$0xff] %v3834
  %3867 = vst [vmem:[#allocation4 + $0xa0] sm:$0xff] %v3835
  %3868 = vst [vmem:[#allocation4 + $0xa8] sm:$0xff] %v3836
  %3869 = vst [vmem:[#allocation4 + $0xb0] sm:$0xff] %v3837
  %3870 = vst [vmem:[#allocation4 + $0xb8] sm:$0xff] %v3838
  %3871 = vst [vmem:[#allocation4 + $0xc0] sm:$0xff] %v3839
  %3872 = vst [vmem:[#allocation4 + $0xc8] sm:$0xff] %v3840
  %3873 = vst [vmem:[#allocation4 + $0xd0] sm:$0xff] %v3841
  %3874 = vst [vmem:[#allocation4 + $0xd8] sm:$0xff] %v3842
  %3875 = vst [vmem:[#allocation4 + $0xe0] sm:$0xff] %v3843
  %3876 = vst [vmem:[#allocation4 + $0xe8] sm:$0xff] %v3844
  %3877 = vst [vmem:[#allocation4 + $0xf0] sm:$0xff] %v3845
  %3878 = vst [vmem:[#allocation4 + $0xf8] sm:$0xff] %v3846
  %v3879 = vld [vmem:[%s10] sm:$0xff]
  %v3880 = vld [vmem:[%s10 + $0x8] sm:$0xff]
  %v3881 = vld [vmem:[%s10 + $0x10] sm:$0xff]
  %v3882 = vld [vmem:[%s10 + $0x18] sm:$0xff]
  %v3883 = vld [vmem:[%s10 + $0x20] sm:$0xff]
  %v3884 = vld [vmem:[%s10 + $0x28] sm:$0xff]
  %v3885 = vld [vmem:[%s10 + $0x30] sm:$0xff]
  %v3886 = vld [vmem:[%s10 + $0x38] sm:$0xff]
  %v3887 = vld [vmem:[%s10 + $0x40] sm:$0xff]
  %v3888 = vld [vmem:[%s10 + $0x48] sm:$0xff]
  %v3889 = vld [vmem:[%s10 + $0x50] sm:$0xff]
  %v3890 = vld [vmem:[%s10 + $0x58] sm:$0xff]
  %v3891 = vld [vmem:[%s10 + $0x60] sm:$0xff]
  %v3892 = vld [vmem:[%s10 + $0x68] sm:$0xff]
  %v3893 = vld [vmem:[%s10 + $0x70] sm:$0xff]
  %v3894 = vld [vmem:[%s10 + $0x78] sm:$0xff]
  %v3895 = vld [vmem:[%s10 + $0x80] sm:$0xff]
  %v3896 = vld [vmem:[%s10 + $0x88] sm:$0xff]
  %v3897 = vld [vmem:[%s10 + $0x90] sm:$0xff]
  %v3898 = vld [vmem:[%s10 + $0x98] sm:$0xff]
  %v3899 = vld [vmem:[%s10 + $0xa0] sm:$0xff]
  %v3900 = vld [vmem:[%s10 + $0xa8] sm:$0xff]
  %v3901 = vld [vmem:[%s10 + $0xb0] sm:$0xff]
  %v3902 = vld [vmem:[%s10 + $0xb8] sm:$0xff]
  %v3903 = vld [vmem:[%s10 + $0xc0] sm:$0xff]
  %v3904 = vld [vmem:[%s10 + $0xc8] sm:$0xff]
  %v3905 = vld [vmem:[%s10 + $0xd0] sm:$0xff]
  %v3906 = vld [vmem:[%s10 + $0xd8] sm:$0xff]
  %v3907 = vld [vmem:[%s10 + $0xe0] sm:$0xff]
  %v3908 = vld [vmem:[%s10 + $0xe8] sm:$0xff]
  %v3909 = vld [vmem:[%s10 + $0xf0] sm:$0xff]
  %v3910 = vld [vmem:[%s10 + $0xf8] sm:$0xff]
  %v3911 = vld [vmem:[%s10 + $0x100] sm:$0xff]
  %v3912 = vld [vmem:[%s10 + $0x108] sm:$0xff]
  %v3913 = vld [vmem:[%s10 + $0x110] sm:$0xff]
  %v3914 = vld [vmem:[%s10 + $0x118] sm:$0xff]
  %v3915 = vld [vmem:[%s10 + $0x120] sm:$0xff]
  %v3916 = vld [vmem:[%s10 + $0x128] sm:$0xff]
  %v3917 = vld [vmem:[%s10 + $0x130] sm:$0xff]
  %v3918 = vld [vmem:[%s10 + $0x138] sm:$0xff]
  %v3919 = vld [vmem:[%s10 + $0x140] sm:$0xff]
  %v3920 = vld [vmem:[%s10 + $0x148] sm:$0xff]
  %v3921 = vld [vmem:[%s10 + $0x150] sm:$0xff]
  %v3922 = vld [vmem:[%s10 + $0x158] sm:$0xff]
  %v3923 = vld [vmem:[%s10 + $0x160] sm:$0xff]
  %v3924 = vld [vmem:[%s10 + $0x168] sm:$0xff]
  %v3925 = vld [vmem:[%s10 + $0x170] sm:$0xff]
  %v3926 = vld [vmem:[%s10 + $0x178] sm:$0xff]
  %v3927 = vld [vmem:[%s10 + $0x180] sm:$0xff]
  %v3928 = vld [vmem:[%s10 + $0x188] sm:$0xff]
  %v3929 = vld [vmem:[%s10 + $0x190] sm:$0xff]
  %v3930 = vld [vmem:[%s10 + $0x198] sm:$0xff]
  %v3931 = vld [vmem:[%s10 + $0x1a0] sm:$0xff]
  %v3932 = vld [vmem:[%s10 + $0x1a8] sm:$0xff]
  %v3933 = vld [vmem:[%s10 + $0x1b0] sm:$0xff]
  %v3934 = vld [vmem:[%s10 + $0x1b8] sm:$0xff]
  %v3935 = vld [vmem:[%s10 + $0x1c0] sm:$0xff]
  %v3936 = vld [vmem:[%s10 + $0x1c8] sm:$0xff]
  %v3937 = vld [vmem:[%s10 + $0x1d0] sm:$0xff]
  %v3938 = vld [vmem:[%s10 + $0x1d8] sm:$0xff]
  %v3939 = vld [vmem:[%s10 + $0x1e0] sm:$0xff]
  %v3940 = vld [vmem:[%s10 + $0x1e8] sm:$0xff]
  %v3941 = vld [vmem:[%s10 + $0x1f0] sm:$0xff]
  %v3942 = vld [vmem:[%s10 + $0x1f8] sm:$0xff]
  %v3975 = vunpack.c.l.b16 %v3911
  %v3976 = vunpack.c.h.b16 %v3911
  %v3977 = vunpack.c.l.b16 %v3912
  %v3978 = vunpack.c.h.b16 %v3912
  %v3979 = vunpack.c.l.b16 %v3913
  %v3980 = vunpack.c.h.b16 %v3913
  %v3981 = vunpack.c.l.b16 %v3914
  %v3982 = vunpack.c.h.b16 %v3914
  %v3983 = vunpack.c.l.b16 %v3915
  %v3984 = vunpack.c.h.b16 %v3915
  %v3985 = vunpack.c.l.b16 %v3916
  %v3986 = vunpack.c.h.b16 %v3916
  %v3987 = vunpack.c.l.b16 %v3917
  %v3988 = vunpack.c.h.b16 %v3917
  %v3989 = vunpack.c.l.b16 %v3918
  %v3990 = vunpack.c.h.b16 %v3918
  %v3991 = vunpack.c.l.b16 %v3919
  %v3992 = vunpack.c.h.b16 %v3919
  %v3993 = vunpack.c.l.b16 %v3920
  %v3994 = vunpack.c.h.b16 %v3920
  %v3995 = vunpack.c.l.b16 %v3921
  %v3996 = vunpack.c.h.b16 %v3921
  %v3997 = vunpack.c.l.b16 %v3922
  %v3998 = vunpack.c.h.b16 %v3922
  %v3999 = vunpack.c.l.b16 %v3923
  %v4000 = vunpack.c.h.b16 %v3923
  %v4001 = vunpack.c.l.b16 %v3924
  %v4002 = vunpack.c.h.b16 %v3924
  %v4003 = vunpack.c.l.b16 %v3925
  %v4004 = vunpack.c.h.b16 %v3925
  %v4005 = vunpack.c.l.b16 %v3926
  %v4006 = vunpack.c.h.b16 %v3926
  %v4007 = vunpack.c.l.b16 %v3927
  %v4008 = vunpack.c.h.b16 %v3927
  %v4009 = vunpack.c.l.b16 %v3928
  %v4010 = vunpack.c.h.b16 %v3928
  %v4011 = vunpack.c.l.b16 %v3929
  %v4012 = vunpack.c.h.b16 %v3929
  %v4013 = vunpack.c.l.b16 %v3930
  %v4014 = vunpack.c.h.b16 %v3930
  %v4015 = vunpack.c.l.b16 %v3931
  %v4016 = vunpack.c.h.b16 %v3931
  %v4017 = vunpack.c.l.b16 %v3932
  %v4018 = vunpack.c.h.b16 %v3932
  %v4019 = vunpack.c.l.b16 %v3933
  %v4020 = vunpack.c.h.b16 %v3933
  %v4021 = vunpack.c.l.b16 %v3934
  %v4022 = vunpack.c.h.b16 %v3934
  %v4023 = vunpack.c.l.b16 %v3935
  %v4024 = vunpack.c.h.b16 %v3935
  %v4025 = vunpack.c.l.b16 %v3936
  %v4026 = vunpack.c.h.b16 %v3936
  %v4027 = vunpack.c.l.b16 %v3937
  %v4028 = vunpack.c.h.b16 %v3937
  %v4029 = vunpack.c.l.b16 %v3938
  %v4030 = vunpack.c.h.b16 %v3938
  %v4031 = vunpack.c.l.b16 %v3939
  %v4032 = vunpack.c.h.b16 %v3939
  %v4033 = vunpack.c.l.b16 %v3940
  %v4034 = vunpack.c.h.b16 %v3940
  %v4035 = vunpack.c.l.b16 %v3941
  %v4036 = vunpack.c.h.b16 %v3941
  %v4037 = vunpack.c.l.b16 %v3942
  %v4038 = vunpack.c.h.b16 %v3942
  %v4039 = vpack.c.b16 %v3979, %v3975
  %v4040 = vpack.c.b16 %v3980, %v3976
  %v4041 = vpack.c.b16 %v3981, %v3977
  %v4042 = vpack.c.b16 %v3982, %v3978
  %v4043 = vpack.c.b16 %v3987, %v3983
  %v4044 = vpack.c.b16 %v3988, %v3984
  %v4045 = vpack.c.b16 %v3989, %v3985
  %v4046 = vpack.c.b16 %v3990, %v3986
  %v4047 = vpack.c.b16 %v3995, %v3991
  %v4048 = vpack.c.b16 %v3996, %v3992
  %v4049 = vpack.c.b16 %v3997, %v3993
  %v4050 = vpack.c.b16 %v3998, %v3994
  %v4051 = vpack.c.b16 %v4003, %v3999
  %v4052 = vpack.c.b16 %v4004, %v4000
  %v4053 = vpack.c.b16 %v4005, %v4001
  %v4054 = vpack.c.b16 %v4006, %v4002
  %v4055 = vpack.c.b16 %v4011, %v4007
  %v4056 = vpack.c.b16 %v4012, %v4008
  %v4057 = vpack.c.b16 %v4013, %v4009
  %v4058 = vpack.c.b16 %v4014, %v4010
  %v4059 = vpack.c.b16 %v4019, %v4015
  %v4060 = vpack.c.b16 %v4020, %v4016
  %v4061 = vpack.c.b16 %v4021, %v4017
  %v4062 = vpack.c.b16 %v4022, %v4018
  %v4063 = vpack.c.b16 %v4027, %v4023
  %v4064 = vpack.c.b16 %v4028, %v4024
  %v4065 = vpack.c.b16 %v4029, %v4025
  %v4066 = vpack.c.b16 %v4030, %v4026
  %v4067 = vpack.c.b16 %v4035, %v4031
  %v4068 = vpack.c.b16 %v4036, %v4032
  %v4069 = vpack.c.b16 %v4037, %v4033
  %v4070 = vpack.c.b16 %v4038, %v4034
  %4103 = vmatpush.bf16.msra.mxu0 %v4067
  %4104 = vmatpush.bf16.msra.mxu0 %v4063
  %4105 = vmatpush.bf16.msra.mxu0 %v4059
  %4106 = vmatpush.bf16.msra.mxu0 %v4055
  %4107 = vmatpush.bf16.msra.mxu0 %v4051
  %4108 = vmatpush.bf16.msra.mxu0 %v4047
  %4109 = vmatpush.bf16.msra.mxu0 %v4043
  %4110 = vmatpush.bf16.msra.mxu0 %v4039
  %4111 = vmatmul.bf16.gmra.mxu0 %v3185
  %v4112 = vpop.f32.mrf.mxu0
  %v4113 = vadd.f32 0.0, %v4112
  %v4114 = vpop.f32.mrf.mxu0
  %v4115 = vadd.f32 0.0, %v4114
  %4116 = vmatmul.bf16.gmra.mxu0 %v3186
  %v4117 = vpop.f32.mrf.mxu0
  %v4118 = vadd.f32 0.0, %v4117
  %v4119 = vpop.f32.mrf.mxu0
  %v4120 = vadd.f32 0.0, %v4119
  %4121 = vmatmul.bf16.gmra.mxu0 %v3187
  %v4122 = vpop.f32.mrf.mxu0
  %v4123 = vadd.f32 0.0, %v4122
  %v4124 = vpop.f32.mrf.mxu0
  %v4125 = vadd.f32 0.0, %v4124
  %4126 = vmatmul.bf16.gmra.mxu0 %v3188
  %v4127 = vpop.f32.mrf.mxu0
  %v4128 = vadd.f32 0.0, %v4127
  %v4129 = vpop.f32.mrf.mxu0
  %v4130 = vadd.f32 0.0, %v4129
  %4131 = vdwg.mxu0
  %4132 = vmatpush.bf16.msra.mxu0 %v4068
  %4133 = vmatpush.bf16.msra.mxu0 %v4064
  %4134 = vmatpush.bf16.msra.mxu0 %v4060
  %4135 = vmatpush.bf16.msra.mxu0 %v4056
  %4136 = vmatpush.bf16.msra.mxu0 %v4052
  %4137 = vmatpush.bf16.msra.mxu0 %v4048
  %4138 = vmatpush.bf16.msra.mxu0 %v4044
  %4139 = vmatpush.bf16.msra.mxu0 %v4040
  %4140 = vmatmul.bf16.gmra.mxu0 %v3185
  %v4141 = vpop.f32.mrf.mxu0
  %v4142 = vadd.f32 0.0, %v4141
  %v4143 = vpop.f32.mrf.mxu0
  %v4144 = vadd.f32 0.0, %v4143
  %4145 = vmatmul.bf16.gmra.mxu0 %v3186
  %v4146 = vpop.f32.mrf.mxu0
  %v4147 = vadd.f32 0.0, %v4146
  %v4148 = vpop.f32.mrf.mxu0
  %v4149 = vadd.f32 0.0, %v4148
  %4150 = vmatmul.bf16.gmra.mxu0 %v3187
  %v4151 = vpop.f32.mrf.mxu0
  %v4152 = vadd.f32 0.0, %v4151
  %v4153 = vpop.f32.mrf.mxu0
  %v4154 = vadd.f32 0.0, %v4153
  %4155 = vmatmul.bf16.gmra.mxu0 %v3188
  %v4156 = vpop.f32.mrf.mxu0
  %v4157 = vadd.f32 0.0, %v4156
  %v4158 = vpop.f32.mrf.mxu0
  %v4159 = vadd.f32 0.0, %v4158
  %4160 = vdwg.mxu0
  %4161 = vmatpush.bf16.msra.mxu0 %v4069
  %4162 = vmatpush.bf16.msra.mxu0 %v4065
  %4163 = vmatpush.bf16.msra.mxu0 %v4061
  %4164 = vmatpush.bf16.msra.mxu0 %v4057
  %4165 = vmatpush.bf16.msra.mxu0 %v4053
  %4166 = vmatpush.bf16.msra.mxu0 %v4049
  %4167 = vmatpush.bf16.msra.mxu0 %v4045
  %4168 = vmatpush.bf16.msra.mxu0 %v4041
  %4169 = vmatmul.bf16.gmra.mxu0 %v3185
  %v4170 = vpop.f32.mrf.mxu0
  %v4171 = vadd.f32 0.0, %v4170
  %v4172 = vpop.f32.mrf.mxu0
  %v4173 = vadd.f32 0.0, %v4172
  %4174 = vmatmul.bf16.gmra.mxu0 %v3186
  %v4175 = vpop.f32.mrf.mxu0
  %v4176 = vadd.f32 0.0, %v4175
  %v4177 = vpop.f32.mrf.mxu0
  %v4178 = vadd.f32 0.0, %v4177
  %4179 = vmatmul.bf16.gmra.mxu0 %v3187
  %v4180 = vpop.f32.mrf.mxu0
  %v4181 = vadd.f32 0.0, %v4180
  %v4182 = vpop.f32.mrf.mxu0
  %v4183 = vadd.f32 0.0, %v4182
  %4184 = vmatmul.bf16.gmra.mxu0 %v3188
  %v4185 = vpop.f32.mrf.mxu0
  %v4186 = vadd.f32 0.0, %v4185
  %v4187 = vpop.f32.mrf.mxu0
  %v4188 = vadd.f32 0.0, %v4187
  %4189 = vdwg.mxu0
  %4190 = vmatpush.bf16.msra.mxu0 %v4070
  %4191 = vmatpush.bf16.msra.mxu0 %v4066
  %4192 = vmatpush.bf16.msra.mxu0 %v4062
  %4193 = vmatpush.bf16.msra.mxu0 %v4058
  %4194 = vmatpush.bf16.msra.mxu0 %v4054
  %4195 = vmatpush.bf16.msra.mxu0 %v4050
  %4196 = vmatpush.bf16.msra.mxu0 %v4046
  %4197 = vmatpush.bf16.msra.mxu0 %v4042
  %4198 = vmatmul.bf16.gmra.mxu0 %v3185
  %v4199 = vpop.f32.mrf.mxu0
  %v4200 = vadd.f32 0.0, %v4199
  %v4201 = vpop.f32.mrf.mxu0
  %v4202 = vadd.f32 0.0, %v4201
  %4203 = vmatmul.bf16.gmra.mxu0 %v3186
  %v4204 = vpop.f32.mrf.mxu0
  %v4205 = vadd.f32 0.0, %v4204
  %v4206 = vpop.f32.mrf.mxu0
  %v4207 = vadd.f32 0.0, %v4206
  %4208 = vmatmul.bf16.gmra.mxu0 %v3187
  %v4209 = vpop.f32.mrf.mxu0
  %v4210 = vadd.f32 0.0, %v4209
  %v4211 = vpop.f32.mrf.mxu0
  %v4212 = vadd.f32 0.0, %v4211
  %4213 = vmatmul.bf16.gmra.mxu0 %v3188
  %v4214 = vpop.f32.mrf.mxu0
  %v4215 = vadd.f32 0.0, %v4214
  %v4216 = vpop.f32.mrf.mxu0
  %v4217 = vadd.f32 0.0, %v4216
  %4218 = vdwg.mxu0
  %v4251 = vunpack.c.l.b16 %v3879
  %v4252 = vunpack.c.h.b16 %v3879
  %v4253 = vunpack.c.l.b16 %v3880
  %v4254 = vunpack.c.h.b16 %v3880
  %v4255 = vunpack.c.l.b16 %v3881
  %v4256 = vunpack.c.h.b16 %v3881
  %v4257 = vunpack.c.l.b16 %v3882
  %v4258 = vunpack.c.h.b16 %v3882
  %v4259 = vunpack.c.l.b16 %v3883
  %v4260 = vunpack.c.h.b16 %v3883
  %v4261 = vunpack.c.l.b16 %v3884
  %v4262 = vunpack.c.h.b16 %v3884
  %v4263 = vunpack.c.l.b16 %v3885
  %v4264 = vunpack.c.h.b16 %v3885
  %v4265 = vunpack.c.l.b16 %v3886
  %v4266 = vunpack.c.h.b16 %v3886
  %v4267 = vunpack.c.l.b16 %v3887
  %v4268 = vunpack.c.h.b16 %v3887
  %v4269 = vunpack.c.l.b16 %v3888
  %v4270 = vunpack.c.h.b16 %v3888
  %v4271 = vunpack.c.l.b16 %v3889
  %v4272 = vunpack.c.h.b16 %v3889
  %v4273 = vunpack.c.l.b16 %v3890
  %v4274 = vunpack.c.h.b16 %v3890
  %v4275 = vunpack.c.l.b16 %v3891
  %v4276 = vunpack.c.h.b16 %v3891
  %v4277 = vunpack.c.l.b16 %v3892
  %v4278 = vunpack.c.h.b16 %v3892
  %v4279 = vunpack.c.l.b16 %v3893
  %v4280 = vunpack.c.h.b16 %v3893
  %v4281 = vunpack.c.l.b16 %v3894
  %v4282 = vunpack.c.h.b16 %v3894
  %v4283 = vunpack.c.l.b16 %v3895
  %v4284 = vunpack.c.h.b16 %v3895
  %v4285 = vunpack.c.l.b16 %v3896
  %v4286 = vunpack.c.h.b16 %v3896
  %v4287 = vunpack.c.l.b16 %v3897
  %v4288 = vunpack.c.h.b16 %v3897
  %v4289 = vunpack.c.l.b16 %v3898
  %v4290 = vunpack.c.h.b16 %v3898
  %v4291 = vunpack.c.l.b16 %v3899
  %v4292 = vunpack.c.h.b16 %v3899
  %v4293 = vunpack.c.l.b16 %v3900
  %v4294 = vunpack.c.h.b16 %v3900
  %v4295 = vunpack.c.l.b16 %v3901
  %v4296 = vunpack.c.h.b16 %v3901
  %v4297 = vunpack.c.l.b16 %v3902
  %v4298 = vunpack.c.h.b16 %v3902
  %v4299 = vunpack.c.l.b16 %v3903
  %v4300 = vunpack.c.h.b16 %v3903
  %v4301 = vunpack.c.l.b16 %v3904
  %v4302 = vunpack.c.h.b16 %v3904
  %v4303 = vunpack.c.l.b16 %v3905
  %v4304 = vunpack.c.h.b16 %v3905
  %v4305 = vunpack.c.l.b16 %v3906
  %v4306 = vunpack.c.h.b16 %v3906
  %v4307 = vunpack.c.l.b16 %v3907
  %v4308 = vunpack.c.h.b16 %v3907
  %v4309 = vunpack.c.l.b16 %v3908
  %v4310 = vunpack.c.h.b16 %v3908
  %v4311 = vunpack.c.l.b16 %v3909
  %v4312 = vunpack.c.h.b16 %v3909
  %v4313 = vunpack.c.l.b16 %v3910
  %v4314 = vunpack.c.h.b16 %v3910
  %v4315 = vpack.c.b16 %v4255, %v4251
  %v4316 = vpack.c.b16 %v4256, %v4252
  %v4317 = vpack.c.b16 %v4257, %v4253
  %v4318 = vpack.c.b16 %v4258, %v4254
  %v4319 = vpack.c.b16 %v4263, %v4259
  %v4320 = vpack.c.b16 %v4264, %v4260
  %v4321 = vpack.c.b16 %v4265, %v4261
  %v4322 = vpack.c.b16 %v4266, %v4262
  %v4323 = vpack.c.b16 %v4271, %v4267
  %v4324 = vpack.c.b16 %v4272, %v4268
  %v4325 = vpack.c.b16 %v4273, %v4269
  %v4326 = vpack.c.b16 %v4274, %v4270
  %v4327 = vpack.c.b16 %v4279, %v4275
  %v4328 = vpack.c.b16 %v4280, %v4276
  %v4329 = vpack.c.b16 %v4281, %v4277
  %v4330 = vpack.c.b16 %v4282, %v4278
  %v4331 = vpack.c.b16 %v4287, %v4283
  %v4332 = vpack.c.b16 %v4288, %v4284
  %v4333 = vpack.c.b16 %v4289, %v4285
  %v4334 = vpack.c.b16 %v4290, %v4286
  %v4335 = vpack.c.b16 %v4295, %v4291
  %v4336 = vpack.c.b16 %v4296, %v4292
  %v4337 = vpack.c.b16 %v4297, %v4293
  %v4338 = vpack.c.b16 %v4298, %v4294
  %v4339 = vpack.c.b16 %v4303, %v4299
  %v4340 = vpack.c.b16 %v4304, %v4300
  %v4341 = vpack.c.b16 %v4305, %v4301
  %v4342 = vpack.c.b16 %v4306, %v4302
  %v4343 = vpack.c.b16 %v4311, %v4307
  %v4344 = vpack.c.b16 %v4312, %v4308
  %v4345 = vpack.c.b16 %v4313, %v4309
  %v4346 = vpack.c.b16 %v4314, %v4310
  %4379 = vmatpush.bf16.msra.mxu0 %v4343
  %4380 = vmatpush.bf16.msra.mxu0 %v4339
  %4381 = vmatpush.bf16.msra.mxu0 %v4335
  %4382 = vmatpush.bf16.msra.mxu0 %v4331
  %4383 = vmatpush.bf16.msra.mxu0 %v4327
  %4384 = vmatpush.bf16.msra.mxu0 %v4323
  %4385 = vmatpush.bf16.msra.mxu0 %v4319
  %4386 = vmatpush.bf16.msra.mxu0 %v4315
  %4387 = vmatmul.bf16.gmra.mxu0 %v3173
  %v4388 = vpop.f32.mrf.mxu0
  %v4389 = vadd.f32 %v4113, %v4388
  %v4390 = vpop.f32.mrf.mxu0
  %v4391 = vadd.f32 %v4115, %v4390
  %4392 = vmatmul.bf16.gmra.mxu0 %v3174
  %v4393 = vpop.f32.mrf.mxu0
  %v4394 = vadd.f32 %v4118, %v4393
  %v4395 = vpop.f32.mrf.mxu0
  %v4396 = vadd.f32 %v4120, %v4395
  %4397 = vmatmul.bf16.gmra.mxu0 %v3175
  %v4398 = vpop.f32.mrf.mxu0
  %v4399 = vadd.f32 %v4123, %v4398
  %v4400 = vpop.f32.mrf.mxu0
  %v4401 = vadd.f32 %v4125, %v4400
  %4402 = vmatmul.bf16.gmra.mxu0 %v3176
  %v4403 = vpop.f32.mrf.mxu0
  %v4404 = vadd.f32 %v4128, %v4403
  %v4405 = vpop.f32.mrf.mxu0
  %v4406 = vadd.f32 %v4130, %v4405
  %4407 = vdwg.mxu0
  %4408 = vmatpush.bf16.msra.mxu0 %v4344
  %4409 = vmatpush.bf16.msra.mxu0 %v4340
  %4410 = vmatpush.bf16.msra.mxu0 %v4336
  %4411 = vmatpush.bf16.msra.mxu0 %v4332
  %4412 = vmatpush.bf16.msra.mxu0 %v4328
  %4413 = vmatpush.bf16.msra.mxu0 %v4324
  %4414 = vmatpush.bf16.msra.mxu0 %v4320
  %4415 = vmatpush.bf16.msra.mxu0 %v4316
  %4416 = vmatmul.bf16.gmra.mxu0 %v3173
  %v4417 = vpop.f32.mrf.mxu0
  %v4418 = vadd.f32 %v4142, %v4417
  %v4419 = vpop.f32.mrf.mxu0
  %v4420 = vadd.f32 %v4144, %v4419
  %4421 = vmatmul.bf16.gmra.mxu0 %v3174
  %v4422 = vpop.f32.mrf.mxu0
  %v4423 = vadd.f32 %v4147, %v4422
  %v4424 = vpop.f32.mrf.mxu0
  %v4425 = vadd.f32 %v4149, %v4424
  %4426 = vmatmul.bf16.gmra.mxu0 %v3175
  %v4427 = vpop.f32.mrf.mxu0
  %v4428 = vadd.f32 %v4152, %v4427
  %v4429 = vpop.f32.mrf.mxu0
  %v4430 = vadd.f32 %v4154, %v4429
  %4431 = vmatmul.bf16.gmra.mxu0 %v3176
  %v4432 = vpop.f32.mrf.mxu0
  %v4433 = vadd.f32 %v4157, %v4432
  %v4434 = vpop.f32.mrf.mxu0
  %v4435 = vadd.f32 %v4159, %v4434
  %4436 = vdwg.mxu0
  %4437 = vmatpush.bf16.msra.mxu0 %v4345
  %4438 = vmatpush.bf16.msra.mxu0 %v4341
  %4439 = vmatpush.bf16.msra.mxu0 %v4337
  %4440 = vmatpush.bf16.msra.mxu0 %v4333
  %4441 = vmatpush.bf16.msra.mxu0 %v4329
  %4442 = vmatpush.bf16.msra.mxu0 %v4325
  %4443 = vmatpush.bf16.msra.mxu0 %v4321
  %4444 = vmatpush.bf16.msra.mxu0 %v4317
  %4445 = vmatmul.bf16.gmra.mxu0 %v3173
  %v4446 = vpop.f32.mrf.mxu0
  %v4447 = vadd.f32 %v4171, %v4446
  %v4448 = vpop.f32.mrf.mxu0
  %v4449 = vadd.f32 %v4173, %v4448
  %4450 = vmatmul.bf16.gmra.mxu0 %v3174
  %v4451 = vpop.f32.mrf.mxu0
  %v4452 = vadd.f32 %v4176, %v4451
  %v4453 = vpop.f32.mrf.mxu0
  %v4454 = vadd.f32 %v4178, %v4453
  %4455 = vmatmul.bf16.gmra.mxu0 %v3175
  %v4456 = vpop.f32.mrf.mxu0
  %v4457 = vadd.f32 %v4181, %v4456
  %v4458 = vpop.f32.mrf.mxu0
  %v4459 = vadd.f32 %v4183, %v4458
  %4460 = vmatmul.bf16.gmra.mxu0 %v3176
  %v4461 = vpop.f32.mrf.mxu0
  %v4462 = vadd.f32 %v4186, %v4461
  %v4463 = vpop.f32.mrf.mxu0
  %v4464 = vadd.f32 %v4188, %v4463
  %4465 = vdwg.mxu0
  %4466 = vmatpush.bf16.msra.mxu0 %v4346
  %4467 = vmatpush.bf16.msra.mxu0 %v4342
  %4468 = vmatpush.bf16.msra.mxu0 %v4338
  %4469 = vmatpush.bf16.msra.mxu0 %v4334
  %4470 = vmatpush.bf16.msra.mxu0 %v4330
  %4471 = vmatpush.bf16.msra.mxu0 %v4326
  %4472 = vmatpush.bf16.msra.mxu0 %v4322
  %4473 = vmatpush.bf16.msra.mxu0 %v4318
  %4474 = vmatmul.bf16.gmra.mxu0 %v3173
  %v4475 = vpop.f32.mrf.mxu0
  %v4476 = vadd.f32 %v4200, %v4475
  %v4477 = vpop.f32.mrf.mxu0
  %v4478 = vadd.f32 %v4202, %v4477
  %4479 = vmatmul.bf16.gmra.mxu0 %v3174
  %v4480 = vpop.f32.mrf.mxu0
  %v4481 = vadd.f32 %v4205, %v4480
  %v4482 = vpop.f32.mrf.mxu0
  %v4483 = vadd.f32 %v4207, %v4482
  %4484 = vmatmul.bf16.gmra.mxu0 %v3175
  %v4485 = vpop.f32.mrf.mxu0
  %v4486 = vadd.f32 %v4210, %v4485
  %v4487 = vpop.f32.mrf.mxu0
  %v4488 = vadd.f32 %v4212, %v4487
  %4489 = vmatmul.bf16.gmra.mxu0 %v3176
  %v4490 = vpop.f32.mrf.mxu0
  %v4491 = vadd.f32 %v4215, %v4490
  %v4492 = vpop.f32.mrf.mxu0
  %v4493 = vadd.f32 %v4217, %v4492
  %4494 = vdwg.mxu0
  %v4495 = vld [vmem:[%s12] sm:$0xf]
  %v4497 = vperm.slane %v4495, 0
  %v4498 = vperm.slane %v4495, 1
  %v4499 = vperm.slane %v4495, 2
  %v4500 = vperm.slane %v4495, 3
  %v4505 = vadd.f32 %v4389, %v4497
  %v4506 = vadd.f32 %v4418, %v4498
  %v4507 = vadd.f32 %v4447, %v4499
  %v4508 = vadd.f32 %v4476, %v4500
  %v4509 = vadd.f32 %v4391, %v4497
  %v4510 = vadd.f32 %v4420, %v4498
  %v4511 = vadd.f32 %v4449, %v4499
  %v4512 = vadd.f32 %v4478, %v4500
  %v4513 = vadd.f32 %v4394, %v4497
  %v4514 = vadd.f32 %v4423, %v4498
  %v4515 = vadd.f32 %v4452, %v4499
  %v4516 = vadd.f32 %v4481, %v4500
  %v4517 = vadd.f32 %v4396, %v4497
  %v4518 = vadd.f32 %v4425, %v4498
  %v4519 = vadd.f32 %v4454, %v4499
  %v4520 = vadd.f32 %v4483, %v4500
  %v4521 = vadd.f32 %v4399, %v4497
  %v4522 = vadd.f32 %v4428, %v4498
  %v4523 = vadd.f32 %v4457, %v4499
  %v4524 = vadd.f32 %v4486, %v4500
  %v4525 = vadd.f32 %v4401, %v4497
  %v4526 = vadd.f32 %v4430, %v4498
  %v4527 = vadd.f32 %v4459, %v4499
  %v4528 = vadd.f32 %v4488, %v4500
  %v4529 = vadd.f32 %v4404, %v4497
  %v4530 = vadd.f32 %v4433, %v4498
  %v4531 = vadd.f32 %v4462, %v4499
  %v4532 = vadd.f32 %v4491, %v4500
  %v4533 = vadd.f32 %v4406, %v4497
  %v4534 = vadd.f32 %v4435, %v4498
  %v4535 = vadd.f32 %v4464, %v4499
  %v4536 = vadd.f32 %v4493, %v4500
  %4537 = vst [vmem:[#allocation5] sm:$0xff] %v4505
  %4538 = vst [vmem:[#allocation5 + $0x8] sm:$0xff] %v4506
  %4539 = vst [vmem:[#allocation5 + $0x10] sm:$0xff] %v4507
  %4540 = vst [vmem:[#allocation5 + $0x18] sm:$0xff] %v4508
  %4541 = vst [vmem:[#allocation5 + $0x20] sm:$0xff] %v4509
  %4542 = vst [vmem:[#allocation5 + $0x28] sm:$0xff] %v4510
  %4543 = vst [vmem:[#allocation5 + $0x30] sm:$0xff] %v4511
  %4544 = vst [vmem:[#allocation5 + $0x38] sm:$0xff] %v4512
  %4545 = vst [vmem:[#allocation5 + $0x40] sm:$0xff] %v4513
  %4546 = vst [vmem:[#allocation5 + $0x48] sm:$0xff] %v4514
  %4547 = vst [vmem:[#allocation5 + $0x50] sm:$0xff] %v4515
  %4548 = vst [vmem:[#allocation5 + $0x58] sm:$0xff] %v4516
  %4549 = vst [vmem:[#allocation5 + $0x60] sm:$0xff] %v4517
  %4550 = vst [vmem:[#allocation5 + $0x68] sm:$0xff] %v4518
  %4551 = vst [vmem:[#allocation5 + $0x70] sm:$0xff] %v4519
  %4552 = vst [vmem:[#allocation5 + $0x78] sm:$0xff] %v4520
  %4553 = vst [vmem:[#allocation5 + $0x80] sm:$0xff] %v4521
  %4554 = vst [vmem:[#allocation5 + $0x88] sm:$0xff] %v4522
  %4555 = vst [vmem:[#allocation5 + $0x90] sm:$0xff] %v4523
  %4556 = vst [vmem:[#allocation5 + $0x98] sm:$0xff] %v4524
  %4557 = vst [vmem:[#allocation5 + $0xa0] sm:$0xff] %v4525
  %4558 = vst [vmem:[#allocation5 + $0xa8] sm:$0xff] %v4526
  %4559 = vst [vmem:[#allocation5 + $0xb0] sm:$0xff] %v4527
  %4560 = vst [vmem:[#allocation5 + $0xb8] sm:$0xff] %v4528
  %4561 = vst [vmem:[#allocation5 + $0xc0] sm:$0xff] %v4529
  %4562 = vst [vmem:[#allocation5 + $0xc8] sm:$0xff] %v4530
  %4563 = vst [vmem:[#allocation5 + $0xd0] sm:$0xff] %v4531
  %4564 = vst [vmem:[#allocation5 + $0xd8] sm:$0xff] %v4532
  %4565 = vst [vmem:[#allocation5 + $0xe0] sm:$0xff] %v4533
  %4566 = vst [vmem:[#allocation5 + $0xe8] sm:$0xff] %v4534
  %4567 = vst [vmem:[#allocation5 + $0xf0] sm:$0xff] %v4535
  %4568 = vst [vmem:[#allocation5 + $0xf8] sm:$0xff] %v4536
  %v4569 = vld [vmem:[%s8] sm:$0xff]
  %v4570 = vld [vmem:[%s8 + $0x8] sm:$0xff]
  %v4571 = vld [vmem:[%s8 + $0x10] sm:$0xff]
  %v4572 = vld [vmem:[%s8 + $0x18] sm:$0xff]
  %v4573 = vld [vmem:[%s8 + $0x20] sm:$0xff]
  %v4574 = vld [vmem:[%s8 + $0x28] sm:$0xff]
  %v4575 = vld [vmem:[%s8 + $0x30] sm:$0xff]
  %v4576 = vld [vmem:[%s8 + $0x38] sm:$0xff]
  %v4577 = vld [vmem:[%s8 + $0x40] sm:$0xff]
  %v4578 = vld [vmem:[%s8 + $0x48] sm:$0xff]
  %v4579 = vld [vmem:[%s8 + $0x50] sm:$0xff]
  %v4580 = vld [vmem:[%s8 + $0x58] sm:$0xff]
  %v4581 = vld [vmem:[%s8 + $0x60] sm:$0xff]
  %v4582 = vld [vmem:[%s8 + $0x68] sm:$0xff]
  %v4583 = vld [vmem:[%s8 + $0x70] sm:$0xff]
  %v4584 = vld [vmem:[%s8 + $0x78] sm:$0xff]
  %v4585 = vld [vmem:[%s8 + $0x80] sm:$0xff]
  %v4586 = vld [vmem:[%s8 + $0x88] sm:$0xff]
  %v4587 = vld [vmem:[%s8 + $0x90] sm:$0xff]
  %v4588 = vld [vmem:[%s8 + $0x98] sm:$0xff]
  %v4589 = vld [vmem:[%s8 + $0xa0] sm:$0xff]
  %v4590 = vld [vmem:[%s8 + $0xa8] sm:$0xff]
  %v4591 = vld [vmem:[%s8 + $0xb0] sm:$0xff]
  %v4592 = vld [vmem:[%s8 + $0xb8] sm:$0xff]
  %v4593 = vld [vmem:[%s8 + $0xc0] sm:$0xff]
  %v4594 = vld [vmem:[%s8 + $0xc8] sm:$0xff]
  %v4595 = vld [vmem:[%s8 + $0xd0] sm:$0xff]
  %v4596 = vld [vmem:[%s8 + $0xd8] sm:$0xff]
  %v4597 = vld [vmem:[%s8 + $0xe0] sm:$0xff]
  %v4598 = vld [vmem:[%s8 + $0xe8] sm:$0xff]
  %v4599 = vld [vmem:[%s8 + $0xf0] sm:$0xff]
  %v4600 = vld [vmem:[%s8 + $0xf8] sm:$0xff]
  %v4601 = vld [vmem:[%s11] sm:$0xff]
  %v4602 = vld [vmem:[%s11 + $0x8] sm:$0xff]
  %v4603 = vld [vmem:[%s11 + $0x10] sm:$0xff]
  %v4604 = vld [vmem:[%s11 + $0x18] sm:$0xff]
  %v4605 = vld [vmem:[%s11 + $0x20] sm:$0xff]
  %v4606 = vld [vmem:[%s11 + $0x28] sm:$0xff]
  %v4607 = vld [vmem:[%s11 + $0x30] sm:$0xff]
  %v4608 = vld [vmem:[%s11 + $0x38] sm:$0xff]
  %v4609 = vld [vmem:[%s11 + $0x40] sm:$0xff]
  %v4610 = vld [vmem:[%s11 + $0x48] sm:$0xff]
  %v4611 = vld [vmem:[%s11 + $0x50] sm:$0xff]
  %v4612 = vld [vmem:[%s11 + $0x58] sm:$0xff]
  %v4613 = vld [vmem:[%s11 + $0x60] sm:$0xff]
  %v4614 = vld [vmem:[%s11 + $0x68] sm:$0xff]
  %v4615 = vld [vmem:[%s11 + $0x70] sm:$0xff]
  %v4616 = vld [vmem:[%s11 + $0x78] sm:$0xff]
  %v4617 = vld [vmem:[%s11 + $0x80] sm:$0xff]
  %v4618 = vld [vmem:[%s11 + $0x88] sm:$0xff]
  %v4619 = vld [vmem:[%s11 + $0x90] sm:$0xff]
  %v4620 = vld [vmem:[%s11 + $0x98] sm:$0xff]
  %v4621 = vld [vmem:[%s11 + $0xa0] sm:$0xff]
  %v4622 = vld [vmem:[%s11 + $0xa8] sm:$0xff]
  %v4623 = vld [vmem:[%s11 + $0xb0] sm:$0xff]
  %v4624 = vld [vmem:[%s11 + $0xb8] sm:$0xff]
  %v4625 = vld [vmem:[%s11 + $0xc0] sm:$0xff]
  %v4626 = vld [vmem:[%s11 + $0xc8] sm:$0xff]
  %v4627 = vld [vmem:[%s11 + $0xd0] sm:$0xff]
  %v4628 = vld [vmem:[%s11 + $0xd8] sm:$0xff]
  %v4629 = vld [vmem:[%s11 + $0xe0] sm:$0xff]
  %v4630 = vld [vmem:[%s11 + $0xe8] sm:$0xff]
  %v4631 = vld [vmem:[%s11 + $0xf0] sm:$0xff]
  %v4632 = vld [vmem:[%s11 + $0xf8] sm:$0xff]
  %v4633 = vld [vmem:[#allocation4] sm:$0xff]
  %v4634 = vld [vmem:[#allocation4 + $0x8] sm:$0xff]
  %v4635 = vld [vmem:[#allocation4 + $0x10] sm:$0xff]
  %v4636 = vld [vmem:[#allocation4 + $0x18] sm:$0xff]
  %v4669 = vunpack.c.l.b16 %v4569
  %v4670 = vunpack.c.h.b16 %v4569
  %v4671 = vunpack.c.l.b16 %v4570
  %v4672 = vunpack.c.h.b16 %v4570
  %v4673 = vunpack.c.l.b16 %v4571
  %v4674 = vunpack.c.h.b16 %v4571
  %v4675 = vunpack.c.l.b16 %v4572
  %v4676 = vunpack.c.h.b16 %v4572
  %v4677 = vunpack.c.l.b16 %v4573
  %v4678 = vunpack.c.h.b16 %v4573
  %v4679 = vunpack.c.l.b16 %v4574
  %v4680 = vunpack.c.h.b16 %v4574
  %v4681 = vunpack.c.l.b16 %v4575
  %v4682 = vunpack.c.h.b16 %v4575
  %v4683 = vunpack.c.l.b16 %v4576
  %v4684 = vunpack.c.h.b16 %v4576
  %v4685 = vunpack.c.l.b16 %v4577
  %v4686 = vunpack.c.h.b16 %v4577
  %v4687 = vunpack.c.l.b16 %v4578
  %v4688 = vunpack.c.h.b16 %v4578
  %v4689 = vunpack.c.l.b16 %v4579
  %v4690 = vunpack.c.h.b16 %v4579
  %v4691 = vunpack.c.l.b16 %v4580
  %v4692 = vunpack.c.h.b16 %v4580
  %v4693 = vunpack.c.l.b16 %v4581
  %v4694 = vunpack.c.h.b16 %v4581
  %v4695 = vunpack.c.l.b16 %v4582
  %v4696 = vunpack.c.h.b16 %v4582
  %v4697 = vunpack.c.l.b16 %v4583
  %v4698 = vunpack.c.h.b16 %v4583
  %v4699 = vunpack.c.l.b16 %v4584
  %v4700 = vunpack.c.h.b16 %v4584
  %v4701 = vunpack.c.l.b16 %v4585
  %v4702 = vunpack.c.h.b16 %v4585
  %v4703 = vunpack.c.l.b16 %v4586
  %v4704 = vunpack.c.h.b16 %v4586
  %v4705 = vunpack.c.l.b16 %v4587
  %v4706 = vunpack.c.h.b16 %v4587
  %v4707 = vunpack.c.l.b16 %v4588
  %v4708 = vunpack.c.h.b16 %v4588
  %v4709 = vunpack.c.l.b16 %v4589
  %v4710 = vunpack.c.h.b16 %v4589
  %v4711 = vunpack.c.l.b16 %v4590
  %v4712 = vunpack.c.h.b16 %v4590
  %v4713 = vunpack.c.l.b16 %v4591
  %v4714 = vunpack.c.h.b16 %v4591
  %v4715 = vunpack.c.l.b16 %v4592
  %v4716 = vunpack.c.h.b16 %v4592
  %v4717 = vunpack.c.l.b16 %v4593
  %v4718 = vunpack.c.h.b16 %v4593
  %v4719 = vunpack.c.l.b16 %v4594
  %v4720 = vunpack.c.h.b16 %v4594
  %v4721 = vunpack.c.l.b16 %v4595
  %v4722 = vunpack.c.h.b16 %v4595
  %v4723 = vunpack.c.l.b16 %v4596
  %v4724 = vunpack.c.h.b16 %v4596
  %v4725 = vunpack.c.l.b16 %v4597
  %v4726 = vunpack.c.h.b16 %v4597
  %v4727 = vunpack.c.l.b16 %v4598
  %v4728 = vunpack.c.h.b16 %v4598
  %v4729 = vunpack.c.l.b16 %v4599
  %v4730 = vunpack.c.h.b16 %v4599
  %v4731 = vunpack.c.l.b16 %v4600
  %v4732 = vunpack.c.h.b16 %v4600
  %v4733 = vpack.c.b16 %v4673, %v4669
  %v4734 = vpack.c.b16 %v4674, %v4670
  %v4735 = vpack.c.b16 %v4675, %v4671
  %v4736 = vpack.c.b16 %v4676, %v4672
  %v4737 = vpack.c.b16 %v4681, %v4677
  %v4738 = vpack.c.b16 %v4682, %v4678
  %v4739 = vpack.c.b16 %v4683, %v4679
  %v4740 = vpack.c.b16 %v4684, %v4680
  %v4741 = vpack.c.b16 %v4689, %v4685
  %v4742 = vpack.c.b16 %v4690, %v4686
  %v4743 = vpack.c.b16 %v4691, %v4687
  %v4744 = vpack.c.b16 %v4692, %v4688
  %v4745 = vpack.c.b16 %v4697, %v4693
  %v4746 = vpack.c.b16 %v4698, %v4694
  %v4747 = vpack.c.b16 %v4699, %v4695
  %v4748 = vpack.c.b16 %v4700, %v4696
  %v4749 = vpack.c.b16 %v4705, %v4701
  %v4750 = vpack.c.b16 %v4706, %v4702
  %v4751 = vpack.c.b16 %v4707, %v4703
  %v4752 = vpack.c.b16 %v4708, %v4704
  %v4753 = vpack.c.b16 %v4713, %v4709
  %v4754 = vpack.c.b16 %v4714, %v4710
  %v4755 = vpack.c.b16 %v4715, %v4711
  %v4756 = vpack.c.b16 %v4716, %v4712
  %v4757 = vpack.c.b16 %v4721, %v4717
  %v4758 = vpack.c.b16 %v4722, %v4718
  %v4759 = vpack.c.b16 %v4723, %v4719
  %v4760 = vpack.c.b16 %v4724, %v4720
  %v4761 = vpack.c.b16 %v4729, %v4725
  %v4762 = vpack.c.b16 %v4730, %v4726
  %v4763 = vpack.c.b16 %v4731, %v4727
  %v4764 = vpack.c.b16 %v4732, %v4728
  %4797 = vmatpush.bf16.msra.mxu0 %v4761
  %4798 = vmatpush.bf16.msra.mxu0 %v4757
  %4799 = vmatpush.bf16.msra.mxu0 %v4753
  %4800 = vmatpush.bf16.msra.mxu0 %v4749
  %4801 = vmatpush.bf16.msra.mxu0 %v4745
  %4802 = vmatpush.bf16.msra.mxu0 %v4741
  %4803 = vmatpush.bf16.msra.mxu0 %v4737
  %4804 = vmatpush.bf16.msra.mxu0 %v4733
  %4805 = vmatmul.bf16.gmra.mxu0 0
  %v4806 = vpop.f32.mrf.mxu0
  %v4807 = vadd.f32 0.0, %v4806
  %v4808 = vpop.f32.mrf.mxu0
  %4809 = vdwg.mxu0
  %4810 = vmatpush.bf16.msra.mxu0 %v4762
  %4811 = vmatpush.bf16.msra.mxu0 %v4758
  %4812 = vmatpush.bf16.msra.mxu0 %v4754
  %4813 = vmatpush.bf16.msra.mxu0 %v4750
  %4814 = vmatpush.bf16.msra.mxu0 %v4746
  %4815 = vmatpush.bf16.msra.mxu0 %v4742
  %4816 = vmatpush.bf16.msra.mxu0 %v4738
  %4817 = vmatpush.bf16.msra.mxu0 %v4734
  %4818 = vmatmul.bf16.gmra.mxu0 0
  %v4819 = vpop.f32.mrf.mxu0
  %v4820 = vadd.f32 0.0, %v4819
  %v4821 = vpop.f32.mrf.mxu0
  %4822 = vdwg.mxu0
  %4823 = vmatpush.bf16.msra.mxu0 %v4763
  %4824 = vmatpush.bf16.msra.mxu0 %v4759
  %4825 = vmatpush.bf16.msra.mxu0 %v4755
  %4826 = vmatpush.bf16.msra.mxu0 %v4751
  %4827 = vmatpush.bf16.msra.mxu0 %v4747
  %4828 = vmatpush.bf16.msra.mxu0 %v4743
  %4829 = vmatpush.bf16.msra.mxu0 %v4739
  %4830 = vmatpush.bf16.msra.mxu0 %v4735
  %4831 = vmatmul.bf16.gmra.mxu0 0
  %v4832 = vpop.f32.mrf.mxu0
  %v4833 = vadd.f32 0.0, %v4832
  %v4834 = vpop.f32.mrf.mxu0
  %4835 = vdwg.mxu0
  %4836 = vmatpush.bf16.msra.mxu0 %v4764
  %4837 = vmatpush.bf16.msra.mxu0 %v4760
  %4838 = vmatpush.bf16.msra.mxu0 %v4756
  %4839 = vmatpush.bf16.msra.mxu0 %v4752
  %4840 = vmatpush.bf16.msra.mxu0 %v4748
  %4841 = vmatpush.bf16.msra.mxu0 %v4744
  %4842 = vmatpush.bf16.msra.mxu0 %v4740
  %4843 = vmatpush.bf16.msra.mxu0 %v4736
  %4844 = vmatmul.bf16.gmra.mxu0 0
  %v4845 = vpop.f32.mrf.mxu0
  %v4846 = vadd.f32 0.0, %v4845
  %v4847 = vpop.f32.mrf.mxu0
  %4848 = vdwg.mxu0
  %v4849 = vadd.f32 %v4633, %v4807
  %v4850 = vadd.f32 %v4634, %v4820
  %v4851 = vadd.f32 %v4635, %v4833
  %v4852 = vadd.f32 %v4636, %v4846
  %v4853 = vld [vmem:[#allocation5 + $0xe0] sm:$0xff]
  %v4854 = vld [vmem:[#allocation5 + $0xe8] sm:$0xff]
  %v4855 = vld [vmem:[#allocation5 + $0xf0] sm:$0xff]
  %v4856 = vld [vmem:[#allocation5 + $0xf8] sm:$0xff]
  %v4889 = vunpack.c.l.b16 %v4601
  %v4890 = vunpack.c.h.b16 %v4601
  %v4891 = vunpack.c.l.b16 %v4602
  %v4892 = vunpack.c.h.b16 %v4602
  %v4893 = vunpack.c.l.b16 %v4603
  %v4894 = vunpack.c.h.b16 %v4603
  %v4895 = vunpack.c.l.b16 %v4604
  %v4896 = vunpack.c.h.b16 %v4604
  %v4897 = vunpack.c.l.b16 %v4605
  %v4898 = vunpack.c.h.b16 %v4605
  %v4899 = vunpack.c.l.b16 %v4606
  %v4900 = vunpack.c.h.b16 %v4606
  %v4901 = vunpack.c.l.b16 %v4607
  %v4902 = vunpack.c.h.b16 %v4607
  %v4903 = vunpack.c.l.b16 %v4608
  %v4904 = vunpack.c.h.b16 %v4608
  %v4905 = vunpack.c.l.b16 %v4609
  %v4906 = vunpack.c.h.b16 %v4609
  %v4907 = vunpack.c.l.b16 %v4610
  %v4908 = vunpack.c.h.b16 %v4610
  %v4909 = vunpack.c.l.b16 %v4611
  %v4910 = vunpack.c.h.b16 %v4611
  %v4911 = vunpack.c.l.b16 %v4612
  %v4912 = vunpack.c.h.b16 %v4612
  %v4913 = vunpack.c.l.b16 %v4613
  %v4914 = vunpack.c.h.b16 %v4613
  %v4915 = vunpack.c.l.b16 %v4614
  %v4916 = vunpack.c.h.b16 %v4614
  %v4917 = vunpack.c.l.b16 %v4615
  %v4918 = vunpack.c.h.b16 %v4615
  %v4919 = vunpack.c.l.b16 %v4616
  %v4920 = vunpack.c.h.b16 %v4616
  %v4921 = vunpack.c.l.b16 %v4617
  %v4922 = vunpack.c.h.b16 %v4617
  %v4923 = vunpack.c.l.b16 %v4618
  %v4924 = vunpack.c.h.b16 %v4618
  %v4925 = vunpack.c.l.b16 %v4619
  %v4926 = vunpack.c.h.b16 %v4619
  %v4927 = vunpack.c.l.b16 %v4620
  %v4928 = vunpack.c.h.b16 %v4620
  %v4929 = vunpack.c.l.b16 %v4621
  %v4930 = vunpack.c.h.b16 %v4621
  %v4931 = vunpack.c.l.b16 %v4622
  %v4932 = vunpack.c.h.b16 %v4622
  %v4933 = vunpack.c.l.b16 %v4623
  %v4934 = vunpack.c.h.b16 %v4623
  %v4935 = vunpack.c.l.b16 %v4624
  %v4936 = vunpack.c.h.b16 %v4624
  %v4937 = vunpack.c.l.b16 %v4625
  %v4938 = vunpack.c.h.b16 %v4625
  %v4939 = vunpack.c.l.b16 %v4626
  %v4940 = vunpack.c.h.b16 %v4626
  %v4941 = vunpack.c.l.b16 %v4627
  %v4942 = vunpack.c.h.b16 %v4627
  %v4943 = vunpack.c.l.b16 %v4628
  %v4944 = vunpack.c.h.b16 %v4628
  %v4945 = vunpack.c.l.b16 %v4629
  %v4946 = vunpack.c.h.b16 %v4629
  %v4947 = vunpack.c.l.b16 %v4630
  %v4948 = vunpack.c.h.b16 %v4630
  %v4949 = vunpack.c.l.b16 %v4631
  %v4950 = vunpack.c.h.b16 %v4631
  %v4951 = vunpack.c.l.b16 %v4632
  %v4952 = vunpack.c.h.b16 %v4632
  %v4953 = vpack.c.b16 %v4893, %v4889
  %v4954 = vpack.c.b16 %v4894, %v4890
  %v4955 = vpack.c.b16 %v4895, %v4891
  %v4956 = vpack.c.b16 %v4896, %v4892
  %v4957 = vpack.c.b16 %v4901, %v4897
  %v4958 = vpack.c.b16 %v4902, %v4898
  %v4959 = vpack.c.b16 %v4903, %v4899
  %v4960 = vpack.c.b16 %v4904, %v4900
  %v4961 = vpack.c.b16 %v4909, %v4905
  %v4962 = vpack.c.b16 %v4910, %v4906
  %v4963 = vpack.c.b16 %v4911, %v4907
  %v4964 = vpack.c.b16 %v4912, %v4908
  %v4965 = vpack.c.b16 %v4917, %v4913
  %v4966 = vpack.c.b16 %v4918, %v4914
  %v4967 = vpack.c.b16 %v4919, %v4915
  %v4968 = vpack.c.b16 %v4920, %v4916
  %v4969 = vpack.c.b16 %v4925, %v4921
  %v4970 = vpack.c.b16 %v4926, %v4922
  %v4971 = vpack.c.b16 %v4927, %v4923
  %v4972 = vpack.c.b16 %v4928, %v4924
  %v4973 = vpack.c.b16 %v4933, %v4929
  %v4974 = vpack.c.b16 %v4934, %v4930
  %v4975 = vpack.c.b16 %v4935, %v4931
  %v4976 = vpack.c.b16 %v4936, %v4932
  %v4977 = vpack.c.b16 %v4941, %v4937
  %v4978 = vpack.c.b16 %v4942, %v4938
  %v4979 = vpack.c.b16 %v4943, %v4939
  %v4980 = vpack.c.b16 %v4944, %v4940
  %v4981 = vpack.c.b16 %v4949, %v4945
  %v4982 = vpack.c.b16 %v4950, %v4946
  %v4983 = vpack.c.b16 %v4951, %v4947
  %v4984 = vpack.c.b16 %v4952, %v4948
  %5017 = vmatpush.bf16.msra.mxu0 %v4981
  %5018 = vmatpush.bf16.msra.mxu0 %v4977
  %5019 = vmatpush.bf16.msra.mxu0 %v4973
  %5020 = vmatpush.bf16.msra.mxu0 %v4969
  %5021 = vmatpush.bf16.msra.mxu0 %v4965
  %5022 = vmatpush.bf16.msra.mxu0 %v4961
  %5023 = vmatpush.bf16.msra.mxu0 %v4957
  %5024 = vmatpush.bf16.msra.mxu0 %v4953
  %5025 = vmatmul.bf16.gmra.mxu0 0
  %v5026 = vpop.f32.mrf.mxu0
  %v5027 = vadd.f32 0.0, %v5026
  %v5028 = vpop.f32.mrf.mxu0
  %5029 = vdwg.mxu0
  %5030 = vmatpush.bf16.msra.mxu0 %v4982
  %5031 = vmatpush.bf16.msra.mxu0 %v4978
  %5032 = vmatpush.bf16.msra.mxu0 %v4974
  %5033 = vmatpush.bf16.msra.mxu0 %v4970
  %5034 = vmatpush.bf16.msra.mxu0 %v4966
  %5035 = vmatpush.bf16.msra.mxu0 %v4962
  %5036 = vmatpush.bf16.msra.mxu0 %v4958
  %5037 = vmatpush.bf16.msra.mxu0 %v4954
  %5038 = vmatmul.bf16.gmra.mxu0 0
  %v5039 = vpop.f32.mrf.mxu0
  %v5040 = vadd.f32 0.0, %v5039
  %v5041 = vpop.f32.mrf.mxu0
  %5042 = vdwg.mxu0
  %5043 = vmatpush.bf16.msra.mxu0 %v4983
  %5044 = vmatpush.bf16.msra.mxu0 %v4979
  %5045 = vmatpush.bf16.msra.mxu0 %v4975
  %5046 = vmatpush.bf16.msra.mxu0 %v4971
  %5047 = vmatpush.bf16.msra.mxu0 %v4967
  %5048 = vmatpush.bf16.msra.mxu0 %v4963
  %5049 = vmatpush.bf16.msra.mxu0 %v4959
  %5050 = vmatpush.bf16.msra.mxu0 %v4955
  %5051 = vmatmul.bf16.gmra.mxu0 0
  %v5052 = vpop.f32.mrf.mxu0
  %v5053 = vadd.f32 0.0, %v5052
  %v5054 = vpop.f32.mrf.mxu0
  %5055 = vdwg.mxu0
  %5056 = vmatpush.bf16.msra.mxu0 %v4984
  %5057 = vmatpush.bf16.msra.mxu0 %v4980
  %5058 = vmatpush.bf16.msra.mxu0 %v4976
  %5059 = vmatpush.bf16.msra.mxu0 %v4972
  %5060 = vmatpush.bf16.msra.mxu0 %v4968
  %5061 = vmatpush.bf16.msra.mxu0 %v4964
  %5062 = vmatpush.bf16.msra.mxu0 %v4960
  %5063 = vmatpush.bf16.msra.mxu0 %v4956
  %5064 = vmatmul.bf16.gmra.mxu0 0
  %v5065 = vpop.f32.mrf.mxu0
  %v5066 = vadd.f32 0.0, %v5065
  %v5067 = vpop.f32.mrf.mxu0
  %5068 = vdwg.mxu0
  %v5069 = vadd.f32 %v4853, %v5027
  %v5070 = vadd.f32 %v4854, %v5040
  %v5071 = vadd.f32 %v4855, %v5053
  %v5072 = vadd.f32 %v4856, %v5066
  %v5073 = vxor.u32 %v4849, 2147483648
  %v5074 = vmul.f32 %v5073, 1.442695
  %v5075 = vpow.pop %v5074
  %v5076 = vadd.f32 %v5075, 1.0
  %v5077 = vrcp.pop %v5076
  %v5078 = vmul.f32 %v5076, %v5077
  %v5079 = vsub.f32 1.0, %v5078
  %v5080 = vmul.f32 %v5077, %v5079
  %v5081 = vadd.f32 %v5077, %v5080
  %vm5082 = vweird.f32 %v5076
  %vm5083 = vweird.f32 %v5077
  %vm5084 = vmor %vm5082, %vm5083
  %v5085 = vsel %vm5084, %v5077, %v5081
  %v5086 = vand.u32 2147483647, %v5076
  %vm5087 = vcmp.eq.f32.partialorder %v5086, 8.507059e+37
  %v5088 = vand.u32 %v5076, 2147483648
  %v5089 = vor.u32 1.1754944e-38, %v5088
  %v5090 = vsel %vm5087, %v5089, %v5085
  %v5091 = vmul.f32 1.0, %v5090
  %v5092 = vxor.u32 %v4850, 2147483648
  %v5093 = vmul.f32 %v5092, 1.442695
  %v5094 = vpow.pop %v5093
  %v5095 = vadd.f32 %v5094, 1.0
  %v5096 = vrcp.pop %v5095
  %v5097 = vmul.f32 %v5095, %v5096
  %v5098 = vsub.f32 1.0, %v5097
  %v5099 = vmul.f32 %v5096, %v5098
  %v5100 = vadd.f32 %v5096, %v5099
  %vm5101 = vweird.f32 %v5095
  %vm5102 = vweird.f32 %v5096
  %vm5103 = vmor %vm5101, %vm5102
  %v5104 = vsel %vm5103, %v5096, %v5100
  %v5105 = vand.u32 2147483647, %v5095
  %vm5106 = vcmp.eq.f32.partialorder %v5105, 8.507059e+37
  %v5107 = vand.u32 %v5095, 2147483648
  %v5108 = vor.u32 1.1754944e-38, %v5107
  %v5109 = vsel %vm5106, %v5108, %v5104
  %v5110 = vmul.f32 1.0, %v5109
  %v5111 = vtanh.pop %v4851
  %v5112 = vxor.u32 %v4852, 2147483648
  %v5113 = vmul.f32 %v5112, 1.442695
  %v5114 = vpow.pop %v5113
  %v5115 = vadd.f32 %v5114, 1.0
  %v5116 = vrcp.pop %v5115
  %v5117 = vmul.f32 %v5115, %v5116
  %v5118 = vsub.f32 1.0, %v5117
  %v5119 = vmul.f32 %v5116, %v5118
  %v5120 = vadd.f32 %v5116, %v5119
  %vm5121 = vweird.f32 %v5115
  %vm5122 = vweird.f32 %v5116
  %vm5123 = vmor %vm5121, %vm5122
  %v5124 = vsel %vm5123, %v5116, %v5120
  %v5125 = vand.u32 2147483647, %v5115
  %vm5126 = vcmp.eq.f32.partialorder %v5125, 8.507059e+37
  %v5127 = vand.u32 %v5115, 2147483648
  %v5128 = vor.u32 1.1754944e-38, %v5127
  %v5129 = vsel %vm5126, %v5128, %v5124
  %v5130 = vmul.f32 1.0, %v5129
  %v5131 = vmul.f32 %v5110, 0.0
  %v5132 = vmul.f32 %v5091, %v5111
  %v5133 = vadd.f32 %v5131, %v5132
  %v5134 = vtanh.pop %v5133
  %v5135 = vmul.f32 %v5130, %v5134
  %v5136 = vxor.u32 %v5069, 2147483648
  %v5137 = vmul.f32 %v5136, 1.442695
  %v5138 = vpow.pop %v5137
  %v5139 = vadd.f32 %v5138, 1.0
  %v5140 = vrcp.pop %v5139
  %v5141 = vmul.f32 %v5139, %v5140
  %v5142 = vsub.f32 1.0, %v5141
  %v5143 = vmul.f32 %v5140, %v5142
  %v5144 = vadd.f32 %v5140, %v5143
  %vm5145 = vweird.f32 %v5139
  %vm5146 = vweird.f32 %v5140
  %vm5147 = vmor %vm5145, %vm5146
  %v5148 = vsel %vm5147, %v5140, %v5144
  %v5149 = vand.u32 2147483647, %v5139
  %vm5150 = vcmp.eq.f32.partialorder %v5149, 8.507059e+37
  %v5151 = vand.u32 %v5139, 2147483648
  %v5152 = vor.u32 1.1754944e-38, %v5151
  %v5153 = vsel %vm5150, %v5152, %v5148
  %v5154 = vmul.f32 1.0, %v5153
  %v5155 = vxor.u32 %v5070, 2147483648
  %v5156 = vmul.f32 %v5155, 1.442695
  %v5157 = vpow.pop %v5156
  %v5158 = vadd.f32 %v5157, 1.0
  %v5159 = vrcp.pop %v5158
  %v5160 = vmul.f32 %v5158, %v5159
  %v5161 = vsub.f32 1.0, %v5160
  %v5162 = vmul.f32 %v5159, %v5161
  %v5163 = vadd.f32 %v5159, %v5162
  %vm5164 = vweird.f32 %v5158
  %vm5165 = vweird.f32 %v5159
  %vm5166 = vmor %vm5164, %vm5165
  %v5167 = vsel %vm5166, %v5159, %v5163
  %v5168 = vand.u32 2147483647, %v5158
  %vm5169 = vcmp.eq.f32.partialorder %v5168, 8.507059e+37
  %v5170 = vand.u32 %v5158, 2147483648
  %v5171 = vor.u32 1.1754944e-38, %v5170
  %v5172 = vsel %vm5169, %v5171, %v5167
  %v5173 = vmul.f32 1.0, %v5172
  %v5174 = vtanh.pop %v5071
  %v5175 = vxor.u32 %v5072, 2147483648
  %v5176 = vmul.f32 %v5175, 1.442695
  %v5177 = vpow.pop %v5176
  %v5178 = vadd.f32 %v5177, 1.0
  %v5179 = vrcp.pop %v5178
  %v5180 = vmul.f32 %v5178, %v5179
  %v5181 = vsub.f32 1.0, %v5180
  %v5182 = vmul.f32 %v5179, %v5181
  %v5183 = vadd.f32 %v5179, %v5182
  %vm5184 = vweird.f32 %v5178
  %vm5185 = vweird.f32 %v5179
  %vm5186 = vmor %vm5184, %vm5185
  %v5187 = vsel %vm5186, %v5179, %v5183
  %v5188 = vand.u32 2147483647, %v5178
  %vm5189 = vcmp.eq.f32.partialorder %v5188, 8.507059e+37
  %v5190 = vand.u32 %v5178, 2147483648
  %v5191 = vor.u32 1.1754944e-38, %v5190
  %v5192 = vsel %vm5189, %v5191, %v5187
  %v5193 = vmul.f32 1.0, %v5192
  %v5194 = vmul.f32 %v5173, 0.0
  %v5195 = vmul.f32 %v5154, %v5174
  %v5196 = vadd.f32 %v5194, %v5195
  %v5197 = vtanh.pop %v5196
  %v5198 = vmul.f32 %v5193, %v5197
  %5199 = vst [vmem:[#allocation2] sm:$0xff] %v5135
  %5200 = vst [vmem:[#allocation3 + $0x38] sm:$0xff] %v5198
  %v5201 = vld [vmem:[#allocation4 + $0x20] sm:$0xff]
  %v5202 = vld [vmem:[#allocation4 + $0x28] sm:$0xff]
  %v5203 = vld [vmem:[#allocation4 + $0x30] sm:$0xff]
  %v5204 = vld [vmem:[#allocation4 + $0x38] sm:$0xff]
  %v5205 = vpack.c.bf16 %v5135, %v5135
  %5206 = vmatpush.bf16.msra.mxu0 %v4761
  %5207 = vmatpush.bf16.msra.mxu0 %v4757
  %5208 = vmatpush.bf16.msra.mxu0 %v4753
  %5209 = vmatpush.bf16.msra.mxu0 %v4749
  %5210 = vmatpush.bf16.msra.mxu0 %v4745
  %5211 = vmatpush.bf16.msra.mxu0 %v4741
  %5212 = vmatpush.bf16.msra.mxu0 %v4737
  %5213 = vmatpush.bf16.msra.mxu0 %v4733
  %5214 = vmatmul.bf16.gmra.mxu0 %v5205
  %v5215 = vpop.f32.mrf.mxu0
  %v5216 = vadd.f32 0.0, %v5215
  %v5217 = vpop.f32.mrf.mxu0
  %5218 = vdwg.mxu0
  %5219 = vmatpush.bf16.msra.mxu0 %v4762
  %5220 = vmatpush.bf16.msra.mxu0 %v4758
  %5221 = vmatpush.bf16.msra.mxu0 %v4754
  %5222 = vmatpush.bf16.msra.mxu0 %v4750
  %5223 = vmatpush.bf16.msra.mxu0 %v4746
  %5224 = vmatpush.bf16.msra.mxu0 %v4742
  %5225 = vmatpush.bf16.msra.mxu0 %v4738
  %5226 = vmatpush.bf16.msra.mxu0 %v4734
  %5227 = vmatmul.bf16.gmra.mxu0 %v5205
  %v5228 = vpop.f32.mrf.mxu0
  %v5229 = vadd.f32 0.0, %v5228
  %v5230 = vpop.f32.mrf.mxu0
  %5231 = vdwg.mxu0
  %5232 = vmatpush.bf16.msra.mxu0 %v4763
  %5233 = vmatpush.bf16.msra.mxu0 %v4759
  %5234 = vmatpush.bf16.msra.mxu0 %v4755
  %5235 = vmatpush.bf16.msra.mxu0 %v4751
  %5236 = vmatpush.bf16.msra.mxu0 %v4747
  %5237 = vmatpush.bf16.msra.mxu0 %v4743
  %5238 = vmatpush.bf16.msra.mxu0 %v4739
  %5239 = vmatpush.bf16.msra.mxu0 %v4735
  %5240 = vmatmul.bf16.gmra.mxu0 %v5205
  %v5241 = vpop.f32.mrf.mxu0
  %v5242 = vadd.f32 0.0, %v5241
  %v5243 = vpop.f32.mrf.mxu0
  %5244 = vdwg.mxu0
  %5245 = vmatpush.bf16.msra.mxu0 %v4764
  %5246 = vmatpush.bf16.msra.mxu0 %v4760
  %5247 = vmatpush.bf16.msra.mxu0 %v4756
  %5248 = vmatpush.bf16.msra.mxu0 %v4752
  %5249 = vmatpush.bf16.msra.mxu0 %v4748
  %5250 = vmatpush.bf16.msra.mxu0 %v4744
  %5251 = vmatpush.bf16.msra.mxu0 %v4740
  %5252 = vmatpush.bf16.msra.mxu0 %v4736
  %5253 = vmatmul.bf16.gmra.mxu0 %v5205
  %v5254 = vpop.f32.mrf.mxu0
  %v5255 = vadd.f32 0.0, %v5254
  %v5256 = vpop.f32.mrf.mxu0
  %5257 = vdwg.mxu0
  %v5258 = vadd.f32 %v5201, %v5216
  %v5259 = vadd.f32 %v5202, %v5229
  %v5260 = vadd.f32 %v5203, %v5242
  %v5261 = vadd.f32 %v5204, %v5255
  %v5262 = vld [vmem:[#allocation5 + $0xc0] sm:$0xff]
  %v5263 = vld [vmem:[#allocation5 + $0xc8] sm:$0xff]
  %v5264 = vld [vmem:[#allocation5 + $0xd0] sm:$0xff]
  %v5265 = vld [vmem:[#allocation5 + $0xd8] sm:$0xff]
  %v5266 = vpack.c.bf16 %v5198, %v5198
  %5267 = vmatpush.bf16.msra.mxu0 %v4981
  %5268 = vmatpush.bf16.msra.mxu0 %v4977
  %5269 = vmatpush.bf16.msra.mxu0 %v4973
  %5270 = vmatpush.bf16.msra.mxu0 %v4969
  %5271 = vmatpush.bf16.msra.mxu0 %v4965
  %5272 = vmatpush.bf16.msra.mxu0 %v4961
  %5273 = vmatpush.bf16.msra.mxu0 %v4957
  %5274 = vmatpush.bf16.msra.mxu0 %v4953
  %5275 = vmatmul.bf16.gmra.mxu0 %v5266
  %v5276 = vpop.f32.mrf.mxu0
  %v5277 = vadd.f32 0.0, %v5276
  %v5278 = vpop.f32.mrf.mxu0
  %5279 = vdwg.mxu0
  %5280 = vmatpush.bf16.msra.mxu0 %v4982
  %5281 = vmatpush.bf16.msra.mxu0 %v4978
  %5282 = vmatpush.bf16.msra.mxu0 %v4974
  %5283 = vmatpush.bf16.msra.mxu0 %v4970
  %5284 = vmatpush.bf16.msra.mxu0 %v4966
  %5285 = vmatpush.bf16.msra.mxu0 %v4962
  %5286 = vmatpush.bf16.msra.mxu0 %v4958
  %5287 = vmatpush.bf16.msra.mxu0 %v4954
  %5288 = vmatmul.bf16.gmra.mxu0 %v5266
  %v5289 = vpop.f32.mrf.mxu0
  %v5290 = vadd.f32 0.0, %v5289
  %v5291 = vpop.f32.mrf.mxu0
  %5292 = vdwg.mxu0
  %5293 = vmatpush.bf16.msra.mxu0 %v4983
  %5294 = vmatpush.bf16.msra.mxu0 %v4979
  %5295 = vmatpush.bf16.msra.mxu0 %v4975
  %5296 = vmatpush.bf16.msra.mxu0 %v4971
  %5297 = vmatpush.bf16.msra.mxu0 %v4967
  %5298 = vmatpush.bf16.msra.mxu0 %v4963
  %5299 = vmatpush.bf16.msra.mxu0 %v4959
  %5300 = vmatpush.bf16.msra.mxu0 %v4955
  %5301 = vmatmul.bf16.gmra.mxu0 %v5266
  %v5302 = vpop.f32.mrf.mxu0
  %v5303 = vadd.f32 0.0, %v5302
  %v5304 = vpop.f32.mrf.mxu0
  %5305 = vdwg.mxu0
  %5306 = vmatpush.bf16.msra.mxu0 %v4984
  %5307 = vmatpush.bf16.msra.mxu0 %v4980
  %5308 = vmatpush.bf16.msra.mxu0 %v4976
  %5309 = vmatpush.bf16.msra.mxu0 %v4972
  %5310 = vmatpush.bf16.msra.mxu0 %v4968
  %5311 = vmatpush.bf16.msra.mxu0 %v4964
  %5312 = vmatpush.bf16.msra.mxu0 %v4960
  %5313 = vmatpush.bf16.msra.mxu0 %v4956
  %5314 = vmatmul.bf16.gmra.mxu0 %v5266
  %v5315 = vpop.f32.mrf.mxu0
  %v5316 = vadd.f32 0.0, %v5315
  %v5317 = vpop.f32.mrf.mxu0
  %5318 = vdwg.mxu0
  %v5319 = vadd.f32 %v5262, %v5277
  %v5320 = vadd.f32 %v5263, %v5290
  %v5321 = vadd.f32 %v5264, %v5303
  %v5322 = vadd.f32 %v5265, %v5316
  %v5323 = vxor.u32 %v5258, 2147483648
  %v5324 = vmul.f32 %v5323, 1.442695
  %v5325 = vpow.pop %v5324
  %v5326 = vadd.f32 %v5325, 1.0
  %v5327 = vrcp.pop %v5326
  %v5328 = vmul.f32 %v5326, %v5327
  %v5329 = vsub.f32 1.0, %v5328
  %v5330 = vmul.f32 %v5327, %v5329
  %v5331 = vadd.f32 %v5327, %v5330
  %vm5332 = vweird.f32 %v5326
  %vm5333 = vweird.f32 %v5327
  %vm5334 = vmor %vm5332, %vm5333
  %v5335 = vsel %vm5334, %v5327, %v5331
  %v5336 = vand.u32 2147483647, %v5326
  %vm5337 = vcmp.eq.f32.partialorder %v5336, 8.507059e+37
  %v5338 = vand.u32 %v5326, 2147483648
  %v5339 = vor.u32 1.1754944e-38, %v5338
  %v5340 = vsel %vm5337, %v5339, %v5335
  %v5341 = vmul.f32 1.0, %v5340
  %v5342 = vxor.u32 %v5259, 2147483648
  %v5343 = vmul.f32 %v5342, 1.442695
  %v5344 = vpow.pop %v5343
  %v5345 = vadd.f32 %v5344, 1.0
  %v5346 = vrcp.pop %v5345
  %v5347 = vmul.f32 %v5345, %v5346
  %v5348 = vsub.f32 1.0, %v5347
  %v5349 = vmul.f32 %v5346, %v5348
  %v5350 = vadd.f32 %v5346, %v5349
  %vm5351 = vweird.f32 %v5345
  %vm5352 = vweird.f32 %v5346
  %vm5353 = vmor %vm5351, %vm5352
  %v5354 = vsel %vm5353, %v5346, %v5350
  %v5355 = vand.u32 2147483647, %v5345
  %vm5356 = vcmp.eq.f32.partialorder %v5355, 8.507059e+37
  %v5357 = vand.u32 %v5345, 2147483648
  %v5358 = vor.u32 1.1754944e-38, %v5357
  %v5359 = vsel %vm5356, %v5358, %v5354
  %v5360 = vmul.f32 1.0, %v5359
  %v5361 = vtanh.pop %v5260
  %v5362 = vxor.u32 %v5261, 2147483648
  %v5363 = vmul.f32 %v5362, 1.442695
  %v5364 = vpow.pop %v5363
  %v5365 = vadd.f32 %v5364, 1.0
  %v5366 = vrcp.pop %v5365
  %v5367 = vmul.f32 %v5365, %v5366
  %v5368 = vsub.f32 1.0, %v5367
  %v5369 = vmul.f32 %v5366, %v5368
  %v5370 = vadd.f32 %v5366, %v5369
  %vm5371 = vweird.f32 %v5365
  %vm5372 = vweird.f32 %v5366
  %vm5373 = vmor %vm5371, %vm5372
  %v5374 = vsel %vm5373, %v5366, %v5370
  %v5375 = vand.u32 2147483647, %v5365
  %vm5376 = vcmp.eq.f32.partialorder %v5375, 8.507059e+37
  %v5377 = vand.u32 %v5365, 2147483648
  %v5378 = vor.u32 1.1754944e-38, %v5377
  %v5379 = vsel %vm5376, %v5378, %v5374
  %v5380 = vmul.f32 1.0, %v5379
  %v5381 = vmul.f32 %v5360, %v5133
  %v5382 = vmul.f32 %v5341, %v5361
  %v5383 = vadd.f32 %v5381, %v5382
  %v5384 = vtanh.pop %v5383
  %v5385 = vmul.f32 %v5380, %v5384
  %v5386 = vxor.u32 %v5319, 2147483648
  %v5387 = vmul.f32 %v5386, 1.442695
  %v5388 = vpow.pop %v5387
  %v5389 = vadd.f32 %v5388, 1.0
  %v5390 = vrcp.pop %v5389
  %v5391 = vmul.f32 %v5389, %v5390
  %v5392 = vsub.f32 1.0, %v5391
  %v5393 = vmul.f32 %v5390, %v5392
  %v5394 = vadd.f32 %v5390, %v5393
  %vm5395 = vweird.f32 %v5389
  %vm5396 = vweird.f32 %v5390
  %vm5397 = vmor %vm5395, %vm5396
  %v5398 = vsel %vm5397, %v5390, %v5394
  %v5399 = vand.u32 2147483647, %v5389
  %vm5400 = vcmp.eq.f32.partialorder %v5399, 8.507059e+37
  %v5401 = vand.u32 %v5389, 2147483648
  %v5402 = vor.u32 1.1754944e-38, %v5401
  %v5403 = vsel %vm5400, %v5402, %v5398
  %v5404 = vmul.f32 1.0, %v5403
  %v5405 = vxor.u32 %v5320, 2147483648
  %v5406 = vmul.f32 %v5405, 1.442695
  %v5407 = vpow.pop %v5406
  %v5408 = vadd.f32 %v5407, 1.0
  %v5409 = vrcp.pop %v5408
  %v5410 = vmul.f32 %v5408, %v5409
  %v5411 = vsub.f32 1.0, %v5410
  %v5412 = vmul.f32 %v5409, %v5411
  %v5413 = vadd.f32 %v5409, %v5412
  %vm5414 = vweird.f32 %v5408
  %vm5415 = vweird.f32 %v5409
  %vm5416 = vmor %vm5414, %vm5415
  %v5417 = vsel %vm5416, %v5409, %v5413
  %v5418 = vand.u32 2147483647, %v5408
  %vm5419 = vcmp.eq.f32.partialorder %v5418, 8.507059e+37
  %v5420 = vand.u32 %v5408, 2147483648
  %v5421 = vor.u32 1.1754944e-38, %v5420
  %v5422 = vsel %vm5419, %v5421, %v5417
  %v5423 = vmul.f32 1.0, %v5422
  %v5424 = vtanh.pop %v5321
  %v5425 = vxor.u32 %v5322, 2147483648
  %v5426 = vmul.f32 %v5425, 1.442695
  %v5427 = vpow.pop %v5426
  %v5428 = vadd.f32 %v5427, 1.0
  %v5429 = vrcp.pop %v5428
  %v5430 = vmul.f32 %v5428, %v5429
  %v5431 = vsub.f32 1.0, %v5430
  %v5432 = vmul.f32 %v5429, %v5431
  %v5433 = vadd.f32 %v5429, %v5432
  %vm5434 = vweird.f32 %v5428
  %vm5435 = vweird.f32 %v5429
  %vm5436 = vmor %vm5434, %vm5435
  %v5437 = vsel %vm5436, %v5429, %v5433
  %v5438 = vand.u32 2147483647, %v5428
  %vm5439 = vcmp.eq.f32.partialorder %v5438, 8.507059e+37
  %v5440 = vand.u32 %v5428, 2147483648
  %v5441 = vor.u32 1.1754944e-38, %v5440
  %v5442 = vsel %vm5439, %v5441, %v5437
  %v5443 = vmul.f32 1.0, %v5442
  %v5444 = vmul.f32 %v5423, %v5196
  %v5445 = vmul.f32 %v5404, %v5424
  %v5446 = vadd.f32 %v5444, %v5445
  %v5447 = vtanh.pop %v5446
  %v5448 = vmul.f32 %v5443, %v5447
  %5449 = vst [vmem:[#allocation2 + $0x8] sm:$0xff] %v5385
  %5450 = vst [vmem:[#allocation3 + $0x30] sm:$0xff] %v5448
  %v5451 = vld [vmem:[#allocation4 + $0x40] sm:$0xff]
  %v5452 = vld [vmem:[#allocation4 + $0x48] sm:$0xff]
  %v5453 = vld [vmem:[#allocation4 + $0x50] sm:$0xff]
  %v5454 = vld [vmem:[#allocation4 + $0x58] sm:$0xff]
  %v5455 = vpack.c.bf16 %v5385, %v5385
  %5456 = vmatpush.bf16.msra.mxu0 %v4761
  %5457 = vmatpush.bf16.msra.mxu0 %v4757
  %5458 = vmatpush.bf16.msra.mxu0 %v4753
  %5459 = vmatpush.bf16.msra.mxu0 %v4749
  %5460 = vmatpush.bf16.msra.mxu0 %v4745
  %5461 = vmatpush.bf16.msra.mxu0 %v4741
  %5462 = vmatpush.bf16.msra.mxu0 %v4737
  %5463 = vmatpush.bf16.msra.mxu0 %v4733
  %5464 = vmatmul.bf16.gmra.mxu0 %v5455
  %v5465 = vpop.f32.mrf.mxu0
  %v5466 = vadd.f32 0.0, %v5465
  %v5467 = vpop.f32.mrf.mxu0
  %5468 = vdwg.mxu0
  %5469 = vmatpush.bf16.msra.mxu0 %v4762
  %5470 = vmatpush.bf16.msra.mxu0 %v4758
  %5471 = vmatpush.bf16.msra.mxu0 %v4754
  %5472 = vmatpush.bf16.msra.mxu0 %v4750
  %5473 = vmatpush.bf16.msra.mxu0 %v4746
  %5474 = vmatpush.bf16.msra.mxu0 %v4742
  %5475 = vmatpush.bf16.msra.mxu0 %v4738
  %5476 = vmatpush.bf16.msra.mxu0 %v4734
  %5477 = vmatmul.bf16.gmra.mxu0 %v5455
  %v5478 = vpop.f32.mrf.mxu0
  %v5479 = vadd.f32 0.0, %v5478
  %v5480 = vpop.f32.mrf.mxu0
  %5481 = vdwg.mxu0
  %5482 = vmatpush.bf16.msra.mxu0 %v4763
  %5483 = vmatpush.bf16.msra.mxu0 %v4759
  %5484 = vmatpush.bf16.msra.mxu0 %v4755
  %5485 = vmatpush.bf16.msra.mxu0 %v4751
  %5486 = vmatpush.bf16.msra.mxu0 %v4747
  %5487 = vmatpush.bf16.msra.mxu0 %v4743
  %5488 = vmatpush.bf16.msra.mxu0 %v4739
  %5489 = vmatpush.bf16.msra.mxu0 %v4735
  %5490 = vmatmul.bf16.gmra.mxu0 %v5455
  %v5491 = vpop.f32.mrf.mxu0
  %v5492 = vadd.f32 0.0, %v5491
  %v5493 = vpop.f32.mrf.mxu0
  %5494 = vdwg.mxu0
  %5495 = vmatpush.bf16.msra.mxu0 %v4764
  %5496 = vmatpush.bf16.msra.mxu0 %v4760
  %5497 = vmatpush.bf16.msra.mxu0 %v4756
  %5498 = vmatpush.bf16.msra.mxu0 %v4752
  %5499 = vmatpush.bf16.msra.mxu0 %v4748
  %5500 = vmatpush.bf16.msra.mxu0 %v4744
  %5501 = vmatpush.bf16.msra.mxu0 %v4740
  %5502 = vmatpush.bf16.msra.mxu0 %v4736
  %5503 = vmatmul.bf16.gmra.mxu0 %v5455
  %v5504 = vpop.f32.mrf.mxu0
  %v5505 = vadd.f32 0.0, %v5504
  %v5506 = vpop.f32.mrf.mxu0
  %5507 = vdwg.mxu0
  %v5508 = vadd.f32 %v5451, %v5466
  %v5509 = vadd.f32 %v5452, %v5479
  %v5510 = vadd.f32 %v5453, %v5492
  %v5511 = vadd.f32 %v5454, %v5505
  %v5512 = vld [vmem:[#allocation5 + $0xa0] sm:$0xff]
  %v5513 = vld [vmem:[#allocation5 + $0xa8] sm:$0xff]
  %v5514 = vld [vmem:[#allocation5 + $0xb0] sm:$0xff]
  %v5515 = vld [vmem:[#allocation5 + $0xb8] sm:$0xff]
  %v5516 = vpack.c.bf16 %v5448, %v5448
  %5517 = vmatpush.bf16.msra.mxu0 %v4981
  %5518 = vmatpush.bf16.msra.mxu0 %v4977
  %5519 = vmatpush.bf16.msra.mxu0 %v4973
  %5520 = vmatpush.bf16.msra.mxu0 %v4969
  %5521 = vmatpush.bf16.msra.mxu0 %v4965
  %5522 = vmatpush.bf16.msra.mxu0 %v4961
  %5523 = vmatpush.bf16.msra.mxu0 %v4957
  %5524 = vmatpush.bf16.msra.mxu0 %v4953
  %5525 = vmatmul.bf16.gmra.mxu0 %v5516
  %v5526 = vpop.f32.mrf.mxu0
  %v5527 = vadd.f32 0.0, %v5526
  %v5528 = vpop.f32.mrf.mxu0
  %5529 = vdwg.mxu0
  %5530 = vmatpush.bf16.msra.mxu0 %v4982
  %5531 = vmatpush.bf16.msra.mxu0 %v4978
  %5532 = vmatpush.bf16.msra.mxu0 %v4974
  %5533 = vmatpush.bf16.msra.mxu0 %v4970
  %5534 = vmatpush.bf16.msra.mxu0 %v4966
  %5535 = vmatpush.bf16.msra.mxu0 %v4962
  %5536 = vmatpush.bf16.msra.mxu0 %v4958
  %5537 = vmatpush.bf16.msra.mxu0 %v4954
  %5538 = vmatmul.bf16.gmra.mxu0 %v5516
  %v5539 = vpop.f32.mrf.mxu0
  %v5540 = vadd.f32 0.0, %v5539
  %v5541 = vpop.f32.mrf.mxu0
  %5542 = vdwg.mxu0
  %5543 = vmatpush.bf16.msra.mxu0 %v4983
  %5544 = vmatpush.bf16.msra.mxu0 %v4979
  %5545 = vmatpush.bf16.msra.mxu0 %v4975
  %5546 = vmatpush.bf16.msra.mxu0 %v4971
  %5547 = vmatpush.bf16.msra.mxu0 %v4967
  %5548 = vmatpush.bf16.msra.mxu0 %v4963
  %5549 = vmatpush.bf16.msra.mxu0 %v4959
  %5550 = vmatpush.bf16.msra.mxu0 %v4955
  %5551 = vmatmul.bf16.gmra.mxu0 %v5516
  %v5552 = vpop.f32.mrf.mxu0
  %v5553 = vadd.f32 0.0, %v5552
  %v5554 = vpop.f32.mrf.mxu0
  %5555 = vdwg.mxu0
  %5556 = vmatpush.bf16.msra.mxu0 %v4984
  %5557 = vmatpush.bf16.msra.mxu0 %v4980
  %5558 = vmatpush.bf16.msra.mxu0 %v4976
  %5559 = vmatpush.bf16.msra.mxu0 %v4972
  %5560 = vmatpush.bf16.msra.mxu0 %v4968
  %5561 = vmatpush.bf16.msra.mxu0 %v4964
  %5562 = vmatpush.bf16.msra.mxu0 %v4960
  %5563 = vmatpush.bf16.msra.mxu0 %v4956
  %5564 = vmatmul.bf16.gmra.mxu0 %v5516
  %v5565 = vpop.f32.mrf.mxu0
  %v5566 = vadd.f32 0.0, %v5565
  %v5567 = vpop.f32.mrf.mxu0
  %5568 = vdwg.mxu0
  %v5569 = vadd.f32 %v5512, %v5527
  %v5570 = vadd.f32 %v5513, %v5540
  %v5571 = vadd.f32 %v5514, %v5553
  %v5572 = vadd.f32 %v5515, %v5566
  %v5573 = vxor.u32 %v5508, 2147483648
  %v5574 = vmul.f32 %v5573, 1.442695
  %v5575 = vpow.pop %v5574
  %v5576 = vadd.f32 %v5575, 1.0
  %v5577 = vrcp.pop %v5576
  %v5578 = vmul.f32 %v5576, %v5577
  %v5579 = vsub.f32 1.0, %v5578
  %v5580 = vmul.f32 %v5577, %v5579
  %v5581 = vadd.f32 %v5577, %v5580
  %vm5582 = vweird.f32 %v5576
  %vm5583 = vweird.f32 %v5577
  %vm5584 = vmor %vm5582, %vm5583
  %v5585 = vsel %vm5584, %v5577, %v5581
  %v5586 = vand.u32 2147483647, %v5576
  %vm5587 = vcmp.eq.f32.partialorder %v5586, 8.507059e+37
  %v5588 = vand.u32 %v5576, 2147483648
  %v5589 = vor.u32 1.1754944e-38, %v5588
  %v5590 = vsel %vm5587, %v5589, %v5585
  %v5591 = vmul.f32 1.0, %v5590
  %v5592 = vxor.u32 %v5509, 2147483648
  %v5593 = vmul.f32 %v5592, 1.442695
  %v5594 = vpow.pop %v5593
  %v5595 = vadd.f32 %v5594, 1.0
  %v5596 = vrcp.pop %v5595
  %v5597 = vmul.f32 %v5595, %v5596
  %v5598 = vsub.f32 1.0, %v5597
  %v5599 = vmul.f32 %v5596, %v5598
  %v5600 = vadd.f32 %v5596, %v5599
  %vm5601 = vweird.f32 %v5595
  %vm5602 = vweird.f32 %v5596
  %vm5603 = vmor %vm5601, %vm5602
  %v5604 = vsel %vm5603, %v5596, %v5600
  %v5605 = vand.u32 2147483647, %v5595
  %vm5606 = vcmp.eq.f32.partialorder %v5605, 8.507059e+37
  %v5607 = vand.u32 %v5595, 2147483648
  %v5608 = vor.u32 1.1754944e-38, %v5607
  %v5609 = vsel %vm5606, %v5608, %v5604
  %v5610 = vmul.f32 1.0, %v5609
  %v5611 = vtanh.pop %v5510
  %v5612 = vxor.u32 %v5511, 2147483648
  %v5613 = vmul.f32 %v5612, 1.442695
  %v5614 = vpow.pop %v5613
  %v5615 = vadd.f32 %v5614, 1.0
  %v5616 = vrcp.pop %v5615
  %v5617 = vmul.f32 %v5615, %v5616
  %v5618 = vsub.f32 1.0, %v5617
  %v5619 = vmul.f32 %v5616, %v5618
  %v5620 = vadd.f32 %v5616, %v5619
  %vm5621 = vweird.f32 %v5615
  %vm5622 = vweird.f32 %v5616
  %vm5623 = vmor %vm5621, %vm5622
  %v5624 = vsel %vm5623, %v5616, %v5620
  %v5625 = vand.u32 2147483647, %v5615
  %vm5626 = vcmp.eq.f32.partialorder %v5625, 8.507059e+37
  %v5627 = vand.u32 %v5615, 2147483648
  %v5628 = vor.u32 1.1754944e-38, %v5627
  %v5629 = vsel %vm5626, %v5628, %v5624
  %v5630 = vmul.f32 1.0, %v5629
  %v5631 = vmul.f32 %v5610, %v5383
  %v5632 = vmul.f32 %v5591, %v5611
  %v5633 = vadd.f32 %v5631, %v5632
  %v5634 = vtanh.pop %v5633
  %v5635 = vmul.f32 %v5630, %v5634
  %v5636 = vxor.u32 %v5569, 2147483648
  %v5637 = vmul.f32 %v5636, 1.442695
  %v5638 = vpow.pop %v5637
  %v5639 = vadd.f32 %v5638, 1.0
  %v5640 = vrcp.pop %v5639
  %v5641 = vmul.f32 %v5639, %v5640
  %v5642 = vsub.f32 1.0, %v5641
  %v5643 = vmul.f32 %v5640, %v5642
  %v5644 = vadd.f32 %v5640, %v5643
  %vm5645 = vweird.f32 %v5639
  %vm5646 = vweird.f32 %v5640
  %vm5647 = vmor %vm5645, %vm5646
  %v5648 = vsel %vm5647, %v5640, %v5644
  %v5649 = vand.u32 2147483647, %v5639
  %vm5650 = vcmp.eq.f32.partialorder %v5649, 8.507059e+37
  %v5651 = vand.u32 %v5639, 2147483648
  %v5652 = vor.u32 1.1754944e-38, %v5651
  %v5653 = vsel %vm5650, %v5652, %v5648
  %v5654 = vmul.f32 1.0, %v5653
  %v5655 = vxor.u32 %v5570, 2147483648
  %v5656 = vmul.f32 %v5655, 1.442695
  %v5657 = vpow.pop %v5656
  %v5658 = vadd.f32 %v5657, 1.0
  %v5659 = vrcp.pop %v5658
  %v5660 = vmul.f32 %v5658, %v5659
  %v5661 = vsub.f32 1.0, %v5660
  %v5662 = vmul.f32 %v5659, %v5661
  %v5663 = vadd.f32 %v5659, %v5662
  %vm5664 = vweird.f32 %v5658
  %vm5665 = vweird.f32 %v5659
  %vm5666 = vmor %vm5664, %vm5665
  %v5667 = vsel %vm5666, %v5659, %v5663
  %v5668 = vand.u32 2147483647, %v5658
  %vm5669 = vcmp.eq.f32.partialorder %v5668, 8.507059e+37
  %v5670 = vand.u32 %v5658, 2147483648
  %v5671 = vor.u32 1.1754944e-38, %v5670
  %v5672 = vsel %vm5669, %v5671, %v5667
  %v5673 = vmul.f32 1.0, %v5672
  %v5674 = vtanh.pop %v5571
  %v5675 = vxor.u32 %v5572, 2147483648
  %v5676 = vmul.f32 %v5675, 1.442695
  %v5677 = vpow.pop %v5676
  %v5678 = vadd.f32 %v5677, 1.0
  %v5679 = vrcp.pop %v5678
  %v5680 = vmul.f32 %v5678, %v5679
  %v5681 = vsub.f32 1.0, %v5680
  %v5682 = vmul.f32 %v5679, %v5681
  %v5683 = vadd.f32 %v5679, %v5682
  %vm5684 = vweird.f32 %v5678
  %vm5685 = vweird.f32 %v5679
  %vm5686 = vmor %vm5684, %vm5685
  %v5687 = vsel %vm5686, %v5679, %v5683
  %v5688 = vand.u32 2147483647, %v5678
  %vm5689 = vcmp.eq.f32.partialorder %v5688, 8.507059e+37
  %v5690 = vand.u32 %v5678, 2147483648
  %v5691 = vor.u32 1.1754944e-38, %v5690
  %v5692 = vsel %vm5689, %v5691, %v5687
  %v5693 = vmul.f32 1.0, %v5692
  %v5694 = vmul.f32 %v5673, %v5446
  %v5695 = vmul.f32 %v5654, %v5674
  %v5696 = vadd.f32 %v5694, %v5695
  %v5697 = vtanh.pop %v5696
  %v5698 = vmul.f32 %v5693, %v5697
  %5699 = vst [vmem:[#allocation2 + $0x10] sm:$0xff] %v5635
  %5700 = vst [vmem:[#allocation3 + $0x28] sm:$0xff] %v5698
  %v5701 = vld [vmem:[#allocation4 + $0x60] sm:$0xff]
  %v5702 = vld [vmem:[#allocation4 + $0x68] sm:$0xff]
  %v5703 = vld [vmem:[#allocation4 + $0x70] sm:$0xff]
  %v5704 = vld [vmem:[#allocation4 + $0x78] sm:$0xff]
  %v5705 = vpack.c.bf16 %v5635, %v5635
  %5706 = vmatpush.bf16.msra.mxu0 %v4761
  %5707 = vmatpush.bf16.msra.mxu0 %v4757
  %5708 = vmatpush.bf16.msra.mxu0 %v4753
  %5709 = vmatpush.bf16.msra.mxu0 %v4749
  %5710 = vmatpush.bf16.msra.mxu0 %v4745
  %5711 = vmatpush.bf16.msra.mxu0 %v4741
  %5712 = vmatpush.bf16.msra.mxu0 %v4737
  %5713 = vmatpush.bf16.msra.mxu0 %v4733
  %5714 = vmatmul.bf16.gmra.mxu0 %v5705
  %v5715 = vpop.f32.mrf.mxu0
  %v5716 = vadd.f32 0.0, %v5715
  %v5717 = vpop.f32.mrf.mxu0
  %5718 = vdwg.mxu0
  %5719 = vmatpush.bf16.msra.mxu0 %v4762
  %5720 = vmatpush.bf16.msra.mxu0 %v4758
  %5721 = vmatpush.bf16.msra.mxu0 %v4754
  %5722 = vmatpush.bf16.msra.mxu0 %v4750
  %5723 = vmatpush.bf16.msra.mxu0 %v4746
  %5724 = vmatpush.bf16.msra.mxu0 %v4742
  %5725 = vmatpush.bf16.msra.mxu0 %v4738
  %5726 = vmatpush.bf16.msra.mxu0 %v4734
  %5727 = vmatmul.bf16.gmra.mxu0 %v5705
  %v5728 = vpop.f32.mrf.mxu0
  %v5729 = vadd.f32 0.0, %v5728
  %v5730 = vpop.f32.mrf.mxu0
  %5731 = vdwg.mxu0
  %5732 = vmatpush.bf16.msra.mxu0 %v4763
  %5733 = vmatpush.bf16.msra.mxu0 %v4759
  %5734 = vmatpush.bf16.msra.mxu0 %v4755
  %5735 = vmatpush.bf16.msra.mxu0 %v4751
  %5736 = vmatpush.bf16.msra.mxu0 %v4747
  %5737 = vmatpush.bf16.msra.mxu0 %v4743
  %5738 = vmatpush.bf16.msra.mxu0 %v4739
  %5739 = vmatpush.bf16.msra.mxu0 %v4735
  %5740 = vmatmul.bf16.gmra.mxu0 %v5705
  %v5741 = vpop.f32.mrf.mxu0
  %v5742 = vadd.f32 0.0, %v5741
  %v5743 = vpop.f32.mrf.mxu0
  %5744 = vdwg.mxu0
  %5745 = vmatpush.bf16.msra.mxu0 %v4764
  %5746 = vmatpush.bf16.msra.mxu0 %v4760
  %5747 = vmatpush.bf16.msra.mxu0 %v4756
  %5748 = vmatpush.bf16.msra.mxu0 %v4752
  %5749 = vmatpush.bf16.msra.mxu0 %v4748
  %5750 = vmatpush.bf16.msra.mxu0 %v4744
  %5751 = vmatpush.bf16.msra.mxu0 %v4740
  %5752 = vmatpush.bf16.msra.mxu0 %v4736
  %5753 = vmatmul.bf16.gmra.mxu0 %v5705
  %v5754 = vpop.f32.mrf.mxu0
  %v5755 = vadd.f32 0.0, %v5754
  %v5756 = vpop.f32.mrf.mxu0
  %5757 = vdwg.mxu0
  %v5758 = vadd.f32 %v5701, %v5716
  %v5759 = vadd.f32 %v5702, %v5729
  %v5760 = vadd.f32 %v5703, %v5742
  %v5761 = vadd.f32 %v5704, %v5755
  %v5762 = vld [vmem:[#allocation5 + $0x80] sm:$0xff]
  %v5763 = vld [vmem:[#allocation5 + $0x88] sm:$0xff]
  %v5764 = vld [vmem:[#allocation5 + $0x90] sm:$0xff]
  %v5765 = vld [vmem:[#allocation5 + $0x98] sm:$0xff]
  %v5766 = vpack.c.bf16 %v5698, %v5698
  %5767 = vmatpush.bf16.msra.mxu0 %v4981
  %5768 = vmatpush.bf16.msra.mxu0 %v4977
  %5769 = vmatpush.bf16.msra.mxu0 %v4973
  %5770 = vmatpush.bf16.msra.mxu0 %v4969
  %5771 = vmatpush.bf16.msra.mxu0 %v4965
  %5772 = vmatpush.bf16.msra.mxu0 %v4961
  %5773 = vmatpush.bf16.msra.mxu0 %v4957
  %5774 = vmatpush.bf16.msra.mxu0 %v4953
  %5775 = vmatmul.bf16.gmra.mxu0 %v5766
  %v5776 = vpop.f32.mrf.mxu0
  %v5777 = vadd.f32 0.0, %v5776
  %v5778 = vpop.f32.mrf.mxu0
  %5779 = vdwg.mxu0
  %5780 = vmatpush.bf16.msra.mxu0 %v4982
  %5781 = vmatpush.bf16.msra.mxu0 %v4978
  %5782 = vmatpush.bf16.msra.mxu0 %v4974
  %5783 = vmatpush.bf16.msra.mxu0 %v4970
  %5784 = vmatpush.bf16.msra.mxu0 %v4966
  %5785 = vmatpush.bf16.msra.mxu0 %v4962
  %5786 = vmatpush.bf16.msra.mxu0 %v4958
  %5787 = vmatpush.bf16.msra.mxu0 %v4954
  %5788 = vmatmul.bf16.gmra.mxu0 %v5766
  %v5789 = vpop.f32.mrf.mxu0
  %v5790 = vadd.f32 0.0, %v5789
  %v5791 = vpop.f32.mrf.mxu0
  %5792 = vdwg.mxu0
  %5793 = vmatpush.bf16.msra.mxu0 %v4983
  %5794 = vmatpush.bf16.msra.mxu0 %v4979
  %5795 = vmatpush.bf16.msra.mxu0 %v4975
  %5796 = vmatpush.bf16.msra.mxu0 %v4971
  %5797 = vmatpush.bf16.msra.mxu0 %v4967
  %5798 = vmatpush.bf16.msra.mxu0 %v4963
  %5799 = vmatpush.bf16.msra.mxu0 %v4959
  %5800 = vmatpush.bf16.msra.mxu0 %v4955
  %5801 = vmatmul.bf16.gmra.mxu0 %v5766
  %v5802 = vpop.f32.mrf.mxu0
  %v5803 = vadd.f32 0.0, %v5802
  %v5804 = vpop.f32.mrf.mxu0
  %5805 = vdwg.mxu0
  %5806 = vmatpush.bf16.msra.mxu0 %v4984
  %5807 = vmatpush.bf16.msra.mxu0 %v4980
  %5808 = vmatpush.bf16.msra.mxu0 %v4976
  %5809 = vmatpush.bf16.msra.mxu0 %v4972
  %5810 = vmatpush.bf16.msra.mxu0 %v4968
  %5811 = vmatpush.bf16.msra.mxu0 %v4964
  %5812 = vmatpush.bf16.msra.mxu0 %v4960
  %5813 = vmatpush.bf16.msra.mxu0 %v4956
  %5814 = vmatmul.bf16.gmra.mxu0 %v5766
  %v5815 = vpop.f32.mrf.mxu0
  %v5816 = vadd.f32 0.0, %v5815
  %v5817 = vpop.f32.mrf.mxu0
  %5818 = vdwg.mxu0
  %v5819 = vadd.f32 %v5762, %v5777
  %v5820 = vadd.f32 %v5763, %v5790
  %v5821 = vadd.f32 %v5764, %v5803
  %v5822 = vadd.f32 %v5765, %v5816
  %v5823 = vxor.u32 %v5758, 2147483648
  %v5824 = vmul.f32 %v5823, 1.442695
  %v5825 = vpow.pop %v5824
  %v5826 = vadd.f32 %v5825, 1.0
  %v5827 = vrcp.pop %v5826
  %v5828 = vmul.f32 %v5826, %v5827
  %v5829 = vsub.f32 1.0, %v5828
  %v5830 = vmul.f32 %v5827, %v5829
  %v5831 = vadd.f32 %v5827, %v5830
  %vm5832 = vweird.f32 %v5826
  %vm5833 = vweird.f32 %v5827
  %vm5834 = vmor %vm5832, %vm5833
  %v5835 = vsel %vm5834, %v5827, %v5831
  %v5836 = vand.u32 2147483647, %v5826
  %vm5837 = vcmp.eq.f32.partialorder %v5836, 8.507059e+37
  %v5838 = vand.u32 %v5826, 2147483648
  %v5839 = vor.u32 1.1754944e-38, %v5838
  %v5840 = vsel %vm5837, %v5839, %v5835
  %v5841 = vmul.f32 1.0, %v5840
  %v5842 = vxor.u32 %v5759, 2147483648
  %v5843 = vmul.f32 %v5842, 1.442695
  %v5844 = vpow.pop %v5843
  %v5845 = vadd.f32 %v5844, 1.0
  %v5846 = vrcp.pop %v5845
  %v5847 = vmul.f32 %v5845, %v5846
  %v5848 = vsub.f32 1.0, %v5847
  %v5849 = vmul.f32 %v5846, %v5848
  %v5850 = vadd.f32 %v5846, %v5849
  %vm5851 = vweird.f32 %v5845
  %vm5852 = vweird.f32 %v5846
  %vm5853 = vmor %vm5851, %vm5852
  %v5854 = vsel %vm5853, %v5846, %v5850
  %v5855 = vand.u32 2147483647, %v5845
  %vm5856 = vcmp.eq.f32.partialorder %v5855, 8.507059e+37
  %v5857 = vand.u32 %v5845, 2147483648
  %v5858 = vor.u32 1.1754944e-38, %v5857
  %v5859 = vsel %vm5856, %v5858, %v5854
  %v5860 = vmul.f32 1.0, %v5859
  %v5861 = vtanh.pop %v5760
  %v5862 = vxor.u32 %v5761, 2147483648
  %v5863 = vmul.f32 %v5862, 1.442695
  %v5864 = vpow.pop %v5863
  %v5865 = vadd.f32 %v5864, 1.0
  %v5866 = vrcp.pop %v5865
  %v5867 = vmul.f32 %v5865, %v5866
  %v5868 = vsub.f32 1.0, %v5867
  %v5869 = vmul.f32 %v5866, %v5868
  %v5870 = vadd.f32 %v5866, %v5869
  %vm5871 = vweird.f32 %v5865
  %vm5872 = vweird.f32 %v5866
  %vm5873 = vmor %vm5871, %vm5872
  %v5874 = vsel %vm5873, %v5866, %v5870
  %v5875 = vand.u32 2147483647, %v5865
  %vm5876 = vcmp.eq.f32.partialorder %v5875, 8.507059e+37
  %v5877 = vand.u32 %v5865, 2147483648
  %v5878 = vor.u32 1.1754944e-38, %v5877
  %v5879 = vsel %vm5876, %v5878, %v5874
  %v5880 = vmul.f32 1.0, %v5879
  %v5881 = vmul.f32 %v5860, %v5633
  %v5882 = vmul.f32 %v5841, %v5861
  %v5883 = vadd.f32 %v5881, %v5882
  %v5884 = vtanh.pop %v5883
  %v5885 = vmul.f32 %v5880, %v5884
  %v5886 = vxor.u32 %v5819, 2147483648
  %v5887 = vmul.f32 %v5886, 1.442695
  %v5888 = vpow.pop %v5887
  %v5889 = vadd.f32 %v5888, 1.0
  %v5890 = vrcp.pop %v5889
  %v5891 = vmul.f32 %v5889, %v5890
  %v5892 = vsub.f32 1.0, %v5891
  %v5893 = vmul.f32 %v5890, %v5892
  %v5894 = vadd.f32 %v5890, %v5893
  %vm5895 = vweird.f32 %v5889
  %vm5896 = vweird.f32 %v5890
  %vm5897 = vmor %vm5895, %vm5896
  %v5898 = vsel %vm5897, %v5890, %v5894
  %v5899 = vand.u32 2147483647, %v5889
  %vm5900 = vcmp.eq.f32.partialorder %v5899, 8.507059e+37
  %v5901 = vand.u32 %v5889, 2147483648
  %v5902 = vor.u32 1.1754944e-38, %v5901
  %v5903 = vsel %vm5900, %v5902, %v5898
  %v5904 = vmul.f32 1.0, %v5903
  %v5905 = vxor.u32 %v5820, 2147483648
  %v5906 = vmul.f32 %v5905, 1.442695
  %v5907 = vpow.pop %v5906
  %v5908 = vadd.f32 %v5907, 1.0
  %v5909 = vrcp.pop %v5908
  %v5910 = vmul.f32 %v5908, %v5909
  %v5911 = vsub.f32 1.0, %v5910
  %v5912 = vmul.f32 %v5909, %v5911
  %v5913 = vadd.f32 %v5909, %v5912
  %vm5914 = vweird.f32 %v5908
  %vm5915 = vweird.f32 %v5909
  %vm5916 = vmor %vm5914, %vm5915
  %v5917 = vsel %vm5916, %v5909, %v5913
  %v5918 = vand.u32 2147483647, %v5908
  %vm5919 = vcmp.eq.f32.partialorder %v5918, 8.507059e+37
  %v5920 = vand.u32 %v5908, 2147483648
  %v5921 = vor.u32 1.1754944e-38, %v5920
  %v5922 = vsel %vm5919, %v5921, %v5917
  %v5923 = vmul.f32 1.0, %v5922
  %v5924 = vtanh.pop %v5821
  %v5925 = vxor.u32 %v5822, 2147483648
  %v5926 = vmul.f32 %v5925, 1.442695
  %v5927 = vpow.pop %v5926
  %v5928 = vadd.f32 %v5927, 1.0
  %v5929 = vrcp.pop %v5928
  %v5930 = vmul.f32 %v5928, %v5929
  %v5931 = vsub.f32 1.0, %v5930
  %v5932 = vmul.f32 %v5929, %v5931
  %v5933 = vadd.f32 %v5929, %v5932
  %vm5934 = vweird.f32 %v5928
  %vm5935 = vweird.f32 %v5929
  %vm5936 = vmor %vm5934, %vm5935
  %v5937 = vsel %vm5936, %v5929, %v5933
  %v5938 = vand.u32 2147483647, %v5928
  %vm5939 = vcmp.eq.f32.partialorder %v5938, 8.507059e+37
  %v5940 = vand.u32 %v5928, 2147483648
  %v5941 = vor.u32 1.1754944e-38, %v5940
  %v5942 = vsel %vm5939, %v5941, %v5937
  %v5943 = vmul.f32 1.0, %v5942
  %v5944 = vmul.f32 %v5923, %v5696
  %v5945 = vmul.f32 %v5904, %v5924
  %v5946 = vadd.f32 %v5944, %v5945
  %v5947 = vtanh.pop %v5946
  %v5948 = vmul.f32 %v5943, %v5947
  %5949 = vst [vmem:[#allocation2 + $0x18] sm:$0xff] %v5885
  %5950 = vst [vmem:[#allocation3 + $0x20] sm:$0xff] %v5948
  %v5951 = vld [vmem:[#allocation4 + $0x80] sm:$0xff]
  %v5952 = vld [vmem:[#allocation4 + $0x88] sm:$0xff]
  %v5953 = vld [vmem:[#allocation4 + $0x90] sm:$0xff]
  %v5954 = vld [vmem:[#allocation4 + $0x98] sm:$0xff]
  %v5955 = vpack.c.bf16 %v5885, %v5885
  %5956 = vmatpush.bf16.msra.mxu0 %v4761
  %5957 = vmatpush.bf16.msra.mxu0 %v4757
  %5958 = vmatpush.bf16.msra.mxu0 %v4753
  %5959 = vmatpush.bf16.msra.mxu0 %v4749
  %5960 = vmatpush.bf16.msra.mxu0 %v4745
  %5961 = vmatpush.bf16.msra.mxu0 %v4741
  %5962 = vmatpush.bf16.msra.mxu0 %v4737
  %5963 = vmatpush.bf16.msra.mxu0 %v4733
  %5964 = vmatmul.bf16.gmra.mxu0 %v5955
  %v5965 = vpop.f32.mrf.mxu0
  %v5966 = vadd.f32 0.0, %v5965
  %v5967 = vpop.f32.mrf.mxu0
  %5968 = vdwg.mxu0
  %5969 = vmatpush.bf16.msra.mxu0 %v4762
  %5970 = vmatpush.bf16.msra.mxu0 %v4758
  %5971 = vmatpush.bf16.msra.mxu0 %v4754
  %5972 = vmatpush.bf16.msra.mxu0 %v4750
  %5973 = vmatpush.bf16.msra.mxu0 %v4746
  %5974 = vmatpush.bf16.msra.mxu0 %v4742
  %5975 = vmatpush.bf16.msra.mxu0 %v4738
  %5976 = vmatpush.bf16.msra.mxu0 %v4734
  %5977 = vmatmul.bf16.gmra.mxu0 %v5955
  %v5978 = vpop.f32.mrf.mxu0
  %v5979 = vadd.f32 0.0, %v5978
  %v5980 = vpop.f32.mrf.mxu0
  %5981 = vdwg.mxu0
  %5982 = vmatpush.bf16.msra.mxu0 %v4763
  %5983 = vmatpush.bf16.msra.mxu0 %v4759
  %5984 = vmatpush.bf16.msra.mxu0 %v4755
  %5985 = vmatpush.bf16.msra.mxu0 %v4751
  %5986 = vmatpush.bf16.msra.mxu0 %v4747
  %5987 = vmatpush.bf16.msra.mxu0 %v4743
  %5988 = vmatpush.bf16.msra.mxu0 %v4739
  %5989 = vmatpush.bf16.msra.mxu0 %v4735
  %5990 = vmatmul.bf16.gmra.mxu0 %v5955
  %v5991 = vpop.f32.mrf.mxu0
  %v5992 = vadd.f32 0.0, %v5991
  %v5993 = vpop.f32.mrf.mxu0
  %5994 = vdwg.mxu0
  %5995 = vmatpush.bf16.msra.mxu0 %v4764
  %5996 = vmatpush.bf16.msra.mxu0 %v4760
  %5997 = vmatpush.bf16.msra.mxu0 %v4756
  %5998 = vmatpush.bf16.msra.mxu0 %v4752
  %5999 = vmatpush.bf16.msra.mxu0 %v4748
  %6000 = vmatpush.bf16.msra.mxu0 %v4744
  %6001 = vmatpush.bf16.msra.mxu0 %v4740
  %6002 = vmatpush.bf16.msra.mxu0 %v4736
  %6003 = vmatmul.bf16.gmra.mxu0 %v5955
  %v6004 = vpop.f32.mrf.mxu0
  %v6005 = vadd.f32 0.0, %v6004
  %v6006 = vpop.f32.mrf.mxu0
  %6007 = vdwg.mxu0
  %v6008 = vadd.f32 %v5951, %v5966
  %v6009 = vadd.f32 %v5952, %v5979
  %v6010 = vadd.f32 %v5953, %v5992
  %v6011 = vadd.f32 %v5954, %v6005
  %v6012 = vld [vmem:[#allocation5 + $0x60] sm:$0xff]
  %v6013 = vld [vmem:[#allocation5 + $0x68] sm:$0xff]
  %v6014 = vld [vmem:[#allocation5 + $0x70] sm:$0xff]
  %v6015 = vld [vmem:[#allocation5 + $0x78] sm:$0xff]
  %v6016 = vpack.c.bf16 %v5948, %v5948
  %6017 = vmatpush.bf16.msra.mxu0 %v4981
  %6018 = vmatpush.bf16.msra.mxu0 %v4977
  %6019 = vmatpush.bf16.msra.mxu0 %v4973
  %6020 = vmatpush.bf16.msra.mxu0 %v4969
  %6021 = vmatpush.bf16.msra.mxu0 %v4965
  %6022 = vmatpush.bf16.msra.mxu0 %v4961
  %6023 = vmatpush.bf16.msra.mxu0 %v4957
  %6024 = vmatpush.bf16.msra.mxu0 %v4953
  %6025 = vmatmul.bf16.gmra.mxu0 %v6016
  %v6026 = vpop.f32.mrf.mxu0
  %v6027 = vadd.f32 0.0, %v6026
  %v6028 = vpop.f32.mrf.mxu0
  %6029 = vdwg.mxu0
  %6030 = vmatpush.bf16.msra.mxu0 %v4982
  %6031 = vmatpush.bf16.msra.mxu0 %v4978
  %6032 = vmatpush.bf16.msra.mxu0 %v4974
  %6033 = vmatpush.bf16.msra.mxu0 %v4970
  %6034 = vmatpush.bf16.msra.mxu0 %v4966
  %6035 = vmatpush.bf16.msra.mxu0 %v4962
  %6036 = vmatpush.bf16.msra.mxu0 %v4958
  %6037 = vmatpush.bf16.msra.mxu0 %v4954
  %6038 = vmatmul.bf16.gmra.mxu0 %v6016
  %v6039 = vpop.f32.mrf.mxu0
  %v6040 = vadd.f32 0.0, %v6039
  %v6041 = vpop.f32.mrf.mxu0
  %6042 = vdwg.mxu0
  %6043 = vmatpush.bf16.msra.mxu0 %v4983
  %6044 = vmatpush.bf16.msra.mxu0 %v4979
  %6045 = vmatpush.bf16.msra.mxu0 %v4975
  %6046 = vmatpush.bf16.msra.mxu0 %v4971
  %6047 = vmatpush.bf16.msra.mxu0 %v4967
  %6048 = vmatpush.bf16.msra.mxu0 %v4963
  %6049 = vmatpush.bf16.msra.mxu0 %v4959
  %6050 = vmatpush.bf16.msra.mxu0 %v4955
  %6051 = vmatmul.bf16.gmra.mxu0 %v6016
  %v6052 = vpop.f32.mrf.mxu0
  %v6053 = vadd.f32 0.0, %v6052
  %v6054 = vpop.f32.mrf.mxu0
  %6055 = vdwg.mxu0
  %6056 = vmatpush.bf16.msra.mxu0 %v4984
  %6057 = vmatpush.bf16.msra.mxu0 %v4980
  %6058 = vmatpush.bf16.msra.mxu0 %v4976
  %6059 = vmatpush.bf16.msra.mxu0 %v4972
  %6060 = vmatpush.bf16.msra.mxu0 %v4968
  %6061 = vmatpush.bf16.msra.mxu0 %v4964
  %6062 = vmatpush.bf16.msra.mxu0 %v4960
  %6063 = vmatpush.bf16.msra.mxu0 %v4956
  %6064 = vmatmul.bf16.gmra.mxu0 %v6016
  %v6065 = vpop.f32.mrf.mxu0
  %v6066 = vadd.f32 0.0, %v6065
  %v6067 = vpop.f32.mrf.mxu0
  %6068 = vdwg.mxu0
  %v6069 = vadd.f32 %v6012, %v6027
  %v6070 = vadd.f32 %v6013, %v6040
  %v6071 = vadd.f32 %v6014, %v6053
  %v6072 = vadd.f32 %v6015, %v6066
  %v6073 = vxor.u32 %v6008, 2147483648
  %v6074 = vmul.f32 %v6073, 1.442695
  %v6075 = vpow.pop %v6074
  %v6076 = vadd.f32 %v6075, 1.0
  %v6077 = vrcp.pop %v6076
  %v6078 = vmul.f32 %v6076, %v6077
  %v6079 = vsub.f32 1.0, %v6078
  %v6080 = vmul.f32 %v6077, %v6079
  %v6081 = vadd.f32 %v6077, %v6080
  %vm6082 = vweird.f32 %v6076
  %vm6083 = vweird.f32 %v6077
  %vm6084 = vmor %vm6082, %vm6083
  %v6085 = vsel %vm6084, %v6077, %v6081
  %v6086 = vand.u32 2147483647, %v6076
  %vm6087 = vcmp.eq.f32.partialorder %v6086, 8.507059e+37
  %v6088 = vand.u32 %v6076, 2147483648
  %v6089 = vor.u32 1.1754944e-38, %v6088
  %v6090 = vsel %vm6087, %v6089, %v6085
  %v6091 = vmul.f32 1.0, %v6090
  %v6092 = vxor.u32 %v6009, 2147483648
  %v6093 = vmul.f32 %v6092, 1.442695
  %v6094 = vpow.pop %v6093
  %v6095 = vadd.f32 %v6094, 1.0
  %v6096 = vrcp.pop %v6095
  %v6097 = vmul.f32 %v6095, %v6096
  %v6098 = vsub.f32 1.0, %v6097
  %v6099 = vmul.f32 %v6096, %v6098
  %v6100 = vadd.f32 %v6096, %v6099
  %vm6101 = vweird.f32 %v6095
  %vm6102 = vweird.f32 %v6096
  %vm6103 = vmor %vm6101, %vm6102
  %v6104 = vsel %vm6103, %v6096, %v6100
  %v6105 = vand.u32 2147483647, %v6095
  %vm6106 = vcmp.eq.f32.partialorder %v6105, 8.507059e+37
  %v6107 = vand.u32 %v6095, 2147483648
  %v6108 = vor.u32 1.1754944e-38, %v6107
  %v6109 = vsel %vm6106, %v6108, %v6104
  %v6110 = vmul.f32 1.0, %v6109
  %v6111 = vtanh.pop %v6010
  %v6112 = vxor.u32 %v6011, 2147483648
  %v6113 = vmul.f32 %v6112, 1.442695
  %v6114 = vpow.pop %v6113
  %v6115 = vadd.f32 %v6114, 1.0
  %v6116 = vrcp.pop %v6115
  %v6117 = vmul.f32 %v6115, %v6116
  %v6118 = vsub.f32 1.0, %v6117
  %v6119 = vmul.f32 %v6116, %v6118
  %v6120 = vadd.f32 %v6116, %v6119
  %vm6121 = vweird.f32 %v6115
  %vm6122 = vweird.f32 %v6116
  %vm6123 = vmor %vm6121, %vm6122
  %v6124 = vsel %vm6123, %v6116, %v6120
  %v6125 = vand.u32 2147483647, %v6115
  %vm6126 = vcmp.eq.f32.partialorder %v6125, 8.507059e+37
  %v6127 = vand.u32 %v6115, 2147483648
  %v6128 = vor.u32 1.1754944e-38, %v6127
  %v6129 = vsel %vm6126, %v6128, %v6124
  %v6130 = vmul.f32 1.0, %v6129
  %v6131 = vmul.f32 %v6110, %v5883
  %v6132 = vmul.f32 %v6091, %v6111
  %v6133 = vadd.f32 %v6131, %v6132
  %v6134 = vtanh.pop %v6133
  %v6135 = vmul.f32 %v6130, %v6134
  %v6136 = vxor.u32 %v6069, 2147483648
  %v6137 = vmul.f32 %v6136, 1.442695
  %v6138 = vpow.pop %v6137
  %v6139 = vadd.f32 %v6138, 1.0
  %v6140 = vrcp.pop %v6139
  %v6141 = vmul.f32 %v6139, %v6140
  %v6142 = vsub.f32 1.0, %v6141
  %v6143 = vmul.f32 %v6140, %v6142
  %v6144 = vadd.f32 %v6140, %v6143
  %vm6145 = vweird.f32 %v6139
  %vm6146 = vweird.f32 %v6140
  %vm6147 = vmor %vm6145, %vm6146
  %v6148 = vsel %vm6147, %v6140, %v6144
  %v6149 = vand.u32 2147483647, %v6139
  %vm6150 = vcmp.eq.f32.partialorder %v6149, 8.507059e+37
  %v6151 = vand.u32 %v6139, 2147483648
  %v6152 = vor.u32 1.1754944e-38, %v6151
  %v6153 = vsel %vm6150, %v6152, %v6148
  %v6154 = vmul.f32 1.0, %v6153
  %v6155 = vxor.u32 %v6070, 2147483648
  %v6156 = vmul.f32 %v6155, 1.442695
  %v6157 = vpow.pop %v6156
  %v6158 = vadd.f32 %v6157, 1.0
  %v6159 = vrcp.pop %v6158
  %v6160 = vmul.f32 %v6158, %v6159
  %v6161 = vsub.f32 1.0, %v6160
  %v6162 = vmul.f32 %v6159, %v6161
  %v6163 = vadd.f32 %v6159, %v6162
  %vm6164 = vweird.f32 %v6158
  %vm6165 = vweird.f32 %v6159
  %vm6166 = vmor %vm6164, %vm6165
  %v6167 = vsel %vm6166, %v6159, %v6163
  %v6168 = vand.u32 2147483647, %v6158
  %vm6169 = vcmp.eq.f32.partialorder %v6168, 8.507059e+37
  %v6170 = vand.u32 %v6158, 2147483648
  %v6171 = vor.u32 1.1754944e-38, %v6170
  %v6172 = vsel %vm6169, %v6171, %v6167
  %v6173 = vmul.f32 1.0, %v6172
  %v6174 = vtanh.pop %v6071
  %v6175 = vxor.u32 %v6072, 2147483648
  %v6176 = vmul.f32 %v6175, 1.442695
  %v6177 = vpow.pop %v6176
  %v6178 = vadd.f32 %v6177, 1.0
  %v6179 = vrcp.pop %v6178
  %v6180 = vmul.f32 %v6178, %v6179
  %v6181 = vsub.f32 1.0, %v6180
  %v6182 = vmul.f32 %v6179, %v6181
  %v6183 = vadd.f32 %v6179, %v6182
  %vm6184 = vweird.f32 %v6178
  %vm6185 = vweird.f32 %v6179
  %vm6186 = vmor %vm6184, %vm6185
  %v6187 = vsel %vm6186, %v6179, %v6183
  %v6188 = vand.u32 2147483647, %v6178
  %vm6189 = vcmp.eq.f32.partialorder %v6188, 8.507059e+37
  %v6190 = vand.u32 %v6178, 2147483648
  %v6191 = vor.u32 1.1754944e-38, %v6190
  %v6192 = vsel %vm6189, %v6191, %v6187
  %v6193 = vmul.f32 1.0, %v6192
  %v6194 = vmul.f32 %v6173, %v5946
  %v6195 = vmul.f32 %v6154, %v6174
  %v6196 = vadd.f32 %v6194, %v6195
  %v6197 = vtanh.pop %v6196
  %v6198 = vmul.f32 %v6193, %v6197
  %6199 = vst [vmem:[#allocation2 + $0x20] sm:$0xff] %v6135
  %6200 = vst [vmem:[#allocation3 + $0x18] sm:$0xff] %v6198
  %v6201 = vld [vmem:[#allocation4 + $0xa0] sm:$0xff]
  %v6202 = vld [vmem:[#allocation4 + $0xa8] sm:$0xff]
  %v6203 = vld [vmem:[#allocation4 + $0xb0] sm:$0xff]
  %v6204 = vld [vmem:[#allocation4 + $0xb8] sm:$0xff]
  %v6205 = vpack.c.bf16 %v6135, %v6135
  %6206 = vmatpush.bf16.msra.mxu0 %v4761
  %6207 = vmatpush.bf16.msra.mxu0 %v4757
  %6208 = vmatpush.bf16.msra.mxu0 %v4753
  %6209 = vmatpush.bf16.msra.mxu0 %v4749
  %6210 = vmatpush.bf16.msra.mxu0 %v4745
  %6211 = vmatpush.bf16.msra.mxu0 %v4741
  %6212 = vmatpush.bf16.msra.mxu0 %v4737
  %6213 = vmatpush.bf16.msra.mxu0 %v4733
  %6214 = vmatmul.bf16.gmra.mxu0 %v6205
  %v6215 = vpop.f32.mrf.mxu0
  %v6216 = vadd.f32 0.0, %v6215
  %v6217 = vpop.f32.mrf.mxu0
  %6218 = vdwg.mxu0
  %6219 = vmatpush.bf16.msra.mxu0 %v4762
  %6220 = vmatpush.bf16.msra.mxu0 %v4758
  %6221 = vmatpush.bf16.msra.mxu0 %v4754
  %6222 = vmatpush.bf16.msra.mxu0 %v4750
  %6223 = vmatpush.bf16.msra.mxu0 %v4746
  %6224 = vmatpush.bf16.msra.mxu0 %v4742
  %6225 = vmatpush.bf16.msra.mxu0 %v4738
  %6226 = vmatpush.bf16.msra.mxu0 %v4734
  %6227 = vmatmul.bf16.gmra.mxu0 %v6205
  %v6228 = vpop.f32.mrf.mxu0
  %v6229 = vadd.f32 0.0, %v6228
  %v6230 = vpop.f32.mrf.mxu0
  %6231 = vdwg.mxu0
  %6232 = vmatpush.bf16.msra.mxu0 %v4763
  %6233 = vmatpush.bf16.msra.mxu0 %v4759
  %6234 = vmatpush.bf16.msra.mxu0 %v4755
  %6235 = vmatpush.bf16.msra.mxu0 %v4751
  %6236 = vmatpush.bf16.msra.mxu0 %v4747
  %6237 = vmatpush.bf16.msra.mxu0 %v4743
  %6238 = vmatpush.bf16.msra.mxu0 %v4739
  %6239 = vmatpush.bf16.msra.mxu0 %v4735
  %6240 = vmatmul.bf16.gmra.mxu0 %v6205
  %v6241 = vpop.f32.mrf.mxu0
  %v6242 = vadd.f32 0.0, %v6241
  %v6243 = vpop.f32.mrf.mxu0
  %6244 = vdwg.mxu0
  %6245 = vmatpush.bf16.msra.mxu0 %v4764
  %6246 = vmatpush.bf16.msra.mxu0 %v4760
  %6247 = vmatpush.bf16.msra.mxu0 %v4756
  %6248 = vmatpush.bf16.msra.mxu0 %v4752
  %6249 = vmatpush.bf16.msra.mxu0 %v4748
  %6250 = vmatpush.bf16.msra.mxu0 %v4744
  %6251 = vmatpush.bf16.msra.mxu0 %v4740
  %6252 = vmatpush.bf16.msra.mxu0 %v4736
  %6253 = vmatmul.bf16.gmra.mxu0 %v6205
  %v6254 = vpop.f32.mrf.mxu0
  %v6255 = vadd.f32 0.0, %v6254
  %v6256 = vpop.f32.mrf.mxu0
  %6257 = vdwg.mxu0
  %v6258 = vadd.f32 %v6201, %v6216
  %v6259 = vadd.f32 %v6202, %v6229
  %v6260 = vadd.f32 %v6203, %v6242
  %v6261 = vadd.f32 %v6204, %v6255
  %v6262 = vld [vmem:[#allocation5 + $0x40] sm:$0xff]
  %v6263 = vld [vmem:[#allocation5 + $0x48] sm:$0xff]
  %v6264 = vld [vmem:[#allocation5 + $0x50] sm:$0xff]
  %v6265 = vld [vmem:[#allocation5 + $0x58] sm:$0xff]
  %v6266 = vpack.c.bf16 %v6198, %v6198
  %6267 = vmatpush.bf16.msra.mxu0 %v4981
  %6268 = vmatpush.bf16.msra.mxu0 %v4977
  %6269 = vmatpush.bf16.msra.mxu0 %v4973
  %6270 = vmatpush.bf16.msra.mxu0 %v4969
  %6271 = vmatpush.bf16.msra.mxu0 %v4965
  %6272 = vmatpush.bf16.msra.mxu0 %v4961
  %6273 = vmatpush.bf16.msra.mxu0 %v4957
  %6274 = vmatpush.bf16.msra.mxu0 %v4953
  %6275 = vmatmul.bf16.gmra.mxu0 %v6266
  %v6276 = vpop.f32.mrf.mxu0
  %v6277 = vadd.f32 0.0, %v6276
  %v6278 = vpop.f32.mrf.mxu0
  %6279 = vdwg.mxu0
  %6280 = vmatpush.bf16.msra.mxu0 %v4982
  %6281 = vmatpush.bf16.msra.mxu0 %v4978
  %6282 = vmatpush.bf16.msra.mxu0 %v4974
  %6283 = vmatpush.bf16.msra.mxu0 %v4970
  %6284 = vmatpush.bf16.msra.mxu0 %v4966
  %6285 = vmatpush.bf16.msra.mxu0 %v4962
  %6286 = vmatpush.bf16.msra.mxu0 %v4958
  %6287 = vmatpush.bf16.msra.mxu0 %v4954
  %6288 = vmatmul.bf16.gmra.mxu0 %v6266
  %v6289 = vpop.f32.mrf.mxu0
  %v6290 = vadd.f32 0.0, %v6289
  %v6291 = vpop.f32.mrf.mxu0
  %6292 = vdwg.mxu0
  %6293 = vmatpush.bf16.msra.mxu0 %v4983
  %6294 = vmatpush.bf16.msra.mxu0 %v4979
  %6295 = vmatpush.bf16.msra.mxu0 %v4975
  %6296 = vmatpush.bf16.msra.mxu0 %v4971
  %6297 = vmatpush.bf16.msra.mxu0 %v4967
  %6298 = vmatpush.bf16.msra.mxu0 %v4963
  %6299 = vmatpush.bf16.msra.mxu0 %v4959
  %6300 = vmatpush.bf16.msra.mxu0 %v4955
  %6301 = vmatmul.bf16.gmra.mxu0 %v6266
  %v6302 = vpop.f32.mrf.mxu0
  %v6303 = vadd.f32 0.0, %v6302
  %v6304 = vpop.f32.mrf.mxu0
  %6305 = vdwg.mxu0
  %6306 = vmatpush.bf16.msra.mxu0 %v4984
  %6307 = vmatpush.bf16.msra.mxu0 %v4980
  %6308 = vmatpush.bf16.msra.mxu0 %v4976
  %6309 = vmatpush.bf16.msra.mxu0 %v4972
  %6310 = vmatpush.bf16.msra.mxu0 %v4968
  %6311 = vmatpush.bf16.msra.mxu0 %v4964
  %6312 = vmatpush.bf16.msra.mxu0 %v4960
  %6313 = vmatpush.bf16.msra.mxu0 %v4956
  %6314 = vmatmul.bf16.gmra.mxu0 %v6266
  %v6315 = vpop.f32.mrf.mxu0
  %v6316 = vadd.f32 0.0, %v6315
  %v6317 = vpop.f32.mrf.mxu0
  %6318 = vdwg.mxu0
  %v6319 = vadd.f32 %v6262, %v6277
  %v6320 = vadd.f32 %v6263, %v6290
  %v6321 = vadd.f32 %v6264, %v6303
  %v6322 = vadd.f32 %v6265, %v6316
  %v6323 = vxor.u32 %v6258, 2147483648
  %v6324 = vmul.f32 %v6323, 1.442695
  %v6325 = vpow.pop %v6324
  %v6326 = vadd.f32 %v6325, 1.0
  %v6327 = vrcp.pop %v6326
  %v6328 = vmul.f32 %v6326, %v6327
  %v6329 = vsub.f32 1.0, %v6328
  %v6330 = vmul.f32 %v6327, %v6329
  %v6331 = vadd.f32 %v6327, %v6330
  %vm6332 = vweird.f32 %v6326
  %vm6333 = vweird.f32 %v6327
  %vm6334 = vmor %vm6332, %vm6333
  %v6335 = vsel %vm6334, %v6327, %v6331
  %v6336 = vand.u32 2147483647, %v6326
  %vm6337 = vcmp.eq.f32.partialorder %v6336, 8.507059e+37
  %v6338 = vand.u32 %v6326, 2147483648
  %v6339 = vor.u32 1.1754944e-38, %v6338
  %v6340 = vsel %vm6337, %v6339, %v6335
  %v6341 = vmul.f32 1.0, %v6340
  %v6342 = vxor.u32 %v6259, 2147483648
  %v6343 = vmul.f32 %v6342, 1.442695
  %v6344 = vpow.pop %v6343
  %v6345 = vadd.f32 %v6344, 1.0
  %v6346 = vrcp.pop %v6345
  %v6347 = vmul.f32 %v6345, %v6346
  %v6348 = vsub.f32 1.0, %v6347
  %v6349 = vmul.f32 %v6346, %v6348
  %v6350 = vadd.f32 %v6346, %v6349
  %vm6351 = vweird.f32 %v6345
  %vm6352 = vweird.f32 %v6346
  %vm6353 = vmor %vm6351, %vm6352
  %v6354 = vsel %vm6353, %v6346, %v6350
  %v6355 = vand.u32 2147483647, %v6345
  %vm6356 = vcmp.eq.f32.partialorder %v6355, 8.507059e+37
  %v6357 = vand.u32 %v6345, 2147483648
  %v6358 = vor.u32 1.1754944e-38, %v6357
  %v6359 = vsel %vm6356, %v6358, %v6354
  %v6360 = vmul.f32 1.0, %v6359
  %v6361 = vtanh.pop %v6260
  %v6362 = vxor.u32 %v6261, 2147483648
  %v6363 = vmul.f32 %v6362, 1.442695
  %v6364 = vpow.pop %v6363
  %v6365 = vadd.f32 %v6364, 1.0
  %v6366 = vrcp.pop %v6365
  %v6367 = vmul.f32 %v6365, %v6366
  %v6368 = vsub.f32 1.0, %v6367
  %v6369 = vmul.f32 %v6366, %v6368
  %v6370 = vadd.f32 %v6366, %v6369
  %vm6371 = vweird.f32 %v6365
  %vm6372 = vweird.f32 %v6366
  %vm6373 = vmor %vm6371, %vm6372
  %v6374 = vsel %vm6373, %v6366, %v6370
  %v6375 = vand.u32 2147483647, %v6365
  %vm6376 = vcmp.eq.f32.partialorder %v6375, 8.507059e+37
  %v6377 = vand.u32 %v6365, 2147483648
  %v6378 = vor.u32 1.1754944e-38, %v6377
  %v6379 = vsel %vm6376, %v6378, %v6374
  %v6380 = vmul.f32 1.0, %v6379
  %v6381 = vmul.f32 %v6360, %v6133
  %v6382 = vmul.f32 %v6341, %v6361
  %v6383 = vadd.f32 %v6381, %v6382
  %v6384 = vtanh.pop %v6383
  %v6385 = vmul.f32 %v6380, %v6384
  %v6386 = vxor.u32 %v6319, 2147483648
  %v6387 = vmul.f32 %v6386, 1.442695
  %v6388 = vpow.pop %v6387
  %v6389 = vadd.f32 %v6388, 1.0
  %v6390 = vrcp.pop %v6389
  %v6391 = vmul.f32 %v6389, %v6390
  %v6392 = vsub.f32 1.0, %v6391
  %v6393 = vmul.f32 %v6390, %v6392
  %v6394 = vadd.f32 %v6390, %v6393
  %vm6395 = vweird.f32 %v6389
  %vm6396 = vweird.f32 %v6390
  %vm6397 = vmor %vm6395, %vm6396
  %v6398 = vsel %vm6397, %v6390, %v6394
  %v6399 = vand.u32 2147483647, %v6389
  %vm6400 = vcmp.eq.f32.partialorder %v6399, 8.507059e+37
  %v6401 = vand.u32 %v6389, 2147483648
  %v6402 = vor.u32 1.1754944e-38, %v6401
  %v6403 = vsel %vm6400, %v6402, %v6398
  %v6404 = vmul.f32 1.0, %v6403
  %v6405 = vxor.u32 %v6320, 2147483648
  %v6406 = vmul.f32 %v6405, 1.442695
  %v6407 = vpow.pop %v6406
  %v6408 = vadd.f32 %v6407, 1.0
  %v6409 = vrcp.pop %v6408
  %v6410 = vmul.f32 %v6408, %v6409
  %v6411 = vsub.f32 1.0, %v6410
  %v6412 = vmul.f32 %v6409, %v6411
  %v6413 = vadd.f32 %v6409, %v6412
  %vm6414 = vweird.f32 %v6408
  %vm6415 = vweird.f32 %v6409
  %vm6416 = vmor %vm6414, %vm6415
  %v6417 = vsel %vm6416, %v6409, %v6413
  %v6418 = vand.u32 2147483647, %v6408
  %vm6419 = vcmp.eq.f32.partialorder %v6418, 8.507059e+37
  %v6420 = vand.u32 %v6408, 2147483648
  %v6421 = vor.u32 1.1754944e-38, %v6420
  %v6422 = vsel %vm6419, %v6421, %v6417
  %v6423 = vmul.f32 1.0, %v6422
  %v6424 = vtanh.pop %v6321
  %v6425 = vxor.u32 %v6322, 2147483648
  %v6426 = vmul.f32 %v6425, 1.442695
  %v6427 = vpow.pop %v6426
  %v6428 = vadd.f32 %v6427, 1.0
  %v6429 = vrcp.pop %v6428
  %v6430 = vmul.f32 %v6428, %v6429
  %v6431 = vsub.f32 1.0, %v6430
  %v6432 = vmul.f32 %v6429, %v6431
  %v6433 = vadd.f32 %v6429, %v6432
  %vm6434 = vweird.f32 %v6428
  %vm6435 = vweird.f32 %v6429
  %vm6436 = vmor %vm6434, %vm6435
  %v6437 = vsel %vm6436, %v6429, %v6433
  %v6438 = vand.u32 2147483647, %v6428
  %vm6439 = vcmp.eq.f32.partialorder %v6438, 8.507059e+37
  %v6440 = vand.u32 %v6428, 2147483648
  %v6441 = vor.u32 1.1754944e-38, %v6440
  %v6442 = vsel %vm6439, %v6441, %v6437
  %v6443 = vmul.f32 1.0, %v6442
  %v6444 = vmul.f32 %v6423, %v6196
  %v6445 = vmul.f32 %v6404, %v6424
  %v6446 = vadd.f32 %v6444, %v6445
  %v6447 = vtanh.pop %v6446
  %v6448 = vmul.f32 %v6443, %v6447
  %6449 = vst [vmem:[#allocation2 + $0x28] sm:$0xff] %v6385
  %6450 = vst [vmem:[#allocation3 + $0x10] sm:$0xff] %v6448
  %v6451 = vld [vmem:[#allocation4 + $0xc0] sm:$0xff]
  %v6452 = vld [vmem:[#allocation4 + $0xc8] sm:$0xff]
  %v6453 = vld [vmem:[#allocation4 + $0xd0] sm:$0xff]
  %v6454 = vld [vmem:[#allocation4 + $0xd8] sm:$0xff]
  %v6455 = vpack.c.bf16 %v6385, %v6385
  %6456 = vmatpush.bf16.msra.mxu0 %v4761
  %6457 = vmatpush.bf16.msra.mxu0 %v4757
  %6458 = vmatpush.bf16.msra.mxu0 %v4753
  %6459 = vmatpush.bf16.msra.mxu0 %v4749
  %6460 = vmatpush.bf16.msra.mxu0 %v4745
  %6461 = vmatpush.bf16.msra.mxu0 %v4741
  %6462 = vmatpush.bf16.msra.mxu0 %v4737
  %6463 = vmatpush.bf16.msra.mxu0 %v4733
  %6464 = vmatmul.bf16.gmra.mxu0 %v6455
  %v6465 = vpop.f32.mrf.mxu0
  %v6466 = vadd.f32 0.0, %v6465
  %v6467 = vpop.f32.mrf.mxu0
  %6468 = vdwg.mxu0
  %6469 = vmatpush.bf16.msra.mxu0 %v4762
  %6470 = vmatpush.bf16.msra.mxu0 %v4758
  %6471 = vmatpush.bf16.msra.mxu0 %v4754
  %6472 = vmatpush.bf16.msra.mxu0 %v4750
  %6473 = vmatpush.bf16.msra.mxu0 %v4746
  %6474 = vmatpush.bf16.msra.mxu0 %v4742
  %6475 = vmatpush.bf16.msra.mxu0 %v4738
  %6476 = vmatpush.bf16.msra.mxu0 %v4734
  %6477 = vmatmul.bf16.gmra.mxu0 %v6455
  %v6478 = vpop.f32.mrf.mxu0
  %v6479 = vadd.f32 0.0, %v6478
  %v6480 = vpop.f32.mrf.mxu0
  %6481 = vdwg.mxu0
  %6482 = vmatpush.bf16.msra.mxu0 %v4763
  %6483 = vmatpush.bf16.msra.mxu0 %v4759
  %6484 = vmatpush.bf16.msra.mxu0 %v4755
  %6485 = vmatpush.bf16.msra.mxu0 %v4751
  %6486 = vmatpush.bf16.msra.mxu0 %v4747
  %6487 = vmatpush.bf16.msra.mxu0 %v4743
  %6488 = vmatpush.bf16.msra.mxu0 %v4739
  %6489 = vmatpush.bf16.msra.mxu0 %v4735
  %6490 = vmatmul.bf16.gmra.mxu0 %v6455
  %v6491 = vpop.f32.mrf.mxu0
  %v6492 = vadd.f32 0.0, %v6491
  %v6493 = vpop.f32.mrf.mxu0
  %6494 = vdwg.mxu0
  %6495 = vmatpush.bf16.msra.mxu0 %v4764
  %6496 = vmatpush.bf16.msra.mxu0 %v4760
  %6497 = vmatpush.bf16.msra.mxu0 %v4756
  %6498 = vmatpush.bf16.msra.mxu0 %v4752
  %6499 = vmatpush.bf16.msra.mxu0 %v4748
  %6500 = vmatpush.bf16.msra.mxu0 %v4744
  %6501 = vmatpush.bf16.msra.mxu0 %v4740
  %6502 = vmatpush.bf16.msra.mxu0 %v4736
  %6503 = vmatmul.bf16.gmra.mxu0 %v6455
  %v6504 = vpop.f32.mrf.mxu0
  %v6505 = vadd.f32 0.0, %v6504
  %v6506 = vpop.f32.mrf.mxu0
  %6507 = vdwg.mxu0
  %v6508 = vadd.f32 %v6451, %v6466
  %v6509 = vadd.f32 %v6452, %v6479
  %v6510 = vadd.f32 %v6453, %v6492
  %v6511 = vadd.f32 %v6454, %v6505
  %v6512 = vld [vmem:[#allocation5 + $0x20] sm:$0xff]
  %v6513 = vld [vmem:[#allocation5 + $0x28] sm:$0xff]
  %v6514 = vld [vmem:[#allocation5 + $0x30] sm:$0xff]
  %v6515 = vld [vmem:[#allocation5 + $0x38] sm:$0xff]
  %v6516 = vpack.c.bf16 %v6448, %v6448
  %6517 = vmatpush.bf16.msra.mxu0 %v4981
  %6518 = vmatpush.bf16.msra.mxu0 %v4977
  %6519 = vmatpush.bf16.msra.mxu0 %v4973
  %6520 = vmatpush.bf16.msra.mxu0 %v4969
  %6521 = vmatpush.bf16.msra.mxu0 %v4965
  %6522 = vmatpush.bf16.msra.mxu0 %v4961
  %6523 = vmatpush.bf16.msra.mxu0 %v4957
  %6524 = vmatpush.bf16.msra.mxu0 %v4953
  %6525 = vmatmul.bf16.gmra.mxu0 %v6516
  %v6526 = vpop.f32.mrf.mxu0
  %v6527 = vadd.f32 0.0, %v6526
  %v6528 = vpop.f32.mrf.mxu0
  %6529 = vdwg.mxu0
  %6530 = vmatpush.bf16.msra.mxu0 %v4982
  %6531 = vmatpush.bf16.msra.mxu0 %v4978
  %6532 = vmatpush.bf16.msra.mxu0 %v4974
  %6533 = vmatpush.bf16.msra.mxu0 %v4970
  %6534 = vmatpush.bf16.msra.mxu0 %v4966
  %6535 = vmatpush.bf16.msra.mxu0 %v4962
  %6536 = vmatpush.bf16.msra.mxu0 %v4958
  %6537 = vmatpush.bf16.msra.mxu0 %v4954
  %6538 = vmatmul.bf16.gmra.mxu0 %v6516
  %v6539 = vpop.f32.mrf.mxu0
  %v6540 = vadd.f32 0.0, %v6539
  %v6541 = vpop.f32.mrf.mxu0
  %6542 = vdwg.mxu0
  %6543 = vmatpush.bf16.msra.mxu0 %v4983
  %6544 = vmatpush.bf16.msra.mxu0 %v4979
  %6545 = vmatpush.bf16.msra.mxu0 %v4975
  %6546 = vmatpush.bf16.msra.mxu0 %v4971
  %6547 = vmatpush.bf16.msra.mxu0 %v4967
  %6548 = vmatpush.bf16.msra.mxu0 %v4963
  %6549 = vmatpush.bf16.msra.mxu0 %v4959
  %6550 = vmatpush.bf16.msra.mxu0 %v4955
  %6551 = vmatmul.bf16.gmra.mxu0 %v6516
  %v6552 = vpop.f32.mrf.mxu0
  %v6553 = vadd.f32 0.0, %v6552
  %v6554 = vpop.f32.mrf.mxu0
  %6555 = vdwg.mxu0
  %6556 = vmatpush.bf16.msra.mxu0 %v4984
  %6557 = vmatpush.bf16.msra.mxu0 %v4980
  %6558 = vmatpush.bf16.msra.mxu0 %v4976
  %6559 = vmatpush.bf16.msra.mxu0 %v4972
  %6560 = vmatpush.bf16.msra.mxu0 %v4968
  %6561 = vmatpush.bf16.msra.mxu0 %v4964
  %6562 = vmatpush.bf16.msra.mxu0 %v4960
  %6563 = vmatpush.bf16.msra.mxu0 %v4956
  %6564 = vmatmul.bf16.gmra.mxu0 %v6516
  %v6565 = vpop.f32.mrf.mxu0
  %v6566 = vadd.f32 0.0, %v6565
  %v6567 = vpop.f32.mrf.mxu0
  %6568 = vdwg.mxu0
  %v6569 = vadd.f32 %v6512, %v6527
  %v6570 = vadd.f32 %v6513, %v6540
  %v6571 = vadd.f32 %v6514, %v6553
  %v6572 = vadd.f32 %v6515, %v6566
  %v6573 = vxor.u32 %v6508, 2147483648
  %v6574 = vmul.f32 %v6573, 1.442695
  %v6575 = vpow.pop %v6574
  %v6576 = vadd.f32 %v6575, 1.0
  %v6577 = vrcp.pop %v6576
  %v6578 = vmul.f32 %v6576, %v6577
  %v6579 = vsub.f32 1.0, %v6578
  %v6580 = vmul.f32 %v6577, %v6579
  %v6581 = vadd.f32 %v6577, %v6580
  %vm6582 = vweird.f32 %v6576
  %vm6583 = vweird.f32 %v6577
  %vm6584 = vmor %vm6582, %vm6583
  %v6585 = vsel %vm6584, %v6577, %v6581
  %v6586 = vand.u32 2147483647, %v6576
  %vm6587 = vcmp.eq.f32.partialorder %v6586, 8.507059e+37
  %v6588 = vand.u32 %v6576, 2147483648
  %v6589 = vor.u32 1.1754944e-38, %v6588
  %v6590 = vsel %vm6587, %v6589, %v6585
  %v6591 = vmul.f32 1.0, %v6590
  %v6592 = vxor.u32 %v6509, 2147483648
  %v6593 = vmul.f32 %v6592, 1.442695
  %v6594 = vpow.pop %v6593
  %v6595 = vadd.f32 %v6594, 1.0
  %v6596 = vrcp.pop %v6595
  %v6597 = vmul.f32 %v6595, %v6596
  %v6598 = vsub.f32 1.0, %v6597
  %v6599 = vmul.f32 %v6596, %v6598
  %v6600 = vadd.f32 %v6596, %v6599
  %vm6601 = vweird.f32 %v6595
  %vm6602 = vweird.f32 %v6596
  %vm6603 = vmor %vm6601, %vm6602
  %v6604 = vsel %vm6603, %v6596, %v6600
  %v6605 = vand.u32 2147483647, %v6595
  %vm6606 = vcmp.eq.f32.partialorder %v6605, 8.507059e+37
  %v6607 = vand.u32 %v6595, 2147483648
  %v6608 = vor.u32 1.1754944e-38, %v6607
  %v6609 = vsel %vm6606, %v6608, %v6604
  %v6610 = vmul.f32 1.0, %v6609
  %v6611 = vtanh.pop %v6510
  %v6612 = vxor.u32 %v6511, 2147483648
  %v6613 = vmul.f32 %v6612, 1.442695
  %v6614 = vpow.pop %v6613
  %v6615 = vadd.f32 %v6614, 1.0
  %v6616 = vrcp.pop %v6615
  %v6617 = vmul.f32 %v6615, %v6616
  %v6618 = vsub.f32 1.0, %v6617
  %v6619 = vmul.f32 %v6616, %v6618
  %v6620 = vadd.f32 %v6616, %v6619
  %vm6621 = vweird.f32 %v6615
  %vm6622 = vweird.f32 %v6616
  %vm6623 = vmor %vm6621, %vm6622
  %v6624 = vsel %vm6623, %v6616, %v6620
  %v6625 = vand.u32 2147483647, %v6615
  %vm6626 = vcmp.eq.f32.partialorder %v6625, 8.507059e+37
  %v6627 = vand.u32 %v6615, 2147483648
  %v6628 = vor.u32 1.1754944e-38, %v6627
  %v6629 = vsel %vm6626, %v6628, %v6624
  %v6630 = vmul.f32 1.0, %v6629
  %v6631 = vmul.f32 %v6610, %v6383
  %v6632 = vmul.f32 %v6591, %v6611
  %v6633 = vadd.f32 %v6631, %v6632
  %v6634 = vtanh.pop %v6633
  %v6635 = vmul.f32 %v6630, %v6634
  %v6636 = vxor.u32 %v6569, 2147483648
  %v6637 = vmul.f32 %v6636, 1.442695
  %v6638 = vpow.pop %v6637
  %v6639 = vadd.f32 %v6638, 1.0
  %v6640 = vrcp.pop %v6639
  %v6641 = vmul.f32 %v6639, %v6640
  %v6642 = vsub.f32 1.0, %v6641
  %v6643 = vmul.f32 %v6640, %v6642
  %v6644 = vadd.f32 %v6640, %v6643
  %vm6645 = vweird.f32 %v6639
  %vm6646 = vweird.f32 %v6640
  %vm6647 = vmor %vm6645, %vm6646
  %v6648 = vsel %vm6647, %v6640, %v6644
  %v6649 = vand.u32 2147483647, %v6639
  %vm6650 = vcmp.eq.f32.partialorder %v6649, 8.507059e+37
  %v6651 = vand.u32 %v6639, 2147483648
  %v6652 = vor.u32 1.1754944e-38, %v6651
  %v6653 = vsel %vm6650, %v6652, %v6648
  %v6654 = vmul.f32 1.0, %v6653
  %v6655 = vxor.u32 %v6570, 2147483648
  %v6656 = vmul.f32 %v6655, 1.442695
  %v6657 = vpow.pop %v6656
  %v6658 = vadd.f32 %v6657, 1.0
  %v6659 = vrcp.pop %v6658
  %v6660 = vmul.f32 %v6658, %v6659
  %v6661 = vsub.f32 1.0, %v6660
  %v6662 = vmul.f32 %v6659, %v6661
  %v6663 = vadd.f32 %v6659, %v6662
  %vm6664 = vweird.f32 %v6658
  %vm6665 = vweird.f32 %v6659
  %vm6666 = vmor %vm6664, %vm6665
  %v6667 = vsel %vm6666, %v6659, %v6663
  %v6668 = vand.u32 2147483647, %v6658
  %vm6669 = vcmp.eq.f32.partialorder %v6668, 8.507059e+37
  %v6670 = vand.u32 %v6658, 2147483648
  %v6671 = vor.u32 1.1754944e-38, %v6670
  %v6672 = vsel %vm6669, %v6671, %v6667
  %v6673 = vmul.f32 1.0, %v6672
  %v6674 = vtanh.pop %v6571
  %v6675 = vxor.u32 %v6572, 2147483648
  %v6676 = vmul.f32 %v6675, 1.442695
  %v6677 = vpow.pop %v6676
  %v6678 = vadd.f32 %v6677, 1.0
  %v6679 = vrcp.pop %v6678
  %v6680 = vmul.f32 %v6678, %v6679
  %v6681 = vsub.f32 1.0, %v6680
  %v6682 = vmul.f32 %v6679, %v6681
  %v6683 = vadd.f32 %v6679, %v6682
  %vm6684 = vweird.f32 %v6678
  %vm6685 = vweird.f32 %v6679
  %vm6686 = vmor %vm6684, %vm6685
  %v6687 = vsel %vm6686, %v6679, %v6683
  %v6688 = vand.u32 2147483647, %v6678
  %vm6689 = vcmp.eq.f32.partialorder %v6688, 8.507059e+37
  %v6690 = vand.u32 %v6678, 2147483648
  %v6691 = vor.u32 1.1754944e-38, %v6690
  %v6692 = vsel %vm6689, %v6691, %v6687
  %v6693 = vmul.f32 1.0, %v6692
  %v6694 = vmul.f32 %v6673, %v6446
  %v6695 = vmul.f32 %v6654, %v6674
  %v6696 = vadd.f32 %v6694, %v6695
  %v6697 = vtanh.pop %v6696
  %v6698 = vmul.f32 %v6693, %v6697
  %6699 = vst [vmem:[#allocation2 + $0x30] sm:$0xff] %v6635
  %6700 = vst [vmem:[#allocation3 + $0x8] sm:$0xff] %v6698
  %v6701 = vld [vmem:[#allocation4 + $0xe0] sm:$0xff]
  %v6702 = vld [vmem:[#allocation4 + $0xe8] sm:$0xff]
  %v6703 = vld [vmem:[#allocation4 + $0xf0] sm:$0xff]
  %v6704 = vld [vmem:[#allocation4 + $0xf8] sm:$0xff]
  %v6705 = vpack.c.bf16 %v6635, %v6635
  %6706 = vmatpush.bf16.msra.mxu0 %v4761
  %6707 = vmatpush.bf16.msra.mxu0 %v4757
  %6708 = vmatpush.bf16.msra.mxu0 %v4753
  %6709 = vmatpush.bf16.msra.mxu0 %v4749
  %6710 = vmatpush.bf16.msra.mxu0 %v4745
  %6711 = vmatpush.bf16.msra.mxu0 %v4741
  %6712 = vmatpush.bf16.msra.mxu0 %v4737
  %6713 = vmatpush.bf16.msra.mxu0 %v4733
  %6714 = vmatmul.bf16.gmra.mxu0 %v6705
  %v6715 = vpop.f32.mrf.mxu0
  %v6716 = vadd.f32 0.0, %v6715
  %v6717 = vpop.f32.mrf.mxu0
  %6718 = vdwg.mxu0
  %6719 = vmatpush.bf16.msra.mxu0 %v4762
  %6720 = vmatpush.bf16.msra.mxu0 %v4758
  %6721 = vmatpush.bf16.msra.mxu0 %v4754
  %6722 = vmatpush.bf16.msra.mxu0 %v4750
  %6723 = vmatpush.bf16.msra.mxu0 %v4746
  %6724 = vmatpush.bf16.msra.mxu0 %v4742
  %6725 = vmatpush.bf16.msra.mxu0 %v4738
  %6726 = vmatpush.bf16.msra.mxu0 %v4734
  %6727 = vmatmul.bf16.gmra.mxu0 %v6705
  %v6728 = vpop.f32.mrf.mxu0
  %v6729 = vadd.f32 0.0, %v6728
  %v6730 = vpop.f32.mrf.mxu0
  %6731 = vdwg.mxu0
  %6732 = vmatpush.bf16.msra.mxu0 %v4763
  %6733 = vmatpush.bf16.msra.mxu0 %v4759
  %6734 = vmatpush.bf16.msra.mxu0 %v4755
  %6735 = vmatpush.bf16.msra.mxu0 %v4751
  %6736 = vmatpush.bf16.msra.mxu0 %v4747
  %6737 = vmatpush.bf16.msra.mxu0 %v4743
  %6738 = vmatpush.bf16.msra.mxu0 %v4739
  %6739 = vmatpush.bf16.msra.mxu0 %v4735
  %6740 = vmatmul.bf16.gmra.mxu0 %v6705
  %v6741 = vpop.f32.mrf.mxu0
  %v6742 = vadd.f32 0.0, %v6741
  %v6743 = vpop.f32.mrf.mxu0
  %6744 = vdwg.mxu0
  %6745 = vmatpush.bf16.msra.mxu0 %v4764
  %6746 = vmatpush.bf16.msra.mxu0 %v4760
  %6747 = vmatpush.bf16.msra.mxu0 %v4756
  %6748 = vmatpush.bf16.msra.mxu0 %v4752
  %6749 = vmatpush.bf16.msra.mxu0 %v4748
  %6750 = vmatpush.bf16.msra.mxu0 %v4744
  %6751 = vmatpush.bf16.msra.mxu0 %v4740
  %6752 = vmatpush.bf16.msra.mxu0 %v4736
  %6753 = vmatmul.bf16.gmra.mxu0 %v6705
  %v6754 = vpop.f32.mrf.mxu0
  %v6755 = vadd.f32 0.0, %v6754
  %v6756 = vpop.f32.mrf.mxu0
  %6757 = vdwg.mxu0
  %v6758 = vadd.f32 %v6701, %v6716
  %v6759 = vadd.f32 %v6702, %v6729
  %v6760 = vadd.f32 %v6703, %v6742
  %v6761 = vadd.f32 %v6704, %v6755
  %v6762 = vld [vmem:[#allocation5] sm:$0xff]
  %v6763 = vld [vmem:[#allocation5 + $0x8] sm:$0xff]
  %v6764 = vld [vmem:[#allocation5 + $0x10] sm:$0xff]
  %v6765 = vld [vmem:[#allocation5 + $0x18] sm:$0xff]
  %v6766 = vpack.c.bf16 %v6698, %v6698
  %6767 = vmatpush.bf16.msra.mxu0 %v4981
  %6768 = vmatpush.bf16.msra.mxu0 %v4977
  %6769 = vmatpush.bf16.msra.mxu0 %v4973
  %6770 = vmatpush.bf16.msra.mxu0 %v4969
  %6771 = vmatpush.bf16.msra.mxu0 %v4965
  %6772 = vmatpush.bf16.msra.mxu0 %v4961
  %6773 = vmatpush.bf16.msra.mxu0 %v4957
  %6774 = vmatpush.bf16.msra.mxu0 %v4953
  %6775 = vmatmul.bf16.gmra.mxu0 %v6766
  %v6776 = vpop.f32.mrf.mxu0
  %v6777 = vadd.f32 0.0, %v6776
  %v6778 = vpop.f32.mrf.mxu0
  %6779 = vdwg.mxu0
  %6780 = vmatpush.bf16.msra.mxu0 %v4982
  %6781 = vmatpush.bf16.msra.mxu0 %v4978
  %6782 = vmatpush.bf16.msra.mxu0 %v4974
  %6783 = vmatpush.bf16.msra.mxu0 %v4970
  %6784 = vmatpush.bf16.msra.mxu0 %v4966
  %6785 = vmatpush.bf16.msra.mxu0 %v4962
  %6786 = vmatpush.bf16.msra.mxu0 %v4958
  %6787 = vmatpush.bf16.msra.mxu0 %v4954
  %6788 = vmatmul.bf16.gmra.mxu0 %v6766
  %v6789 = vpop.f32.mrf.mxu0
  %v6790 = vadd.f32 0.0, %v6789
  %v6791 = vpop.f32.mrf.mxu0
  %6792 = vdwg.mxu0
  %6793 = vmatpush.bf16.msra.mxu0 %v4983
  %6794 = vmatpush.bf16.msra.mxu0 %v4979
  %6795 = vmatpush.bf16.msra.mxu0 %v4975
  %6796 = vmatpush.bf16.msra.mxu0 %v4971
  %6797 = vmatpush.bf16.msra.mxu0 %v4967
  %6798 = vmatpush.bf16.msra.mxu0 %v4963
  %6799 = vmatpush.bf16.msra.mxu0 %v4959
  %6800 = vmatpush.bf16.msra.mxu0 %v4955
  %6801 = vmatmul.bf16.gmra.mxu0 %v6766
  %v6802 = vpop.f32.mrf.mxu0
  %v6803 = vadd.f32 0.0, %v6802
  %v6804 = vpop.f32.mrf.mxu0
  %6805 = vdwg.mxu0
  %6806 = vmatpush.bf16.msra.mxu0 %v4984
  %6807 = vmatpush.bf16.msra.mxu0 %v4980
  %6808 = vmatpush.bf16.msra.mxu0 %v4976
  %6809 = vmatpush.bf16.msra.mxu0 %v4972
  %6810 = vmatpush.bf16.msra.mxu0 %v4968
  %6811 = vmatpush.bf16.msra.mxu0 %v4964
  %6812 = vmatpush.bf16.msra.mxu0 %v4960
  %6813 = vmatpush.bf16.msra.mxu0 %v4956
  %6814 = vmatmul.bf16.gmra.mxu0 %v6766
  %v6815 = vpop.f32.mrf.mxu0
  %v6816 = vadd.f32 0.0, %v6815
  %v6817 = vpop.f32.mrf.mxu0
  %6818 = vdwg.mxu0
  %v6819 = vadd.f32 %v6762, %v6777
  %v6820 = vadd.f32 %v6763, %v6790
  %v6821 = vadd.f32 %v6764, %v6803
  %v6822 = vadd.f32 %v6765, %v6816
  %v6823 = vxor.u32 %v6758, 2147483648
  %v6824 = vmul.f32 %v6823, 1.442695
  %v6825 = vpow.pop %v6824
  %v6826 = vadd.f32 %v6825, 1.0
  %v6827 = vrcp.pop %v6826
  %v6828 = vmul.f32 %v6826, %v6827
  %v6829 = vsub.f32 1.0, %v6828
  %v6830 = vmul.f32 %v6827, %v6829
  %v6831 = vadd.f32 %v6827, %v6830
  %vm6832 = vweird.f32 %v6826
  %vm6833 = vweird.f32 %v6827
  %vm6834 = vmor %vm6832, %vm6833
  %v6835 = vsel %vm6834, %v6827, %v6831
  %v6836 = vand.u32 2147483647, %v6826
  %vm6837 = vcmp.eq.f32.partialorder %v6836, 8.507059e+37
  %v6838 = vand.u32 %v6826, 2147483648
  %v6839 = vor.u32 1.1754944e-38, %v6838
  %v6840 = vsel %vm6837, %v6839, %v6835
  %v6841 = vmul.f32 1.0, %v6840
  %v6842 = vxor.u32 %v6759, 2147483648
  %v6843 = vmul.f32 %v6842, 1.442695
  %v6844 = vpow.pop %v6843
  %v6845 = vadd.f32 %v6844, 1.0
  %v6846 = vrcp.pop %v6845
  %v6847 = vmul.f32 %v6845, %v6846
  %v6848 = vsub.f32 1.0, %v6847
  %v6849 = vmul.f32 %v6846, %v6848
  %v6850 = vadd.f32 %v6846, %v6849
  %vm6851 = vweird.f32 %v6845
  %vm6852 = vweird.f32 %v6846
  %vm6853 = vmor %vm6851, %vm6852
  %v6854 = vsel %vm6853, %v6846, %v6850
  %v6855 = vand.u32 2147483647, %v6845
  %vm6856 = vcmp.eq.f32.partialorder %v6855, 8.507059e+37
  %v6857 = vand.u32 %v6845, 2147483648
  %v6858 = vor.u32 1.1754944e-38, %v6857
  %v6859 = vsel %vm6856, %v6858, %v6854
  %v6860 = vmul.f32 1.0, %v6859
  %v6861 = vtanh.pop %v6760
  %v6862 = vxor.u32 %v6761, 2147483648
  %v6863 = vmul.f32 %v6862, 1.442695
  %v6864 = vpow.pop %v6863
  %v6865 = vadd.f32 %v6864, 1.0
  %v6866 = vrcp.pop %v6865
  %v6867 = vmul.f32 %v6865, %v6866
  %v6868 = vsub.f32 1.0, %v6867
  %v6869 = vmul.f32 %v6866, %v6868
  %v6870 = vadd.f32 %v6866, %v6869
  %vm6871 = vweird.f32 %v6865
  %vm6872 = vweird.f32 %v6866
  %vm6873 = vmor %vm6871, %vm6872
  %v6874 = vsel %vm6873, %v6866, %v6870
  %v6875 = vand.u32 2147483647, %v6865
  %vm6876 = vcmp.eq.f32.partialorder %v6875, 8.507059e+37
  %v6877 = vand.u32 %v6865, 2147483648
  %v6878 = vor.u32 1.1754944e-38, %v6877
  %v6879 = vsel %vm6876, %v6878, %v6874
  %v6880 = vmul.f32 1.0, %v6879
  %v6881 = vmul.f32 %v6860, %v6633
  %v6882 = vmul.f32 %v6841, %v6861
  %v6883 = vadd.f32 %v6881, %v6882
  %v6884 = vtanh.pop %v6883
  %v6885 = vmul.f32 %v6880, %v6884
  %v6886 = vxor.u32 %v6819, 2147483648
  %v6887 = vmul.f32 %v6886, 1.442695
  %v6888 = vpow.pop %v6887
  %v6889 = vadd.f32 %v6888, 1.0
  %v6890 = vrcp.pop %v6889
  %v6891 = vmul.f32 %v6889, %v6890
  %v6892 = vsub.f32 1.0, %v6891
  %v6893 = vmul.f32 %v6890, %v6892
  %v6894 = vadd.f32 %v6890, %v6893
  %vm6895 = vweird.f32 %v6889
  %vm6896 = vweird.f32 %v6890
  %vm6897 = vmor %vm6895, %vm6896
  %v6898 = vsel %vm6897, %v6890, %v6894
  %v6899 = vand.u32 2147483647, %v6889
  %vm6900 = vcmp.eq.f32.partialorder %v6899, 8.507059e+37
  %v6901 = vand.u32 %v6889, 2147483648
  %v6902 = vor.u32 1.1754944e-38, %v6901
  %v6903 = vsel %vm6900, %v6902, %v6898
  %v6904 = vmul.f32 1.0, %v6903
  %v6905 = vxor.u32 %v6820, 2147483648
  %v6906 = vmul.f32 %v6905, 1.442695
  %v6907 = vpow.pop %v6906
  %v6908 = vadd.f32 %v6907, 1.0
  %v6909 = vrcp.pop %v6908
  %v6910 = vmul.f32 %v6908, %v6909
  %v6911 = vsub.f32 1.0, %v6910
  %v6912 = vmul.f32 %v6909, %v6911
  %v6913 = vadd.f32 %v6909, %v6912
  %vm6914 = vweird.f32 %v6908
  %vm6915 = vweird.f32 %v6909
  %vm6916 = vmor %vm6914, %vm6915
  %v6917 = vsel %vm6916, %v6909, %v6913
  %v6918 = vand.u32 2147483647, %v6908
  %vm6919 = vcmp.eq.f32.partialorder %v6918, 8.507059e+37
  %v6920 = vand.u32 %v6908, 2147483648
  %v6921 = vor.u32 1.1754944e-38, %v6920
  %v6922 = vsel %vm6919, %v6921, %v6917
  %v6923 = vmul.f32 1.0, %v6922
  %v6924 = vtanh.pop %v6821
  %v6925 = vxor.u32 %v6822, 2147483648
  %v6926 = vmul.f32 %v6925, 1.442695
  %v6927 = vpow.pop %v6926
  %v6928 = vadd.f32 %v6927, 1.0
  %v6929 = vrcp.pop %v6928
  %v6930 = vmul.f32 %v6928, %v6929
  %v6931 = vsub.f32 1.0, %v6930
  %v6932 = vmul.f32 %v6929, %v6931
  %v6933 = vadd.f32 %v6929, %v6932
  %vm6934 = vweird.f32 %v6928
  %vm6935 = vweird.f32 %v6929
  %vm6936 = vmor %vm6934, %vm6935
  %v6937 = vsel %vm6936, %v6929, %v6933
  %v6938 = vand.u32 2147483647, %v6928
  %vm6939 = vcmp.eq.f32.partialorder %v6938, 8.507059e+37
  %v6940 = vand.u32 %v6928, 2147483648
  %v6941 = vor.u32 1.1754944e-38, %v6940
  %v6942 = vsel %vm6939, %v6941, %v6937
  %v6943 = vmul.f32 1.0, %v6942
  %v6944 = vmul.f32 %v6923, %v6696
  %v6945 = vmul.f32 %v6904, %v6924
  %v6946 = vadd.f32 %v6944, %v6945
  %v6947 = vtanh.pop %v6946
  %v6948 = vmul.f32 %v6943, %v6947
  %6949 = vst [vmem:[#allocation2 + $0x38] sm:$0xff] %v6885
  %6950 = vst [vmem:[#allocation3] sm:$0xff] %v6948
  %v6951 = vld [vmem:[#allocation2 + $0x38] sm:$0xff]
  %v6952 = vpack.c.bf16 %v6951, %v6951
  %v6953 = vld [vmem:[#allocation3 + $0x38] sm:$0xff]
  %v6954 = vpack.c.bf16 %v6953, %v6953
  %v6955 = vld [vmem:[%s13] sm:$0xf]
  %v6956 = vld [vmem:[%s13 + $0x4] sm:$0xf]
  %v6957 = vld [vmem:[%s13 + $0x8] sm:$0xf]
  %v6958 = vld [vmem:[%s13 + $0xc] sm:$0xf]
  %v6959 = vld [vmem:[%s13 + $0x10] sm:$0xf]
  %v6960 = vld [vmem:[%s13 + $0x14] sm:$0xf]
  %v6961 = vld [vmem:[%s13 + $0x18] sm:$0xf]
  %v6962 = vld [vmem:[%s13 + $0x1c] sm:$0xf]
  %v6963 = vld [vmem:[%s13 + $0x20] sm:$0xf]
  %v6964 = vld [vmem:[%s13 + $0x24] sm:$0xf]
  %v6965 = vld [vmem:[%s13 + $0x28] sm:$0xf]
  %v6966 = vld [vmem:[%s13 + $0x2c] sm:$0xf]
  %v6967 = vld [vmem:[%s13 + $0x30] sm:$0xf]
  %v6968 = vld [vmem:[%s13 + $0x34] sm:$0xf]
  %v6969 = vld [vmem:[%s13 + $0x38] sm:$0xf]
  %v6970 = vld [vmem:[%s13 + $0x3c] sm:$0xf]
  %v6971 = vld [vmem:[%s13 + $0x40] sm:$0xf]
  %v6972 = vld [vmem:[%s13 + $0x44] sm:$0xf]
  %v6973 = vld [vmem:[%s13 + $0x48] sm:$0xf]
  %v6974 = vld [vmem:[%s13 + $0x4c] sm:$0xf]
  %v6975 = vld [vmem:[%s13 + $0x50] sm:$0xf]
  %v6976 = vld [vmem:[%s13 + $0x54] sm:$0xf]
  %v6977 = vld [vmem:[%s13 + $0x58] sm:$0xf]
  %v6978 = vld [vmem:[%s13 + $0x5c] sm:$0xf]
  %v6979 = vld [vmem:[%s13 + $0x60] sm:$0xf]
  %v6980 = vld [vmem:[%s13 + $0x64] sm:$0xf]
  %v6981 = vld [vmem:[%s13 + $0x68] sm:$0xf]
  %v6982 = vld [vmem:[%s13 + $0x6c] sm:$0xf]
  %v6983 = vld [vmem:[%s13 + $0x70] sm:$0xf]
  %v6984 = vld [vmem:[%s13 + $0x74] sm:$0xf]
  %v6985 = vld [vmem:[%s13 + $0x78] sm:$0xf]
  %v6986 = vld [vmem:[%s13 + $0x7c] sm:$0xf]
  %v7003 = vunpack.c.l.b16 %v6971
  %v7004 = vunpack.c.l.b16 %v6972
  %v7005 = vunpack.c.l.b16 %v6973
  %v7006 = vunpack.c.l.b16 %v6974
  %v7007 = vunpack.c.l.b16 %v6975
  %v7008 = vunpack.c.l.b16 %v6976
  %v7009 = vunpack.c.l.b16 %v6977
  %v7010 = vunpack.c.l.b16 %v6978
  %v7011 = vunpack.c.l.b16 %v6979
  %v7012 = vunpack.c.l.b16 %v6980
  %v7013 = vunpack.c.l.b16 %v6981
  %v7014 = vunpack.c.l.b16 %v6982
  %v7015 = vunpack.c.l.b16 %v6983
  %v7016 = vunpack.c.l.b16 %v6984
  %v7017 = vunpack.c.l.b16 %v6985
  %v7018 = vunpack.c.l.b16 %v6986
  %v7019 = vpack.c.b16 %v7004, %v7003
  %v7020 = vpack.c.b16 %v7006, %v7005
  %v7021 = vpack.c.b16 %v7008, %v7007
  %v7022 = vpack.c.b16 %v7010, %v7009
  %v7023 = vpack.c.b16 %v7012, %v7011
  %v7024 = vpack.c.b16 %v7014, %v7013
  %v7025 = vpack.c.b16 %v7016, %v7015
  %v7026 = vpack.c.b16 %v7018, %v7017
  %7035 = vmatpush.bf16.msra.mxu0 %v7026
  %7036 = vmatpush.bf16.msra.mxu0 %v7025
  %7037 = vmatpush.bf16.msra.mxu0 %v7024
  %7038 = vmatpush.bf16.msra.mxu0 %v7023
  %7039 = vmatpush.bf16.msra.mxu0 %v7022
  %7040 = vmatpush.bf16.msra.mxu0 %v7021
  %7041 = vmatpush.bf16.msra.mxu0 %v7020
  %7042 = vmatpush.bf16.msra.mxu0 %v7019
  %7043 = vmatmul.bf16.gmra.mxu0 %v6954
  %v7044 = vpop.f32.mrf.mxu0
  %v7045 = vadd.f32 0.0, %v7044
  %v7046 = vpop.f32.mrf.mxu0
  %7047 = vdwg.mxu0
  %v7064 = vunpack.c.l.b16 %v6955
  %v7065 = vunpack.c.l.b16 %v6956
  %v7066 = vunpack.c.l.b16 %v6957
  %v7067 = vunpack.c.l.b16 %v6958
  %v7068 = vunpack.c.l.b16 %v6959
  %v7069 = vunpack.c.l.b16 %v6960
  %v7070 = vunpack.c.l.b16 %v6961
  %v7071 = vunpack.c.l.b16 %v6962
  %v7072 = vunpack.c.l.b16 %v6963
  %v7073 = vunpack.c.l.b16 %v6964
  %v7074 = vunpack.c.l.b16 %v6965
  %v7075 = vunpack.c.l.b16 %v6966
  %v7076 = vunpack.c.l.b16 %v6967
  %v7077 = vunpack.c.l.b16 %v6968
  %v7078 = vunpack.c.l.b16 %v6969
  %v7079 = vunpack.c.l.b16 %v6970
  %v7080 = vpack.c.b16 %v7065, %v7064
  %v7081 = vpack.c.b16 %v7067, %v7066
  %v7082 = vpack.c.b16 %v7069, %v7068
  %v7083 = vpack.c.b16 %v7071, %v7070
  %v7084 = vpack.c.b16 %v7073, %v7072
  %v7085 = vpack.c.b16 %v7075, %v7074
  %v7086 = vpack.c.b16 %v7077, %v7076
  %v7087 = vpack.c.b16 %v7079, %v7078
  %7096 = vmatpush.bf16.msra.mxu0 %v7087
  %7097 = vmatpush.bf16.msra.mxu0 %v7086
  %7098 = vmatpush.bf16.msra.mxu0 %v7085
  %7099 = vmatpush.bf16.msra.mxu0 %v7084
  %7100 = vmatpush.bf16.msra.mxu0 %v7083
  %7101 = vmatpush.bf16.msra.mxu0 %v7082
  %7102 = vmatpush.bf16.msra.mxu0 %v7081
  %7103 = vmatpush.bf16.msra.mxu0 %v7080
  %7104 = vmatmul.bf16.gmra.mxu0 %v6952
  %v7105 = vpop.f32.mrf.mxu0
  %v7106 = vadd.f32 %v7045, %v7105
  %v7107 = vpop.f32.mrf.mxu0
  %7108 = vdwg.mxu0
  %v7109 = vld [vmem:[%s14] sm:$0x1]
  %v7111 = vperm.slane %v7109, 0
  %v7113 = vadd.f32 %v7106, %v7111
  %7114 = vst [vmem:[%s15] sm:$0xff] %v7113
  // Predicated region
  $region62: #{text_rnn_forward.1} parent=0 // pred_check
    _
  $region63: #{text_rnn_forward.1} parent=0 // pred_check_branch
    %7116 = sbr.rel (0) target = $region65
  $region64: #{text_rnn_forward.1} parent=0 // pred_region
    _
  $region65: #{text_rnn_forward.1} parent=0 // pred_fallthru
    _
  // Predicated region
  $region66: #{text_rnn_forward.1} parent=0 // pred_check
    _
  $region67: #{text_rnn_forward.1} parent=0 // pred_check_branch
    %7118 = sbr.rel (0) target = $region69
  $region68: #{text_rnn_forward.1} parent=0 // pred_region
    _
  $region69: #{text_rnn_forward.1} parent=0 // pred_fallthru
    _

</llo_original>
